<compile_context>
chip_gen: v7x
topology: tpu7x:2x2x1
jax: 0.10.0
libtpu: 0.0.40
codegen_flags: <defaults>
</compile_context>

<pallas_src>
import jax
import jax.numpy as jnp
from jax.experimental import pallas as pl
from jax.experimental.pallas import tpu as pltpu

LRELU_SLOPE = 0.2
IN_FEATURES = 3 * 32 * 32 + 10          # 3082
HID = 512
OUT_PAD = 128                            # lane-dense padding of the final (., 1) output


def _leaky_relu(y):
    return jnp.where(y > 0, y, LRELU_SLOPE * y)


def _sigmoid(y):
    return 1.0 / (1.0 + jnp.exp(-y))


def cdisc_kernel(x_ref, w1_ref, w2_ref, w3_ref, w4_ref, b_ref, out_ref):
    x = x_ref[...]                                                 # (TB, 3082) f32

    def linear(h, w_ref, b):
        # bf16 x bf16 -> f32 accumulate on the MXU; bias add in f32.
        return jnp.dot(h.astype(jnp.bfloat16), w_ref[...],
                       preferred_element_type=jnp.float32) + b

    # TODO(synk): Dropout(0.4) layers are identity here (eval-mode); the
    # training-mode random masks are not implemented in the kernel.
    h = _leaky_relu(linear(x, w1_ref, b_ref[0:1, :]))              # (TB, 512)
    h = _leaky_relu(linear(h, w2_ref, b_ref[1:2, :]))              # (TB, 512)
    h = _leaky_relu(linear(h, w3_ref, b_ref[2:3, :]))              # (TB, 512)
    y = linear(h, w4_ref, b_ref[3:4, 0:OUT_PAD])                   # (TB, 128); col 0 real
    out_ref[...] = _sigmoid(y)


def init_params(key):
    """PyTorch-style deterministic init (Linear: U(+-1/sqrt(fan_in)), Emb: N(0,1))."""
    keys = jax.random.split(key, 9)
    params = {"emb": jax.random.normal(keys[0], (10, 10), jnp.float32)}
    sizes = [(IN_FEATURES, HID), (HID, HID), (HID, HID), (HID, 1)]
    for li, (fan_in, fan_out) in enumerate(sizes, start=1):
        bound = 1.0 / float(fan_in) ** 0.5
        params[f"w{li}"] = jax.random.uniform(
            keys[2 * li - 1], (fan_in, fan_out), jnp.float32, -bound, bound
        ).astype(jnp.bfloat16)                                     # stream weights as bf16
        params[f"b{li}"] = jax.random.uniform(
            keys[2 * li], (1, fan_out), jnp.float32, -bound, bound)
    # Kernel-side packed / padded forms (built once, reused every call).
    params["w4p"] = jnp.pad(params["w4"], ((0, 0), (0, OUT_PAD - 1)))          # (512,128) bf16
    params["bpack"] = jnp.concatenate(
        [params["b1"], params["b2"], params["b3"],
         jnp.pad(params["b4"], ((0, 0), (0, HID - 1)))], axis=0)               # (4,512) f32
    return params


def _round_up(n, m):
    return ((n + m - 1) // m) * m


@jax.jit
def cdiscriminator_forward(params, img, class_target):
    B = img.shape[0]
    # Glue in plain JAX: embedding lookup + flatten + concat (tiny).
    emb = params["emb"][class_target]                              # (B, 10)
    x = jnp.concatenate([img.reshape(B, -1), emb], axis=-1)        # (B, 3082) f32

    TB = min(128, _round_up(B, 8))
    Bp = _round_up(B, TB)
    if Bp != B:
        x = jnp.pad(x, ((0, Bp - B), (0, 0)))

    w1, w2, w3, w4p, bpack = (params["w1"], params["w2"], params["w3"],
                              params["w4p"], params["bpack"])

    def resident(shape):  # full-array block, constant index -> stays in VMEM across grid
        return pl.BlockSpec(shape, lambda i: (0, 0))

    out = pl.pallas_call(
        cdisc_kernel,
        out_shape=jax.ShapeDtypeStruct((Bp, OUT_PAD), jnp.float32),
        grid=(Bp // TB,),
        in_specs=[
            pl.BlockSpec((TB, IN_FEATURES), lambda i: (i, 0)),     # x tiled over batch
            resident(w1.shape),
            resident(w2.shape),
            resident(w3.shape),
            resident(w4p.shape),
            resident(bpack.shape),
        ],
        out_specs=pl.BlockSpec((TB, OUT_PAD), lambda i: (i, 0)),
        compiler_params=pltpu.CompilerParams(
            dimension_semantics=("parallel",),
            vmem_limit_bytes=32 * 1024 * 1024,                     # fits v7x's 64 MiB VMEM
        ),
    )(x, w1, w2, w3, w4p, bpack)

    return out[:B, :1]                                             # (B, 1)


def reference_forward(params, img, class_target):
    """Pure-JAX reference using the same bf16-weight / f32-accumulate recipe."""
    B = img.shape[0]
    emb = params["emb"][class_target]
    h = jnp.concatenate([img.reshape(B, -1), emb], axis=-1)
    for li in (1, 2, 3):
        y = jnp.dot(h.astype(jnp.bfloat16), params[f"w{li}"],
                    preferred_element_type=jnp.float32) + params[f"b{li}"]
        h = _leaky_relu(y)
    y = jnp.dot(h.astype(jnp.bfloat16), params["w4"],
                preferred_element_type=jnp.float32) + params["b4"]
    return _sigmoid(y)                                             # (B, 1)


if __name__ == "__main__":
    batch = 8

    key = jax.random.PRNGKey(0)
    kp, ki, kc = jax.random.split(key, 3)
    params = init_params(kp)
    img = jax.random.normal(ki, (batch, 3, 32, 32), jnp.float32)
    class_target = jax.random.randint(kc, (batch,), 0, 10, jnp.int32)

    out = cdiscriminator_forward(params, img, class_target)
    out = jax.block_until_ready(out)

    ref = reference_forward(params, img, class_target)
    assert out.shape == (batch, 1), out.shape
    max_err = float(jnp.max(jnp.abs(out - ref)))
    assert jnp.allclose(out, ref, atol=2e-3, rtol=2e-3), max_err

    print("KERNEL_OK")
</pallas_src>

<mosaic_0001>
module attributes {stable_mosaic.version = 11 : i64} {
  func.func @cdisc_kernel(%arg0: i32, %arg1: memref<8x3082xf32, #tpu.memory_space<vmem>>, %arg2: memref<3082x512xbf16, #tpu.memory_space<vmem>>, %arg3: memref<512x512xbf16, #tpu.memory_space<vmem>>, %arg4: memref<512x512xbf16, #tpu.memory_space<vmem>>, %arg5: memref<512x128xbf16, #tpu.memory_space<vmem>>, %arg6: memref<4x512xf32, #tpu.memory_space<vmem>>, %arg7: memref<8x128xf32, #tpu.memory_space<vmem>>) attributes {dimension_semantics = [#tpu.dimension_semantics<parallel>], iteration_bounds = array<i64: 1>, scalar_prefetch = 0 : i64, scratch_operands = 0 : i64, tpu.core_type = #tpu.core_type<tc>, window_params = [{transform_indices = @transform_0, window_bounds = array<i64: 8, 3082>}, {pipeline_mode = #tpu.pipeline_mode<synchronous>, transform_indices = @transform_1, window_bounds = array<i64: 3082, 512>}, {pipeline_mode = #tpu.pipeline_mode<synchronous>, transform_indices = @transform_2, window_bounds = array<i64: 512, 512>}, {pipeline_mode = #tpu.pipeline_mode<synchronous>, transform_indices = @transform_3, window_bounds = array<i64: 512, 512>}, {pipeline_mode = #tpu.pipeline_mode<synchronous>, transform_indices = @transform_4, window_bounds = array<i64: 512, 128>}, {pipeline_mode = #tpu.pipeline_mode<synchronous>, transform_indices = @transform_5, window_bounds = array<i64: 4, 512>}, {transform_indices = @transform_6, window_bounds = array<i64: 8, 128>}]} {
    %c0 = arith.constant 0 : index
    %c0_0 = arith.constant 0 : index
    %0 = vector.load %arg1[%c0, %c0_0] : memref<8x3082xf32, #tpu.memory_space<vmem>>, vector<8x3082xf32>
    %c0_1 = arith.constant 0 : index
    %c0_2 = arith.constant 0 : index
    %1 = vector.load %arg6[%c0_1, %c0_2] : memref<4x512xf32, #tpu.memory_space<vmem>>, vector<1x512xf32>
    %2 = arith.truncf %0 : vector<8x3082xf32> to vector<8x3082xbf16>
    %c0_3 = arith.constant 0 : index
    %c0_4 = arith.constant 0 : index
    %3 = vector.load %arg2[%c0_3, %c0_4] : memref<3082x512xbf16, #tpu.memory_space<vmem>>, vector<3082x512xbf16>
    %cst = arith.constant dense<0.000000e+00> : vector<8x512xf32>
    %4 = tpu.matmul %2, %3, %cst {dimension_numbers = #tpu.dot_dimension_numbers<[1], [0], [0], [1], [0, 0, 1, 1], [], []>} : vector<8x3082xbf16>, vector<3082x512xbf16>, vector<8x512xf32> -> vector<8x512xf32>
    %5 = vector.broadcast %1 : vector<1x512xf32> to vector<8x512xf32>
    %6 = arith.addf %4, %5 : vector<8x512xf32>
    %cst_5 = arith.constant 0.000000e+00 : f32
    %7 = vector.broadcast %cst_5 : f32 to vector<8x512xf32>
    %8 = arith.cmpf ogt, %6, %7 : vector<8x512xf32>
    %cst_6 = arith.constant 2.000000e-01 : f32
    %9 = vector.broadcast %cst_6 : f32 to vector<8x512xf32>
    %10 = arith.mulf %9, %6 : vector<8x512xf32>
    %11 = arith.select %8, %6, %10 : vector<8x512xi1>, vector<8x512xf32>
    %c1 = arith.constant 1 : index
    %c0_7 = arith.constant 0 : index
    %12 = vector.load %arg6[%c1, %c0_7] : memref<4x512xf32, #tpu.memory_space<vmem>>, vector<1x512xf32>
    %13 = arith.truncf %11 : vector<8x512xf32> to vector<8x512xbf16>
    %c0_8 = arith.constant 0 : index
    %c0_9 = arith.constant 0 : index
    %14 = vector.load %arg3[%c0_8, %c0_9] : memref<512x512xbf16, #tpu.memory_space<vmem>>, vector<512x512xbf16>
    %cst_10 = arith.constant dense<0.000000e+00> : vector<8x512xf32>
    %15 = tpu.matmul %13, %14, %cst_10 {dimension_numbers = #tpu.dot_dimension_numbers<[1], [0], [0], [1], [0, 0, 1, 1], [], []>} : vector<8x512xbf16>, vector<512x512xbf16>, vector<8x512xf32> -> vector<8x512xf32>
    %16 = vector.broadcast %12 : vector<1x512xf32> to vector<8x512xf32>
    %17 = arith.addf %15, %16 : vector<8x512xf32>
    %cst_11 = arith.constant 0.000000e+00 : f32
    %18 = vector.broadcast %cst_11 : f32 to vector<8x512xf32>
    %19 = arith.cmpf ogt, %17, %18 : vector<8x512xf32>
    %cst_12 = arith.constant 2.000000e-01 : f32
    %20 = vector.broadcast %cst_12 : f32 to vector<8x512xf32>
    %21 = arith.mulf %20, %17 : vector<8x512xf32>
    %22 = arith.select %19, %17, %21 : vector<8x512xi1>, vector<8x512xf32>
    %c2 = arith.constant 2 : index
    %c0_13 = arith.constant 0 : index
    %23 = vector.load %arg6[%c2, %c0_13] : memref<4x512xf32, #tpu.memory_space<vmem>>, vector<1x512xf32>
    %24 = arith.truncf %22 : vector<8x512xf32> to vector<8x512xbf16>
    %c0_14 = arith.constant 0 : index
    %c0_15 = arith.constant 0 : index
    %25 = vector.load %arg4[%c0_14, %c0_15] : memref<512x512xbf16, #tpu.memory_space<vmem>>, vector<512x512xbf16>
    %cst_16 = arith.constant dense<0.000000e+00> : vector<8x512xf32>
    %26 = tpu.matmul %24, %25, %cst_16 {dimension_numbers = #tpu.dot_dimension_numbers<[1], [0], [0], [1], [0, 0, 1, 1], [], []>} : vector<8x512xbf16>, vector<512x512xbf16>, vector<8x512xf32> -> vector<8x512xf32>
    %27 = vector.broadcast %23 : vector<1x512xf32> to vector<8x512xf32>
    %28 = arith.addf %26, %27 : vector<8x512xf32>
    %cst_17 = arith.constant 0.000000e+00 : f32
    %29 = vector.broadcast %cst_17 : f32 to vector<8x512xf32>
    %30 = arith.cmpf ogt, %28, %29 : vector<8x512xf32>
    %cst_18 = arith.constant 2.000000e-01 : f32
    %31 = vector.broadcast %cst_18 : f32 to vector<8x512xf32>
    %32 = arith.mulf %31, %28 : vector<8x512xf32>
    %33 = arith.select %30, %28, %32 : vector<8x512xi1>, vector<8x512xf32>
    %c3 = arith.constant 3 : index
    %c0_19 = arith.constant 0 : index
    %34 = vector.load %arg6[%c3, %c0_19] : memref<4x512xf32, #tpu.memory_space<vmem>>, vector<1x128xf32>
    %35 = arith.truncf %33 : vector<8x512xf32> to vector<8x512xbf16>
    %c0_20 = arith.constant 0 : index
    %c0_21 = arith.constant 0 : index
    %36 = vector.load %arg5[%c0_20, %c0_21] : memref<512x128xbf16, #tpu.memory_space<vmem>>, vector<512x128xbf16>
    %cst_22 = arith.constant dense<0.000000e+00> : vector<8x128xf32>
    %37 = tpu.matmul %35, %36, %cst_22 {dimension_numbers = #tpu.dot_dimension_numbers<[1], [0], [0], [1], [0, 0, 1, 1], [], []>} : vector<8x512xbf16>, vector<512x128xbf16>, vector<8x128xf32> -> vector<8x128xf32>
    %38 = vector.broadcast %34 : vector<1x128xf32> to vector<8x128xf32>
    %39 = arith.addf %37, %38 : vector<8x128xf32>
    %cst_23 = arith.constant 0.000000e+00 : f32
    %40 = vector.broadcast %cst_23 : f32 to vector<8x128xf32>
    %41 = arith.subf %40, %39 : vector<8x128xf32>
    %42 = math.exp %41 : vector<8x128xf32>
    %cst_24 = arith.constant 1.000000e+00 : f32
    %43 = vector.broadcast %cst_24 : f32 to vector<8x128xf32>
    %44 = arith.addf %43, %42 : vector<8x128xf32>
    %cst_25 = arith.constant 1.000000e+00 : f32
    %45 = vector.broadcast %cst_25 : f32 to vector<8x128xf32>
    %46 = arith.divf %45, %44 : vector<8x128xf32>
    %c0_26 = arith.constant 0 : index
    %c0_27 = arith.constant 0 : index
    %47 = vector.load %arg7[%c0_26, %c0_27] : memref<8x128xf32, #tpu.memory_space<vmem>>, vector<8x128xf32>
    tpu.vector_store %arg7[%c0_26, %c0_27], %46 {strides = array<i32>} : memref<8x128xf32, #tpu.memory_space<vmem>>, vector<8x128xf32>,
    return
  }
  func.func @transform_0(%arg0: i32) -> (i32, i32) {
    %c0_i32 = arith.constant 0 : i32
    %c0_i32_0 = arith.constant 0 : i32
    return %arg0, %c0_i32 : i32, i32
  }
  func.func @transform_1(%arg0: i32) -> (i32, i32) {
    %c0_i32 = arith.constant 0 : i32
    %c0_i32_0 = arith.constant 0 : i32
    %c0_i32_1 = arith.constant 0 : i32
    return %c0_i32, %c0_i32_0 : i32, i32
  }
  func.func @transform_2(%arg0: i32) -> (i32, i32) {
    %c0_i32 = arith.constant 0 : i32
    %c0_i32_0 = arith.constant 0 : i32
    %c0_i32_1 = arith.constant 0 : i32
    return %c0_i32, %c0_i32_0 : i32, i32
  }
  func.func @transform_3(%arg0: i32) -> (i32, i32) {
    %c0_i32 = arith.constant 0 : i32
    %c0_i32_0 = arith.constant 0 : i32
    %c0_i32_1 = arith.constant 0 : i32
    return %c0_i32, %c0_i32_0 : i32, i32
  }
  func.func @transform_4(%arg0: i32) -> (i32, i32) {
    %c0_i32 = arith.constant 0 : i32
    %c0_i32_0 = arith.constant 0 : i32
    %c0_i32_1 = arith.constant 0 : i32
    return %c0_i32, %c0_i32_0 : i32, i32
  }
  func.func @transform_5(%arg0: i32) -> (i32, i32) {
    %c0_i32 = arith.constant 0 : i32
    %c0_i32_0 = arith.constant 0 : i32
    %c0_i32_1 = arith.constant 0 : i32
    return %c0_i32, %c0_i32_0 : i32, i32
  }
  func.func @transform_6(%arg0: i32) -> (i32, i32) {
    %c0_i32 = arith.constant 0 : i32
    %c0_i32_0 = arith.constant 0 : i32
    return %arg0, %c0_i32 : i32, i32
  }
}

</mosaic_0001>

<llo_original>
// kernel: cdiscriminator_forward.1
$region0: #{cdiscriminator_forward.1}
  #allocation0 [shape = 'u32[]', space=smem, size = 0x4, offset = 0x4, fixed_abs, tag = 'smem constant byte address 0x4 - core index']
  #allocation1 [shape = 'u32[144,128]{1,0:T(1,128)}', space=vmem, size = 0x12000, scoped, tag = 'internal scratch']
  %s0 = inlined_call_operand.vmem [shape: f32[8,3082], index: 0, kind: input, shape index: {}]
  %s1 = inlined_call_operand.hbm [shape: bf16[3082,512], index: 1, kind: input, shape index: {}]
  %s2 = inlined_call_operand.hbm [shape: bf16[512,512], index: 2, kind: input, shape index: {}]
  %s3 = inlined_call_operand.hbm [shape: bf16[512,512], index: 3, kind: input, shape index: {}]
  %s4 = inlined_call_operand.hbm [shape: bf16[512,128], index: 4, kind: input, shape index: {}]
  %s5 = inlined_call_operand.hbm [shape: f32[4,512], index: 5, kind: input, shape index: {}]
  %s6 = inlined_call_operand.vmem [shape: f32[8,128], index: 6, kind: output, shape index: {}]
  %s7 = sld [smem:[#allocation0]]
  $region54: #{cdiscriminator_forward.1} parent=0
    _
  %s9 = ssub.s32 1, %s7
  %s10 = scalar_select 0, %s9, %s7
  $region1: #{cdiscriminator_forward.1} parent=0
    #allocation2 [shape = 'u8[3162112]{0}', space=vmem, size = 0x304000, scoped, tag = 'input window, operand 1, single buffered']
    #allocation3 [shape = 's32[1]{0}', space=sflag, size = 0x4, scoped, tag = 'scoped memory for cdiscriminator_forward.1']
    #allocation4 [shape = 'u8[524288]{0}', space=vmem, size = 0x80000, scoped, tag = 'input window, operand 2, single buffered']
    #allocation5 [shape = 's32[1]{0}', space=sflag, size = 0x4, scoped, tag = 'scoped memory for cdiscriminator_forward.1']
    #allocation6 [shape = 'u8[524288]{0}', space=vmem, size = 0x80000, scoped, tag = 'input window, operand 3, single buffered']
    #allocation7 [shape = 'u8[131072]{0}', space=vmem, size = 0x20000, scoped, tag = 'input window, operand 4, single buffered']
    #allocation8 [shape = 's32[1]{0}', space=sflag, size = 0x4, scoped, tag = 'scoped memory for cdiscriminator_forward.1']
    #allocation9 [shape = 'u8[8192]{0}', space=vmem, size = 0x2000, scoped, tag = 'input window, operand 5, single buffered']
    %11 = vsyncpa [#allocation3], 0
    %12 = vsyncpa [#allocation5], 0
    %13 = vsyncpa [#allocation8], 0
    // Predicated region
    $region2: #{cdiscriminator_forward.1} parent=1 // pred_check
      _
    $region3: #{cdiscriminator_forward.1} parent=1 // pred_check_branch
      %15 = sbr.rel (0) target = $region5
    $region4: #{cdiscriminator_forward.1} parent=1 // pred_region
      _
    $region5: #{cdiscriminator_forward.1} parent=1 // pred_fallthru
      _
    // Predicated region
    $region6: #{cdiscriminator_forward.1} parent=1 // pred_check
      _
    $region7: #{cdiscriminator_forward.1} parent=1 // pred_check_branch
      %17 = sbr.rel (0) target = $region9
    $region8: #{cdiscriminator_forward.1} parent=1 // pred_region
      %s19 = ssub.s32 98816, 98816
      %20 = vsyncadd [#allocation3], %s19
      %s21 = sshll.u32 [#allocation2], 4
      %s22 = int_to_ptr.vmem [resolvable:$true] %s21
      %27 = dma.hbm_to_vmem [thread:$0]  %s1, 98816, %s22, [#allocation3], 256, 256, 16
    $region9: #{cdiscriminator_forward.1} parent=1 // pred_fallthru
      _
    // Predicated region
    $region10: #{cdiscriminator_forward.1} parent=1 // pred_check
      _
    $region11: #{cdiscriminator_forward.1} parent=1 // pred_check_branch
      %29 = sbr.rel (0) target = $region13
    $region12: #{cdiscriminator_forward.1} parent=1 // pred_region
      %s31 = ssub.s32 16384, 16384
      %32 = vsyncadd [#allocation5], %s31
      %s33 = sshll.u32 [#allocation4], 4
      %s34 = int_to_ptr.vmem [resolvable:$true] %s33
      %39 = dma.hbm_to_vmem [thread:$0]  %s2, 16384, %s34, [#allocation5], 256, 256, 16
    $region13: #{cdiscriminator_forward.1} parent=1 // pred_fallthru
      _
    // Predicated region
    $region14: #{cdiscriminator_forward.1} parent=1 // pred_check
      _
    $region15: #{cdiscriminator_forward.1} parent=1 // pred_check_branch
      %41 = sbr.rel (0) target = $region17
    $region16: #{cdiscriminator_forward.1} parent=1 // pred_region
      %s43 = ssub.s32 16384, 16384
      %44 = vsyncadd [#allocation5], %s43
      %s45 = sshll.u32 [#allocation6], 4
      %s46 = int_to_ptr.vmem [resolvable:$true] %s45
      %51 = dma.hbm_to_vmem [thread:$0]  %s3, 16384, %s46, [#allocation5], 256, 256, 16
    $region17: #{cdiscriminator_forward.1} parent=1 // pred_fallthru
      _
    // Predicated region
    $region18: #{cdiscriminator_forward.1} parent=1 // pred_check
      _
    $region19: #{cdiscriminator_forward.1} parent=1 // pred_check_branch
      %53 = sbr.rel (0) target = $region21
    $region20: #{cdiscriminator_forward.1} parent=1 // pred_region
      %s55 = ssub.s32 4096, 4096
      %56 = vsyncadd [#allocation8], %s55
      %s57 = sshll.u32 [#allocation7], 4
      %s58 = int_to_ptr.vmem [resolvable:$true] %s57
      %63 = dma.hbm_to_vmem [thread:$0]  %s4, 4096, %s58, [#allocation8], 64, 64, 4
    $region21: #{cdiscriminator_forward.1} parent=1 // pred_fallthru
      _
    // Predicated region
    $region22: #{cdiscriminator_forward.1} parent=1 // pred_check
      _
    $region23: #{cdiscriminator_forward.1} parent=1 // pred_check_branch
      %65 = sbr.rel (0) target = $region25
    $region24: #{cdiscriminator_forward.1} parent=1 // pred_region
      %s67 = ssub.s32 256, 256
      %68 = vsyncadd [#allocation8], %s67
      %s70 = sshll.u32 [#allocation9], 4
      %s71 = int_to_ptr.vmem [resolvable:$true] %s70
      %73 = dma.hbm_to_vmem [thread:$0]  %s5, 256, %s71, [#allocation8]
    $region25: #{cdiscriminator_forward.1} parent=1 // pred_fallthru
      _
    // Predicated region
    $region26: #{cdiscriminator_forward.1} parent=1 // pred_check
      _
    $region27: #{cdiscriminator_forward.1} parent=1 // pred_check_branch
      %75 = sbr.rel (0) target = $region29
    $region28: #{cdiscriminator_forward.1} parent=1 // pred_region
      %76 = dma.done [#allocation3], 98816
    $region29: #{cdiscriminator_forward.1} parent=1 // pred_fallthru
      _
    // Predicated region
    $region30: #{cdiscriminator_forward.1} parent=1 // pred_check
      _
    $region31: #{cdiscriminator_forward.1} parent=1 // pred_check_branch
      %78 = sbr.rel (0) target = $region33
    $region32: #{cdiscriminator_forward.1} parent=1 // pred_region
      %79 = dma.done [#allocation5], 16384
    $region33: #{cdiscriminator_forward.1} parent=1 // pred_fallthru
      _
    // Predicated region
    $region34: #{cdiscriminator_forward.1} parent=1 // pred_check
      _
    $region35: #{cdiscriminator_forward.1} parent=1 // pred_check_branch
      %81 = sbr.rel (0) target = $region37
    $region36: #{cdiscriminator_forward.1} parent=1 // pred_region
      %82 = dma.done [#allocation5], 16384
    $region37: #{cdiscriminator_forward.1} parent=1 // pred_fallthru
      _
    // Predicated region
    $region38: #{cdiscriminator_forward.1} parent=1 // pred_check
      _
    $region39: #{cdiscriminator_forward.1} parent=1 // pred_check_branch
      %84 = sbr.rel (0) target = $region41
    $region40: #{cdiscriminator_forward.1} parent=1 // pred_region
      %85 = dma.done [#allocation8], 4096
    $region41: #{cdiscriminator_forward.1} parent=1 // pred_fallthru
      _
    // Predicated region
    $region42: #{cdiscriminator_forward.1} parent=1 // pred_check
      _
    $region43: #{cdiscriminator_forward.1} parent=1 // pred_check_branch
      %87 = sbr.rel (0) target = $region45
    $region44: #{cdiscriminator_forward.1} parent=1 // pred_region
      %88 = dma.done [#allocation8], 256
    $region45: #{cdiscriminator_forward.1} parent=1 // pred_fallthru
      _
    %v90 = vld [vmem:[%s0] sm:$0xff]
    %v91 = vld [vmem:[%s0 + $0x8] sm:$0xff]
    %v92 = vld [vmem:[%s0 + $0x10] sm:$0xff]
    %v93 = vld [vmem:[%s0 + $0x18] sm:$0xff]
    %v94 = vld [vmem:[%s0 + $0x20] sm:$0xff]
    %v95 = vld [vmem:[%s0 + $0x28] sm:$0xff]
    %v96 = vld [vmem:[%s0 + $0x30] sm:$0xff]
    %v97 = vld [vmem:[%s0 + $0x38] sm:$0xff]
    %v98 = vld [vmem:[%s0 + $0x40] sm:$0xff]
    %v99 = vld [vmem:[%s0 + $0x48] sm:$0xff]
    %v100 = vld [vmem:[%s0 + $0x50] sm:$0xff]
    %v101 = vld [vmem:[%s0 + $0x58] sm:$0xff]
    %v102 = vld [vmem:[%s0 + $0x60] sm:$0xff]
    %v103 = vld [vmem:[%s0 + $0x68] sm:$0xff]
    %v104 = vld [vmem:[%s0 + $0x70] sm:$0xff]
    %v105 = vld [vmem:[%s0 + $0x78] sm:$0xff]
    %v106 = vld [vmem:[%s0 + $0x80] sm:$0xff]
    %v107 = vld [vmem:[%s0 + $0x88] sm:$0xff]
    %v108 = vld [vmem:[%s0 + $0x90] sm:$0xff]
    %v109 = vld [vmem:[%s0 + $0x98] sm:$0xff]
    %v110 = vld [vmem:[%s0 + $0xa0] sm:$0xff]
    %v111 = vld [vmem:[%s0 + $0xa8] sm:$0xff]
    %v112 = vld [vmem:[%s0 + $0xb0] sm:$0xff]
    %v113 = vld [vmem:[%s0 + $0xb8] sm:$0xff]
    %v114 = vld [vmem:[%s0 + $0xc0] sm:$0xff]
    %v115 = vld [vmem:[#allocation9] ss:$4 sm:$0xf]
    %v116 = vpack.c.bf16 %v90, %v90
    %v117 = vpack.c.bf16 %v91, %v91
    %v118 = vpack.c.bf16 %v92, %v92
    %v119 = vpack.c.bf16 %v93, %v93
    %v120 = vpack.c.bf16 %v94, %v94
    %v121 = vpack.c.bf16 %v95, %v95
    %v122 = vpack.c.bf16 %v96, %v96
    %v123 = vpack.c.bf16 %v97, %v97
    %v124 = vpack.c.bf16 %v98, %v98
    %v125 = vpack.c.bf16 %v99, %v99
    %v126 = vpack.c.bf16 %v100, %v100
    %v127 = vpack.c.bf16 %v101, %v101
    %v128 = vpack.c.bf16 %v102, %v102
    %v129 = vpack.c.bf16 %v103, %v103
    %v130 = vpack.c.bf16 %v104, %v104
    %v131 = vpack.c.bf16 %v105, %v105
    %v132 = vpack.c.bf16 %v106, %v106
    %v133 = vpack.c.bf16 %v107, %v107
    %v134 = vpack.c.bf16 %v108, %v108
    %v135 = vpack.c.bf16 %v109, %v109
    %v136 = vpack.c.bf16 %v110, %v110
    %v137 = vpack.c.bf16 %v111, %v111
    %v138 = vpack.c.bf16 %v112, %v112
    %v139 = vpack.c.bf16 %v113, %v113
    %v140 = vpack.c.bf16 %v114, %v114
    %v141 = vld [vmem:[#allocation2] sm:$0xff]
    %v142 = vld [vmem:[#allocation2 + $0x8] sm:$0xff]
    %v143 = vld [vmem:[#allocation2 + $0x10] sm:$0xff]
    %v144 = vld [vmem:[#allocation2 + $0x18] sm:$0xff]
    %v145 = vld [vmem:[#allocation2 + $0x20] sm:$0xff]
    %v146 = vld [vmem:[#allocation2 + $0x28] sm:$0xff]
    %v147 = vld [vmem:[#allocation2 + $0x30] sm:$0xff]
    %v148 = vld [vmem:[#allocation2 + $0x38] sm:$0xff]
    %v149 = vld [vmem:[#allocation2 + $0x40] sm:$0xff]
    %v150 = vld [vmem:[#allocation2 + $0x48] sm:$0xff]
    %v151 = vld [vmem:[#allocation2 + $0x50] sm:$0xff]
    %v152 = vld [vmem:[#allocation2 + $0x58] sm:$0xff]
    %v153 = vld [vmem:[#allocation2 + $0x60] sm:$0xff]
    %v154 = vld [vmem:[#allocation2 + $0x68] sm:$0xff]
    %v155 = vld [vmem:[#allocation2 + $0x70] sm:$0xff]
    %v156 = vld [vmem:[#allocation2 + $0x78] sm:$0xff]
    %v157 = vld [vmem:[#allocation2 + $0x80] sm:$0xff]
    %v158 = vld [vmem:[#allocation2 + $0x88] sm:$0xff]
    %v159 = vld [vmem:[#allocation2 + $0x90] sm:$0xff]
    %v160 = vld [vmem:[#allocation2 + $0x98] sm:$0xff]
    %v161 = vld [vmem:[#allocation2 + $0xa0] sm:$0xff]
    %v162 = vld [vmem:[#allocation2 + $0xa8] sm:$0xff]
    %v163 = vld [vmem:[#allocation2 + $0xb0] sm:$0xff]
    %v164 = vld [vmem:[#allocation2 + $0xb8] sm:$0xff]
    %v165 = vld [vmem:[#allocation2 + $0xc0] sm:$0xff]
    %v166 = vld [vmem:[#allocation2 + $0xc8] sm:$0xff]
    %v167 = vld [vmem:[#allocation2 + $0xd0] sm:$0xff]
    %v168 = vld [vmem:[#allocation2 + $0xd8] sm:$0xff]
    %v169 = vld [vmem:[#allocation2 + $0xe0] sm:$0xff]
    %v170 = vld [vmem:[#allocation2 + $0xe8] sm:$0xff]
    %v171 = vld [vmem:[#allocation2 + $0xf0] sm:$0xff]
    %v172 = vld [vmem:[#allocation2 + $0xf8] sm:$0xff]
    %v173 = vld [vmem:[#allocation2 + $0x100] sm:$0xff]
    %v174 = vld [vmem:[#allocation2 + $0x108] sm:$0xff]
    %v175 = vld [vmem:[#allocation2 + $0x110] sm:$0xff]
    %v176 = vld [vmem:[#allocation2 + $0x118] sm:$0xff]
    %v177 = vld [vmem:[#allocation2 + $0x120] sm:$0xff]
    %v178 = vld [vmem:[#allocation2 + $0x128] sm:$0xff]
    %v179 = vld [vmem:[#allocation2 + $0x130] sm:$0xff]
    %v180 = vld [vmem:[#allocation2 + $0x138] sm:$0xff]
    %v181 = vld [vmem:[#allocation2 + $0x140] sm:$0xff]
    %v182 = vld [vmem:[#allocation2 + $0x148] sm:$0xff]
    %v183 = vld [vmem:[#allocation2 + $0x150] sm:$0xff]
    %v184 = vld [vmem:[#allocation2 + $0x158] sm:$0xff]
    %v185 = vld [vmem:[#allocation2 + $0x160] sm:$0xff]
    %v186 = vld [vmem:[#allocation2 + $0x168] sm:$0xff]
    %v187 = vld [vmem:[#allocation2 + $0x170] sm:$0xff]
    %v188 = vld [vmem:[#allocation2 + $0x178] sm:$0xff]
    %v189 = vld [vmem:[#allocation2 + $0x180] sm:$0xff]
    %v190 = vld [vmem:[#allocation2 + $0x188] sm:$0xff]
    %v191 = vld [vmem:[#allocation2 + $0x190] sm:$0xff]
    %v192 = vld [vmem:[#allocation2 + $0x198] sm:$0xff]
    %v193 = vld [vmem:[#allocation2 + $0x1a0] sm:$0xff]
    %v194 = vld [vmem:[#allocation2 + $0x1a8] sm:$0xff]
    %v195 = vld [vmem:[#allocation2 + $0x1b0] sm:$0xff]
    %v196 = vld [vmem:[#allocation2 + $0x1b8] sm:$0xff]
    %v197 = vld [vmem:[#allocation2 + $0x1c0] sm:$0xff]
    %v198 = vld [vmem:[#allocation2 + $0x1c8] sm:$0xff]
    %v199 = vld [vmem:[#allocation2 + $0x1d0] sm:$0xff]
    %v200 = vld [vmem:[#allocation2 + $0x1d8] sm:$0xff]
    %v201 = vld [vmem:[#allocation2 + $0x1e0] sm:$0xff]
    %v202 = vld [vmem:[#allocation2 + $0x1e8] sm:$0xff]
    %v203 = vld [vmem:[#allocation2 + $0x1f0] sm:$0xff]
    %v204 = vld [vmem:[#allocation2 + $0x1f8] sm:$0xff]
    %v205 = vld [vmem:[#allocation2 + $0x200] sm:$0xff]
    %v206 = vld [vmem:[#allocation2 + $0x208] sm:$0xff]
    %v207 = vld [vmem:[#allocation2 + $0x210] sm:$0xff]
    %v208 = vld [vmem:[#allocation2 + $0x218] sm:$0xff]
    %v209 = vld [vmem:[#allocation2 + $0x220] sm:$0xff]
    %v210 = vld [vmem:[#allocation2 + $0x228] sm:$0xff]
    %v211 = vld [vmem:[#allocation2 + $0x230] sm:$0xff]
    %v212 = vld [vmem:[#allocation2 + $0x238] sm:$0xff]
    %v213 = vld [vmem:[#allocation2 + $0x240] sm:$0xff]
    %v214 = vld [vmem:[#allocation2 + $0x248] sm:$0xff]
    %v215 = vld [vmem:[#allocation2 + $0x250] sm:$0xff]
    %v216 = vld [vmem:[#allocation2 + $0x258] sm:$0xff]
    %v217 = vld [vmem:[#allocation2 + $0x260] sm:$0xff]
    %v218 = vld [vmem:[#allocation2 + $0x268] sm:$0xff]
    %v219 = vld [vmem:[#allocation2 + $0x270] sm:$0xff]
    %v220 = vld [vmem:[#allocation2 + $0x278] sm:$0xff]
    %v221 = vld [vmem:[#allocation2 + $0x280] sm:$0xff]
    %v222 = vld [vmem:[#allocation2 + $0x288] sm:$0xff]
    %v223 = vld [vmem:[#allocation2 + $0x290] sm:$0xff]
    %v224 = vld [vmem:[#allocation2 + $0x298] sm:$0xff]
    %v225 = vld [vmem:[#allocation2 + $0x2a0] sm:$0xff]
    %v226 = vld [vmem:[#allocation2 + $0x2a8] sm:$0xff]
    %v227 = vld [vmem:[#allocation2 + $0x2b0] sm:$0xff]
    %v228 = vld [vmem:[#allocation2 + $0x2b8] sm:$0xff]
    %v229 = vld [vmem:[#allocation2 + $0x2c0] sm:$0xff]
    %v230 = vld [vmem:[#allocation2 + $0x2c8] sm:$0xff]
    %v231 = vld [vmem:[#allocation2 + $0x2d0] sm:$0xff]
    %v232 = vld [vmem:[#allocation2 + $0x2d8] sm:$0xff]
    %v233 = vld [vmem:[#allocation2 + $0x2e0] sm:$0xff]
    %v234 = vld [vmem:[#allocation2 + $0x2e8] sm:$0xff]
    %v235 = vld [vmem:[#allocation2 + $0x2f0] sm:$0xff]
    %v236 = vld [vmem:[#allocation2 + $0x2f8] sm:$0xff]
    %v237 = vld [vmem:[#allocation2 + $0x300] sm:$0xff]
    %v238 = vld [vmem:[#allocation2 + $0x308] sm:$0xff]
    %v239 = vld [vmem:[#allocation2 + $0x310] sm:$0xff]
    %v240 = vld [vmem:[#allocation2 + $0x318] sm:$0xff]
    %v241 = vld [vmem:[#allocation2 + $0x320] sm:$0xff]
    %v242 = vld [vmem:[#allocation2 + $0x328] sm:$0xff]
    %v243 = vld [vmem:[#allocation2 + $0x330] sm:$0xff]
    %v244 = vld [vmem:[#allocation2 + $0x338] sm:$0xff]
    %v245 = vld [vmem:[#allocation2 + $0x340] sm:$0xff]
    %v246 = vld [vmem:[#allocation2 + $0x348] sm:$0xff]
    %v247 = vld [vmem:[#allocation2 + $0x350] sm:$0xff]
    %v248 = vld [vmem:[#allocation2 + $0x358] sm:$0xff]
    %v249 = vld [vmem:[#allocation2 + $0x360] sm:$0xff]
    %v250 = vld [vmem:[#allocation2 + $0x368] sm:$0xff]
    %v251 = vld [vmem:[#allocation2 + $0x370] sm:$0xff]
    %v252 = vld [vmem:[#allocation2 + $0x378] sm:$0xff]
    %v253 = vld [vmem:[#allocation2 + $0x380] sm:$0xff]
    %v254 = vld [vmem:[#allocation2 + $0x388] sm:$0xff]
    %v255 = vld [vmem:[#allocation2 + $0x390] sm:$0xff]
    %v256 = vld [vmem:[#allocation2 + $0x398] sm:$0xff]
    %v257 = vld [vmem:[#allocation2 + $0x3a0] sm:$0xff]
    %v258 = vld [vmem:[#allocation2 + $0x3a8] sm:$0xff]
    %v259 = vld [vmem:[#allocation2 + $0x3b0] sm:$0xff]
    %v260 = vld [vmem:[#allocation2 + $0x3b8] sm:$0xff]
    %v261 = vld [vmem:[#allocation2 + $0x3c0] sm:$0xff]
    %v262 = vld [vmem:[#allocation2 + $0x3c8] sm:$0xff]
    %v263 = vld [vmem:[#allocation2 + $0x3d0] sm:$0xff]
    %v264 = vld [vmem:[#allocation2 + $0x3d8] sm:$0xff]
    %v265 = vld [vmem:[#allocation2 + $0x3e0] sm:$0xff]
    %v266 = vld [vmem:[#allocation2 + $0x3e8] sm:$0xff]
    %v267 = vld [vmem:[#allocation2 + $0x3f0] sm:$0xff]
    %v268 = vld [vmem:[#allocation2 + $0x3f8] sm:$0xff]
    %v269 = vld [vmem:[#allocation2 + $0x400] sm:$0xff]
    %v270 = vld [vmem:[#allocation2 + $0x408] sm:$0xff]
    %v271 = vld [vmem:[#allocation2 + $0x410] sm:$0xff]
    %v272 = vld [vmem:[#allocation2 + $0x418] sm:$0xff]
    %v273 = vld [vmem:[#allocation2 + $0x420] sm:$0xff]
    %v274 = vld [vmem:[#allocation2 + $0x428] sm:$0xff]
    %v275 = vld [vmem:[#allocation2 + $0x430] sm:$0xff]
    %v276 = vld [vmem:[#allocation2 + $0x438] sm:$0xff]
    %v277 = vld [vmem:[#allocation2 + $0x440] sm:$0xff]
    %v278 = vld [vmem:[#allocation2 + $0x448] sm:$0xff]
    %v279 = vld [vmem:[#allocation2 + $0x450] sm:$0xff]
    %v280 = vld [vmem:[#allocation2 + $0x458] sm:$0xff]
    %v281 = vld [vmem:[#allocation2 + $0x460] sm:$0xff]
    %v282 = vld [vmem:[#allocation2 + $0x468] sm:$0xff]
    %v283 = vld [vmem:[#allocation2 + $0x470] sm:$0xff]
    %v284 = vld [vmem:[#allocation2 + $0x478] sm:$0xff]
    %v285 = vld [vmem:[#allocation2 + $0x480] sm:$0xff]
    %v286 = vld [vmem:[#allocation2 + $0x488] sm:$0xff]
    %v287 = vld [vmem:[#allocation2 + $0x490] sm:$0xff]
    %v288 = vld [vmem:[#allocation2 + $0x498] sm:$0xff]
    %v289 = vld [vmem:[#allocation2 + $0x4a0] sm:$0xff]
    %v290 = vld [vmem:[#allocation2 + $0x4a8] sm:$0xff]
    %v291 = vld [vmem:[#allocation2 + $0x4b0] sm:$0xff]
    %v292 = vld [vmem:[#allocation2 + $0x4b8] sm:$0xff]
    %v293 = vld [vmem:[#allocation2 + $0x4c0] sm:$0xff]
    %v294 = vld [vmem:[#allocation2 + $0x4c8] sm:$0xff]
    %v295 = vld [vmem:[#allocation2 + $0x4d0] sm:$0xff]
    %v296 = vld [vmem:[#allocation2 + $0x4d8] sm:$0xff]
    %v297 = vld [vmem:[#allocation2 + $0x4e0] sm:$0xff]
    %v298 = vld [vmem:[#allocation2 + $0x4e8] sm:$0xff]
    %v299 = vld [vmem:[#allocation2 + $0x4f0] sm:$0xff]
    %v300 = vld [vmem:[#allocation2 + $0x4f8] sm:$0xff]
    %v301 = vld [vmem:[#allocation2 + $0x500] sm:$0xff]
    %v302 = vld [vmem:[#allocation2 + $0x508] sm:$0xff]
    %v303 = vld [vmem:[#allocation2 + $0x510] sm:$0xff]
    %v304 = vld [vmem:[#allocation2 + $0x518] sm:$0xff]
    %v305 = vld [vmem:[#allocation2 + $0x520] sm:$0xff]
    %v306 = vld [vmem:[#allocation2 + $0x528] sm:$0xff]
    %v307 = vld [vmem:[#allocation2 + $0x530] sm:$0xff]
    %v308 = vld [vmem:[#allocation2 + $0x538] sm:$0xff]
    %v309 = vld [vmem:[#allocation2 + $0x540] sm:$0xff]
    %v310 = vld [vmem:[#allocation2 + $0x548] sm:$0xff]
    %v311 = vld [vmem:[#allocation2 + $0x550] sm:$0xff]
    %v312 = vld [vmem:[#allocation2 + $0x558] sm:$0xff]
    %v313 = vld [vmem:[#allocation2 + $0x560] sm:$0xff]
    %v314 = vld [vmem:[#allocation2 + $0x568] sm:$0xff]
    %v315 = vld [vmem:[#allocation2 + $0x570] sm:$0xff]
    %v316 = vld [vmem:[#allocation2 + $0x578] sm:$0xff]
    %v317 = vld [vmem:[#allocation2 + $0x580] sm:$0xff]
    %v318 = vld [vmem:[#allocation2 + $0x588] sm:$0xff]
    %v319 = vld [vmem:[#allocation2 + $0x590] sm:$0xff]
    %v320 = vld [vmem:[#allocation2 + $0x598] sm:$0xff]
    %v321 = vld [vmem:[#allocation2 + $0x5a0] sm:$0xff]
    %v322 = vld [vmem:[#allocation2 + $0x5a8] sm:$0xff]
    %v323 = vld [vmem:[#allocation2 + $0x5b0] sm:$0xff]
    %v324 = vld [vmem:[#allocation2 + $0x5b8] sm:$0xff]
    %v325 = vld [vmem:[#allocation2 + $0x5c0] sm:$0xff]
    %v326 = vld [vmem:[#allocation2 + $0x5c8] sm:$0xff]
    %v327 = vld [vmem:[#allocation2 + $0x5d0] sm:$0xff]
    %v328 = vld [vmem:[#allocation2 + $0x5d8] sm:$0xff]
    %v329 = vld [vmem:[#allocation2 + $0x5e0] sm:$0xff]
    %v330 = vld [vmem:[#allocation2 + $0x5e8] sm:$0xff]
    %v331 = vld [vmem:[#allocation2 + $0x5f0] sm:$0xff]
    %v332 = vld [vmem:[#allocation2 + $0x5f8] sm:$0xff]
    %v333 = vld [vmem:[#allocation2 + $0x600] sm:$0xff]
    %v334 = vld [vmem:[#allocation2 + $0x608] sm:$0xff]
    %v335 = vld [vmem:[#allocation2 + $0x610] sm:$0xff]
    %v336 = vld [vmem:[#allocation2 + $0x618] sm:$0xff]
    %v337 = vld [vmem:[#allocation2 + $0x620] sm:$0xff]
    %v338 = vld [vmem:[#allocation2 + $0x628] sm:$0xff]
    %v339 = vld [vmem:[#allocation2 + $0x630] sm:$0xff]
    %v340 = vld [vmem:[#allocation2 + $0x638] sm:$0xff]
    %v341 = vld [vmem:[#allocation2 + $0x640] sm:$0xff]
    %v342 = vld [vmem:[#allocation2 + $0x648] sm:$0xff]
    %v343 = vld [vmem:[#allocation2 + $0x650] sm:$0xff]
    %v344 = vld [vmem:[#allocation2 + $0x658] sm:$0xff]
    %v345 = vld [vmem:[#allocation2 + $0x660] sm:$0xff]
    %v346 = vld [vmem:[#allocation2 + $0x668] sm:$0xff]
    %v347 = vld [vmem:[#allocation2 + $0x670] sm:$0xff]
    %v348 = vld [vmem:[#allocation2 + $0x678] sm:$0xff]
    %v349 = vld [vmem:[#allocation2 + $0x680] sm:$0xff]
    %v350 = vld [vmem:[#allocation2 + $0x688] sm:$0xff]
    %v351 = vld [vmem:[#allocation2 + $0x690] sm:$0xff]
    %v352 = vld [vmem:[#allocation2 + $0x698] sm:$0xff]
    %v353 = vld [vmem:[#allocation2 + $0x6a0] sm:$0xff]
    %v354 = vld [vmem:[#allocation2 + $0x6a8] sm:$0xff]
    %v355 = vld [vmem:[#allocation2 + $0x6b0] sm:$0xff]
    %v356 = vld [vmem:[#allocation2 + $0x6b8] sm:$0xff]
    %v357 = vld [vmem:[#allocation2 + $0x6c0] sm:$0xff]
    %v358 = vld [vmem:[#allocation2 + $0x6c8] sm:$0xff]
    %v359 = vld [vmem:[#allocation2 + $0x6d0] sm:$0xff]
    %v360 = vld [vmem:[#allocation2 + $0x6d8] sm:$0xff]
    %v361 = vld [vmem:[#allocation2 + $0x6e0] sm:$0xff]
    %v362 = vld [vmem:[#allocation2 + $0x6e8] sm:$0xff]
    %v363 = vld [vmem:[#allocation2 + $0x6f0] sm:$0xff]
    %v364 = vld [vmem:[#allocation2 + $0x6f8] sm:$0xff]
    %v365 = vld [vmem:[#allocation2 + $0x700] sm:$0xff]
    %v366 = vld [vmem:[#allocation2 + $0x708] sm:$0xff]
    %v367 = vld [vmem:[#allocation2 + $0x710] sm:$0xff]
    %v368 = vld [vmem:[#allocation2 + $0x718] sm:$0xff]
    %v369 = vld [vmem:[#allocation2 + $0x720] sm:$0xff]
    %v370 = vld [vmem:[#allocation2 + $0x728] sm:$0xff]
    %v371 = vld [vmem:[#allocation2 + $0x730] sm:$0xff]
    %v372 = vld [vmem:[#allocation2 + $0x738] sm:$0xff]
    %v373 = vld [vmem:[#allocation2 + $0x740] sm:$0xff]
    %v374 = vld [vmem:[#allocation2 + $0x748] sm:$0xff]
    %v375 = vld [vmem:[#allocation2 + $0x750] sm:$0xff]
    %v376 = vld [vmem:[#allocation2 + $0x758] sm:$0xff]
    %v377 = vld [vmem:[#allocation2 + $0x760] sm:$0xff]
    %v378 = vld [vmem:[#allocation2 + $0x768] sm:$0xff]
    %v379 = vld [vmem:[#allocation2 + $0x770] sm:$0xff]
    %v380 = vld [vmem:[#allocation2 + $0x778] sm:$0xff]
    %v381 = vld [vmem:[#allocation2 + $0x780] sm:$0xff]
    %v382 = vld [vmem:[#allocation2 + $0x788] sm:$0xff]
    %v383 = vld [vmem:[#allocation2 + $0x790] sm:$0xff]
    %v384 = vld [vmem:[#allocation2 + $0x798] sm:$0xff]
    %v385 = vld [vmem:[#allocation2 + $0x7a0] sm:$0xff]
    %v386 = vld [vmem:[#allocation2 + $0x7a8] sm:$0xff]
    %v387 = vld [vmem:[#allocation2 + $0x7b0] sm:$0xff]
    %v388 = vld [vmem:[#allocation2 + $0x7b8] sm:$0xff]
    %v389 = vld [vmem:[#allocation2 + $0x7c0] sm:$0xff]
    %v390 = vld [vmem:[#allocation2 + $0x7c8] sm:$0xff]
    %v391 = vld [vmem:[#allocation2 + $0x7d0] sm:$0xff]
    %v392 = vld [vmem:[#allocation2 + $0x7d8] sm:$0xff]
    %v393 = vld [vmem:[#allocation2 + $0x7e0] sm:$0xff]
    %v394 = vld [vmem:[#allocation2 + $0x7e8] sm:$0xff]
    %v395 = vld [vmem:[#allocation2 + $0x7f0] sm:$0xff]
    %v396 = vld [vmem:[#allocation2 + $0x7f8] sm:$0xff]
    %v397 = vld [vmem:[#allocation2 + $0x800] sm:$0xff]
    %v398 = vld [vmem:[#allocation2 + $0x808] sm:$0xff]
    %v399 = vld [vmem:[#allocation2 + $0x810] sm:$0xff]
    %v400 = vld [vmem:[#allocation2 + $0x818] sm:$0xff]
    %v401 = vld [vmem:[#allocation2 + $0x820] sm:$0xff]
    %v402 = vld [vmem:[#allocation2 + $0x828] sm:$0xff]
    %v403 = vld [vmem:[#allocation2 + $0x830] sm:$0xff]
    %v404 = vld [vmem:[#allocation2 + $0x838] sm:$0xff]
    %v405 = vld [vmem:[#allocation2 + $0x840] sm:$0xff]
    %v406 = vld [vmem:[#allocation2 + $0x848] sm:$0xff]
    %v407 = vld [vmem:[#allocation2 + $0x850] sm:$0xff]
    %v408 = vld [vmem:[#allocation2 + $0x858] sm:$0xff]
    %v409 = vld [vmem:[#allocation2 + $0x860] sm:$0xff]
    %v410 = vld [vmem:[#allocation2 + $0x868] sm:$0xff]
    %v411 = vld [vmem:[#allocation2 + $0x870] sm:$0xff]
    %v412 = vld [vmem:[#allocation2 + $0x878] sm:$0xff]
    %v413 = vld [vmem:[#allocation2 + $0x880] sm:$0xff]
    %v414 = vld [vmem:[#allocation2 + $0x888] sm:$0xff]
    %v415 = vld [vmem:[#allocation2 + $0x890] sm:$0xff]
    %v416 = vld [vmem:[#allocation2 + $0x898] sm:$0xff]
    %v417 = vld [vmem:[#allocation2 + $0x8a0] sm:$0xff]
    %v418 = vld [vmem:[#allocation2 + $0x8a8] sm:$0xff]
    %v419 = vld [vmem:[#allocation2 + $0x8b0] sm:$0xff]
    %v420 = vld [vmem:[#allocation2 + $0x8b8] sm:$0xff]
    %v421 = vld [vmem:[#allocation2 + $0x8c0] sm:$0xff]
    %v422 = vld [vmem:[#allocation2 + $0x8c8] sm:$0xff]
    %v423 = vld [vmem:[#allocation2 + $0x8d0] sm:$0xff]
    %v424 = vld [vmem:[#allocation2 + $0x8d8] sm:$0xff]
    %v425 = vld [vmem:[#allocation2 + $0x8e0] sm:$0xff]
    %v426 = vld [vmem:[#allocation2 + $0x8e8] sm:$0xff]
    %v427 = vld [vmem:[#allocation2 + $0x8f0] sm:$0xff]
    %v428 = vld [vmem:[#allocation2 + $0x8f8] sm:$0xff]
    %v429 = vld [vmem:[#allocation2 + $0x900] sm:$0xff]
    %v430 = vld [vmem:[#allocation2 + $0x908] sm:$0xff]
    %v431 = vld [vmem:[#allocation2 + $0x910] sm:$0xff]
    %v432 = vld [vmem:[#allocation2 + $0x918] sm:$0xff]
    %v433 = vld [vmem:[#allocation2 + $0x920] sm:$0xff]
    %v434 = vld [vmem:[#allocation2 + $0x928] sm:$0xff]
    %v435 = vld [vmem:[#allocation2 + $0x930] sm:$0xff]
    %v436 = vld [vmem:[#allocation2 + $0x938] sm:$0xff]
    %v437 = vld [vmem:[#allocation2 + $0x940] sm:$0xff]
    %v438 = vld [vmem:[#allocation2 + $0x948] sm:$0xff]
    %v439 = vld [vmem:[#allocation2 + $0x950] sm:$0xff]
    %v440 = vld [vmem:[#allocation2 + $0x958] sm:$0xff]
    %v441 = vld [vmem:[#allocation2 + $0x960] sm:$0xff]
    %v442 = vld [vmem:[#allocation2 + $0x968] sm:$0xff]
    %v443 = vld [vmem:[#allocation2 + $0x970] sm:$0xff]
    %v444 = vld [vmem:[#allocation2 + $0x978] sm:$0xff]
    %v445 = vld [vmem:[#allocation2 + $0x980] sm:$0xff]
    %v446 = vld [vmem:[#allocation2 + $0x988] sm:$0xff]
    %v447 = vld [vmem:[#allocation2 + $0x990] sm:$0xff]
    %v448 = vld [vmem:[#allocation2 + $0x998] sm:$0xff]
    %v449 = vld [vmem:[#allocation2 + $0x9a0] sm:$0xff]
    %v450 = vld [vmem:[#allocation2 + $0x9a8] sm:$0xff]
    %v451 = vld [vmem:[#allocation2 + $0x9b0] sm:$0xff]
    %v452 = vld [vmem:[#allocation2 + $0x9b8] sm:$0xff]
    %v453 = vld [vmem:[#allocation2 + $0x9c0] sm:$0xff]
    %v454 = vld [vmem:[#allocation2 + $0x9c8] sm:$0xff]
    %v455 = vld [vmem:[#allocation2 + $0x9d0] sm:$0xff]
    %v456 = vld [vmem:[#allocation2 + $0x9d8] sm:$0xff]
    %v457 = vld [vmem:[#allocation2 + $0x9e0] sm:$0xff]
    %v458 = vld [vmem:[#allocation2 + $0x9e8] sm:$0xff]
    %v459 = vld [vmem:[#allocation2 + $0x9f0] sm:$0xff]
    %v460 = vld [vmem:[#allocation2 + $0x9f8] sm:$0xff]
    %v461 = vld [vmem:[#allocation2 + $0xa00] sm:$0xff]
    %v462 = vld [vmem:[#allocation2 + $0xa08] sm:$0xff]
    %v463 = vld [vmem:[#allocation2 + $0xa10] sm:$0xff]
    %v464 = vld [vmem:[#allocation2 + $0xa18] sm:$0xff]
    %v465 = vld [vmem:[#allocation2 + $0xa20] sm:$0xff]
    %v466 = vld [vmem:[#allocation2 + $0xa28] sm:$0xff]
    %v467 = vld [vmem:[#allocation2 + $0xa30] sm:$0xff]
    %v468 = vld [vmem:[#allocation2 + $0xa38] sm:$0xff]
    %v469 = vld [vmem:[#allocation2 + $0xa40] sm:$0xff]
    %v470 = vld [vmem:[#allocation2 + $0xa48] sm:$0xff]
    %v471 = vld [vmem:[#allocation2 + $0xa50] sm:$0xff]
    %v472 = vld [vmem:[#allocation2 + $0xa58] sm:$0xff]
    %v473 = vld [vmem:[#allocation2 + $0xa60] sm:$0xff]
    %v474 = vld [vmem:[#allocation2 + $0xa68] sm:$0xff]
    %v475 = vld [vmem:[#allocation2 + $0xa70] sm:$0xff]
    %v476 = vld [vmem:[#allocation2 + $0xa78] sm:$0xff]
    %v477 = vld [vmem:[#allocation2 + $0xa80] sm:$0xff]
    %v478 = vld [vmem:[#allocation2 + $0xa88] sm:$0xff]
    %v479 = vld [vmem:[#allocation2 + $0xa90] sm:$0xff]
    %v480 = vld [vmem:[#allocation2 + $0xa98] sm:$0xff]
    %v481 = vld [vmem:[#allocation2 + $0xaa0] sm:$0xff]
    %v482 = vld [vmem:[#allocation2 + $0xaa8] sm:$0xff]
    %v483 = vld [vmem:[#allocation2 + $0xab0] sm:$0xff]
    %v484 = vld [vmem:[#allocation2 + $0xab8] sm:$0xff]
    %v485 = vld [vmem:[#allocation2 + $0xac0] sm:$0xff]
    %v486 = vld [vmem:[#allocation2 + $0xac8] sm:$0xff]
    %v487 = vld [vmem:[#allocation2 + $0xad0] sm:$0xff]
    %v488 = vld [vmem:[#allocation2 + $0xad8] sm:$0xff]
    %v489 = vld [vmem:[#allocation2 + $0xae0] sm:$0xff]
    %v490 = vld [vmem:[#allocation2 + $0xae8] sm:$0xff]
    %v491 = vld [vmem:[#allocation2 + $0xaf0] sm:$0xff]
    %v492 = vld [vmem:[#allocation2 + $0xaf8] sm:$0xff]
    %v493 = vld [vmem:[#allocation2 + $0xb00] sm:$0xff]
    %v494 = vld [vmem:[#allocation2 + $0xb08] sm:$0xff]
    %v495 = vld [vmem:[#allocation2 + $0xb10] sm:$0xff]
    %v496 = vld [vmem:[#allocation2 + $0xb18] sm:$0xff]
    %v497 = vld [vmem:[#allocation2 + $0xb20] sm:$0xff]
    %v498 = vld [vmem:[#allocation2 + $0xb28] sm:$0xff]
    %v499 = vld [vmem:[#allocation2 + $0xb30] sm:$0xff]
    %v500 = vld [vmem:[#allocation2 + $0xb38] sm:$0xff]
    %v501 = vld [vmem:[#allocation2 + $0xb40] sm:$0xff]
    %v502 = vld [vmem:[#allocation2 + $0xb48] sm:$0xff]
    %v503 = vld [vmem:[#allocation2 + $0xb50] sm:$0xff]
    %v504 = vld [vmem:[#allocation2 + $0xb58] sm:$0xff]
    %v505 = vld [vmem:[#allocation2 + $0xb60] sm:$0xff]
    %v506 = vld [vmem:[#allocation2 + $0xb68] sm:$0xff]
    %v507 = vld [vmem:[#allocation2 + $0xb70] sm:$0xff]
    %v508 = vld [vmem:[#allocation2 + $0xb78] sm:$0xff]
    %v509 = vld [vmem:[#allocation2 + $0xb80] sm:$0xff]
    %v510 = vld [vmem:[#allocation2 + $0xb88] sm:$0xff]
    %v511 = vld [vmem:[#allocation2 + $0xb90] sm:$0xff]
    %v512 = vld [vmem:[#allocation2 + $0xb98] sm:$0xff]
    %v513 = vld [vmem:[#allocation2 + $0xba0] sm:$0xff]
    %v514 = vld [vmem:[#allocation2 + $0xba8] sm:$0xff]
    %v515 = vld [vmem:[#allocation2 + $0xbb0] sm:$0xff]
    %v516 = vld [vmem:[#allocation2 + $0xbb8] sm:$0xff]
    %v517 = vld [vmem:[#allocation2 + $0xbc0] sm:$0xff]
    %v518 = vld [vmem:[#allocation2 + $0xbc8] sm:$0xff]
    %v519 = vld [vmem:[#allocation2 + $0xbd0] sm:$0xff]
    %v520 = vld [vmem:[#allocation2 + $0xbd8] sm:$0xff]
    %v521 = vld [vmem:[#allocation2 + $0xbe0] sm:$0xff]
    %v522 = vld [vmem:[#allocation2 + $0xbe8] sm:$0xff]
    %v523 = vld [vmem:[#allocation2 + $0xbf0] sm:$0xff]
    %v524 = vld [vmem:[#allocation2 + $0xbf8] sm:$0xff]
    %v525 = vld [vmem:[#allocation2 + $0xc00] sm:$0xff]
    %v526 = vld [vmem:[#allocation2 + $0xc08] sm:$0xff]
    %v527 = vld [vmem:[#allocation2 + $0xc10] sm:$0xff]
    %v528 = vld [vmem:[#allocation2 + $0xc18] sm:$0xff]
    %v529 = vld [vmem:[#allocation2 + $0xc20] sm:$0xff]
    %v530 = vld [vmem:[#allocation2 + $0xc28] sm:$0xff]
    %v531 = vld [vmem:[#allocation2 + $0xc30] sm:$0xff]
    %v532 = vld [vmem:[#allocation2 + $0xc38] sm:$0xff]
    %v533 = vld [vmem:[#allocation2 + $0xc40] sm:$0xff]
    %v534 = vld [vmem:[#allocation2 + $0xc48] sm:$0xff]
    %v535 = vld [vmem:[#allocation2 + $0xc50] sm:$0xff]
    %v536 = vld [vmem:[#allocation2 + $0xc58] sm:$0xff]
    %v537 = vld [vmem:[#allocation2 + $0xc60] sm:$0xff]
    %v538 = vld [vmem:[#allocation2 + $0xc68] sm:$0xff]
    %v539 = vld [vmem:[#allocation2 + $0xc70] sm:$0xff]
    %v540 = vld [vmem:[#allocation2 + $0xc78] sm:$0xff]
    %v541 = vld [vmem:[#allocation2 + $0xc80] sm:$0xff]
    %v542 = vld [vmem:[#allocation2 + $0xc88] sm:$0xff]
    %v543 = vld [vmem:[#allocation2 + $0xc90] sm:$0xff]
    %v544 = vld [vmem:[#allocation2 + $0xc98] sm:$0xff]
    %v545 = vld [vmem:[#allocation2 + $0xca0] sm:$0xff]
    %v546 = vld [vmem:[#allocation2 + $0xca8] sm:$0xff]
    %v547 = vld [vmem:[#allocation2 + $0xcb0] sm:$0xff]
    %v548 = vld [vmem:[#allocation2 + $0xcb8] sm:$0xff]
    %v549 = vld [vmem:[#allocation2 + $0xcc0] sm:$0xff]
    %v550 = vld [vmem:[#allocation2 + $0xcc8] sm:$0xff]
    %v551 = vld [vmem:[#allocation2 + $0xcd0] sm:$0xff]
    %v552 = vld [vmem:[#allocation2 + $0xcd8] sm:$0xff]
    %v553 = vld [vmem:[#allocation2 + $0xce0] sm:$0xff]
    %v554 = vld [vmem:[#allocation2 + $0xce8] sm:$0xff]
    %v555 = vld [vmem:[#allocation2 + $0xcf0] sm:$0xff]
    %v556 = vld [vmem:[#allocation2 + $0xcf8] sm:$0xff]
    %v557 = vld [vmem:[#allocation2 + $0xd00] sm:$0xff]
    %v558 = vld [vmem:[#allocation2 + $0xd08] sm:$0xff]
    %v559 = vld [vmem:[#allocation2 + $0xd10] sm:$0xff]
    %v560 = vld [vmem:[#allocation2 + $0xd18] sm:$0xff]
    %v561 = vld [vmem:[#allocation2 + $0xd20] sm:$0xff]
    %v562 = vld [vmem:[#allocation2 + $0xd28] sm:$0xff]
    %v563 = vld [vmem:[#allocation2 + $0xd30] sm:$0xff]
    %v564 = vld [vmem:[#allocation2 + $0xd38] sm:$0xff]
    %v565 = vld [vmem:[#allocation2 + $0xd40] sm:$0xff]
    %v566 = vld [vmem:[#allocation2 + $0xd48] sm:$0xff]
    %v567 = vld [vmem:[#allocation2 + $0xd50] sm:$0xff]
    %v568 = vld [vmem:[#allocation2 + $0xd58] sm:$0xff]
    %v569 = vld [vmem:[#allocation2 + $0xd60] sm:$0xff]
    %v570 = vld [vmem:[#allocation2 + $0xd68] sm:$0xff]
    %v571 = vld [vmem:[#allocation2 + $0xd70] sm:$0xff]
    %v572 = vld [vmem:[#allocation2 + $0xd78] sm:$0xff]
    %v573 = vld [vmem:[#allocation2 + $0xd80] sm:$0xff]
    %v574 = vld [vmem:[#allocation2 + $0xd88] sm:$0xff]
    %v575 = vld [vmem:[#allocation2 + $0xd90] sm:$0xff]
    %v576 = vld [vmem:[#allocation2 + $0xd98] sm:$0xff]
    %v577 = vld [vmem:[#allocation2 + $0xda0] sm:$0xff]
    %v578 = vld [vmem:[#allocation2 + $0xda8] sm:$0xff]
    %v579 = vld [vmem:[#allocation2 + $0xdb0] sm:$0xff]
    %v580 = vld [vmem:[#allocation2 + $0xdb8] sm:$0xff]
    %v581 = vld [vmem:[#allocation2 + $0xdc0] sm:$0xff]
    %v582 = vld [vmem:[#allocation2 + $0xdc8] sm:$0xff]
    %v583 = vld [vmem:[#allocation2 + $0xdd0] sm:$0xff]
    %v584 = vld [vmem:[#allocation2 + $0xdd8] sm:$0xff]
    %v585 = vld [vmem:[#allocation2 + $0xde0] sm:$0xff]
    %v586 = vld [vmem:[#allocation2 + $0xde8] sm:$0xff]
    %v587 = vld [vmem:[#allocation2 + $0xdf0] sm:$0xff]
    %v588 = vld [vmem:[#allocation2 + $0xdf8] sm:$0xff]
    %v589 = vld [vmem:[#allocation2 + $0xe00] sm:$0xff]
    %v590 = vld [vmem:[#allocation2 + $0xe08] sm:$0xff]
    %v591 = vld [vmem:[#allocation2 + $0xe10] sm:$0xff]
    %v592 = vld [vmem:[#allocation2 + $0xe18] sm:$0xff]
    %v593 = vld [vmem:[#allocation2 + $0xe20] sm:$0xff]
    %v594 = vld [vmem:[#allocation2 + $0xe28] sm:$0xff]
    %v595 = vld [vmem:[#allocation2 + $0xe30] sm:$0xff]
    %v596 = vld [vmem:[#allocation2 + $0xe38] sm:$0xff]
    %v597 = vld [vmem:[#allocation2 + $0xe40] sm:$0xff]
    %v598 = vld [vmem:[#allocation2 + $0xe48] sm:$0xff]
    %v599 = vld [vmem:[#allocation2 + $0xe50] sm:$0xff]
    %v600 = vld [vmem:[#allocation2 + $0xe58] sm:$0xff]
    %v601 = vld [vmem:[#allocation2 + $0xe60] sm:$0xff]
    %v602 = vld [vmem:[#allocation2 + $0xe68] sm:$0xff]
    %v603 = vld [vmem:[#allocation2 + $0xe70] sm:$0xff]
    %v604 = vld [vmem:[#allocation2 + $0xe78] sm:$0xff]
    %v605 = vld [vmem:[#allocation2 + $0xe80] sm:$0xff]
    %v606 = vld [vmem:[#allocation2 + $0xe88] sm:$0xff]
    %v607 = vld [vmem:[#allocation2 + $0xe90] sm:$0xff]
    %v608 = vld [vmem:[#allocation2 + $0xe98] sm:$0xff]
    %v609 = vld [vmem:[#allocation2 + $0xea0] sm:$0xff]
    %v610 = vld [vmem:[#allocation2 + $0xea8] sm:$0xff]
    %v611 = vld [vmem:[#allocation2 + $0xeb0] sm:$0xff]
    %v612 = vld [vmem:[#allocation2 + $0xeb8] sm:$0xff]
    %v613 = vld [vmem:[#allocation2 + $0xec0] sm:$0xff]
    %v614 = vld [vmem:[#allocation2 + $0xec8] sm:$0xff]
    %v615 = vld [vmem:[#allocation2 + $0xed0] sm:$0xff]
    %v616 = vld [vmem:[#allocation2 + $0xed8] sm:$0xff]
    %v617 = vld [vmem:[#allocation2 + $0xee0] sm:$0xff]
    %v618 = vld [vmem:[#allocation2 + $0xee8] sm:$0xff]
    %v619 = vld [vmem:[#allocation2 + $0xef0] sm:$0xff]
    %v620 = vld [vmem:[#allocation2 + $0xef8] sm:$0xff]
    %v621 = vld [vmem:[#allocation2 + $0xf00] sm:$0xff]
    %v622 = vld [vmem:[#allocation2 + $0xf08] sm:$0xff]
    %v623 = vld [vmem:[#allocation2 + $0xf10] sm:$0xff]
    %v624 = vld [vmem:[#allocation2 + $0xf18] sm:$0xff]
    %v625 = vld [vmem:[#allocation2 + $0xf20] sm:$0xff]
    %v626 = vld [vmem:[#allocation2 + $0xf28] sm:$0xff]
    %v627 = vld [vmem:[#allocation2 + $0xf30] sm:$0xff]
    %v628 = vld [vmem:[#allocation2 + $0xf38] sm:$0xff]
    %v629 = vld [vmem:[#allocation2 + $0xf40] sm:$0xff]
    %v630 = vld [vmem:[#allocation2 + $0xf48] sm:$0xff]
    %v631 = vld [vmem:[#allocation2 + $0xf50] sm:$0xff]
    %v632 = vld [vmem:[#allocation2 + $0xf58] sm:$0xff]
    %v633 = vld [vmem:[#allocation2 + $0xf60] sm:$0xff]
    %v634 = vld [vmem:[#allocation2 + $0xf68] sm:$0xff]
    %v635 = vld [vmem:[#allocation2 + $0xf70] sm:$0xff]
    %v636 = vld [vmem:[#allocation2 + $0xf78] sm:$0xff]
    %v637 = vld [vmem:[#allocation2 + $0xf80] sm:$0xff]
    %v638 = vld [vmem:[#allocation2 + $0xf88] sm:$0xff]
    %v639 = vld [vmem:[#allocation2 + $0xf90] sm:$0xff]
    %v640 = vld [vmem:[#allocation2 + $0xf98] sm:$0xff]
    %v641 = vld [vmem:[#allocation2 + $0xfa0] sm:$0xff]
    %v642 = vld [vmem:[#allocation2 + $0xfa8] sm:$0xff]
    %v643 = vld [vmem:[#allocation2 + $0xfb0] sm:$0xff]
    %v644 = vld [vmem:[#allocation2 + $0xfb8] sm:$0xff]
    %v645 = vld [vmem:[#allocation2 + $0xfc0] sm:$0xff]
    %v646 = vld [vmem:[#allocation2 + $0xfc8] sm:$0xff]
    %v647 = vld [vmem:[#allocation2 + $0xfd0] sm:$0xff]
    %v648 = vld [vmem:[#allocation2 + $0xfd8] sm:$0xff]
    %v649 = vld [vmem:[#allocation2 + $0xfe0] sm:$0xff]
    %v650 = vld [vmem:[#allocation2 + $0xfe8] sm:$0xff]
    %v651 = vld [vmem:[#allocation2 + $0xff0] sm:$0xff]
    %v652 = vld [vmem:[#allocation2 + $0xff8] sm:$0xff]
    %v653 = vld [vmem:[#allocation2 + $0x1000] sm:$0xff]
    %v654 = vld [vmem:[#allocation2 + $0x1008] sm:$0xff]
    %v655 = vld [vmem:[#allocation2 + $0x1010] sm:$0xff]
    %v656 = vld [vmem:[#allocation2 + $0x1018] sm:$0xff]
    %v657 = vld [vmem:[#allocation2 + $0x1020] sm:$0xff]
    %v658 = vld [vmem:[#allocation2 + $0x1028] sm:$0xff]
    %v659 = vld [vmem:[#allocation2 + $0x1030] sm:$0xff]
    %v660 = vld [vmem:[#allocation2 + $0x1038] sm:$0xff]
    %v661 = vld [vmem:[#allocation2 + $0x1040] sm:$0xff]
    %v662 = vld [vmem:[#allocation2 + $0x1048] sm:$0xff]
    %v663 = vld [vmem:[#allocation2 + $0x1050] sm:$0xff]
    %v664 = vld [vmem:[#allocation2 + $0x1058] sm:$0xff]
    %v665 = vld [vmem:[#allocation2 + $0x1060] sm:$0xff]
    %v666 = vld [vmem:[#allocation2 + $0x1068] sm:$0xff]
    %v667 = vld [vmem:[#allocation2 + $0x1070] sm:$0xff]
    %v668 = vld [vmem:[#allocation2 + $0x1078] sm:$0xff]
    %v669 = vld [vmem:[#allocation2 + $0x1080] sm:$0xff]
    %v670 = vld [vmem:[#allocation2 + $0x1088] sm:$0xff]
    %v671 = vld [vmem:[#allocation2 + $0x1090] sm:$0xff]
    %v672 = vld [vmem:[#allocation2 + $0x1098] sm:$0xff]
    %v673 = vld [vmem:[#allocation2 + $0x10a0] sm:$0xff]
    %v674 = vld [vmem:[#allocation2 + $0x10a8] sm:$0xff]
    %v675 = vld [vmem:[#allocation2 + $0x10b0] sm:$0xff]
    %v676 = vld [vmem:[#allocation2 + $0x10b8] sm:$0xff]
    %v677 = vld [vmem:[#allocation2 + $0x10c0] sm:$0xff]
    %v678 = vld [vmem:[#allocation2 + $0x10c8] sm:$0xff]
    %v679 = vld [vmem:[#allocation2 + $0x10d0] sm:$0xff]
    %v680 = vld [vmem:[#allocation2 + $0x10d8] sm:$0xff]
    %v681 = vld [vmem:[#allocation2 + $0x10e0] sm:$0xff]
    %v682 = vld [vmem:[#allocation2 + $0x10e8] sm:$0xff]
    %v683 = vld [vmem:[#allocation2 + $0x10f0] sm:$0xff]
    %v684 = vld [vmem:[#allocation2 + $0x10f8] sm:$0xff]
    %v685 = vld [vmem:[#allocation2 + $0x1100] sm:$0xff]
    %v686 = vld [vmem:[#allocation2 + $0x1108] sm:$0xff]
    %v687 = vld [vmem:[#allocation2 + $0x1110] sm:$0xff]
    %v688 = vld [vmem:[#allocation2 + $0x1118] sm:$0xff]
    %v689 = vld [vmem:[#allocation2 + $0x1120] sm:$0xff]
    %v690 = vld [vmem:[#allocation2 + $0x1128] sm:$0xff]
    %v691 = vld [vmem:[#allocation2 + $0x1130] sm:$0xff]
    %v692 = vld [vmem:[#allocation2 + $0x1138] sm:$0xff]
    %v693 = vld [vmem:[#allocation2 + $0x1140] sm:$0xff]
    %v694 = vld [vmem:[#allocation2 + $0x1148] sm:$0xff]
    %v695 = vld [vmem:[#allocation2 + $0x1150] sm:$0xff]
    %v696 = vld [vmem:[#allocation2 + $0x1158] sm:$0xff]
    %v697 = vld [vmem:[#allocation2 + $0x1160] sm:$0xff]
    %v698 = vld [vmem:[#allocation2 + $0x1168] sm:$0xff]
    %v699 = vld [vmem:[#allocation2 + $0x1170] sm:$0xff]
    %v700 = vld [vmem:[#allocation2 + $0x1178] sm:$0xff]
    %v701 = vld [vmem:[#allocation2 + $0x1180] sm:$0xff]
    %v702 = vld [vmem:[#allocation2 + $0x1188] sm:$0xff]
    %v703 = vld [vmem:[#allocation2 + $0x1190] sm:$0xff]
    %v704 = vld [vmem:[#allocation2 + $0x1198] sm:$0xff]
    %v705 = vld [vmem:[#allocation2 + $0x11a0] sm:$0xff]
    %v706 = vld [vmem:[#allocation2 + $0x11a8] sm:$0xff]
    %v707 = vld [vmem:[#allocation2 + $0x11b0] sm:$0xff]
    %v708 = vld [vmem:[#allocation2 + $0x11b8] sm:$0xff]
    %v709 = vld [vmem:[#allocation2 + $0x11c0] sm:$0xff]
    %v710 = vld [vmem:[#allocation2 + $0x11c8] sm:$0xff]
    %v711 = vld [vmem:[#allocation2 + $0x11d0] sm:$0xff]
    %v712 = vld [vmem:[#allocation2 + $0x11d8] sm:$0xff]
    %v713 = vld [vmem:[#allocation2 + $0x11e0] sm:$0xff]
    %v714 = vld [vmem:[#allocation2 + $0x11e8] sm:$0xff]
    %v715 = vld [vmem:[#allocation2 + $0x11f0] sm:$0xff]
    %v716 = vld [vmem:[#allocation2 + $0x11f8] sm:$0xff]
    %v717 = vld [vmem:[#allocation2 + $0x1200] sm:$0xff]
    %v718 = vld [vmem:[#allocation2 + $0x1208] sm:$0xff]
    %v719 = vld [vmem:[#allocation2 + $0x1210] sm:$0xff]
    %v720 = vld [vmem:[#allocation2 + $0x1218] sm:$0xff]
    %v721 = vld [vmem:[#allocation2 + $0x1220] sm:$0xff]
    %v722 = vld [vmem:[#allocation2 + $0x1228] sm:$0xff]
    %v723 = vld [vmem:[#allocation2 + $0x1230] sm:$0xff]
    %v724 = vld [vmem:[#allocation2 + $0x1238] sm:$0xff]
    %v725 = vld [vmem:[#allocation2 + $0x1240] sm:$0xff]
    %v726 = vld [vmem:[#allocation2 + $0x1248] sm:$0xff]
    %v727 = vld [vmem:[#allocation2 + $0x1250] sm:$0xff]
    %v728 = vld [vmem:[#allocation2 + $0x1258] sm:$0xff]
    %v729 = vld [vmem:[#allocation2 + $0x1260] sm:$0xff]
    %v730 = vld [vmem:[#allocation2 + $0x1268] sm:$0xff]
    %v731 = vld [vmem:[#allocation2 + $0x1270] sm:$0xff]
    %v732 = vld [vmem:[#allocation2 + $0x1278] sm:$0xff]
    %v733 = vld [vmem:[#allocation2 + $0x1280] sm:$0xff]
    %v734 = vld [vmem:[#allocation2 + $0x1288] sm:$0xff]
    %v735 = vld [vmem:[#allocation2 + $0x1290] sm:$0xff]
    %v736 = vld [vmem:[#allocation2 + $0x1298] sm:$0xff]
    %v737 = vld [vmem:[#allocation2 + $0x12a0] sm:$0xff]
    %v738 = vld [vmem:[#allocation2 + $0x12a8] sm:$0xff]
    %v739 = vld [vmem:[#allocation2 + $0x12b0] sm:$0xff]
    %v740 = vld [vmem:[#allocation2 + $0x12b8] sm:$0xff]
    %v741 = vld [vmem:[#allocation2 + $0x12c0] sm:$0xff]
    %v742 = vld [vmem:[#allocation2 + $0x12c8] sm:$0xff]
    %v743 = vld [vmem:[#allocation2 + $0x12d0] sm:$0xff]
    %v744 = vld [vmem:[#allocation2 + $0x12d8] sm:$0xff]
    %v745 = vld [vmem:[#allocation2 + $0x12e0] sm:$0xff]
    %v746 = vld [vmem:[#allocation2 + $0x12e8] sm:$0xff]
    %v747 = vld [vmem:[#allocation2 + $0x12f0] sm:$0xff]
    %v748 = vld [vmem:[#allocation2 + $0x12f8] sm:$0xff]
    %v749 = vld [vmem:[#allocation2 + $0x1300] sm:$0xff]
    %v750 = vld [vmem:[#allocation2 + $0x1308] sm:$0xff]
    %v751 = vld [vmem:[#allocation2 + $0x1310] sm:$0xff]
    %v752 = vld [vmem:[#allocation2 + $0x1318] sm:$0xff]
    %v753 = vld [vmem:[#allocation2 + $0x1320] sm:$0xff]
    %v754 = vld [vmem:[#allocation2 + $0x1328] sm:$0xff]
    %v755 = vld [vmem:[#allocation2 + $0x1330] sm:$0xff]
    %v756 = vld [vmem:[#allocation2 + $0x1338] sm:$0xff]
    %v757 = vld [vmem:[#allocation2 + $0x1340] sm:$0xff]
    %v758 = vld [vmem:[#allocation2 + $0x1348] sm:$0xff]
    %v759 = vld [vmem:[#allocation2 + $0x1350] sm:$0xff]
    %v760 = vld [vmem:[#allocation2 + $0x1358] sm:$0xff]
    %v761 = vld [vmem:[#allocation2 + $0x1360] sm:$0xff]
    %v762 = vld [vmem:[#allocation2 + $0x1368] sm:$0xff]
    %v763 = vld [vmem:[#allocation2 + $0x1370] sm:$0xff]
    %v764 = vld [vmem:[#allocation2 + $0x1378] sm:$0xff]
    %v765 = vld [vmem:[#allocation2 + $0x1380] sm:$0xff]
    %v766 = vld [vmem:[#allocation2 + $0x1388] sm:$0xff]
    %v767 = vld [vmem:[#allocation2 + $0x1390] sm:$0xff]
    %v768 = vld [vmem:[#allocation2 + $0x1398] sm:$0xff]
    %v769 = vld [vmem:[#allocation2 + $0x13a0] sm:$0xff]
    %v770 = vld [vmem:[#allocation2 + $0x13a8] sm:$0xff]
    %v771 = vld [vmem:[#allocation2 + $0x13b0] sm:$0xff]
    %v772 = vld [vmem:[#allocation2 + $0x13b8] sm:$0xff]
    %v773 = vld [vmem:[#allocation2 + $0x13c0] sm:$0xff]
    %v774 = vld [vmem:[#allocation2 + $0x13c8] sm:$0xff]
    %v775 = vld [vmem:[#allocation2 + $0x13d0] sm:$0xff]
    %v776 = vld [vmem:[#allocation2 + $0x13d8] sm:$0xff]
    %v777 = vld [vmem:[#allocation2 + $0x13e0] sm:$0xff]
    %v778 = vld [vmem:[#allocation2 + $0x13e8] sm:$0xff]
    %v779 = vld [vmem:[#allocation2 + $0x13f0] sm:$0xff]
    %v780 = vld [vmem:[#allocation2 + $0x13f8] sm:$0xff]
    %v781 = vld [vmem:[#allocation2 + $0x1400] sm:$0xff]
    %v782 = vld [vmem:[#allocation2 + $0x1408] sm:$0xff]
    %v783 = vld [vmem:[#allocation2 + $0x1410] sm:$0xff]
    %v784 = vld [vmem:[#allocation2 + $0x1418] sm:$0xff]
    %v785 = vld [vmem:[#allocation2 + $0x1420] sm:$0xff]
    %v786 = vld [vmem:[#allocation2 + $0x1428] sm:$0xff]
    %v787 = vld [vmem:[#allocation2 + $0x1430] sm:$0xff]
    %v788 = vld [vmem:[#allocation2 + $0x1438] sm:$0xff]
    %v789 = vld [vmem:[#allocation2 + $0x1440] sm:$0xff]
    %v790 = vld [vmem:[#allocation2 + $0x1448] sm:$0xff]
    %v791 = vld [vmem:[#allocation2 + $0x1450] sm:$0xff]
    %v792 = vld [vmem:[#allocation2 + $0x1458] sm:$0xff]
    %v793 = vld [vmem:[#allocation2 + $0x1460] sm:$0xff]
    %v794 = vld [vmem:[#allocation2 + $0x1468] sm:$0xff]
    %v795 = vld [vmem:[#allocation2 + $0x1470] sm:$0xff]
    %v796 = vld [vmem:[#allocation2 + $0x1478] sm:$0xff]
    %v797 = vld [vmem:[#allocation2 + $0x1480] sm:$0xff]
    %v798 = vld [vmem:[#allocation2 + $0x1488] sm:$0xff]
    %v799 = vld [vmem:[#allocation2 + $0x1490] sm:$0xff]
    %v800 = vld [vmem:[#allocation2 + $0x1498] sm:$0xff]
    %v801 = vld [vmem:[#allocation2 + $0x14a0] sm:$0xff]
    %v802 = vld [vmem:[#allocation2 + $0x14a8] sm:$0xff]
    %v803 = vld [vmem:[#allocation2 + $0x14b0] sm:$0xff]
    %v804 = vld [vmem:[#allocation2 + $0x14b8] sm:$0xff]
    %v805 = vld [vmem:[#allocation2 + $0x14c0] sm:$0xff]
    %v806 = vld [vmem:[#allocation2 + $0x14c8] sm:$0xff]
    %v807 = vld [vmem:[#allocation2 + $0x14d0] sm:$0xff]
    %v808 = vld [vmem:[#allocation2 + $0x14d8] sm:$0xff]
    %v809 = vld [vmem:[#allocation2 + $0x14e0] sm:$0xff]
    %v810 = vld [vmem:[#allocation2 + $0x14e8] sm:$0xff]
    %v811 = vld [vmem:[#allocation2 + $0x14f0] sm:$0xff]
    %v812 = vld [vmem:[#allocation2 + $0x14f8] sm:$0xff]
    %v813 = vld [vmem:[#allocation2 + $0x1500] sm:$0xff]
    %v814 = vld [vmem:[#allocation2 + $0x1508] sm:$0xff]
    %v815 = vld [vmem:[#allocation2 + $0x1510] sm:$0xff]
    %v816 = vld [vmem:[#allocation2 + $0x1518] sm:$0xff]
    %v817 = vld [vmem:[#allocation2 + $0x1520] sm:$0xff]
    %v818 = vld [vmem:[#allocation2 + $0x1528] sm:$0xff]
    %v819 = vld [vmem:[#allocation2 + $0x1530] sm:$0xff]
    %v820 = vld [vmem:[#allocation2 + $0x1538] sm:$0xff]
    %v821 = vld [vmem:[#allocation2 + $0x1540] sm:$0xff]
    %v822 = vld [vmem:[#allocation2 + $0x1548] sm:$0xff]
    %v823 = vld [vmem:[#allocation2 + $0x1550] sm:$0xff]
    %v824 = vld [vmem:[#allocation2 + $0x1558] sm:$0xff]
    %v825 = vld [vmem:[#allocation2 + $0x1560] sm:$0xff]
    %v826 = vld [vmem:[#allocation2 + $0x1568] sm:$0xff]
    %v827 = vld [vmem:[#allocation2 + $0x1570] sm:$0xff]
    %v828 = vld [vmem:[#allocation2 + $0x1578] sm:$0xff]
    %v829 = vld [vmem:[#allocation2 + $0x1580] sm:$0xff]
    %v830 = vld [vmem:[#allocation2 + $0x1588] sm:$0xff]
    %v831 = vld [vmem:[#allocation2 + $0x1590] sm:$0xff]
    %v832 = vld [vmem:[#allocation2 + $0x1598] sm:$0xff]
    %v833 = vld [vmem:[#allocation2 + $0x15a0] sm:$0xff]
    %v834 = vld [vmem:[#allocation2 + $0x15a8] sm:$0xff]
    %v835 = vld [vmem:[#allocation2 + $0x15b0] sm:$0xff]
    %v836 = vld [vmem:[#allocation2 + $0x15b8] sm:$0xff]
    %v837 = vld [vmem:[#allocation2 + $0x15c0] sm:$0xff]
    %v838 = vld [vmem:[#allocation2 + $0x15c8] sm:$0xff]
    %v839 = vld [vmem:[#allocation2 + $0x15d0] sm:$0xff]
    %v840 = vld [vmem:[#allocation2 + $0x15d8] sm:$0xff]
    %v841 = vld [vmem:[#allocation2 + $0x15e0] sm:$0xff]
    %v842 = vld [vmem:[#allocation2 + $0x15e8] sm:$0xff]
    %v843 = vld [vmem:[#allocation2 + $0x15f0] sm:$0xff]
    %v844 = vld [vmem:[#allocation2 + $0x15f8] sm:$0xff]
    %v845 = vld [vmem:[#allocation2 + $0x1600] sm:$0xff]
    %v846 = vld [vmem:[#allocation2 + $0x1608] sm:$0xff]
    %v847 = vld [vmem:[#allocation2 + $0x1610] sm:$0xff]
    %v848 = vld [vmem:[#allocation2 + $0x1618] sm:$0xff]
    %v849 = vld [vmem:[#allocation2 + $0x1620] sm:$0xff]
    %v850 = vld [vmem:[#allocation2 + $0x1628] sm:$0xff]
    %v851 = vld [vmem:[#allocation2 + $0x1630] sm:$0xff]
    %v852 = vld [vmem:[#allocation2 + $0x1638] sm:$0xff]
    %v853 = vld [vmem:[#allocation2 + $0x1640] sm:$0xff]
    %v854 = vld [vmem:[#allocation2 + $0x1648] sm:$0xff]
    %v855 = vld [vmem:[#allocation2 + $0x1650] sm:$0xff]
    %v856 = vld [vmem:[#allocation2 + $0x1658] sm:$0xff]
    %v857 = vld [vmem:[#allocation2 + $0x1660] sm:$0xff]
    %v858 = vld [vmem:[#allocation2 + $0x1668] sm:$0xff]
    %v859 = vld [vmem:[#allocation2 + $0x1670] sm:$0xff]
    %v860 = vld [vmem:[#allocation2 + $0x1678] sm:$0xff]
    %v861 = vld [vmem:[#allocation2 + $0x1680] sm:$0xff]
    %v862 = vld [vmem:[#allocation2 + $0x1688] sm:$0xff]
    %v863 = vld [vmem:[#allocation2 + $0x1690] sm:$0xff]
    %v864 = vld [vmem:[#allocation2 + $0x1698] sm:$0xff]
    %v865 = vld [vmem:[#allocation2 + $0x16a0] sm:$0xff]
    %v866 = vld [vmem:[#allocation2 + $0x16a8] sm:$0xff]
    %v867 = vld [vmem:[#allocation2 + $0x16b0] sm:$0xff]
    %v868 = vld [vmem:[#allocation2 + $0x16b8] sm:$0xff]
    %v869 = vld [vmem:[#allocation2 + $0x16c0] sm:$0xff]
    %v870 = vld [vmem:[#allocation2 + $0x16c8] sm:$0xff]
    %v871 = vld [vmem:[#allocation2 + $0x16d0] sm:$0xff]
    %v872 = vld [vmem:[#allocation2 + $0x16d8] sm:$0xff]
    %v873 = vld [vmem:[#allocation2 + $0x16e0] sm:$0xff]
    %v874 = vld [vmem:[#allocation2 + $0x16e8] sm:$0xff]
    %v875 = vld [vmem:[#allocation2 + $0x16f0] sm:$0xff]
    %v876 = vld [vmem:[#allocation2 + $0x16f8] sm:$0xff]
    %v877 = vld [vmem:[#allocation2 + $0x1700] sm:$0xff]
    %v878 = vld [vmem:[#allocation2 + $0x1708] sm:$0xff]
    %v879 = vld [vmem:[#allocation2 + $0x1710] sm:$0xff]
    %v880 = vld [vmem:[#allocation2 + $0x1718] sm:$0xff]
    %v881 = vld [vmem:[#allocation2 + $0x1720] sm:$0xff]
    %v882 = vld [vmem:[#allocation2 + $0x1728] sm:$0xff]
    %v883 = vld [vmem:[#allocation2 + $0x1730] sm:$0xff]
    %v884 = vld [vmem:[#allocation2 + $0x1738] sm:$0xff]
    %v885 = vld [vmem:[#allocation2 + $0x1740] sm:$0xff]
    %v886 = vld [vmem:[#allocation2 + $0x1748] sm:$0xff]
    %v887 = vld [vmem:[#allocation2 + $0x1750] sm:$0xff]
    %v888 = vld [vmem:[#allocation2 + $0x1758] sm:$0xff]
    %v889 = vld [vmem:[#allocation2 + $0x1760] sm:$0xff]
    %v890 = vld [vmem:[#allocation2 + $0x1768] sm:$0xff]
    %v891 = vld [vmem:[#allocation2 + $0x1770] sm:$0xff]
    %v892 = vld [vmem:[#allocation2 + $0x1778] sm:$0xff]
    %v893 = vld [vmem:[#allocation2 + $0x1780] sm:$0xff]
    %v894 = vld [vmem:[#allocation2 + $0x1788] sm:$0xff]
    %v895 = vld [vmem:[#allocation2 + $0x1790] sm:$0xff]
    %v896 = vld [vmem:[#allocation2 + $0x1798] sm:$0xff]
    %v897 = vld [vmem:[#allocation2 + $0x17a0] sm:$0xff]
    %v898 = vld [vmem:[#allocation2 + $0x17a8] sm:$0xff]
    %v899 = vld [vmem:[#allocation2 + $0x17b0] sm:$0xff]
    %v900 = vld [vmem:[#allocation2 + $0x17b8] sm:$0xff]
    %v901 = vld [vmem:[#allocation2 + $0x17c0] sm:$0xff]
    %v902 = vld [vmem:[#allocation2 + $0x17c8] sm:$0xff]
    %v903 = vld [vmem:[#allocation2 + $0x17d0] sm:$0xff]
    %v904 = vld [vmem:[#allocation2 + $0x17d8] sm:$0xff]
    %v905 = vld [vmem:[#allocation2 + $0x17e0] sm:$0xff]
    %v906 = vld [vmem:[#allocation2 + $0x17e8] sm:$0xff]
    %v907 = vld [vmem:[#allocation2 + $0x17f0] sm:$0xff]
    %v908 = vld [vmem:[#allocation2 + $0x17f8] sm:$0xff]
    %v909 = vld [vmem:[#allocation2 + $0x1800] sm:$0xff]
    %v910 = vld [vmem:[#allocation2 + $0x1808] sm:$0xff]
    %v911 = vld [vmem:[#allocation2 + $0x1810] sm:$0x11]
    %v912 = vld [vmem:[#allocation2 + $0x1818] sm:$0x11]
    %v914 = vlaneseq
    %v915 = vshrl.u32 %v914, 7
    %v916 = vsub.s32 0, %v915
    %v917 = vrot.slane %v115, %v916
    %v918 = vlaneseq
    %v919 = vshrl.u32 %v918, 7
    %v920 = vsub.s32 1, %v919
    %v921 = vrot.slane %v115, %v920
    %v922 = vlaneseq
    %v923 = vshrl.u32 %v922, 7
    %v924 = vsub.s32 2, %v923
    %v925 = vrot.slane %v115, %v924
    %v926 = vlaneseq
    %v927 = vshrl.u32 %v926, 7
    %v928 = vsub.s32 3, %v927
    %v929 = vrot.slane %v115, %v928
    %v1706 = vunpack.c.l.b16 %v141
    %v1707 = vunpack.c.h.b16 %v141
    %v1708 = vunpack.c.l.b16 %v142
    %v1709 = vunpack.c.h.b16 %v142
    %v1710 = vunpack.c.l.b16 %v143
    %v1711 = vunpack.c.h.b16 %v143
    %v1712 = vunpack.c.l.b16 %v144
    %v1713 = vunpack.c.h.b16 %v144
    %v1714 = vunpack.c.l.b16 %v145
    %v1715 = vunpack.c.h.b16 %v145
    %v1716 = vunpack.c.l.b16 %v146
    %v1717 = vunpack.c.h.b16 %v146
    %v1718 = vunpack.c.l.b16 %v147
    %v1719 = vunpack.c.h.b16 %v147
    %v1720 = vunpack.c.l.b16 %v148
    %v1721 = vunpack.c.h.b16 %v148
    %v1722 = vunpack.c.l.b16 %v149
    %v1723 = vunpack.c.h.b16 %v149
    %v1724 = vunpack.c.l.b16 %v150
    %v1725 = vunpack.c.h.b16 %v150
    %v1726 = vunpack.c.l.b16 %v151
    %v1727 = vunpack.c.h.b16 %v151
    %v1728 = vunpack.c.l.b16 %v152
    %v1729 = vunpack.c.h.b16 %v152
    %v1730 = vunpack.c.l.b16 %v153
    %v1731 = vunpack.c.h.b16 %v153
    %v1732 = vunpack.c.l.b16 %v154
    %v1733 = vunpack.c.h.b16 %v154
    %v1734 = vunpack.c.l.b16 %v155
    %v1735 = vunpack.c.h.b16 %v155
    %v1736 = vunpack.c.l.b16 %v156
    %v1737 = vunpack.c.h.b16 %v156
    %v1738 = vunpack.c.l.b16 %v157
    %v1739 = vunpack.c.h.b16 %v157
    %v1740 = vunpack.c.l.b16 %v158
    %v1741 = vunpack.c.h.b16 %v158
    %v1742 = vunpack.c.l.b16 %v159
    %v1743 = vunpack.c.h.b16 %v159
    %v1744 = vunpack.c.l.b16 %v160
    %v1745 = vunpack.c.h.b16 %v160
    %v1746 = vunpack.c.l.b16 %v161
    %v1747 = vunpack.c.h.b16 %v161
    %v1748 = vunpack.c.l.b16 %v162
    %v1749 = vunpack.c.h.b16 %v162
    %v1750 = vunpack.c.l.b16 %v163
    %v1751 = vunpack.c.h.b16 %v163
    %v1752 = vunpack.c.l.b16 %v164
    %v1753 = vunpack.c.h.b16 %v164
    %v1754 = vunpack.c.l.b16 %v165
    %v1755 = vunpack.c.h.b16 %v165
    %v1756 = vunpack.c.l.b16 %v166
    %v1757 = vunpack.c.h.b16 %v166
    %v1758 = vunpack.c.l.b16 %v167
    %v1759 = vunpack.c.h.b16 %v167
    %v1760 = vunpack.c.l.b16 %v168
    %v1761 = vunpack.c.h.b16 %v168
    %v1762 = vunpack.c.l.b16 %v169
    %v1763 = vunpack.c.h.b16 %v169
    %v1764 = vunpack.c.l.b16 %v170
    %v1765 = vunpack.c.h.b16 %v170
    %v1766 = vunpack.c.l.b16 %v171
    %v1767 = vunpack.c.h.b16 %v171
    %v1768 = vunpack.c.l.b16 %v172
    %v1769 = vunpack.c.h.b16 %v172
    %v1770 = vunpack.c.l.b16 %v173
    %v1771 = vunpack.c.h.b16 %v173
    %v1772 = vunpack.c.l.b16 %v174
    %v1773 = vunpack.c.h.b16 %v174
    %v1774 = vunpack.c.l.b16 %v175
    %v1775 = vunpack.c.h.b16 %v175
    %v1776 = vunpack.c.l.b16 %v176
    %v1777 = vunpack.c.h.b16 %v176
    %v1778 = vunpack.c.l.b16 %v177
    %v1779 = vunpack.c.h.b16 %v177
    %v1780 = vunpack.c.l.b16 %v178
    %v1781 = vunpack.c.h.b16 %v178
    %v1782 = vunpack.c.l.b16 %v179
    %v1783 = vunpack.c.h.b16 %v179
    %v1784 = vunpack.c.l.b16 %v180
    %v1785 = vunpack.c.h.b16 %v180
    %v1786 = vunpack.c.l.b16 %v181
    %v1787 = vunpack.c.h.b16 %v181
    %v1788 = vunpack.c.l.b16 %v182
    %v1789 = vunpack.c.h.b16 %v182
    %v1790 = vunpack.c.l.b16 %v183
    %v1791 = vunpack.c.h.b16 %v183
    %v1792 = vunpack.c.l.b16 %v184
    %v1793 = vunpack.c.h.b16 %v184
    %v1794 = vunpack.c.l.b16 %v185
    %v1795 = vunpack.c.h.b16 %v185
    %v1796 = vunpack.c.l.b16 %v186
    %v1797 = vunpack.c.h.b16 %v186
    %v1798 = vunpack.c.l.b16 %v187
    %v1799 = vunpack.c.h.b16 %v187
    %v1800 = vunpack.c.l.b16 %v188
    %v1801 = vunpack.c.h.b16 %v188
    %v1802 = vunpack.c.l.b16 %v189
    %v1803 = vunpack.c.h.b16 %v189
    %v1804 = vunpack.c.l.b16 %v190
    %v1805 = vunpack.c.h.b16 %v190
    %v1806 = vunpack.c.l.b16 %v191
    %v1807 = vunpack.c.h.b16 %v191
    %v1808 = vunpack.c.l.b16 %v192
    %v1809 = vunpack.c.h.b16 %v192
    %v1810 = vunpack.c.l.b16 %v193
    %v1811 = vunpack.c.h.b16 %v193
    %v1812 = vunpack.c.l.b16 %v194
    %v1813 = vunpack.c.h.b16 %v194
    %v1814 = vunpack.c.l.b16 %v195
    %v1815 = vunpack.c.h.b16 %v195
    %v1816 = vunpack.c.l.b16 %v196
    %v1817 = vunpack.c.h.b16 %v196
    %v1818 = vunpack.c.l.b16 %v197
    %v1819 = vunpack.c.h.b16 %v197
    %v1820 = vunpack.c.l.b16 %v198
    %v1821 = vunpack.c.h.b16 %v198
    %v1822 = vunpack.c.l.b16 %v199
    %v1823 = vunpack.c.h.b16 %v199
    %v1824 = vunpack.c.l.b16 %v200
    %v1825 = vunpack.c.h.b16 %v200
    %v1826 = vunpack.c.l.b16 %v201
    %v1827 = vunpack.c.h.b16 %v201
    %v1828 = vunpack.c.l.b16 %v202
    %v1829 = vunpack.c.h.b16 %v202
    %v1830 = vunpack.c.l.b16 %v203
    %v1831 = vunpack.c.h.b16 %v203
    %v1832 = vunpack.c.l.b16 %v204
    %v1833 = vunpack.c.h.b16 %v204
    %v1834 = vunpack.c.l.b16 %v205
    %v1835 = vunpack.c.h.b16 %v205
    %v1836 = vunpack.c.l.b16 %v206
    %v1837 = vunpack.c.h.b16 %v206
    %v1838 = vunpack.c.l.b16 %v207
    %v1839 = vunpack.c.h.b16 %v207
    %v1840 = vunpack.c.l.b16 %v208
    %v1841 = vunpack.c.h.b16 %v208
    %v1842 = vunpack.c.l.b16 %v209
    %v1843 = vunpack.c.h.b16 %v209
    %v1844 = vunpack.c.l.b16 %v210
    %v1845 = vunpack.c.h.b16 %v210
    %v1846 = vunpack.c.l.b16 %v211
    %v1847 = vunpack.c.h.b16 %v211
    %v1848 = vunpack.c.l.b16 %v212
    %v1849 = vunpack.c.h.b16 %v212
    %v1850 = vunpack.c.l.b16 %v213
    %v1851 = vunpack.c.h.b16 %v213
    %v1852 = vunpack.c.l.b16 %v214
    %v1853 = vunpack.c.h.b16 %v214
    %v1854 = vunpack.c.l.b16 %v215
    %v1855 = vunpack.c.h.b16 %v215
    %v1856 = vunpack.c.l.b16 %v216
    %v1857 = vunpack.c.h.b16 %v216
    %v1858 = vunpack.c.l.b16 %v217
    %v1859 = vunpack.c.h.b16 %v217
    %v1860 = vunpack.c.l.b16 %v218
    %v1861 = vunpack.c.h.b16 %v218
    %v1862 = vunpack.c.l.b16 %v219
    %v1863 = vunpack.c.h.b16 %v219
    %v1864 = vunpack.c.l.b16 %v220
    %v1865 = vunpack.c.h.b16 %v220
    %v1866 = vunpack.c.l.b16 %v221
    %v1867 = vunpack.c.h.b16 %v221
    %v1868 = vunpack.c.l.b16 %v222
    %v1869 = vunpack.c.h.b16 %v222
    %v1870 = vunpack.c.l.b16 %v223
    %v1871 = vunpack.c.h.b16 %v223
    %v1872 = vunpack.c.l.b16 %v224
    %v1873 = vunpack.c.h.b16 %v224
    %v1874 = vunpack.c.l.b16 %v225
    %v1875 = vunpack.c.h.b16 %v225
    %v1876 = vunpack.c.l.b16 %v226
    %v1877 = vunpack.c.h.b16 %v226
    %v1878 = vunpack.c.l.b16 %v227
    %v1879 = vunpack.c.h.b16 %v227
    %v1880 = vunpack.c.l.b16 %v228
    %v1881 = vunpack.c.h.b16 %v228
    %v1882 = vunpack.c.l.b16 %v229
    %v1883 = vunpack.c.h.b16 %v229
    %v1884 = vunpack.c.l.b16 %v230
    %v1885 = vunpack.c.h.b16 %v230
    %v1886 = vunpack.c.l.b16 %v231
    %v1887 = vunpack.c.h.b16 %v231
    %v1888 = vunpack.c.l.b16 %v232
    %v1889 = vunpack.c.h.b16 %v232
    %v1890 = vunpack.c.l.b16 %v233
    %v1891 = vunpack.c.h.b16 %v233
    %v1892 = vunpack.c.l.b16 %v234
    %v1893 = vunpack.c.h.b16 %v234
    %v1894 = vunpack.c.l.b16 %v235
    %v1895 = vunpack.c.h.b16 %v235
    %v1896 = vunpack.c.l.b16 %v236
    %v1897 = vunpack.c.h.b16 %v236
    %v1898 = vunpack.c.l.b16 %v237
    %v1899 = vunpack.c.h.b16 %v237
    %v1900 = vunpack.c.l.b16 %v238
    %v1901 = vunpack.c.h.b16 %v238
    %v1902 = vunpack.c.l.b16 %v239
    %v1903 = vunpack.c.h.b16 %v239
    %v1904 = vunpack.c.l.b16 %v240
    %v1905 = vunpack.c.h.b16 %v240
    %v1906 = vunpack.c.l.b16 %v241
    %v1907 = vunpack.c.h.b16 %v241
    %v1908 = vunpack.c.l.b16 %v242
    %v1909 = vunpack.c.h.b16 %v242
    %v1910 = vunpack.c.l.b16 %v243
    %v1911 = vunpack.c.h.b16 %v243
    %v1912 = vunpack.c.l.b16 %v244
    %v1913 = vunpack.c.h.b16 %v244
    %v1914 = vunpack.c.l.b16 %v245
    %v1915 = vunpack.c.h.b16 %v245
    %v1916 = vunpack.c.l.b16 %v246
    %v1917 = vunpack.c.h.b16 %v246
    %v1918 = vunpack.c.l.b16 %v247
    %v1919 = vunpack.c.h.b16 %v247
    %v1920 = vunpack.c.l.b16 %v248
    %v1921 = vunpack.c.h.b16 %v248
    %v1922 = vunpack.c.l.b16 %v249
    %v1923 = vunpack.c.h.b16 %v249
    %v1924 = vunpack.c.l.b16 %v250
    %v1925 = vunpack.c.h.b16 %v250
    %v1926 = vunpack.c.l.b16 %v251
    %v1927 = vunpack.c.h.b16 %v251
    %v1928 = vunpack.c.l.b16 %v252
    %v1929 = vunpack.c.h.b16 %v252
    %v1930 = vunpack.c.l.b16 %v253
    %v1931 = vunpack.c.h.b16 %v253
    %v1932 = vunpack.c.l.b16 %v254
    %v1933 = vunpack.c.h.b16 %v254
    %v1934 = vunpack.c.l.b16 %v255
    %v1935 = vunpack.c.h.b16 %v255
    %v1936 = vunpack.c.l.b16 %v256
    %v1937 = vunpack.c.h.b16 %v256
    %v1938 = vunpack.c.l.b16 %v257
    %v1939 = vunpack.c.h.b16 %v257
    %v1940 = vunpack.c.l.b16 %v258
    %v1941 = vunpack.c.h.b16 %v258
    %v1942 = vunpack.c.l.b16 %v259
    %v1943 = vunpack.c.h.b16 %v259
    %v1944 = vunpack.c.l.b16 %v260
    %v1945 = vunpack.c.h.b16 %v260
    %v1946 = vunpack.c.l.b16 %v261
    %v1947 = vunpack.c.h.b16 %v261
    %v1948 = vunpack.c.l.b16 %v262
    %v1949 = vunpack.c.h.b16 %v262
    %v1950 = vunpack.c.l.b16 %v263
    %v1951 = vunpack.c.h.b16 %v263
    %v1952 = vunpack.c.l.b16 %v264
    %v1953 = vunpack.c.h.b16 %v264
    %v1954 = vunpack.c.l.b16 %v265
    %v1955 = vunpack.c.h.b16 %v265
    %v1956 = vunpack.c.l.b16 %v266
    %v1957 = vunpack.c.h.b16 %v266
    %v1958 = vunpack.c.l.b16 %v267
    %v1959 = vunpack.c.h.b16 %v267
    %v1960 = vunpack.c.l.b16 %v268
    %v1961 = vunpack.c.h.b16 %v268
    %v1962 = vunpack.c.l.b16 %v269
    %v1963 = vunpack.c.h.b16 %v269
    %v1964 = vunpack.c.l.b16 %v270
    %v1965 = vunpack.c.h.b16 %v270
    %v1966 = vunpack.c.l.b16 %v271
    %v1967 = vunpack.c.h.b16 %v271
    %v1968 = vunpack.c.l.b16 %v272
    %v1969 = vunpack.c.h.b16 %v272
    %v1970 = vunpack.c.l.b16 %v273
    %v1971 = vunpack.c.h.b16 %v273
    %v1972 = vunpack.c.l.b16 %v274
    %v1973 = vunpack.c.h.b16 %v274
    %v1974 = vunpack.c.l.b16 %v275
    %v1975 = vunpack.c.h.b16 %v275
    %v1976 = vunpack.c.l.b16 %v276
    %v1977 = vunpack.c.h.b16 %v276
    %v1978 = vunpack.c.l.b16 %v277
    %v1979 = vunpack.c.h.b16 %v277
    %v1980 = vunpack.c.l.b16 %v278
    %v1981 = vunpack.c.h.b16 %v278
    %v1982 = vunpack.c.l.b16 %v279
    %v1983 = vunpack.c.h.b16 %v279
    %v1984 = vunpack.c.l.b16 %v280
    %v1985 = vunpack.c.h.b16 %v280
    %v1986 = vunpack.c.l.b16 %v281
    %v1987 = vunpack.c.h.b16 %v281
    %v1988 = vunpack.c.l.b16 %v282
    %v1989 = vunpack.c.h.b16 %v282
    %v1990 = vunpack.c.l.b16 %v283
    %v1991 = vunpack.c.h.b16 %v283
    %v1992 = vunpack.c.l.b16 %v284
    %v1993 = vunpack.c.h.b16 %v284
    %v1994 = vunpack.c.l.b16 %v285
    %v1995 = vunpack.c.h.b16 %v285
    %v1996 = vunpack.c.l.b16 %v286
    %v1997 = vunpack.c.h.b16 %v286
    %v1998 = vunpack.c.l.b16 %v287
    %v1999 = vunpack.c.h.b16 %v287
    %v2000 = vunpack.c.l.b16 %v288
    %v2001 = vunpack.c.h.b16 %v288
    %v2002 = vunpack.c.l.b16 %v289
    %v2003 = vunpack.c.h.b16 %v289
    %v2004 = vunpack.c.l.b16 %v290
    %v2005 = vunpack.c.h.b16 %v290
    %v2006 = vunpack.c.l.b16 %v291
    %v2007 = vunpack.c.h.b16 %v291
    %v2008 = vunpack.c.l.b16 %v292
    %v2009 = vunpack.c.h.b16 %v292
    %v2010 = vunpack.c.l.b16 %v293
    %v2011 = vunpack.c.h.b16 %v293
    %v2012 = vunpack.c.l.b16 %v294
    %v2013 = vunpack.c.h.b16 %v294
    %v2014 = vunpack.c.l.b16 %v295
    %v2015 = vunpack.c.h.b16 %v295
    %v2016 = vunpack.c.l.b16 %v296
    %v2017 = vunpack.c.h.b16 %v296
    %v2018 = vunpack.c.l.b16 %v297
    %v2019 = vunpack.c.h.b16 %v297
    %v2020 = vunpack.c.l.b16 %v298
    %v2021 = vunpack.c.h.b16 %v298
    %v2022 = vunpack.c.l.b16 %v299
    %v2023 = vunpack.c.h.b16 %v299
    %v2024 = vunpack.c.l.b16 %v300
    %v2025 = vunpack.c.h.b16 %v300
    %v2026 = vunpack.c.l.b16 %v301
    %v2027 = vunpack.c.h.b16 %v301
    %v2028 = vunpack.c.l.b16 %v302
    %v2029 = vunpack.c.h.b16 %v302
    %v2030 = vunpack.c.l.b16 %v303
    %v2031 = vunpack.c.h.b16 %v303
    %v2032 = vunpack.c.l.b16 %v304
    %v2033 = vunpack.c.h.b16 %v304
    %v2034 = vunpack.c.l.b16 %v305
    %v2035 = vunpack.c.h.b16 %v305
    %v2036 = vunpack.c.l.b16 %v306
    %v2037 = vunpack.c.h.b16 %v306
    %v2038 = vunpack.c.l.b16 %v307
    %v2039 = vunpack.c.h.b16 %v307
    %v2040 = vunpack.c.l.b16 %v308
    %v2041 = vunpack.c.h.b16 %v308
    %v2042 = vunpack.c.l.b16 %v309
    %v2043 = vunpack.c.h.b16 %v309
    %v2044 = vunpack.c.l.b16 %v310
    %v2045 = vunpack.c.h.b16 %v310
    %v2046 = vunpack.c.l.b16 %v311
    %v2047 = vunpack.c.h.b16 %v311
    %v2048 = vunpack.c.l.b16 %v312
    %v2049 = vunpack.c.h.b16 %v312
    %v2050 = vunpack.c.l.b16 %v313
    %v2051 = vunpack.c.h.b16 %v313
    %v2052 = vunpack.c.l.b16 %v314
    %v2053 = vunpack.c.h.b16 %v314
    %v2054 = vunpack.c.l.b16 %v315
    %v2055 = vunpack.c.h.b16 %v315
    %v2056 = vunpack.c.l.b16 %v316
    %v2057 = vunpack.c.h.b16 %v316
    %v2058 = vunpack.c.l.b16 %v317
    %v2059 = vunpack.c.h.b16 %v317
    %v2060 = vunpack.c.l.b16 %v318
    %v2061 = vunpack.c.h.b16 %v318
    %v2062 = vunpack.c.l.b16 %v319
    %v2063 = vunpack.c.h.b16 %v319
    %v2064 = vunpack.c.l.b16 %v320
    %v2065 = vunpack.c.h.b16 %v320
    %v2066 = vunpack.c.l.b16 %v321
    %v2067 = vunpack.c.h.b16 %v321
    %v2068 = vunpack.c.l.b16 %v322
    %v2069 = vunpack.c.h.b16 %v322
    %v2070 = vunpack.c.l.b16 %v323
    %v2071 = vunpack.c.h.b16 %v323
    %v2072 = vunpack.c.l.b16 %v324
    %v2073 = vunpack.c.h.b16 %v324
    %v2074 = vunpack.c.l.b16 %v325
    %v2075 = vunpack.c.h.b16 %v325
    %v2076 = vunpack.c.l.b16 %v326
    %v2077 = vunpack.c.h.b16 %v326
    %v2078 = vunpack.c.l.b16 %v327
    %v2079 = vunpack.c.h.b16 %v327
    %v2080 = vunpack.c.l.b16 %v328
    %v2081 = vunpack.c.h.b16 %v328
    %v2082 = vunpack.c.l.b16 %v329
    %v2083 = vunpack.c.h.b16 %v329
    %v2084 = vunpack.c.l.b16 %v330
    %v2085 = vunpack.c.h.b16 %v330
    %v2086 = vunpack.c.l.b16 %v331
    %v2087 = vunpack.c.h.b16 %v331
    %v2088 = vunpack.c.l.b16 %v332
    %v2089 = vunpack.c.h.b16 %v332
    %v2090 = vunpack.c.l.b16 %v333
    %v2091 = vunpack.c.h.b16 %v333
    %v2092 = vunpack.c.l.b16 %v334
    %v2093 = vunpack.c.h.b16 %v334
    %v2094 = vunpack.c.l.b16 %v335
    %v2095 = vunpack.c.h.b16 %v335
    %v2096 = vunpack.c.l.b16 %v336
    %v2097 = vunpack.c.h.b16 %v336
    %v2098 = vunpack.c.l.b16 %v337
    %v2099 = vunpack.c.h.b16 %v337
    %v2100 = vunpack.c.l.b16 %v338
    %v2101 = vunpack.c.h.b16 %v338
    %v2102 = vunpack.c.l.b16 %v339
    %v2103 = vunpack.c.h.b16 %v339
    %v2104 = vunpack.c.l.b16 %v340
    %v2105 = vunpack.c.h.b16 %v340
    %v2106 = vunpack.c.l.b16 %v341
    %v2107 = vunpack.c.h.b16 %v341
    %v2108 = vunpack.c.l.b16 %v342
    %v2109 = vunpack.c.h.b16 %v342
    %v2110 = vunpack.c.l.b16 %v343
    %v2111 = vunpack.c.h.b16 %v343
    %v2112 = vunpack.c.l.b16 %v344
    %v2113 = vunpack.c.h.b16 %v344
    %v2114 = vunpack.c.l.b16 %v345
    %v2115 = vunpack.c.h.b16 %v345
    %v2116 = vunpack.c.l.b16 %v346
    %v2117 = vunpack.c.h.b16 %v346
    %v2118 = vunpack.c.l.b16 %v347
    %v2119 = vunpack.c.h.b16 %v347
    %v2120 = vunpack.c.l.b16 %v348
    %v2121 = vunpack.c.h.b16 %v348
    %v2122 = vunpack.c.l.b16 %v349
    %v2123 = vunpack.c.h.b16 %v349
    %v2124 = vunpack.c.l.b16 %v350
    %v2125 = vunpack.c.h.b16 %v350
    %v2126 = vunpack.c.l.b16 %v351
    %v2127 = vunpack.c.h.b16 %v351
    %v2128 = vunpack.c.l.b16 %v352
    %v2129 = vunpack.c.h.b16 %v352
    %v2130 = vunpack.c.l.b16 %v353
    %v2131 = vunpack.c.h.b16 %v353
    %v2132 = vunpack.c.l.b16 %v354
    %v2133 = vunpack.c.h.b16 %v354
    %v2134 = vunpack.c.l.b16 %v355
    %v2135 = vunpack.c.h.b16 %v355
    %v2136 = vunpack.c.l.b16 %v356
    %v2137 = vunpack.c.h.b16 %v356
    %v2138 = vunpack.c.l.b16 %v357
    %v2139 = vunpack.c.h.b16 %v357
    %v2140 = vunpack.c.l.b16 %v358
    %v2141 = vunpack.c.h.b16 %v358
    %v2142 = vunpack.c.l.b16 %v359
    %v2143 = vunpack.c.h.b16 %v359
    %v2144 = vunpack.c.l.b16 %v360
    %v2145 = vunpack.c.h.b16 %v360
    %v2146 = vunpack.c.l.b16 %v361
    %v2147 = vunpack.c.h.b16 %v361
    %v2148 = vunpack.c.l.b16 %v362
    %v2149 = vunpack.c.h.b16 %v362
    %v2150 = vunpack.c.l.b16 %v363
    %v2151 = vunpack.c.h.b16 %v363
    %v2152 = vunpack.c.l.b16 %v364
    %v2153 = vunpack.c.h.b16 %v364
    %v2154 = vunpack.c.l.b16 %v365
    %v2155 = vunpack.c.h.b16 %v365
    %v2156 = vunpack.c.l.b16 %v366
    %v2157 = vunpack.c.h.b16 %v366
    %v2158 = vunpack.c.l.b16 %v367
    %v2159 = vunpack.c.h.b16 %v367
    %v2160 = vunpack.c.l.b16 %v368
    %v2161 = vunpack.c.h.b16 %v368
    %v2162 = vunpack.c.l.b16 %v369
    %v2163 = vunpack.c.h.b16 %v369
    %v2164 = vunpack.c.l.b16 %v370
    %v2165 = vunpack.c.h.b16 %v370
    %v2166 = vunpack.c.l.b16 %v371
    %v2167 = vunpack.c.h.b16 %v371
    %v2168 = vunpack.c.l.b16 %v372
    %v2169 = vunpack.c.h.b16 %v372
    %v2170 = vunpack.c.l.b16 %v373
    %v2171 = vunpack.c.h.b16 %v373
    %v2172 = vunpack.c.l.b16 %v374
    %v2173 = vunpack.c.h.b16 %v374
    %v2174 = vunpack.c.l.b16 %v375
    %v2175 = vunpack.c.h.b16 %v375
    %v2176 = vunpack.c.l.b16 %v376
    %v2177 = vunpack.c.h.b16 %v376
    %v2178 = vunpack.c.l.b16 %v377
    %v2179 = vunpack.c.h.b16 %v377
    %v2180 = vunpack.c.l.b16 %v378
    %v2181 = vunpack.c.h.b16 %v378
    %v2182 = vunpack.c.l.b16 %v379
    %v2183 = vunpack.c.h.b16 %v379
    %v2184 = vunpack.c.l.b16 %v380
    %v2185 = vunpack.c.h.b16 %v380
    %v2186 = vunpack.c.l.b16 %v381
    %v2187 = vunpack.c.h.b16 %v381
    %v2188 = vunpack.c.l.b16 %v382
    %v2189 = vunpack.c.h.b16 %v382
    %v2190 = vunpack.c.l.b16 %v383
    %v2191 = vunpack.c.h.b16 %v383
    %v2192 = vunpack.c.l.b16 %v384
    %v2193 = vunpack.c.h.b16 %v384
    %v2194 = vunpack.c.l.b16 %v385
    %v2195 = vunpack.c.h.b16 %v385
    %v2196 = vunpack.c.l.b16 %v386
    %v2197 = vunpack.c.h.b16 %v386
    %v2198 = vunpack.c.l.b16 %v387
    %v2199 = vunpack.c.h.b16 %v387
    %v2200 = vunpack.c.l.b16 %v388
    %v2201 = vunpack.c.h.b16 %v388
    %v2202 = vunpack.c.l.b16 %v389
    %v2203 = vunpack.c.h.b16 %v389
    %v2204 = vunpack.c.l.b16 %v390
    %v2205 = vunpack.c.h.b16 %v390
    %v2206 = vunpack.c.l.b16 %v391
    %v2207 = vunpack.c.h.b16 %v391
    %v2208 = vunpack.c.l.b16 %v392
    %v2209 = vunpack.c.h.b16 %v392
    %v2210 = vunpack.c.l.b16 %v393
    %v2211 = vunpack.c.h.b16 %v393
    %v2212 = vunpack.c.l.b16 %v394
    %v2213 = vunpack.c.h.b16 %v394
    %v2214 = vunpack.c.l.b16 %v395
    %v2215 = vunpack.c.h.b16 %v395
    %v2216 = vunpack.c.l.b16 %v396
    %v2217 = vunpack.c.h.b16 %v396
    %v2218 = vunpack.c.l.b16 %v397
    %v2219 = vunpack.c.h.b16 %v397
    %v2220 = vunpack.c.l.b16 %v398
    %v2221 = vunpack.c.h.b16 %v398
    %v2222 = vunpack.c.l.b16 %v399
    %v2223 = vunpack.c.h.b16 %v399
    %v2224 = vunpack.c.l.b16 %v400
    %v2225 = vunpack.c.h.b16 %v400
    %v2226 = vunpack.c.l.b16 %v401
    %v2227 = vunpack.c.h.b16 %v401
    %v2228 = vunpack.c.l.b16 %v402
    %v2229 = vunpack.c.h.b16 %v402
    %v2230 = vunpack.c.l.b16 %v403
    %v2231 = vunpack.c.h.b16 %v403
    %v2232 = vunpack.c.l.b16 %v404
    %v2233 = vunpack.c.h.b16 %v404
    %v2234 = vunpack.c.l.b16 %v405
    %v2235 = vunpack.c.h.b16 %v405
    %v2236 = vunpack.c.l.b16 %v406
    %v2237 = vunpack.c.h.b16 %v406
    %v2238 = vunpack.c.l.b16 %v407
    %v2239 = vunpack.c.h.b16 %v407
    %v2240 = vunpack.c.l.b16 %v408
    %v2241 = vunpack.c.h.b16 %v408
    %v2242 = vunpack.c.l.b16 %v409
    %v2243 = vunpack.c.h.b16 %v409
    %v2244 = vunpack.c.l.b16 %v410
    %v2245 = vunpack.c.h.b16 %v410
    %v2246 = vunpack.c.l.b16 %v411
    %v2247 = vunpack.c.h.b16 %v411
    %v2248 = vunpack.c.l.b16 %v412
    %v2249 = vunpack.c.h.b16 %v412
    %v2250 = vunpack.c.l.b16 %v413
    %v2251 = vunpack.c.h.b16 %v413
    %v2252 = vunpack.c.l.b16 %v414
    %v2253 = vunpack.c.h.b16 %v414
    %v2254 = vunpack.c.l.b16 %v415
    %v2255 = vunpack.c.h.b16 %v415
    %v2256 = vunpack.c.l.b16 %v416
    %v2257 = vunpack.c.h.b16 %v416
    %v2258 = vunpack.c.l.b16 %v417
    %v2259 = vunpack.c.h.b16 %v417
    %v2260 = vunpack.c.l.b16 %v418
    %v2261 = vunpack.c.h.b16 %v418
    %v2262 = vunpack.c.l.b16 %v419
    %v2263 = vunpack.c.h.b16 %v419
    %v2264 = vunpack.c.l.b16 %v420
    %v2265 = vunpack.c.h.b16 %v420
    %v2266 = vunpack.c.l.b16 %v421
    %v2267 = vunpack.c.h.b16 %v421
    %v2268 = vunpack.c.l.b16 %v422
    %v2269 = vunpack.c.h.b16 %v422
    %v2270 = vunpack.c.l.b16 %v423
    %v2271 = vunpack.c.h.b16 %v423
    %v2272 = vunpack.c.l.b16 %v424
    %v2273 = vunpack.c.h.b16 %v424
    %v2274 = vunpack.c.l.b16 %v425
    %v2275 = vunpack.c.h.b16 %v425
    %v2276 = vunpack.c.l.b16 %v426
    %v2277 = vunpack.c.h.b16 %v426
    %v2278 = vunpack.c.l.b16 %v427
    %v2279 = vunpack.c.h.b16 %v427
    %v2280 = vunpack.c.l.b16 %v428
    %v2281 = vunpack.c.h.b16 %v428
    %v2282 = vunpack.c.l.b16 %v429
    %v2283 = vunpack.c.h.b16 %v429
    %v2284 = vunpack.c.l.b16 %v430
    %v2285 = vunpack.c.h.b16 %v430
    %v2286 = vunpack.c.l.b16 %v431
    %v2287 = vunpack.c.h.b16 %v431
    %v2288 = vunpack.c.l.b16 %v432
    %v2289 = vunpack.c.h.b16 %v432
    %v2290 = vunpack.c.l.b16 %v433
    %v2291 = vunpack.c.h.b16 %v433
    %v2292 = vunpack.c.l.b16 %v434
    %v2293 = vunpack.c.h.b16 %v434
    %v2294 = vunpack.c.l.b16 %v435
    %v2295 = vunpack.c.h.b16 %v435
    %v2296 = vunpack.c.l.b16 %v436
    %v2297 = vunpack.c.h.b16 %v436
    %v2298 = vunpack.c.l.b16 %v437
    %v2299 = vunpack.c.h.b16 %v437
    %v2300 = vunpack.c.l.b16 %v438
    %v2301 = vunpack.c.h.b16 %v438
    %v2302 = vunpack.c.l.b16 %v439
    %v2303 = vunpack.c.h.b16 %v439
    %v2304 = vunpack.c.l.b16 %v440
    %v2305 = vunpack.c.h.b16 %v440
    %v2306 = vunpack.c.l.b16 %v441
    %v2307 = vunpack.c.h.b16 %v441
    %v2308 = vunpack.c.l.b16 %v442
    %v2309 = vunpack.c.h.b16 %v442
    %v2310 = vunpack.c.l.b16 %v443
    %v2311 = vunpack.c.h.b16 %v443
    %v2312 = vunpack.c.l.b16 %v444
    %v2313 = vunpack.c.h.b16 %v444
    %v2314 = vunpack.c.l.b16 %v445
    %v2315 = vunpack.c.h.b16 %v445
    %v2316 = vunpack.c.l.b16 %v446
    %v2317 = vunpack.c.h.b16 %v446
    %v2318 = vunpack.c.l.b16 %v447
    %v2319 = vunpack.c.h.b16 %v447
    %v2320 = vunpack.c.l.b16 %v448
    %v2321 = vunpack.c.h.b16 %v448
    %v2322 = vunpack.c.l.b16 %v449
    %v2323 = vunpack.c.h.b16 %v449
    %v2324 = vunpack.c.l.b16 %v450
    %v2325 = vunpack.c.h.b16 %v450
    %v2326 = vunpack.c.l.b16 %v451
    %v2327 = vunpack.c.h.b16 %v451
    %v2328 = vunpack.c.l.b16 %v452
    %v2329 = vunpack.c.h.b16 %v452
    %v2330 = vunpack.c.l.b16 %v453
    %v2331 = vunpack.c.h.b16 %v453
    %v2332 = vunpack.c.l.b16 %v454
    %v2333 = vunpack.c.h.b16 %v454
    %v2334 = vunpack.c.l.b16 %v455
    %v2335 = vunpack.c.h.b16 %v455
    %v2336 = vunpack.c.l.b16 %v456
    %v2337 = vunpack.c.h.b16 %v456
    %v2338 = vunpack.c.l.b16 %v457
    %v2339 = vunpack.c.h.b16 %v457
    %v2340 = vunpack.c.l.b16 %v458
    %v2341 = vunpack.c.h.b16 %v458
    %v2342 = vunpack.c.l.b16 %v459
    %v2343 = vunpack.c.h.b16 %v459
    %v2344 = vunpack.c.l.b16 %v460
    %v2345 = vunpack.c.h.b16 %v460
    %v2346 = vunpack.c.l.b16 %v461
    %v2347 = vunpack.c.h.b16 %v461
    %v2348 = vunpack.c.l.b16 %v462
    %v2349 = vunpack.c.h.b16 %v462
    %v2350 = vunpack.c.l.b16 %v463
    %v2351 = vunpack.c.h.b16 %v463
    %v2352 = vunpack.c.l.b16 %v464
    %v2353 = vunpack.c.h.b16 %v464
    %v2354 = vunpack.c.l.b16 %v465
    %v2355 = vunpack.c.h.b16 %v465
    %v2356 = vunpack.c.l.b16 %v466
    %v2357 = vunpack.c.h.b16 %v466
    %v2358 = vunpack.c.l.b16 %v467
    %v2359 = vunpack.c.h.b16 %v467
    %v2360 = vunpack.c.l.b16 %v468
    %v2361 = vunpack.c.h.b16 %v468
    %v2362 = vunpack.c.l.b16 %v469
    %v2363 = vunpack.c.h.b16 %v469
    %v2364 = vunpack.c.l.b16 %v470
    %v2365 = vunpack.c.h.b16 %v470
    %v2366 = vunpack.c.l.b16 %v471
    %v2367 = vunpack.c.h.b16 %v471
    %v2368 = vunpack.c.l.b16 %v472
    %v2369 = vunpack.c.h.b16 %v472
    %v2370 = vunpack.c.l.b16 %v473
    %v2371 = vunpack.c.h.b16 %v473
    %v2372 = vunpack.c.l.b16 %v474
    %v2373 = vunpack.c.h.b16 %v474
    %v2374 = vunpack.c.l.b16 %v475
    %v2375 = vunpack.c.h.b16 %v475
    %v2376 = vunpack.c.l.b16 %v476
    %v2377 = vunpack.c.h.b16 %v476
    %v2378 = vunpack.c.l.b16 %v477
    %v2379 = vunpack.c.h.b16 %v477
    %v2380 = vunpack.c.l.b16 %v478
    %v2381 = vunpack.c.h.b16 %v478
    %v2382 = vunpack.c.l.b16 %v479
    %v2383 = vunpack.c.h.b16 %v479
    %v2384 = vunpack.c.l.b16 %v480
    %v2385 = vunpack.c.h.b16 %v480
    %v2386 = vunpack.c.l.b16 %v481
    %v2387 = vunpack.c.h.b16 %v481
    %v2388 = vunpack.c.l.b16 %v482
    %v2389 = vunpack.c.h.b16 %v482
    %v2390 = vunpack.c.l.b16 %v483
    %v2391 = vunpack.c.h.b16 %v483
    %v2392 = vunpack.c.l.b16 %v484
    %v2393 = vunpack.c.h.b16 %v484
    %v2394 = vunpack.c.l.b16 %v485
    %v2395 = vunpack.c.h.b16 %v485
    %v2396 = vunpack.c.l.b16 %v486
    %v2397 = vunpack.c.h.b16 %v486
    %v2398 = vunpack.c.l.b16 %v487
    %v2399 = vunpack.c.h.b16 %v487
    %v2400 = vunpack.c.l.b16 %v488
    %v2401 = vunpack.c.h.b16 %v488
    %v2402 = vunpack.c.l.b16 %v489
    %v2403 = vunpack.c.h.b16 %v489
    %v2404 = vunpack.c.l.b16 %v490
    %v2405 = vunpack.c.h.b16 %v490
    %v2406 = vunpack.c.l.b16 %v491
    %v2407 = vunpack.c.h.b16 %v491
    %v2408 = vunpack.c.l.b16 %v492
    %v2409 = vunpack.c.h.b16 %v492
    %v2410 = vunpack.c.l.b16 %v493
    %v2411 = vunpack.c.h.b16 %v493
    %v2412 = vunpack.c.l.b16 %v494
    %v2413 = vunpack.c.h.b16 %v494
    %v2414 = vunpack.c.l.b16 %v495
    %v2415 = vunpack.c.h.b16 %v495
    %v2416 = vunpack.c.l.b16 %v496
    %v2417 = vunpack.c.h.b16 %v496
    %v2418 = vunpack.c.l.b16 %v497
    %v2419 = vunpack.c.h.b16 %v497
    %v2420 = vunpack.c.l.b16 %v498
    %v2421 = vunpack.c.h.b16 %v498
    %v2422 = vunpack.c.l.b16 %v499
    %v2423 = vunpack.c.h.b16 %v499
    %v2424 = vunpack.c.l.b16 %v500
    %v2425 = vunpack.c.h.b16 %v500
    %v2426 = vunpack.c.l.b16 %v501
    %v2427 = vunpack.c.h.b16 %v501
    %v2428 = vunpack.c.l.b16 %v502
    %v2429 = vunpack.c.h.b16 %v502
    %v2430 = vunpack.c.l.b16 %v503
    %v2431 = vunpack.c.h.b16 %v503
    %v2432 = vunpack.c.l.b16 %v504
    %v2433 = vunpack.c.h.b16 %v504
    %v2434 = vunpack.c.l.b16 %v505
    %v2435 = vunpack.c.h.b16 %v505
    %v2436 = vunpack.c.l.b16 %v506
    %v2437 = vunpack.c.h.b16 %v506
    %v2438 = vunpack.c.l.b16 %v507
    %v2439 = vunpack.c.h.b16 %v507
    %v2440 = vunpack.c.l.b16 %v508
    %v2441 = vunpack.c.h.b16 %v508
    %v2442 = vunpack.c.l.b16 %v509
    %v2443 = vunpack.c.h.b16 %v509
    %v2444 = vunpack.c.l.b16 %v510
    %v2445 = vunpack.c.h.b16 %v510
    %v2446 = vunpack.c.l.b16 %v511
    %v2447 = vunpack.c.h.b16 %v511
    %v2448 = vunpack.c.l.b16 %v512
    %v2449 = vunpack.c.h.b16 %v512
    %v2450 = vunpack.c.l.b16 %v513
    %v2451 = vunpack.c.h.b16 %v513
    %v2452 = vunpack.c.l.b16 %v514
    %v2453 = vunpack.c.h.b16 %v514
    %v2454 = vunpack.c.l.b16 %v515
    %v2455 = vunpack.c.h.b16 %v515
    %v2456 = vunpack.c.l.b16 %v516
    %v2457 = vunpack.c.h.b16 %v516
    %v2458 = vunpack.c.l.b16 %v517
    %v2459 = vunpack.c.h.b16 %v517
    %v2460 = vunpack.c.l.b16 %v518
    %v2461 = vunpack.c.h.b16 %v518
    %v2462 = vunpack.c.l.b16 %v519
    %v2463 = vunpack.c.h.b16 %v519
    %v2464 = vunpack.c.l.b16 %v520
    %v2465 = vunpack.c.h.b16 %v520
    %v2466 = vunpack.c.l.b16 %v521
    %v2467 = vunpack.c.h.b16 %v521
    %v2468 = vunpack.c.l.b16 %v522
    %v2469 = vunpack.c.h.b16 %v522
    %v2470 = vunpack.c.l.b16 %v523
    %v2471 = vunpack.c.h.b16 %v523
    %v2472 = vunpack.c.l.b16 %v524
    %v2473 = vunpack.c.h.b16 %v524
    %v2474 = vunpack.c.l.b16 %v525
    %v2475 = vunpack.c.h.b16 %v525
    %v2476 = vunpack.c.l.b16 %v526
    %v2477 = vunpack.c.h.b16 %v526
    %v2478 = vunpack.c.l.b16 %v527
    %v2479 = vunpack.c.h.b16 %v527
    %v2480 = vunpack.c.l.b16 %v528
    %v2481 = vunpack.c.h.b16 %v528
    %v2482 = vunpack.c.l.b16 %v529
    %v2483 = vunpack.c.h.b16 %v529
    %v2484 = vunpack.c.l.b16 %v530
    %v2485 = vunpack.c.h.b16 %v530
    %v2486 = vunpack.c.l.b16 %v531
    %v2487 = vunpack.c.h.b16 %v531
    %v2488 = vunpack.c.l.b16 %v532
    %v2489 = vunpack.c.h.b16 %v532
    %v2490 = vunpack.c.l.b16 %v533
    %v2491 = vunpack.c.h.b16 %v533
    %v2492 = vunpack.c.l.b16 %v534
    %v2493 = vunpack.c.h.b16 %v534
    %v2494 = vunpack.c.l.b16 %v535
    %v2495 = vunpack.c.h.b16 %v535
    %v2496 = vunpack.c.l.b16 %v536
    %v2497 = vunpack.c.h.b16 %v536
    %v2498 = vunpack.c.l.b16 %v537
    %v2499 = vunpack.c.h.b16 %v537
    %v2500 = vunpack.c.l.b16 %v538
    %v2501 = vunpack.c.h.b16 %v538
    %v2502 = vunpack.c.l.b16 %v539
    %v2503 = vunpack.c.h.b16 %v539
    %v2504 = vunpack.c.l.b16 %v540
    %v2505 = vunpack.c.h.b16 %v540
    %v2506 = vunpack.c.l.b16 %v541
    %v2507 = vunpack.c.h.b16 %v541
    %v2508 = vunpack.c.l.b16 %v542
    %v2509 = vunpack.c.h.b16 %v542
    %v2510 = vunpack.c.l.b16 %v543
    %v2511 = vunpack.c.h.b16 %v543
    %v2512 = vunpack.c.l.b16 %v544
    %v2513 = vunpack.c.h.b16 %v544
    %v2514 = vunpack.c.l.b16 %v545
    %v2515 = vunpack.c.h.b16 %v545
    %v2516 = vunpack.c.l.b16 %v546
    %v2517 = vunpack.c.h.b16 %v546
    %v2518 = vunpack.c.l.b16 %v547
    %v2519 = vunpack.c.h.b16 %v547
    %v2520 = vunpack.c.l.b16 %v548
    %v2521 = vunpack.c.h.b16 %v548
    %v2522 = vunpack.c.l.b16 %v549
    %v2523 = vunpack.c.h.b16 %v549
    %v2524 = vunpack.c.l.b16 %v550
    %v2525 = vunpack.c.h.b16 %v550
    %v2526 = vunpack.c.l.b16 %v551
    %v2527 = vunpack.c.h.b16 %v551
    %v2528 = vunpack.c.l.b16 %v552
    %v2529 = vunpack.c.h.b16 %v552
    %v2530 = vunpack.c.l.b16 %v553
    %v2531 = vunpack.c.h.b16 %v553
    %v2532 = vunpack.c.l.b16 %v554
    %v2533 = vunpack.c.h.b16 %v554
    %v2534 = vunpack.c.l.b16 %v555
    %v2535 = vunpack.c.h.b16 %v555
    %v2536 = vunpack.c.l.b16 %v556
    %v2537 = vunpack.c.h.b16 %v556
    %v2538 = vunpack.c.l.b16 %v557
    %v2539 = vunpack.c.h.b16 %v557
    %v2540 = vunpack.c.l.b16 %v558
    %v2541 = vunpack.c.h.b16 %v558
    %v2542 = vunpack.c.l.b16 %v559
    %v2543 = vunpack.c.h.b16 %v559
    %v2544 = vunpack.c.l.b16 %v560
    %v2545 = vunpack.c.h.b16 %v560
    %v2546 = vunpack.c.l.b16 %v561
    %v2547 = vunpack.c.h.b16 %v561
    %v2548 = vunpack.c.l.b16 %v562
    %v2549 = vunpack.c.h.b16 %v562
    %v2550 = vunpack.c.l.b16 %v563
    %v2551 = vunpack.c.h.b16 %v563
    %v2552 = vunpack.c.l.b16 %v564
    %v2553 = vunpack.c.h.b16 %v564
    %v2554 = vunpack.c.l.b16 %v565
    %v2555 = vunpack.c.h.b16 %v565
    %v2556 = vunpack.c.l.b16 %v566
    %v2557 = vunpack.c.h.b16 %v566
    %v2558 = vunpack.c.l.b16 %v567
    %v2559 = vunpack.c.h.b16 %v567
    %v2560 = vunpack.c.l.b16 %v568
    %v2561 = vunpack.c.h.b16 %v568
    %v2562 = vunpack.c.l.b16 %v569
    %v2563 = vunpack.c.h.b16 %v569
    %v2564 = vunpack.c.l.b16 %v570
    %v2565 = vunpack.c.h.b16 %v570
    %v2566 = vunpack.c.l.b16 %v571
    %v2567 = vunpack.c.h.b16 %v571
    %v2568 = vunpack.c.l.b16 %v572
    %v2569 = vunpack.c.h.b16 %v572
    %v2570 = vunpack.c.l.b16 %v573
    %v2571 = vunpack.c.h.b16 %v573
    %v2572 = vunpack.c.l.b16 %v574
    %v2573 = vunpack.c.h.b16 %v574
    %v2574 = vunpack.c.l.b16 %v575
    %v2575 = vunpack.c.h.b16 %v575
    %v2576 = vunpack.c.l.b16 %v576
    %v2577 = vunpack.c.h.b16 %v576
    %v2578 = vunpack.c.l.b16 %v577
    %v2579 = vunpack.c.h.b16 %v577
    %v2580 = vunpack.c.l.b16 %v578
    %v2581 = vunpack.c.h.b16 %v578
    %v2582 = vunpack.c.l.b16 %v579
    %v2583 = vunpack.c.h.b16 %v579
    %v2584 = vunpack.c.l.b16 %v580
    %v2585 = vunpack.c.h.b16 %v580
    %v2586 = vunpack.c.l.b16 %v581
    %v2587 = vunpack.c.h.b16 %v581
    %v2588 = vunpack.c.l.b16 %v582
    %v2589 = vunpack.c.h.b16 %v582
    %v2590 = vunpack.c.l.b16 %v583
    %v2591 = vunpack.c.h.b16 %v583
    %v2592 = vunpack.c.l.b16 %v584
    %v2593 = vunpack.c.h.b16 %v584
    %v2594 = vunpack.c.l.b16 %v585
    %v2595 = vunpack.c.h.b16 %v585
    %v2596 = vunpack.c.l.b16 %v586
    %v2597 = vunpack.c.h.b16 %v586
    %v2598 = vunpack.c.l.b16 %v587
    %v2599 = vunpack.c.h.b16 %v587
    %v2600 = vunpack.c.l.b16 %v588
    %v2601 = vunpack.c.h.b16 %v588
    %v2602 = vunpack.c.l.b16 %v589
    %v2603 = vunpack.c.h.b16 %v589
    %v2604 = vunpack.c.l.b16 %v590
    %v2605 = vunpack.c.h.b16 %v590
    %v2606 = vunpack.c.l.b16 %v591
    %v2607 = vunpack.c.h.b16 %v591
    %v2608 = vunpack.c.l.b16 %v592
    %v2609 = vunpack.c.h.b16 %v592
    %v2610 = vunpack.c.l.b16 %v593
    %v2611 = vunpack.c.h.b16 %v593
    %v2612 = vunpack.c.l.b16 %v594
    %v2613 = vunpack.c.h.b16 %v594
    %v2614 = vunpack.c.l.b16 %v595
    %v2615 = vunpack.c.h.b16 %v595
    %v2616 = vunpack.c.l.b16 %v596
    %v2617 = vunpack.c.h.b16 %v596
    %v2618 = vunpack.c.l.b16 %v597
    %v2619 = vunpack.c.h.b16 %v597
    %v2620 = vunpack.c.l.b16 %v598
    %v2621 = vunpack.c.h.b16 %v598
    %v2622 = vunpack.c.l.b16 %v599
    %v2623 = vunpack.c.h.b16 %v599
    %v2624 = vunpack.c.l.b16 %v600
    %v2625 = vunpack.c.h.b16 %v600
    %v2626 = vunpack.c.l.b16 %v601
    %v2627 = vunpack.c.h.b16 %v601
    %v2628 = vunpack.c.l.b16 %v602
    %v2629 = vunpack.c.h.b16 %v602
    %v2630 = vunpack.c.l.b16 %v603
    %v2631 = vunpack.c.h.b16 %v603
    %v2632 = vunpack.c.l.b16 %v604
    %v2633 = vunpack.c.h.b16 %v604
    %v2634 = vunpack.c.l.b16 %v605
    %v2635 = vunpack.c.h.b16 %v605
    %v2636 = vunpack.c.l.b16 %v606
    %v2637 = vunpack.c.h.b16 %v606
    %v2638 = vunpack.c.l.b16 %v607
    %v2639 = vunpack.c.h.b16 %v607
    %v2640 = vunpack.c.l.b16 %v608
    %v2641 = vunpack.c.h.b16 %v608
    %v2642 = vunpack.c.l.b16 %v609
    %v2643 = vunpack.c.h.b16 %v609
    %v2644 = vunpack.c.l.b16 %v610
    %v2645 = vunpack.c.h.b16 %v610
    %v2646 = vunpack.c.l.b16 %v611
    %v2647 = vunpack.c.h.b16 %v611
    %v2648 = vunpack.c.l.b16 %v612
    %v2649 = vunpack.c.h.b16 %v612
    %v2650 = vunpack.c.l.b16 %v613
    %v2651 = vunpack.c.h.b16 %v613
    %v2652 = vunpack.c.l.b16 %v614
    %v2653 = vunpack.c.h.b16 %v614
    %v2654 = vunpack.c.l.b16 %v615
    %v2655 = vunpack.c.h.b16 %v615
    %v2656 = vunpack.c.l.b16 %v616
    %v2657 = vunpack.c.h.b16 %v616
    %v2658 = vunpack.c.l.b16 %v617
    %v2659 = vunpack.c.h.b16 %v617
    %v2660 = vunpack.c.l.b16 %v618
    %v2661 = vunpack.c.h.b16 %v618
    %v2662 = vunpack.c.l.b16 %v619
    %v2663 = vunpack.c.h.b16 %v619
    %v2664 = vunpack.c.l.b16 %v620
    %v2665 = vunpack.c.h.b16 %v620
    %v2666 = vunpack.c.l.b16 %v621
    %v2667 = vunpack.c.h.b16 %v621
    %v2668 = vunpack.c.l.b16 %v622
    %v2669 = vunpack.c.h.b16 %v622
    %v2670 = vunpack.c.l.b16 %v623
    %v2671 = vunpack.c.h.b16 %v623
    %v2672 = vunpack.c.l.b16 %v624
    %v2673 = vunpack.c.h.b16 %v624
    %v2674 = vunpack.c.l.b16 %v625
    %v2675 = vunpack.c.h.b16 %v625
    %v2676 = vunpack.c.l.b16 %v626
    %v2677 = vunpack.c.h.b16 %v626
    %v2678 = vunpack.c.l.b16 %v627
    %v2679 = vunpack.c.h.b16 %v627
    %v2680 = vunpack.c.l.b16 %v628
    %v2681 = vunpack.c.h.b16 %v628
    %v2682 = vunpack.c.l.b16 %v629
    %v2683 = vunpack.c.h.b16 %v629
    %v2684 = vunpack.c.l.b16 %v630
    %v2685 = vunpack.c.h.b16 %v630
    %v2686 = vunpack.c.l.b16 %v631
    %v2687 = vunpack.c.h.b16 %v631
    %v2688 = vunpack.c.l.b16 %v632
    %v2689 = vunpack.c.h.b16 %v632
    %v2690 = vunpack.c.l.b16 %v633
    %v2691 = vunpack.c.h.b16 %v633
    %v2692 = vunpack.c.l.b16 %v634
    %v2693 = vunpack.c.h.b16 %v634
    %v2694 = vunpack.c.l.b16 %v635
    %v2695 = vunpack.c.h.b16 %v635
    %v2696 = vunpack.c.l.b16 %v636
    %v2697 = vunpack.c.h.b16 %v636
    %v2698 = vunpack.c.l.b16 %v637
    %v2699 = vunpack.c.h.b16 %v637
    %v2700 = vunpack.c.l.b16 %v638
    %v2701 = vunpack.c.h.b16 %v638
    %v2702 = vunpack.c.l.b16 %v639
    %v2703 = vunpack.c.h.b16 %v639
    %v2704 = vunpack.c.l.b16 %v640
    %v2705 = vunpack.c.h.b16 %v640
    %v2706 = vunpack.c.l.b16 %v641
    %v2707 = vunpack.c.h.b16 %v641
    %v2708 = vunpack.c.l.b16 %v642
    %v2709 = vunpack.c.h.b16 %v642
    %v2710 = vunpack.c.l.b16 %v643
    %v2711 = vunpack.c.h.b16 %v643
    %v2712 = vunpack.c.l.b16 %v644
    %v2713 = vunpack.c.h.b16 %v644
    %v2714 = vunpack.c.l.b16 %v645
    %v2715 = vunpack.c.h.b16 %v645
    %v2716 = vunpack.c.l.b16 %v646
    %v2717 = vunpack.c.h.b16 %v646
    %v2718 = vunpack.c.l.b16 %v647
    %v2719 = vunpack.c.h.b16 %v647
    %v2720 = vunpack.c.l.b16 %v648
    %v2721 = vunpack.c.h.b16 %v648
    %v2722 = vunpack.c.l.b16 %v649
    %v2723 = vunpack.c.h.b16 %v649
    %v2724 = vunpack.c.l.b16 %v650
    %v2725 = vunpack.c.h.b16 %v650
    %v2726 = vunpack.c.l.b16 %v651
    %v2727 = vunpack.c.h.b16 %v651
    %v2728 = vunpack.c.l.b16 %v652
    %v2729 = vunpack.c.h.b16 %v652
    %v2730 = vunpack.c.l.b16 %v653
    %v2731 = vunpack.c.h.b16 %v653
    %v2732 = vunpack.c.l.b16 %v654
    %v2733 = vunpack.c.h.b16 %v654
    %v2734 = vunpack.c.l.b16 %v655
    %v2735 = vunpack.c.h.b16 %v655
    %v2736 = vunpack.c.l.b16 %v656
    %v2737 = vunpack.c.h.b16 %v656
    %v2738 = vunpack.c.l.b16 %v657
    %v2739 = vunpack.c.h.b16 %v657
    %v2740 = vunpack.c.l.b16 %v658
    %v2741 = vunpack.c.h.b16 %v658
    %v2742 = vunpack.c.l.b16 %v659
    %v2743 = vunpack.c.h.b16 %v659
    %v2744 = vunpack.c.l.b16 %v660
    %v2745 = vunpack.c.h.b16 %v660
    %v2746 = vunpack.c.l.b16 %v661
    %v2747 = vunpack.c.h.b16 %v661
    %v2748 = vunpack.c.l.b16 %v662
    %v2749 = vunpack.c.h.b16 %v662
    %v2750 = vunpack.c.l.b16 %v663
    %v2751 = vunpack.c.h.b16 %v663
    %v2752 = vunpack.c.l.b16 %v664
    %v2753 = vunpack.c.h.b16 %v664
    %v2754 = vunpack.c.l.b16 %v665
    %v2755 = vunpack.c.h.b16 %v665
    %v2756 = vunpack.c.l.b16 %v666
    %v2757 = vunpack.c.h.b16 %v666
    %v2758 = vunpack.c.l.b16 %v667
    %v2759 = vunpack.c.h.b16 %v667
    %v2760 = vunpack.c.l.b16 %v668
    %v2761 = vunpack.c.h.b16 %v668
    %v2762 = vunpack.c.l.b16 %v669
    %v2763 = vunpack.c.h.b16 %v669
    %v2764 = vunpack.c.l.b16 %v670
    %v2765 = vunpack.c.h.b16 %v670
    %v2766 = vunpack.c.l.b16 %v671
    %v2767 = vunpack.c.h.b16 %v671
    %v2768 = vunpack.c.l.b16 %v672
    %v2769 = vunpack.c.h.b16 %v672
    %v2770 = vunpack.c.l.b16 %v673
    %v2771 = vunpack.c.h.b16 %v673
    %v2772 = vunpack.c.l.b16 %v674
    %v2773 = vunpack.c.h.b16 %v674
    %v2774 = vunpack.c.l.b16 %v675
    %v2775 = vunpack.c.h.b16 %v675
    %v2776 = vunpack.c.l.b16 %v676
    %v2777 = vunpack.c.h.b16 %v676
    %v2778 = vunpack.c.l.b16 %v677
    %v2779 = vunpack.c.h.b16 %v677
    %v2780 = vunpack.c.l.b16 %v678
    %v2781 = vunpack.c.h.b16 %v678
    %v2782 = vunpack.c.l.b16 %v679
    %v2783 = vunpack.c.h.b16 %v679
    %v2784 = vunpack.c.l.b16 %v680
    %v2785 = vunpack.c.h.b16 %v680
    %v2786 = vunpack.c.l.b16 %v681
    %v2787 = vunpack.c.h.b16 %v681
    %v2788 = vunpack.c.l.b16 %v682
    %v2789 = vunpack.c.h.b16 %v682
    %v2790 = vunpack.c.l.b16 %v683
    %v2791 = vunpack.c.h.b16 %v683
    %v2792 = vunpack.c.l.b16 %v684
    %v2793 = vunpack.c.h.b16 %v684
    %v2794 = vunpack.c.l.b16 %v685
    %v2795 = vunpack.c.h.b16 %v685
    %v2796 = vunpack.c.l.b16 %v686
    %v2797 = vunpack.c.h.b16 %v686
    %v2798 = vunpack.c.l.b16 %v687
    %v2799 = vunpack.c.h.b16 %v687
    %v2800 = vunpack.c.l.b16 %v688
    %v2801 = vunpack.c.h.b16 %v688
    %v2802 = vunpack.c.l.b16 %v689
    %v2803 = vunpack.c.h.b16 %v689
    %v2804 = vunpack.c.l.b16 %v690
    %v2805 = vunpack.c.h.b16 %v690
    %v2806 = vunpack.c.l.b16 %v691
    %v2807 = vunpack.c.h.b16 %v691
    %v2808 = vunpack.c.l.b16 %v692
    %v2809 = vunpack.c.h.b16 %v692
    %v2810 = vunpack.c.l.b16 %v693
    %v2811 = vunpack.c.h.b16 %v693
    %v2812 = vunpack.c.l.b16 %v694
    %v2813 = vunpack.c.h.b16 %v694
    %v2814 = vunpack.c.l.b16 %v695
    %v2815 = vunpack.c.h.b16 %v695
    %v2816 = vunpack.c.l.b16 %v696
    %v2817 = vunpack.c.h.b16 %v696
    %v2818 = vunpack.c.l.b16 %v697
    %v2819 = vunpack.c.h.b16 %v697
    %v2820 = vunpack.c.l.b16 %v698
    %v2821 = vunpack.c.h.b16 %v698
    %v2822 = vunpack.c.l.b16 %v699
    %v2823 = vunpack.c.h.b16 %v699
    %v2824 = vunpack.c.l.b16 %v700
    %v2825 = vunpack.c.h.b16 %v700
    %v2826 = vunpack.c.l.b16 %v701
    %v2827 = vunpack.c.h.b16 %v701
    %v2828 = vunpack.c.l.b16 %v702
    %v2829 = vunpack.c.h.b16 %v702
    %v2830 = vunpack.c.l.b16 %v703
    %v2831 = vunpack.c.h.b16 %v703
    %v2832 = vunpack.c.l.b16 %v704
    %v2833 = vunpack.c.h.b16 %v704
    %v2834 = vunpack.c.l.b16 %v705
    %v2835 = vunpack.c.h.b16 %v705
    %v2836 = vunpack.c.l.b16 %v706
    %v2837 = vunpack.c.h.b16 %v706
    %v2838 = vunpack.c.l.b16 %v707
    %v2839 = vunpack.c.h.b16 %v707
    %v2840 = vunpack.c.l.b16 %v708
    %v2841 = vunpack.c.h.b16 %v708
    %v2842 = vunpack.c.l.b16 %v709
    %v2843 = vunpack.c.h.b16 %v709
    %v2844 = vunpack.c.l.b16 %v710
    %v2845 = vunpack.c.h.b16 %v710
    %v2846 = vunpack.c.l.b16 %v711
    %v2847 = vunpack.c.h.b16 %v711
    %v2848 = vunpack.c.l.b16 %v712
    %v2849 = vunpack.c.h.b16 %v712
    %v2850 = vunpack.c.l.b16 %v713
    %v2851 = vunpack.c.h.b16 %v713
    %v2852 = vunpack.c.l.b16 %v714
    %v2853 = vunpack.c.h.b16 %v714
    %v2854 = vunpack.c.l.b16 %v715
    %v2855 = vunpack.c.h.b16 %v715
    %v2856 = vunpack.c.l.b16 %v716
    %v2857 = vunpack.c.h.b16 %v716
    %v2858 = vunpack.c.l.b16 %v717
    %v2859 = vunpack.c.h.b16 %v717
    %v2860 = vunpack.c.l.b16 %v718
    %v2861 = vunpack.c.h.b16 %v718
    %v2862 = vunpack.c.l.b16 %v719
    %v2863 = vunpack.c.h.b16 %v719
    %v2864 = vunpack.c.l.b16 %v720
    %v2865 = vunpack.c.h.b16 %v720
    %v2866 = vunpack.c.l.b16 %v721
    %v2867 = vunpack.c.h.b16 %v721
    %v2868 = vunpack.c.l.b16 %v722
    %v2869 = vunpack.c.h.b16 %v722
    %v2870 = vunpack.c.l.b16 %v723
    %v2871 = vunpack.c.h.b16 %v723
    %v2872 = vunpack.c.l.b16 %v724
    %v2873 = vunpack.c.h.b16 %v724
    %v2874 = vunpack.c.l.b16 %v725
    %v2875 = vunpack.c.h.b16 %v725
    %v2876 = vunpack.c.l.b16 %v726
    %v2877 = vunpack.c.h.b16 %v726
    %v2878 = vunpack.c.l.b16 %v727
    %v2879 = vunpack.c.h.b16 %v727
    %v2880 = vunpack.c.l.b16 %v728
    %v2881 = vunpack.c.h.b16 %v728
    %v2882 = vunpack.c.l.b16 %v729
    %v2883 = vunpack.c.h.b16 %v729
    %v2884 = vunpack.c.l.b16 %v730
    %v2885 = vunpack.c.h.b16 %v730
    %v2886 = vunpack.c.l.b16 %v731
    %v2887 = vunpack.c.h.b16 %v731
    %v2888 = vunpack.c.l.b16 %v732
    %v2889 = vunpack.c.h.b16 %v732
    %v2890 = vunpack.c.l.b16 %v733
    %v2891 = vunpack.c.h.b16 %v733
    %v2892 = vunpack.c.l.b16 %v734
    %v2893 = vunpack.c.h.b16 %v734
    %v2894 = vunpack.c.l.b16 %v735
    %v2895 = vunpack.c.h.b16 %v735
    %v2896 = vunpack.c.l.b16 %v736
    %v2897 = vunpack.c.h.b16 %v736
    %v2898 = vunpack.c.l.b16 %v737
    %v2899 = vunpack.c.h.b16 %v737
    %v2900 = vunpack.c.l.b16 %v738
    %v2901 = vunpack.c.h.b16 %v738
    %v2902 = vunpack.c.l.b16 %v739
    %v2903 = vunpack.c.h.b16 %v739
    %v2904 = vunpack.c.l.b16 %v740
    %v2905 = vunpack.c.h.b16 %v740
    %v2906 = vunpack.c.l.b16 %v741
    %v2907 = vunpack.c.h.b16 %v741
    %v2908 = vunpack.c.l.b16 %v742
    %v2909 = vunpack.c.h.b16 %v742
    %v2910 = vunpack.c.l.b16 %v743
    %v2911 = vunpack.c.h.b16 %v743
    %v2912 = vunpack.c.l.b16 %v744
    %v2913 = vunpack.c.h.b16 %v744
    %v2914 = vunpack.c.l.b16 %v745
    %v2915 = vunpack.c.h.b16 %v745
    %v2916 = vunpack.c.l.b16 %v746
    %v2917 = vunpack.c.h.b16 %v746
    %v2918 = vunpack.c.l.b16 %v747
    %v2919 = vunpack.c.h.b16 %v747
    %v2920 = vunpack.c.l.b16 %v748
    %v2921 = vunpack.c.h.b16 %v748
    %v2922 = vunpack.c.l.b16 %v749
    %v2923 = vunpack.c.h.b16 %v749
    %v2924 = vunpack.c.l.b16 %v750
    %v2925 = vunpack.c.h.b16 %v750
    %v2926 = vunpack.c.l.b16 %v751
    %v2927 = vunpack.c.h.b16 %v751
    %v2928 = vunpack.c.l.b16 %v752
    %v2929 = vunpack.c.h.b16 %v752
    %v2930 = vunpack.c.l.b16 %v753
    %v2931 = vunpack.c.h.b16 %v753
    %v2932 = vunpack.c.l.b16 %v754
    %v2933 = vunpack.c.h.b16 %v754
    %v2934 = vunpack.c.l.b16 %v755
    %v2935 = vunpack.c.h.b16 %v755
    %v2936 = vunpack.c.l.b16 %v756
    %v2937 = vunpack.c.h.b16 %v756
    %v2938 = vunpack.c.l.b16 %v757
    %v2939 = vunpack.c.h.b16 %v757
    %v2940 = vunpack.c.l.b16 %v758
    %v2941 = vunpack.c.h.b16 %v758
    %v2942 = vunpack.c.l.b16 %v759
    %v2943 = vunpack.c.h.b16 %v759
    %v2944 = vunpack.c.l.b16 %v760
    %v2945 = vunpack.c.h.b16 %v760
    %v2946 = vunpack.c.l.b16 %v761
    %v2947 = vunpack.c.h.b16 %v761
    %v2948 = vunpack.c.l.b16 %v762
    %v2949 = vunpack.c.h.b16 %v762
    %v2950 = vunpack.c.l.b16 %v763
    %v2951 = vunpack.c.h.b16 %v763
    %v2952 = vunpack.c.l.b16 %v764
    %v2953 = vunpack.c.h.b16 %v764
    %v2954 = vunpack.c.l.b16 %v765
    %v2955 = vunpack.c.h.b16 %v765
    %v2956 = vunpack.c.l.b16 %v766
    %v2957 = vunpack.c.h.b16 %v766
    %v2958 = vunpack.c.l.b16 %v767
    %v2959 = vunpack.c.h.b16 %v767
    %v2960 = vunpack.c.l.b16 %v768
    %v2961 = vunpack.c.h.b16 %v768
    %v2962 = vunpack.c.l.b16 %v769
    %v2963 = vunpack.c.h.b16 %v769
    %v2964 = vunpack.c.l.b16 %v770
    %v2965 = vunpack.c.h.b16 %v770
    %v2966 = vunpack.c.l.b16 %v771
    %v2967 = vunpack.c.h.b16 %v771
    %v2968 = vunpack.c.l.b16 %v772
    %v2969 = vunpack.c.h.b16 %v772
    %v2970 = vunpack.c.l.b16 %v773
    %v2971 = vunpack.c.h.b16 %v773
    %v2972 = vunpack.c.l.b16 %v774
    %v2973 = vunpack.c.h.b16 %v774
    %v2974 = vunpack.c.l.b16 %v775
    %v2975 = vunpack.c.h.b16 %v775
    %v2976 = vunpack.c.l.b16 %v776
    %v2977 = vunpack.c.h.b16 %v776
    %v2978 = vunpack.c.l.b16 %v777
    %v2979 = vunpack.c.h.b16 %v777
    %v2980 = vunpack.c.l.b16 %v778
    %v2981 = vunpack.c.h.b16 %v778
    %v2982 = vunpack.c.l.b16 %v779
    %v2983 = vunpack.c.h.b16 %v779
    %v2984 = vunpack.c.l.b16 %v780
    %v2985 = vunpack.c.h.b16 %v780
    %v2986 = vunpack.c.l.b16 %v781
    %v2987 = vunpack.c.h.b16 %v781
    %v2988 = vunpack.c.l.b16 %v782
    %v2989 = vunpack.c.h.b16 %v782
    %v2990 = vunpack.c.l.b16 %v783
    %v2991 = vunpack.c.h.b16 %v783
    %v2992 = vunpack.c.l.b16 %v784
    %v2993 = vunpack.c.h.b16 %v784
    %v2994 = vunpack.c.l.b16 %v785
    %v2995 = vunpack.c.h.b16 %v785
    %v2996 = vunpack.c.l.b16 %v786
    %v2997 = vunpack.c.h.b16 %v786
    %v2998 = vunpack.c.l.b16 %v787
    %v2999 = vunpack.c.h.b16 %v787
    %v3000 = vunpack.c.l.b16 %v788
    %v3001 = vunpack.c.h.b16 %v788
    %v3002 = vunpack.c.l.b16 %v789
    %v3003 = vunpack.c.h.b16 %v789
    %v3004 = vunpack.c.l.b16 %v790
    %v3005 = vunpack.c.h.b16 %v790
    %v3006 = vunpack.c.l.b16 %v791
    %v3007 = vunpack.c.h.b16 %v791
    %v3008 = vunpack.c.l.b16 %v792
    %v3009 = vunpack.c.h.b16 %v792
    %v3010 = vunpack.c.l.b16 %v793
    %v3011 = vunpack.c.h.b16 %v793
    %v3012 = vunpack.c.l.b16 %v794
    %v3013 = vunpack.c.h.b16 %v794
    %v3014 = vunpack.c.l.b16 %v795
    %v3015 = vunpack.c.h.b16 %v795
    %v3016 = vunpack.c.l.b16 %v796
    %v3017 = vunpack.c.h.b16 %v796
    %v3018 = vunpack.c.l.b16 %v797
    %v3019 = vunpack.c.h.b16 %v797
    %v3020 = vunpack.c.l.b16 %v798
    %v3021 = vunpack.c.h.b16 %v798
    %v3022 = vunpack.c.l.b16 %v799
    %v3023 = vunpack.c.h.b16 %v799
    %v3024 = vunpack.c.l.b16 %v800
    %v3025 = vunpack.c.h.b16 %v800
    %v3026 = vunpack.c.l.b16 %v801
    %v3027 = vunpack.c.h.b16 %v801
    %v3028 = vunpack.c.l.b16 %v802
    %v3029 = vunpack.c.h.b16 %v802
    %v3030 = vunpack.c.l.b16 %v803
    %v3031 = vunpack.c.h.b16 %v803
    %v3032 = vunpack.c.l.b16 %v804
    %v3033 = vunpack.c.h.b16 %v804
    %v3034 = vunpack.c.l.b16 %v805
    %v3035 = vunpack.c.h.b16 %v805
    %v3036 = vunpack.c.l.b16 %v806
    %v3037 = vunpack.c.h.b16 %v806
    %v3038 = vunpack.c.l.b16 %v807
    %v3039 = vunpack.c.h.b16 %v807
    %v3040 = vunpack.c.l.b16 %v808
    %v3041 = vunpack.c.h.b16 %v808
    %v3042 = vunpack.c.l.b16 %v809
    %v3043 = vunpack.c.h.b16 %v809
    %v3044 = vunpack.c.l.b16 %v810
    %v3045 = vunpack.c.h.b16 %v810
    %v3046 = vunpack.c.l.b16 %v811
    %v3047 = vunpack.c.h.b16 %v811
    %v3048 = vunpack.c.l.b16 %v812
    %v3049 = vunpack.c.h.b16 %v812
    %v3050 = vunpack.c.l.b16 %v813
    %v3051 = vunpack.c.h.b16 %v813
    %v3052 = vunpack.c.l.b16 %v814
    %v3053 = vunpack.c.h.b16 %v814
    %v3054 = vunpack.c.l.b16 %v815
    %v3055 = vunpack.c.h.b16 %v815
    %v3056 = vunpack.c.l.b16 %v816
    %v3057 = vunpack.c.h.b16 %v816
    %v3058 = vunpack.c.l.b16 %v817
    %v3059 = vunpack.c.h.b16 %v817
    %v3060 = vunpack.c.l.b16 %v818
    %v3061 = vunpack.c.h.b16 %v818
    %v3062 = vunpack.c.l.b16 %v819
    %v3063 = vunpack.c.h.b16 %v819
    %v3064 = vunpack.c.l.b16 %v820
    %v3065 = vunpack.c.h.b16 %v820
    %v3066 = vunpack.c.l.b16 %v821
    %v3067 = vunpack.c.h.b16 %v821
    %v3068 = vunpack.c.l.b16 %v822
    %v3069 = vunpack.c.h.b16 %v822
    %v3070 = vunpack.c.l.b16 %v823
    %v3071 = vunpack.c.h.b16 %v823
    %v3072 = vunpack.c.l.b16 %v824
    %v3073 = vunpack.c.h.b16 %v824
    %v3074 = vunpack.c.l.b16 %v825
    %v3075 = vunpack.c.h.b16 %v825
    %v3076 = vunpack.c.l.b16 %v826
    %v3077 = vunpack.c.h.b16 %v826
    %v3078 = vunpack.c.l.b16 %v827
    %v3079 = vunpack.c.h.b16 %v827
    %v3080 = vunpack.c.l.b16 %v828
    %v3081 = vunpack.c.h.b16 %v828
    %v3082 = vunpack.c.l.b16 %v829
    %v3083 = vunpack.c.h.b16 %v829
    %v3084 = vunpack.c.l.b16 %v830
    %v3085 = vunpack.c.h.b16 %v830
    %v3086 = vunpack.c.l.b16 %v831
    %v3087 = vunpack.c.h.b16 %v831
    %v3088 = vunpack.c.l.b16 %v832
    %v3089 = vunpack.c.h.b16 %v832
    %v3090 = vunpack.c.l.b16 %v833
    %v3091 = vunpack.c.h.b16 %v833
    %v3092 = vunpack.c.l.b16 %v834
    %v3093 = vunpack.c.h.b16 %v834
    %v3094 = vunpack.c.l.b16 %v835
    %v3095 = vunpack.c.h.b16 %v835
    %v3096 = vunpack.c.l.b16 %v836
    %v3097 = vunpack.c.h.b16 %v836
    %v3098 = vunpack.c.l.b16 %v837
    %v3099 = vunpack.c.h.b16 %v837
    %v3100 = vunpack.c.l.b16 %v838
    %v3101 = vunpack.c.h.b16 %v838
    %v3102 = vunpack.c.l.b16 %v839
    %v3103 = vunpack.c.h.b16 %v839
    %v3104 = vunpack.c.l.b16 %v840
    %v3105 = vunpack.c.h.b16 %v840
    %v3106 = vunpack.c.l.b16 %v841
    %v3107 = vunpack.c.h.b16 %v841
    %v3108 = vunpack.c.l.b16 %v842
    %v3109 = vunpack.c.h.b16 %v842
    %v3110 = vunpack.c.l.b16 %v843
    %v3111 = vunpack.c.h.b16 %v843
    %v3112 = vunpack.c.l.b16 %v844
    %v3113 = vunpack.c.h.b16 %v844
    %v3114 = vunpack.c.l.b16 %v845
    %v3115 = vunpack.c.h.b16 %v845
    %v3116 = vunpack.c.l.b16 %v846
    %v3117 = vunpack.c.h.b16 %v846
    %v3118 = vunpack.c.l.b16 %v847
    %v3119 = vunpack.c.h.b16 %v847
    %v3120 = vunpack.c.l.b16 %v848
    %v3121 = vunpack.c.h.b16 %v848
    %v3122 = vunpack.c.l.b16 %v849
    %v3123 = vunpack.c.h.b16 %v849
    %v3124 = vunpack.c.l.b16 %v850
    %v3125 = vunpack.c.h.b16 %v850
    %v3126 = vunpack.c.l.b16 %v851
    %v3127 = vunpack.c.h.b16 %v851
    %v3128 = vunpack.c.l.b16 %v852
    %v3129 = vunpack.c.h.b16 %v852
    %v3130 = vunpack.c.l.b16 %v853
    %v3131 = vunpack.c.h.b16 %v853
    %v3132 = vunpack.c.l.b16 %v854
    %v3133 = vunpack.c.h.b16 %v854
    %v3134 = vunpack.c.l.b16 %v855
    %v3135 = vunpack.c.h.b16 %v855
    %v3136 = vunpack.c.l.b16 %v856
    %v3137 = vunpack.c.h.b16 %v856
    %v3138 = vunpack.c.l.b16 %v857
    %v3139 = vunpack.c.h.b16 %v857
    %v3140 = vunpack.c.l.b16 %v858
    %v3141 = vunpack.c.h.b16 %v858
    %v3142 = vunpack.c.l.b16 %v859
    %v3143 = vunpack.c.h.b16 %v859
    %v3144 = vunpack.c.l.b16 %v860
    %v3145 = vunpack.c.h.b16 %v860
    %v3146 = vunpack.c.l.b16 %v861
    %v3147 = vunpack.c.h.b16 %v861
    %v3148 = vunpack.c.l.b16 %v862
    %v3149 = vunpack.c.h.b16 %v862
    %v3150 = vunpack.c.l.b16 %v863
    %v3151 = vunpack.c.h.b16 %v863
    %v3152 = vunpack.c.l.b16 %v864
    %v3153 = vunpack.c.h.b16 %v864
    %v3154 = vunpack.c.l.b16 %v865
    %v3155 = vunpack.c.h.b16 %v865
    %v3156 = vunpack.c.l.b16 %v866
    %v3157 = vunpack.c.h.b16 %v866
    %v3158 = vunpack.c.l.b16 %v867
    %v3159 = vunpack.c.h.b16 %v867
    %v3160 = vunpack.c.l.b16 %v868
    %v3161 = vunpack.c.h.b16 %v868
    %v3162 = vunpack.c.l.b16 %v869
    %v3163 = vunpack.c.h.b16 %v869
    %v3164 = vunpack.c.l.b16 %v870
    %v3165 = vunpack.c.h.b16 %v870
    %v3166 = vunpack.c.l.b16 %v871
    %v3167 = vunpack.c.h.b16 %v871
    %v3168 = vunpack.c.l.b16 %v872
    %v3169 = vunpack.c.h.b16 %v872
    %v3170 = vunpack.c.l.b16 %v873
    %v3171 = vunpack.c.h.b16 %v873
    %v3172 = vunpack.c.l.b16 %v874
    %v3173 = vunpack.c.h.b16 %v874
    %v3174 = vunpack.c.l.b16 %v875
    %v3175 = vunpack.c.h.b16 %v875
    %v3176 = vunpack.c.l.b16 %v876
    %v3177 = vunpack.c.h.b16 %v876
    %v3178 = vunpack.c.l.b16 %v877
    %v3179 = vunpack.c.h.b16 %v877
    %v3180 = vunpack.c.l.b16 %v878
    %v3181 = vunpack.c.h.b16 %v878
    %v3182 = vunpack.c.l.b16 %v879
    %v3183 = vunpack.c.h.b16 %v879
    %v3184 = vunpack.c.l.b16 %v880
    %v3185 = vunpack.c.h.b16 %v880
    %v3186 = vunpack.c.l.b16 %v881
    %v3187 = vunpack.c.h.b16 %v881
    %v3188 = vunpack.c.l.b16 %v882
    %v3189 = vunpack.c.h.b16 %v882
    %v3190 = vunpack.c.l.b16 %v883
    %v3191 = vunpack.c.h.b16 %v883
    %v3192 = vunpack.c.l.b16 %v884
    %v3193 = vunpack.c.h.b16 %v884
    %v3194 = vunpack.c.l.b16 %v885
    %v3195 = vunpack.c.h.b16 %v885
    %v3196 = vunpack.c.l.b16 %v886
    %v3197 = vunpack.c.h.b16 %v886
    %v3198 = vunpack.c.l.b16 %v887
    %v3199 = vunpack.c.h.b16 %v887
    %v3200 = vunpack.c.l.b16 %v888
    %v3201 = vunpack.c.h.b16 %v888
    %v3202 = vunpack.c.l.b16 %v889
    %v3203 = vunpack.c.h.b16 %v889
    %v3204 = vunpack.c.l.b16 %v890
    %v3205 = vunpack.c.h.b16 %v890
    %v3206 = vunpack.c.l.b16 %v891
    %v3207 = vunpack.c.h.b16 %v891
    %v3208 = vunpack.c.l.b16 %v892
    %v3209 = vunpack.c.h.b16 %v892
    %v3210 = vunpack.c.l.b16 %v893
    %v3211 = vunpack.c.h.b16 %v893
    %v3212 = vunpack.c.l.b16 %v894
    %v3213 = vunpack.c.h.b16 %v894
    %v3214 = vunpack.c.l.b16 %v895
    %v3215 = vunpack.c.h.b16 %v895
    %v3216 = vunpack.c.l.b16 %v896
    %v3217 = vunpack.c.h.b16 %v896
    %v3218 = vunpack.c.l.b16 %v897
    %v3219 = vunpack.c.h.b16 %v897
    %v3220 = vunpack.c.l.b16 %v898
    %v3221 = vunpack.c.h.b16 %v898
    %v3222 = vunpack.c.l.b16 %v899
    %v3223 = vunpack.c.h.b16 %v899
    %v3224 = vunpack.c.l.b16 %v900
    %v3225 = vunpack.c.h.b16 %v900
    %v3226 = vunpack.c.l.b16 %v901
    %v3227 = vunpack.c.h.b16 %v901
    %v3228 = vunpack.c.l.b16 %v902
    %v3229 = vunpack.c.h.b16 %v902
    %v3230 = vunpack.c.l.b16 %v903
    %v3231 = vunpack.c.h.b16 %v903
    %v3232 = vunpack.c.l.b16 %v904
    %v3233 = vunpack.c.h.b16 %v904
    %v3234 = vunpack.c.l.b16 %v905
    %v3235 = vunpack.c.h.b16 %v905
    %v3236 = vunpack.c.l.b16 %v906
    %v3237 = vunpack.c.h.b16 %v906
    %v3238 = vunpack.c.l.b16 %v907
    %v3239 = vunpack.c.h.b16 %v907
    %v3240 = vunpack.c.l.b16 %v908
    %v3241 = vunpack.c.h.b16 %v908
    %v3242 = vunpack.c.l.b16 %v909
    %v3243 = vunpack.c.h.b16 %v909
    %v3244 = vunpack.c.l.b16 %v910
    %v3245 = vunpack.c.h.b16 %v910
    %v3246 = vunpack.c.l.b16 %v911
    %v3247 = vunpack.c.h.b16 %v911
    %v3248 = vunpack.c.l.b16 %v912
    %v3249 = vunpack.c.h.b16 %v912
    %v3250 = vpack.c.b16 %v1710, %v1706
    %v3251 = vpack.c.b16 %v1711, %v1707
    %v3252 = vpack.c.b16 %v1712, %v1708
    %v3253 = vpack.c.b16 %v1713, %v1709
    %v3254 = vpack.c.b16 %v1718, %v1714
    %v3255 = vpack.c.b16 %v1719, %v1715
    %v3256 = vpack.c.b16 %v1720, %v1716
    %v3257 = vpack.c.b16 %v1721, %v1717
    %v3258 = vpack.c.b16 %v1726, %v1722
    %v3259 = vpack.c.b16 %v1727, %v1723
    %v3260 = vpack.c.b16 %v1728, %v1724
    %v3261 = vpack.c.b16 %v1729, %v1725
    %v3262 = vpack.c.b16 %v1734, %v1730
    %v3263 = vpack.c.b16 %v1735, %v1731
    %v3264 = vpack.c.b16 %v1736, %v1732
    %v3265 = vpack.c.b16 %v1737, %v1733
    %v3266 = vpack.c.b16 %v1742, %v1738
    %v3267 = vpack.c.b16 %v1743, %v1739
    %v3268 = vpack.c.b16 %v1744, %v1740
    %v3269 = vpack.c.b16 %v1745, %v1741
    %v3270 = vpack.c.b16 %v1750, %v1746
    %v3271 = vpack.c.b16 %v1751, %v1747
    %v3272 = vpack.c.b16 %v1752, %v1748
    %v3273 = vpack.c.b16 %v1753, %v1749
    %v3274 = vpack.c.b16 %v1758, %v1754
    %v3275 = vpack.c.b16 %v1759, %v1755
    %v3276 = vpack.c.b16 %v1760, %v1756
    %v3277 = vpack.c.b16 %v1761, %v1757
    %v3278 = vpack.c.b16 %v1766, %v1762
    %v3279 = vpack.c.b16 %v1767, %v1763
    %v3280 = vpack.c.b16 %v1768, %v1764
    %v3281 = vpack.c.b16 %v1769, %v1765
    %v3282 = vpack.c.b16 %v1774, %v1770
    %v3283 = vpack.c.b16 %v1775, %v1771
    %v3284 = vpack.c.b16 %v1776, %v1772
    %v3285 = vpack.c.b16 %v1777, %v1773
    %v3286 = vpack.c.b16 %v1782, %v1778
    %v3287 = vpack.c.b16 %v1783, %v1779
    %v3288 = vpack.c.b16 %v1784, %v1780
    %v3289 = vpack.c.b16 %v1785, %v1781
    %v3290 = vpack.c.b16 %v1790, %v1786
    %v3291 = vpack.c.b16 %v1791, %v1787
    %v3292 = vpack.c.b16 %v1792, %v1788
    %v3293 = vpack.c.b16 %v1793, %v1789
    %v3294 = vpack.c.b16 %v1798, %v1794
    %v3295 = vpack.c.b16 %v1799, %v1795
    %v3296 = vpack.c.b16 %v1800, %v1796
    %v3297 = vpack.c.b16 %v1801, %v1797
    %v3298 = vpack.c.b16 %v1806, %v1802
    %v3299 = vpack.c.b16 %v1807, %v1803
    %v3300 = vpack.c.b16 %v1808, %v1804
    %v3301 = vpack.c.b16 %v1809, %v1805
    %v3302 = vpack.c.b16 %v1814, %v1810
    %v3303 = vpack.c.b16 %v1815, %v1811
    %v3304 = vpack.c.b16 %v1816, %v1812
    %v3305 = vpack.c.b16 %v1817, %v1813
    %v3306 = vpack.c.b16 %v1822, %v1818
    %v3307 = vpack.c.b16 %v1823, %v1819
    %v3308 = vpack.c.b16 %v1824, %v1820
    %v3309 = vpack.c.b16 %v1825, %v1821
    %v3310 = vpack.c.b16 %v1830, %v1826
    %v3311 = vpack.c.b16 %v1831, %v1827
    %v3312 = vpack.c.b16 %v1832, %v1828
    %v3313 = vpack.c.b16 %v1833, %v1829
    %v3314 = vpack.c.b16 %v1838, %v1834
    %v3315 = vpack.c.b16 %v1839, %v1835
    %v3316 = vpack.c.b16 %v1840, %v1836
    %v3317 = vpack.c.b16 %v1841, %v1837
    %v3318 = vpack.c.b16 %v1846, %v1842
    %v3319 = vpack.c.b16 %v1847, %v1843
    %v3320 = vpack.c.b16 %v1848, %v1844
    %v3321 = vpack.c.b16 %v1849, %v1845
    %v3322 = vpack.c.b16 %v1854, %v1850
    %v3323 = vpack.c.b16 %v1855, %v1851
    %v3324 = vpack.c.b16 %v1856, %v1852
    %v3325 = vpack.c.b16 %v1857, %v1853
    %v3326 = vpack.c.b16 %v1862, %v1858
    %v3327 = vpack.c.b16 %v1863, %v1859
    %v3328 = vpack.c.b16 %v1864, %v1860
    %v3329 = vpack.c.b16 %v1865, %v1861
    %v3330 = vpack.c.b16 %v1870, %v1866
    %v3331 = vpack.c.b16 %v1871, %v1867
    %v3332 = vpack.c.b16 %v1872, %v1868
    %v3333 = vpack.c.b16 %v1873, %v1869
    %v3334 = vpack.c.b16 %v1878, %v1874
    %v3335 = vpack.c.b16 %v1879, %v1875
    %v3336 = vpack.c.b16 %v1880, %v1876
    %v3337 = vpack.c.b16 %v1881, %v1877
    %v3338 = vpack.c.b16 %v1886, %v1882
    %v3339 = vpack.c.b16 %v1887, %v1883
    %v3340 = vpack.c.b16 %v1888, %v1884
    %v3341 = vpack.c.b16 %v1889, %v1885
    %v3342 = vpack.c.b16 %v1894, %v1890
    %v3343 = vpack.c.b16 %v1895, %v1891
    %v3344 = vpack.c.b16 %v1896, %v1892
    %v3345 = vpack.c.b16 %v1897, %v1893
    %v3346 = vpack.c.b16 %v1902, %v1898
    %v3347 = vpack.c.b16 %v1903, %v1899
    %v3348 = vpack.c.b16 %v1904, %v1900
    %v3349 = vpack.c.b16 %v1905, %v1901
    %v3350 = vpack.c.b16 %v1910, %v1906
    %v3351 = vpack.c.b16 %v1911, %v1907
    %v3352 = vpack.c.b16 %v1912, %v1908
    %v3353 = vpack.c.b16 %v1913, %v1909
    %v3354 = vpack.c.b16 %v1918, %v1914
    %v3355 = vpack.c.b16 %v1919, %v1915
    %v3356 = vpack.c.b16 %v1920, %v1916
    %v3357 = vpack.c.b16 %v1921, %v1917
    %v3358 = vpack.c.b16 %v1926, %v1922
    %v3359 = vpack.c.b16 %v1927, %v1923
    %v3360 = vpack.c.b16 %v1928, %v1924
    %v3361 = vpack.c.b16 %v1929, %v1925
    %v3362 = vpack.c.b16 %v1934, %v1930
    %v3363 = vpack.c.b16 %v1935, %v1931
    %v3364 = vpack.c.b16 %v1936, %v1932
    %v3365 = vpack.c.b16 %v1937, %v1933
    %v3366 = vpack.c.b16 %v1942, %v1938
    %v3367 = vpack.c.b16 %v1943, %v1939
    %v3368 = vpack.c.b16 %v1944, %v1940
    %v3369 = vpack.c.b16 %v1945, %v1941
    %v3370 = vpack.c.b16 %v1950, %v1946
    %v3371 = vpack.c.b16 %v1951, %v1947
    %v3372 = vpack.c.b16 %v1952, %v1948
    %v3373 = vpack.c.b16 %v1953, %v1949
    %v3374 = vpack.c.b16 %v1958, %v1954
    %v3375 = vpack.c.b16 %v1959, %v1955
    %v3376 = vpack.c.b16 %v1960, %v1956
    %v3377 = vpack.c.b16 %v1961, %v1957
    %v3378 = vpack.c.b16 %v1966, %v1962
    %v3379 = vpack.c.b16 %v1967, %v1963
    %v3380 = vpack.c.b16 %v1968, %v1964
    %v3381 = vpack.c.b16 %v1969, %v1965
    %v3382 = vpack.c.b16 %v1974, %v1970
    %v3383 = vpack.c.b16 %v1975, %v1971
    %v3384 = vpack.c.b16 %v1976, %v1972
    %v3385 = vpack.c.b16 %v1977, %v1973
    %v3386 = vpack.c.b16 %v1982, %v1978
    %v3387 = vpack.c.b16 %v1983, %v1979
    %v3388 = vpack.c.b16 %v1984, %v1980
    %v3389 = vpack.c.b16 %v1985, %v1981
    %v3390 = vpack.c.b16 %v1990, %v1986
    %v3391 = vpack.c.b16 %v1991, %v1987
    %v3392 = vpack.c.b16 %v1992, %v1988
    %v3393 = vpack.c.b16 %v1993, %v1989
    %v3394 = vpack.c.b16 %v1998, %v1994
    %v3395 = vpack.c.b16 %v1999, %v1995
    %v3396 = vpack.c.b16 %v2000, %v1996
    %v3397 = vpack.c.b16 %v2001, %v1997
    %v3398 = vpack.c.b16 %v2006, %v2002
    %v3399 = vpack.c.b16 %v2007, %v2003
    %v3400 = vpack.c.b16 %v2008, %v2004
    %v3401 = vpack.c.b16 %v2009, %v2005
    %v3402 = vpack.c.b16 %v2014, %v2010
    %v3403 = vpack.c.b16 %v2015, %v2011
    %v3404 = vpack.c.b16 %v2016, %v2012
    %v3405 = vpack.c.b16 %v2017, %v2013
    %v3406 = vpack.c.b16 %v2022, %v2018
    %v3407 = vpack.c.b16 %v2023, %v2019
    %v3408 = vpack.c.b16 %v2024, %v2020
    %v3409 = vpack.c.b16 %v2025, %v2021
    %v3410 = vpack.c.b16 %v2030, %v2026
    %v3411 = vpack.c.b16 %v2031, %v2027
    %v3412 = vpack.c.b16 %v2032, %v2028
    %v3413 = vpack.c.b16 %v2033, %v2029
    %v3414 = vpack.c.b16 %v2038, %v2034
    %v3415 = vpack.c.b16 %v2039, %v2035
    %v3416 = vpack.c.b16 %v2040, %v2036
    %v3417 = vpack.c.b16 %v2041, %v2037
    %v3418 = vpack.c.b16 %v2046, %v2042
    %v3419 = vpack.c.b16 %v2047, %v2043
    %v3420 = vpack.c.b16 %v2048, %v2044
    %v3421 = vpack.c.b16 %v2049, %v2045
    %v3422 = vpack.c.b16 %v2054, %v2050
    %v3423 = vpack.c.b16 %v2055, %v2051
    %v3424 = vpack.c.b16 %v2056, %v2052
    %v3425 = vpack.c.b16 %v2057, %v2053
    %v3426 = vpack.c.b16 %v2062, %v2058
    %v3427 = vpack.c.b16 %v2063, %v2059
    %v3428 = vpack.c.b16 %v2064, %v2060
    %v3429 = vpack.c.b16 %v2065, %v2061
    %v3430 = vpack.c.b16 %v2070, %v2066
    %v3431 = vpack.c.b16 %v2071, %v2067
    %v3432 = vpack.c.b16 %v2072, %v2068
    %v3433 = vpack.c.b16 %v2073, %v2069
    %v3434 = vpack.c.b16 %v2078, %v2074
    %v3435 = vpack.c.b16 %v2079, %v2075
    %v3436 = vpack.c.b16 %v2080, %v2076
    %v3437 = vpack.c.b16 %v2081, %v2077
    %v3438 = vpack.c.b16 %v2086, %v2082
    %v3439 = vpack.c.b16 %v2087, %v2083
    %v3440 = vpack.c.b16 %v2088, %v2084
    %v3441 = vpack.c.b16 %v2089, %v2085
    %v3442 = vpack.c.b16 %v2094, %v2090
    %v3443 = vpack.c.b16 %v2095, %v2091
    %v3444 = vpack.c.b16 %v2096, %v2092
    %v3445 = vpack.c.b16 %v2097, %v2093
    %v3446 = vpack.c.b16 %v2102, %v2098
    %v3447 = vpack.c.b16 %v2103, %v2099
    %v3448 = vpack.c.b16 %v2104, %v2100
    %v3449 = vpack.c.b16 %v2105, %v2101
    %v3450 = vpack.c.b16 %v2110, %v2106
    %v3451 = vpack.c.b16 %v2111, %v2107
    %v3452 = vpack.c.b16 %v2112, %v2108
    %v3453 = vpack.c.b16 %v2113, %v2109
    %v3454 = vpack.c.b16 %v2118, %v2114
    %v3455 = vpack.c.b16 %v2119, %v2115
    %v3456 = vpack.c.b16 %v2120, %v2116
    %v3457 = vpack.c.b16 %v2121, %v2117
    %v3458 = vpack.c.b16 %v2126, %v2122
    %v3459 = vpack.c.b16 %v2127, %v2123
    %v3460 = vpack.c.b16 %v2128, %v2124
    %v3461 = vpack.c.b16 %v2129, %v2125
    %v3462 = vpack.c.b16 %v2134, %v2130
    %v3463 = vpack.c.b16 %v2135, %v2131
    %v3464 = vpack.c.b16 %v2136, %v2132
    %v3465 = vpack.c.b16 %v2137, %v2133
    %v3466 = vpack.c.b16 %v2142, %v2138
    %v3467 = vpack.c.b16 %v2143, %v2139
    %v3468 = vpack.c.b16 %v2144, %v2140
    %v3469 = vpack.c.b16 %v2145, %v2141
    %v3470 = vpack.c.b16 %v2150, %v2146
    %v3471 = vpack.c.b16 %v2151, %v2147
    %v3472 = vpack.c.b16 %v2152, %v2148
    %v3473 = vpack.c.b16 %v2153, %v2149
    %v3474 = vpack.c.b16 %v2158, %v2154
    %v3475 = vpack.c.b16 %v2159, %v2155
    %v3476 = vpack.c.b16 %v2160, %v2156
    %v3477 = vpack.c.b16 %v2161, %v2157
    %v3478 = vpack.c.b16 %v2166, %v2162
    %v3479 = vpack.c.b16 %v2167, %v2163
    %v3480 = vpack.c.b16 %v2168, %v2164
    %v3481 = vpack.c.b16 %v2169, %v2165
    %v3482 = vpack.c.b16 %v2174, %v2170
    %v3483 = vpack.c.b16 %v2175, %v2171
    %v3484 = vpack.c.b16 %v2176, %v2172
    %v3485 = vpack.c.b16 %v2177, %v2173
    %v3486 = vpack.c.b16 %v2182, %v2178
    %v3487 = vpack.c.b16 %v2183, %v2179
    %v3488 = vpack.c.b16 %v2184, %v2180
    %v3489 = vpack.c.b16 %v2185, %v2181
    %v3490 = vpack.c.b16 %v2190, %v2186
    %v3491 = vpack.c.b16 %v2191, %v2187
    %v3492 = vpack.c.b16 %v2192, %v2188
    %v3493 = vpack.c.b16 %v2193, %v2189
    %v3494 = vpack.c.b16 %v2198, %v2194
    %v3495 = vpack.c.b16 %v2199, %v2195
    %v3496 = vpack.c.b16 %v2200, %v2196
    %v3497 = vpack.c.b16 %v2201, %v2197
    %v3498 = vpack.c.b16 %v2206, %v2202
    %v3499 = vpack.c.b16 %v2207, %v2203
    %v3500 = vpack.c.b16 %v2208, %v2204
    %v3501 = vpack.c.b16 %v2209, %v2205
    %v3502 = vpack.c.b16 %v2214, %v2210
    %v3503 = vpack.c.b16 %v2215, %v2211
    %v3504 = vpack.c.b16 %v2216, %v2212
    %v3505 = vpack.c.b16 %v2217, %v2213
    %v3506 = vpack.c.b16 %v2222, %v2218
    %v3507 = vpack.c.b16 %v2223, %v2219
    %v3508 = vpack.c.b16 %v2224, %v2220
    %v3509 = vpack.c.b16 %v2225, %v2221
    %v3510 = vpack.c.b16 %v2230, %v2226
    %v3511 = vpack.c.b16 %v2231, %v2227
    %v3512 = vpack.c.b16 %v2232, %v2228
    %v3513 = vpack.c.b16 %v2233, %v2229
    %v3514 = vpack.c.b16 %v2238, %v2234
    %v3515 = vpack.c.b16 %v2239, %v2235
    %v3516 = vpack.c.b16 %v2240, %v2236
    %v3517 = vpack.c.b16 %v2241, %v2237
    %v3518 = vpack.c.b16 %v2246, %v2242
    %v3519 = vpack.c.b16 %v2247, %v2243
    %v3520 = vpack.c.b16 %v2248, %v2244
    %v3521 = vpack.c.b16 %v2249, %v2245
    %v3522 = vpack.c.b16 %v2254, %v2250
    %v3523 = vpack.c.b16 %v2255, %v2251
    %v3524 = vpack.c.b16 %v2256, %v2252
    %v3525 = vpack.c.b16 %v2257, %v2253
    %v3526 = vpack.c.b16 %v2262, %v2258
    %v3527 = vpack.c.b16 %v2263, %v2259
    %v3528 = vpack.c.b16 %v2264, %v2260
    %v3529 = vpack.c.b16 %v2265, %v2261
    %v3530 = vpack.c.b16 %v2270, %v2266
    %v3531 = vpack.c.b16 %v2271, %v2267
    %v3532 = vpack.c.b16 %v2272, %v2268
    %v3533 = vpack.c.b16 %v2273, %v2269
    %v3534 = vpack.c.b16 %v2278, %v2274
    %v3535 = vpack.c.b16 %v2279, %v2275
    %v3536 = vpack.c.b16 %v2280, %v2276
    %v3537 = vpack.c.b16 %v2281, %v2277
    %v3538 = vpack.c.b16 %v2286, %v2282
    %v3539 = vpack.c.b16 %v2287, %v2283
    %v3540 = vpack.c.b16 %v2288, %v2284
    %v3541 = vpack.c.b16 %v2289, %v2285
    %v3542 = vpack.c.b16 %v2294, %v2290
    %v3543 = vpack.c.b16 %v2295, %v2291
    %v3544 = vpack.c.b16 %v2296, %v2292
    %v3545 = vpack.c.b16 %v2297, %v2293
    %v3546 = vpack.c.b16 %v2302, %v2298
    %v3547 = vpack.c.b16 %v2303, %v2299
    %v3548 = vpack.c.b16 %v2304, %v2300
    %v3549 = vpack.c.b16 %v2305, %v2301
    %v3550 = vpack.c.b16 %v2310, %v2306
    %v3551 = vpack.c.b16 %v2311, %v2307
    %v3552 = vpack.c.b16 %v2312, %v2308
    %v3553 = vpack.c.b16 %v2313, %v2309
    %v3554 = vpack.c.b16 %v2318, %v2314
    %v3555 = vpack.c.b16 %v2319, %v2315
    %v3556 = vpack.c.b16 %v2320, %v2316
    %v3557 = vpack.c.b16 %v2321, %v2317
    %v3558 = vpack.c.b16 %v2326, %v2322
    %v3559 = vpack.c.b16 %v2327, %v2323
    %v3560 = vpack.c.b16 %v2328, %v2324
    %v3561 = vpack.c.b16 %v2329, %v2325
    %v3562 = vpack.c.b16 %v2334, %v2330
    %v3563 = vpack.c.b16 %v2335, %v2331
    %v3564 = vpack.c.b16 %v2336, %v2332
    %v3565 = vpack.c.b16 %v2337, %v2333
    %v3566 = vpack.c.b16 %v2342, %v2338
    %v3567 = vpack.c.b16 %v2343, %v2339
    %v3568 = vpack.c.b16 %v2344, %v2340
    %v3569 = vpack.c.b16 %v2345, %v2341
    %v3570 = vpack.c.b16 %v2350, %v2346
    %v3571 = vpack.c.b16 %v2351, %v2347
    %v3572 = vpack.c.b16 %v2352, %v2348
    %v3573 = vpack.c.b16 %v2353, %v2349
    %v3574 = vpack.c.b16 %v2358, %v2354
    %v3575 = vpack.c.b16 %v2359, %v2355
    %v3576 = vpack.c.b16 %v2360, %v2356
    %v3577 = vpack.c.b16 %v2361, %v2357
    %v3578 = vpack.c.b16 %v2366, %v2362
    %v3579 = vpack.c.b16 %v2367, %v2363
    %v3580 = vpack.c.b16 %v2368, %v2364
    %v3581 = vpack.c.b16 %v2369, %v2365
    %v3582 = vpack.c.b16 %v2374, %v2370
    %v3583 = vpack.c.b16 %v2375, %v2371
    %v3584 = vpack.c.b16 %v2376, %v2372
    %v3585 = vpack.c.b16 %v2377, %v2373
    %v3586 = vpack.c.b16 %v2382, %v2378
    %v3587 = vpack.c.b16 %v2383, %v2379
    %v3588 = vpack.c.b16 %v2384, %v2380
    %v3589 = vpack.c.b16 %v2385, %v2381
    %v3590 = vpack.c.b16 %v2390, %v2386
    %v3591 = vpack.c.b16 %v2391, %v2387
    %v3592 = vpack.c.b16 %v2392, %v2388
    %v3593 = vpack.c.b16 %v2393, %v2389
    %v3594 = vpack.c.b16 %v2398, %v2394
    %v3595 = vpack.c.b16 %v2399, %v2395
    %v3596 = vpack.c.b16 %v2400, %v2396
    %v3597 = vpack.c.b16 %v2401, %v2397
    %v3598 = vpack.c.b16 %v2406, %v2402
    %v3599 = vpack.c.b16 %v2407, %v2403
    %v3600 = vpack.c.b16 %v2408, %v2404
    %v3601 = vpack.c.b16 %v2409, %v2405
    %v3602 = vpack.c.b16 %v2414, %v2410
    %v3603 = vpack.c.b16 %v2415, %v2411
    %v3604 = vpack.c.b16 %v2416, %v2412
    %v3605 = vpack.c.b16 %v2417, %v2413
    %v3606 = vpack.c.b16 %v2422, %v2418
    %v3607 = vpack.c.b16 %v2423, %v2419
    %v3608 = vpack.c.b16 %v2424, %v2420
    %v3609 = vpack.c.b16 %v2425, %v2421
    %v3610 = vpack.c.b16 %v2430, %v2426
    %v3611 = vpack.c.b16 %v2431, %v2427
    %v3612 = vpack.c.b16 %v2432, %v2428
    %v3613 = vpack.c.b16 %v2433, %v2429
    %v3614 = vpack.c.b16 %v2438, %v2434
    %v3615 = vpack.c.b16 %v2439, %v2435
    %v3616 = vpack.c.b16 %v2440, %v2436
    %v3617 = vpack.c.b16 %v2441, %v2437
    %v3618 = vpack.c.b16 %v2446, %v2442
    %v3619 = vpack.c.b16 %v2447, %v2443
    %v3620 = vpack.c.b16 %v2448, %v2444
    %v3621 = vpack.c.b16 %v2449, %v2445
    %v3622 = vpack.c.b16 %v2454, %v2450
    %v3623 = vpack.c.b16 %v2455, %v2451
    %v3624 = vpack.c.b16 %v2456, %v2452
    %v3625 = vpack.c.b16 %v2457, %v2453
    %v3626 = vpack.c.b16 %v2462, %v2458
    %v3627 = vpack.c.b16 %v2463, %v2459
    %v3628 = vpack.c.b16 %v2464, %v2460
    %v3629 = vpack.c.b16 %v2465, %v2461
    %v3630 = vpack.c.b16 %v2470, %v2466
    %v3631 = vpack.c.b16 %v2471, %v2467
    %v3632 = vpack.c.b16 %v2472, %v2468
    %v3633 = vpack.c.b16 %v2473, %v2469
    %v3634 = vpack.c.b16 %v2478, %v2474
    %v3635 = vpack.c.b16 %v2479, %v2475
    %v3636 = vpack.c.b16 %v2480, %v2476
    %v3637 = vpack.c.b16 %v2481, %v2477
    %v3638 = vpack.c.b16 %v2486, %v2482
    %v3639 = vpack.c.b16 %v2487, %v2483
    %v3640 = vpack.c.b16 %v2488, %v2484
    %v3641 = vpack.c.b16 %v2489, %v2485
    %v3642 = vpack.c.b16 %v2494, %v2490
    %v3643 = vpack.c.b16 %v2495, %v2491
    %v3644 = vpack.c.b16 %v2496, %v2492
    %v3645 = vpack.c.b16 %v2497, %v2493
    %v3646 = vpack.c.b16 %v2502, %v2498
    %v3647 = vpack.c.b16 %v2503, %v2499
    %v3648 = vpack.c.b16 %v2504, %v2500
    %v3649 = vpack.c.b16 %v2505, %v2501
    %v3650 = vpack.c.b16 %v2510, %v2506
    %v3651 = vpack.c.b16 %v2511, %v2507
    %v3652 = vpack.c.b16 %v2512, %v2508
    %v3653 = vpack.c.b16 %v2513, %v2509
    %v3654 = vpack.c.b16 %v2518, %v2514
    %v3655 = vpack.c.b16 %v2519, %v2515
    %v3656 = vpack.c.b16 %v2520, %v2516
    %v3657 = vpack.c.b16 %v2521, %v2517
    %v3658 = vpack.c.b16 %v2526, %v2522
    %v3659 = vpack.c.b16 %v2527, %v2523
    %v3660 = vpack.c.b16 %v2528, %v2524
    %v3661 = vpack.c.b16 %v2529, %v2525
    %v3662 = vpack.c.b16 %v2534, %v2530
    %v3663 = vpack.c.b16 %v2535, %v2531
    %v3664 = vpack.c.b16 %v2536, %v2532
    %v3665 = vpack.c.b16 %v2537, %v2533
    %v3666 = vpack.c.b16 %v2542, %v2538
    %v3667 = vpack.c.b16 %v2543, %v2539
    %v3668 = vpack.c.b16 %v2544, %v2540
    %v3669 = vpack.c.b16 %v2545, %v2541
    %v3670 = vpack.c.b16 %v2550, %v2546
    %v3671 = vpack.c.b16 %v2551, %v2547
    %v3672 = vpack.c.b16 %v2552, %v2548
    %v3673 = vpack.c.b16 %v2553, %v2549
    %v3674 = vpack.c.b16 %v2558, %v2554
    %v3675 = vpack.c.b16 %v2559, %v2555
    %v3676 = vpack.c.b16 %v2560, %v2556
    %v3677 = vpack.c.b16 %v2561, %v2557
    %v3678 = vpack.c.b16 %v2566, %v2562
    %v3679 = vpack.c.b16 %v2567, %v2563
    %v3680 = vpack.c.b16 %v2568, %v2564
    %v3681 = vpack.c.b16 %v2569, %v2565
    %v3682 = vpack.c.b16 %v2574, %v2570
    %v3683 = vpack.c.b16 %v2575, %v2571
    %v3684 = vpack.c.b16 %v2576, %v2572
    %v3685 = vpack.c.b16 %v2577, %v2573
    %v3686 = vpack.c.b16 %v2582, %v2578
    %v3687 = vpack.c.b16 %v2583, %v2579
    %v3688 = vpack.c.b16 %v2584, %v2580
    %v3689 = vpack.c.b16 %v2585, %v2581
    %v3690 = vpack.c.b16 %v2590, %v2586
    %v3691 = vpack.c.b16 %v2591, %v2587
    %v3692 = vpack.c.b16 %v2592, %v2588
    %v3693 = vpack.c.b16 %v2593, %v2589
    %v3694 = vpack.c.b16 %v2598, %v2594
    %v3695 = vpack.c.b16 %v2599, %v2595
    %v3696 = vpack.c.b16 %v2600, %v2596
    %v3697 = vpack.c.b16 %v2601, %v2597
    %v3698 = vpack.c.b16 %v2606, %v2602
    %v3699 = vpack.c.b16 %v2607, %v2603
    %v3700 = vpack.c.b16 %v2608, %v2604
    %v3701 = vpack.c.b16 %v2609, %v2605
    %v3702 = vpack.c.b16 %v2614, %v2610
    %v3703 = vpack.c.b16 %v2615, %v2611
    %v3704 = vpack.c.b16 %v2616, %v2612
    %v3705 = vpack.c.b16 %v2617, %v2613
    %v3706 = vpack.c.b16 %v2622, %v2618
    %v3707 = vpack.c.b16 %v2623, %v2619
    %v3708 = vpack.c.b16 %v2624, %v2620
    %v3709 = vpack.c.b16 %v2625, %v2621
    %v3710 = vpack.c.b16 %v2630, %v2626
    %v3711 = vpack.c.b16 %v2631, %v2627
    %v3712 = vpack.c.b16 %v2632, %v2628
    %v3713 = vpack.c.b16 %v2633, %v2629
    %v3714 = vpack.c.b16 %v2638, %v2634
    %v3715 = vpack.c.b16 %v2639, %v2635
    %v3716 = vpack.c.b16 %v2640, %v2636
    %v3717 = vpack.c.b16 %v2641, %v2637
    %v3718 = vpack.c.b16 %v2646, %v2642
    %v3719 = vpack.c.b16 %v2647, %v2643
    %v3720 = vpack.c.b16 %v2648, %v2644
    %v3721 = vpack.c.b16 %v2649, %v2645
    %v3722 = vpack.c.b16 %v2654, %v2650
    %v3723 = vpack.c.b16 %v2655, %v2651
    %v3724 = vpack.c.b16 %v2656, %v2652
    %v3725 = vpack.c.b16 %v2657, %v2653
    %v3726 = vpack.c.b16 %v2662, %v2658
    %v3727 = vpack.c.b16 %v2663, %v2659
    %v3728 = vpack.c.b16 %v2664, %v2660
    %v3729 = vpack.c.b16 %v2665, %v2661
    %v3730 = vpack.c.b16 %v2670, %v2666
    %v3731 = vpack.c.b16 %v2671, %v2667
    %v3732 = vpack.c.b16 %v2672, %v2668
    %v3733 = vpack.c.b16 %v2673, %v2669
    %v3734 = vpack.c.b16 %v2678, %v2674
    %v3735 = vpack.c.b16 %v2679, %v2675
    %v3736 = vpack.c.b16 %v2680, %v2676
    %v3737 = vpack.c.b16 %v2681, %v2677
    %v3738 = vpack.c.b16 %v2686, %v2682
    %v3739 = vpack.c.b16 %v2687, %v2683
    %v3740 = vpack.c.b16 %v2688, %v2684
    %v3741 = vpack.c.b16 %v2689, %v2685
    %v3742 = vpack.c.b16 %v2694, %v2690
    %v3743 = vpack.c.b16 %v2695, %v2691
    %v3744 = vpack.c.b16 %v2696, %v2692
    %v3745 = vpack.c.b16 %v2697, %v2693
    %v3746 = vpack.c.b16 %v2702, %v2698
    %v3747 = vpack.c.b16 %v2703, %v2699
    %v3748 = vpack.c.b16 %v2704, %v2700
    %v3749 = vpack.c.b16 %v2705, %v2701
    %v3750 = vpack.c.b16 %v2710, %v2706
    %v3751 = vpack.c.b16 %v2711, %v2707
    %v3752 = vpack.c.b16 %v2712, %v2708
    %v3753 = vpack.c.b16 %v2713, %v2709
    %v3754 = vpack.c.b16 %v2718, %v2714
    %v3755 = vpack.c.b16 %v2719, %v2715
    %v3756 = vpack.c.b16 %v2720, %v2716
    %v3757 = vpack.c.b16 %v2721, %v2717
    %v3758 = vpack.c.b16 %v2726, %v2722
    %v3759 = vpack.c.b16 %v2727, %v2723
    %v3760 = vpack.c.b16 %v2728, %v2724
    %v3761 = vpack.c.b16 %v2729, %v2725
    %v3762 = vpack.c.b16 %v2734, %v2730
    %v3763 = vpack.c.b16 %v2735, %v2731
    %v3764 = vpack.c.b16 %v2736, %v2732
    %v3765 = vpack.c.b16 %v2737, %v2733
    %v3766 = vpack.c.b16 %v2742, %v2738
    %v3767 = vpack.c.b16 %v2743, %v2739
    %v3768 = vpack.c.b16 %v2744, %v2740
    %v3769 = vpack.c.b16 %v2745, %v2741
    %v3770 = vpack.c.b16 %v2750, %v2746
    %v3771 = vpack.c.b16 %v2751, %v2747
    %v3772 = vpack.c.b16 %v2752, %v2748
    %v3773 = vpack.c.b16 %v2753, %v2749
    %v3774 = vpack.c.b16 %v2758, %v2754
    %v3775 = vpack.c.b16 %v2759, %v2755
    %v3776 = vpack.c.b16 %v2760, %v2756
    %v3777 = vpack.c.b16 %v2761, %v2757
    %v3778 = vpack.c.b16 %v2766, %v2762
    %v3779 = vpack.c.b16 %v2767, %v2763
    %v3780 = vpack.c.b16 %v2768, %v2764
    %v3781 = vpack.c.b16 %v2769, %v2765
    %v3782 = vpack.c.b16 %v2774, %v2770
    %v3783 = vpack.c.b16 %v2775, %v2771
    %v3784 = vpack.c.b16 %v2776, %v2772
    %v3785 = vpack.c.b16 %v2777, %v2773
    %v3786 = vpack.c.b16 %v2782, %v2778
    %v3787 = vpack.c.b16 %v2783, %v2779
    %v3788 = vpack.c.b16 %v2784, %v2780
    %v3789 = vpack.c.b16 %v2785, %v2781
    %v3790 = vpack.c.b16 %v2790, %v2786
    %v3791 = vpack.c.b16 %v2791, %v2787
    %v3792 = vpack.c.b16 %v2792, %v2788
    %v3793 = vpack.c.b16 %v2793, %v2789
    %v3794 = vpack.c.b16 %v2798, %v2794
    %v3795 = vpack.c.b16 %v2799, %v2795
    %v3796 = vpack.c.b16 %v2800, %v2796
    %v3797 = vpack.c.b16 %v2801, %v2797
    %v3798 = vpack.c.b16 %v2806, %v2802
    %v3799 = vpack.c.b16 %v2807, %v2803
    %v3800 = vpack.c.b16 %v2808, %v2804
    %v3801 = vpack.c.b16 %v2809, %v2805
    %v3802 = vpack.c.b16 %v2814, %v2810
    %v3803 = vpack.c.b16 %v2815, %v2811
    %v3804 = vpack.c.b16 %v2816, %v2812
    %v3805 = vpack.c.b16 %v2817, %v2813
    %v3806 = vpack.c.b16 %v2822, %v2818
    %v3807 = vpack.c.b16 %v2823, %v2819
    %v3808 = vpack.c.b16 %v2824, %v2820
    %v3809 = vpack.c.b16 %v2825, %v2821
    %v3810 = vpack.c.b16 %v2830, %v2826
    %v3811 = vpack.c.b16 %v2831, %v2827
    %v3812 = vpack.c.b16 %v2832, %v2828
    %v3813 = vpack.c.b16 %v2833, %v2829
    %v3814 = vpack.c.b16 %v2838, %v2834
    %v3815 = vpack.c.b16 %v2839, %v2835
    %v3816 = vpack.c.b16 %v2840, %v2836
    %v3817 = vpack.c.b16 %v2841, %v2837
    %v3818 = vpack.c.b16 %v2846, %v2842
    %v3819 = vpack.c.b16 %v2847, %v2843
    %v3820 = vpack.c.b16 %v2848, %v2844
    %v3821 = vpack.c.b16 %v2849, %v2845
    %v3822 = vpack.c.b16 %v2854, %v2850
    %v3823 = vpack.c.b16 %v2855, %v2851
    %v3824 = vpack.c.b16 %v2856, %v2852
    %v3825 = vpack.c.b16 %v2857, %v2853
    %v3826 = vpack.c.b16 %v2862, %v2858
    %v3827 = vpack.c.b16 %v2863, %v2859
    %v3828 = vpack.c.b16 %v2864, %v2860
    %v3829 = vpack.c.b16 %v2865, %v2861
    %v3830 = vpack.c.b16 %v2870, %v2866
    %v3831 = vpack.c.b16 %v2871, %v2867
    %v3832 = vpack.c.b16 %v2872, %v2868
    %v3833 = vpack.c.b16 %v2873, %v2869
    %v3834 = vpack.c.b16 %v2878, %v2874
    %v3835 = vpack.c.b16 %v2879, %v2875
    %v3836 = vpack.c.b16 %v2880, %v2876
    %v3837 = vpack.c.b16 %v2881, %v2877
    %v3838 = vpack.c.b16 %v2886, %v2882
    %v3839 = vpack.c.b16 %v2887, %v2883
    %v3840 = vpack.c.b16 %v2888, %v2884
    %v3841 = vpack.c.b16 %v2889, %v2885
    %v3842 = vpack.c.b16 %v2894, %v2890
    %v3843 = vpack.c.b16 %v2895, %v2891
    %v3844 = vpack.c.b16 %v2896, %v2892
    %v3845 = vpack.c.b16 %v2897, %v2893
    %v3846 = vpack.c.b16 %v2902, %v2898
    %v3847 = vpack.c.b16 %v2903, %v2899
    %v3848 = vpack.c.b16 %v2904, %v2900
    %v3849 = vpack.c.b16 %v2905, %v2901
    %v3850 = vpack.c.b16 %v2910, %v2906
    %v3851 = vpack.c.b16 %v2911, %v2907
    %v3852 = vpack.c.b16 %v2912, %v2908
    %v3853 = vpack.c.b16 %v2913, %v2909
    %v3854 = vpack.c.b16 %v2918, %v2914
    %v3855 = vpack.c.b16 %v2919, %v2915
    %v3856 = vpack.c.b16 %v2920, %v2916
    %v3857 = vpack.c.b16 %v2921, %v2917
    %v3858 = vpack.c.b16 %v2926, %v2922
    %v3859 = vpack.c.b16 %v2927, %v2923
    %v3860 = vpack.c.b16 %v2928, %v2924
    %v3861 = vpack.c.b16 %v2929, %v2925
    %v3862 = vpack.c.b16 %v2934, %v2930
    %v3863 = vpack.c.b16 %v2935, %v2931
    %v3864 = vpack.c.b16 %v2936, %v2932
    %v3865 = vpack.c.b16 %v2937, %v2933
    %v3866 = vpack.c.b16 %v2942, %v2938
    %v3867 = vpack.c.b16 %v2943, %v2939
    %v3868 = vpack.c.b16 %v2944, %v2940
    %v3869 = vpack.c.b16 %v2945, %v2941
    %v3870 = vpack.c.b16 %v2950, %v2946
    %v3871 = vpack.c.b16 %v2951, %v2947
    %v3872 = vpack.c.b16 %v2952, %v2948
    %v3873 = vpack.c.b16 %v2953, %v2949
    %v3874 = vpack.c.b16 %v2958, %v2954
    %v3875 = vpack.c.b16 %v2959, %v2955
    %v3876 = vpack.c.b16 %v2960, %v2956
    %v3877 = vpack.c.b16 %v2961, %v2957
    %v3878 = vpack.c.b16 %v2966, %v2962
    %v3879 = vpack.c.b16 %v2967, %v2963
    %v3880 = vpack.c.b16 %v2968, %v2964
    %v3881 = vpack.c.b16 %v2969, %v2965
    %v3882 = vpack.c.b16 %v2974, %v2970
    %v3883 = vpack.c.b16 %v2975, %v2971
    %v3884 = vpack.c.b16 %v2976, %v2972
    %v3885 = vpack.c.b16 %v2977, %v2973
    %v3886 = vpack.c.b16 %v2982, %v2978
    %v3887 = vpack.c.b16 %v2983, %v2979
    %v3888 = vpack.c.b16 %v2984, %v2980
    %v3889 = vpack.c.b16 %v2985, %v2981
    %v3890 = vpack.c.b16 %v2990, %v2986
    %v3891 = vpack.c.b16 %v2991, %v2987
    %v3892 = vpack.c.b16 %v2992, %v2988
    %v3893 = vpack.c.b16 %v2993, %v2989
    %v3894 = vpack.c.b16 %v2998, %v2994
    %v3895 = vpack.c.b16 %v2999, %v2995
    %v3896 = vpack.c.b16 %v3000, %v2996
    %v3897 = vpack.c.b16 %v3001, %v2997
    %v3898 = vpack.c.b16 %v3006, %v3002
    %v3899 = vpack.c.b16 %v3007, %v3003
    %v3900 = vpack.c.b16 %v3008, %v3004
    %v3901 = vpack.c.b16 %v3009, %v3005
    %v3902 = vpack.c.b16 %v3014, %v3010
    %v3903 = vpack.c.b16 %v3015, %v3011
    %v3904 = vpack.c.b16 %v3016, %v3012
    %v3905 = vpack.c.b16 %v3017, %v3013
    %v3906 = vpack.c.b16 %v3022, %v3018
    %v3907 = vpack.c.b16 %v3023, %v3019
    %v3908 = vpack.c.b16 %v3024, %v3020
    %v3909 = vpack.c.b16 %v3025, %v3021
    %v3910 = vpack.c.b16 %v3030, %v3026
    %v3911 = vpack.c.b16 %v3031, %v3027
    %v3912 = vpack.c.b16 %v3032, %v3028
    %v3913 = vpack.c.b16 %v3033, %v3029
    %v3914 = vpack.c.b16 %v3038, %v3034
    %v3915 = vpack.c.b16 %v3039, %v3035
    %v3916 = vpack.c.b16 %v3040, %v3036
    %v3917 = vpack.c.b16 %v3041, %v3037
    %v3918 = vpack.c.b16 %v3046, %v3042
    %v3919 = vpack.c.b16 %v3047, %v3043
    %v3920 = vpack.c.b16 %v3048, %v3044
    %v3921 = vpack.c.b16 %v3049, %v3045
    %v3922 = vpack.c.b16 %v3054, %v3050
    %v3923 = vpack.c.b16 %v3055, %v3051
    %v3924 = vpack.c.b16 %v3056, %v3052
    %v3925 = vpack.c.b16 %v3057, %v3053
    %v3926 = vpack.c.b16 %v3062, %v3058
    %v3927 = vpack.c.b16 %v3063, %v3059
    %v3928 = vpack.c.b16 %v3064, %v3060
    %v3929 = vpack.c.b16 %v3065, %v3061
    %v3930 = vpack.c.b16 %v3070, %v3066
    %v3931 = vpack.c.b16 %v3071, %v3067
    %v3932 = vpack.c.b16 %v3072, %v3068
    %v3933 = vpack.c.b16 %v3073, %v3069
    %v3934 = vpack.c.b16 %v3078, %v3074
    %v3935 = vpack.c.b16 %v3079, %v3075
    %v3936 = vpack.c.b16 %v3080, %v3076
    %v3937 = vpack.c.b16 %v3081, %v3077
    %v3938 = vpack.c.b16 %v3086, %v3082
    %v3939 = vpack.c.b16 %v3087, %v3083
    %v3940 = vpack.c.b16 %v3088, %v3084
    %v3941 = vpack.c.b16 %v3089, %v3085
    %v3942 = vpack.c.b16 %v3094, %v3090
    %v3943 = vpack.c.b16 %v3095, %v3091
    %v3944 = vpack.c.b16 %v3096, %v3092
    %v3945 = vpack.c.b16 %v3097, %v3093
    %v3946 = vpack.c.b16 %v3102, %v3098
    %v3947 = vpack.c.b16 %v3103, %v3099
    %v3948 = vpack.c.b16 %v3104, %v3100
    %v3949 = vpack.c.b16 %v3105, %v3101
    %v3950 = vpack.c.b16 %v3110, %v3106
    %v3951 = vpack.c.b16 %v3111, %v3107
    %v3952 = vpack.c.b16 %v3112, %v3108
    %v3953 = vpack.c.b16 %v3113, %v3109
    %v3954 = vpack.c.b16 %v3118, %v3114
    %v3955 = vpack.c.b16 %v3119, %v3115
    %v3956 = vpack.c.b16 %v3120, %v3116
    %v3957 = vpack.c.b16 %v3121, %v3117
    %v3958 = vpack.c.b16 %v3126, %v3122
    %v3959 = vpack.c.b16 %v3127, %v3123
    %v3960 = vpack.c.b16 %v3128, %v3124
    %v3961 = vpack.c.b16 %v3129, %v3125
    %v3962 = vpack.c.b16 %v3134, %v3130
    %v3963 = vpack.c.b16 %v3135, %v3131
    %v3964 = vpack.c.b16 %v3136, %v3132
    %v3965 = vpack.c.b16 %v3137, %v3133
    %v3966 = vpack.c.b16 %v3142, %v3138
    %v3967 = vpack.c.b16 %v3143, %v3139
    %v3968 = vpack.c.b16 %v3144, %v3140
    %v3969 = vpack.c.b16 %v3145, %v3141
    %v3970 = vpack.c.b16 %v3150, %v3146
    %v3971 = vpack.c.b16 %v3151, %v3147
    %v3972 = vpack.c.b16 %v3152, %v3148
    %v3973 = vpack.c.b16 %v3153, %v3149
    %v3974 = vpack.c.b16 %v3158, %v3154
    %v3975 = vpack.c.b16 %v3159, %v3155
    %v3976 = vpack.c.b16 %v3160, %v3156
    %v3977 = vpack.c.b16 %v3161, %v3157
    %v3978 = vpack.c.b16 %v3166, %v3162
    %v3979 = vpack.c.b16 %v3167, %v3163
    %v3980 = vpack.c.b16 %v3168, %v3164
    %v3981 = vpack.c.b16 %v3169, %v3165
    %v3982 = vpack.c.b16 %v3174, %v3170
    %v3983 = vpack.c.b16 %v3175, %v3171
    %v3984 = vpack.c.b16 %v3176, %v3172
    %v3985 = vpack.c.b16 %v3177, %v3173
    %v3986 = vpack.c.b16 %v3182, %v3178
    %v3987 = vpack.c.b16 %v3183, %v3179
    %v3988 = vpack.c.b16 %v3184, %v3180
    %v3989 = vpack.c.b16 %v3185, %v3181
    %v3990 = vpack.c.b16 %v3190, %v3186
    %v3991 = vpack.c.b16 %v3191, %v3187
    %v3992 = vpack.c.b16 %v3192, %v3188
    %v3993 = vpack.c.b16 %v3193, %v3189
    %v3994 = vpack.c.b16 %v3198, %v3194
    %v3995 = vpack.c.b16 %v3199, %v3195
    %v3996 = vpack.c.b16 %v3200, %v3196
    %v3997 = vpack.c.b16 %v3201, %v3197
    %v3998 = vpack.c.b16 %v3206, %v3202
    %v3999 = vpack.c.b16 %v3207, %v3203
    %v4000 = vpack.c.b16 %v3208, %v3204
    %v4001 = vpack.c.b16 %v3209, %v3205
    %v4002 = vpack.c.b16 %v3214, %v3210
    %v4003 = vpack.c.b16 %v3215, %v3211
    %v4004 = vpack.c.b16 %v3216, %v3212
    %v4005 = vpack.c.b16 %v3217, %v3213
    %v4006 = vpack.c.b16 %v3222, %v3218
    %v4007 = vpack.c.b16 %v3223, %v3219
    %v4008 = vpack.c.b16 %v3224, %v3220
    %v4009 = vpack.c.b16 %v3225, %v3221
    %v4010 = vpack.c.b16 %v3230, %v3226
    %v4011 = vpack.c.b16 %v3231, %v3227
    %v4012 = vpack.c.b16 %v3232, %v3228
    %v4013 = vpack.c.b16 %v3233, %v3229
    %v4014 = vpack.c.b16 %v3238, %v3234
    %v4015 = vpack.c.b16 %v3239, %v3235
    %v4016 = vpack.c.b16 %v3240, %v3236
    %v4017 = vpack.c.b16 %v3241, %v3237
    %v4018 = vpack.c.b16 %v3246, %v3242
    %v4019 = vpack.c.b16 %v3247, %v3243
    %v4020 = vpack.c.b16 %v3248, %v3244
    %v4021 = vpack.c.b16 %v3249, %v3245
    %vm4790 = vcmask 80896
    %v4792 = vsel %vm4790, %v140, 0
    %vm4794 = vcmask 1044480
    %v4796 = vsel %vm4794, %v4018, 0
    %v4799 = vsel %vm4794, %v4019, 0
    %v4802 = vsel %vm4794, %v4020, 0
    %v4805 = vsel %vm4794, %v4021, 0
    %4807 = vmatprep.subr.bf16.mxu0 %v3251
    %4808 = vmatpush1.bf16.msra.mxu0 %v3250
    %4809 = vmatprep.subr.bf16.mxu0 %v3255
    %4810 = vmatpush1.bf16.msra.mxu0 %v3254
    %4811 = vmatprep.subr.bf16.mxu0 %v3259
    %4812 = vmatpush1.bf16.msra.mxu0 %v3258
    %4813 = vmatprep.subr.bf16.mxu0 %v3263
    %4814 = vmatpush1.bf16.msra.mxu0 %v3262
    %4815 = vmatprep.subr.bf16.mxu0 %v3267
    %4816 = vmatpush1.bf16.msra.mxu0 %v3266
    %4817 = vmatprep.subr.bf16.mxu0 %v3271
    %4818 = vmatpush1.bf16.msra.mxu0 %v3270
    %4819 = vmatprep.subr.bf16.mxu0 %v3275
    %4820 = vmatpush1.bf16.msra.mxu0 %v3274
    %4821 = vmatprep.subr.bf16.mxu0 %v3279
    %4822 = vmatpush1.bf16.msra.mxu0 %v3278
    %4823 = vmatprep.subr.bf16.mxu0 %v3283
    %4824 = vmatpush1.bf16.msra.mxu0 %v3282
    %4825 = vmatprep.subr.bf16.mxu0 %v3287
    %4826 = vmatpush1.bf16.msra.mxu0 %v3286
    %4827 = vmatprep.subr.bf16.mxu0 %v3291
    %4828 = vmatpush1.bf16.msra.mxu0 %v3290
    %4829 = vmatprep.subr.bf16.mxu0 %v3295
    %4830 = vmatpush1.bf16.msra.mxu0 %v3294
    %4831 = vmatprep.subr.bf16.mxu0 %v3299
    %4832 = vmatpush1.bf16.msra.mxu0 %v3298
    %4833 = vmatprep.subr.bf16.mxu0 %v3303
    %4834 = vmatpush1.bf16.msra.mxu0 %v3302
    %4835 = vmatprep.subr.bf16.mxu0 %v3307
    %4836 = vmatpush1.bf16.msra.mxu0 %v3306
    %4837 = vmatprep.subr.bf16.mxu0 %v3311
    %4838 = vmatpush1.bf16.msra.mxu0 %v3310
    %4839 = vmatprep.mubr.bf16.mxu0 %v117
    %4840 = vmatmul.mubr.bf16.gmra.mrb[0].mxu0 %v116
    %v4841 = vpop.f32.mrb[0].mxu0
    %v4842 = vadd.f32 %v917, %v4841
    %v4843 = vpop.f32.mrb[0].mxu0
    %v4844 = vadd.f32 %v921, %v4843
    %v4845 = vpop.f32.mrb[0].mxu0
    %v4846 = vpop.f32.mrb[0].mxu0
    %4847 = vdwg.mxu0
    %4848 = vmatprep.subr.bf16.mxu0 %v3315
    %4849 = vmatpush1.bf16.msra.mxu0 %v3314
    %4850 = vmatprep.subr.bf16.mxu0 %v3319
    %4851 = vmatpush1.bf16.msra.mxu0 %v3318
    %4852 = vmatprep.subr.bf16.mxu0 %v3323
    %4853 = vmatpush1.bf16.msra.mxu0 %v3322
    %4854 = vmatprep.subr.bf16.mxu0 %v3327
    %4855 = vmatpush1.bf16.msra.mxu0 %v3326
    %4856 = vmatprep.subr.bf16.mxu0 %v3331
    %4857 = vmatpush1.bf16.msra.mxu0 %v3330
    %4858 = vmatprep.subr.bf16.mxu0 %v3335
    %4859 = vmatpush1.bf16.msra.mxu0 %v3334
    %4860 = vmatprep.subr.bf16.mxu0 %v3339
    %4861 = vmatpush1.bf16.msra.mxu0 %v3338
    %4862 = vmatprep.subr.bf16.mxu0 %v3343
    %4863 = vmatpush1.bf16.msra.mxu0 %v3342
    %4864 = vmatprep.subr.bf16.mxu0 %v3347
    %4865 = vmatpush1.bf16.msra.mxu0 %v3346
    %4866 = vmatprep.subr.bf16.mxu0 %v3351
    %4867 = vmatpush1.bf16.msra.mxu0 %v3350
    %4868 = vmatprep.subr.bf16.mxu0 %v3355
    %4869 = vmatpush1.bf16.msra.mxu0 %v3354
    %4870 = vmatprep.subr.bf16.mxu0 %v3359
    %4871 = vmatpush1.bf16.msra.mxu0 %v3358
    %4872 = vmatprep.subr.bf16.mxu0 %v3363
    %4873 = vmatpush1.bf16.msra.mxu0 %v3362
    %4874 = vmatprep.subr.bf16.mxu0 %v3367
    %4875 = vmatpush1.bf16.msra.mxu0 %v3366
    %4876 = vmatprep.subr.bf16.mxu0 %v3371
    %4877 = vmatpush1.bf16.msra.mxu0 %v3370
    %4878 = vmatprep.subr.bf16.mxu0 %v3375
    %4879 = vmatpush1.bf16.msra.mxu0 %v3374
    %4880 = vmatprep.mubr.bf16.mxu0 %v119
    %4881 = vmatmul.mubr.bf16.gmra.mrb[0].mxu0 %v118
    %v4882 = vpop.f32.mrb[0].mxu0
    %v4883 = vadd.f32 %v4842, %v4882
    %v4884 = vpop.f32.mrb[0].mxu0
    %v4885 = vadd.f32 %v4844, %v4884
    %v4886 = vpop.f32.mrb[0].mxu0
    %v4887 = vpop.f32.mrb[0].mxu0
    %4888 = vdwg.mxu0
    %4889 = vmatprep.subr.bf16.mxu0 %v3379
    %4890 = vmatpush1.bf16.msra.mxu0 %v3378
    %4891 = vmatprep.subr.bf16.mxu0 %v3383
    %4892 = vmatpush1.bf16.msra.mxu0 %v3382
    %4893 = vmatprep.subr.bf16.mxu0 %v3387
    %4894 = vmatpush1.bf16.msra.mxu0 %v3386
    %4895 = vmatprep.subr.bf16.mxu0 %v3391
    %4896 = vmatpush1.bf16.msra.mxu0 %v3390
    %4897 = vmatprep.subr.bf16.mxu0 %v3395
    %4898 = vmatpush1.bf16.msra.mxu0 %v3394
    %4899 = vmatprep.subr.bf16.mxu0 %v3399
    %4900 = vmatpush1.bf16.msra.mxu0 %v3398
    %4901 = vmatprep.subr.bf16.mxu0 %v3403
    %4902 = vmatpush1.bf16.msra.mxu0 %v3402
    %4903 = vmatprep.subr.bf16.mxu0 %v3407
    %4904 = vmatpush1.bf16.msra.mxu0 %v3406
    %4905 = vmatprep.subr.bf16.mxu0 %v3411
    %4906 = vmatpush1.bf16.msra.mxu0 %v3410
    %4907 = vmatprep.subr.bf16.mxu0 %v3415
    %4908 = vmatpush1.bf16.msra.mxu0 %v3414
    %4909 = vmatprep.subr.bf16.mxu0 %v3419
    %4910 = vmatpush1.bf16.msra.mxu0 %v3418
    %4911 = vmatprep.subr.bf16.mxu0 %v3423
    %4912 = vmatpush1.bf16.msra.mxu0 %v3422
    %4913 = vmatprep.subr.bf16.mxu0 %v3427
    %4914 = vmatpush1.bf16.msra.mxu0 %v3426
    %4915 = vmatprep.subr.bf16.mxu0 %v3431
    %4916 = vmatpush1.bf16.msra.mxu0 %v3430
    %4917 = vmatprep.subr.bf16.mxu0 %v3435
    %4918 = vmatpush1.bf16.msra.mxu0 %v3434
    %4919 = vmatprep.subr.bf16.mxu0 %v3439
    %4920 = vmatpush1.bf16.msra.mxu0 %v3438
    %4921 = vmatprep.mubr.bf16.mxu0 %v121
    %4922 = vmatmul.mubr.bf16.gmra.mrb[0].mxu0 %v120
    %v4923 = vpop.f32.mrb[0].mxu0
    %v4924 = vadd.f32 %v4883, %v4923
    %v4925 = vpop.f32.mrb[0].mxu0
    %v4926 = vadd.f32 %v4885, %v4925
    %v4927 = vpop.f32.mrb[0].mxu0
    %v4928 = vpop.f32.mrb[0].mxu0
    %4929 = vdwg.mxu0
    %4930 = vmatprep.subr.bf16.mxu0 %v3443
    %4931 = vmatpush1.bf16.msra.mxu0 %v3442
    %4932 = vmatprep.subr.bf16.mxu0 %v3447
    %4933 = vmatpush1.bf16.msra.mxu0 %v3446
    %4934 = vmatprep.subr.bf16.mxu0 %v3451
    %4935 = vmatpush1.bf16.msra.mxu0 %v3450
    %4936 = vmatprep.subr.bf16.mxu0 %v3455
    %4937 = vmatpush1.bf16.msra.mxu0 %v3454
    %4938 = vmatprep.subr.bf16.mxu0 %v3459
    %4939 = vmatpush1.bf16.msra.mxu0 %v3458
    %4940 = vmatprep.subr.bf16.mxu0 %v3463
    %4941 = vmatpush1.bf16.msra.mxu0 %v3462
    %4942 = vmatprep.subr.bf16.mxu0 %v3467
    %4943 = vmatpush1.bf16.msra.mxu0 %v3466
    %4944 = vmatprep.subr.bf16.mxu0 %v3471
    %4945 = vmatpush1.bf16.msra.mxu0 %v3470
    %4946 = vmatprep.subr.bf16.mxu0 %v3475
    %4947 = vmatpush1.bf16.msra.mxu0 %v3474
    %4948 = vmatprep.subr.bf16.mxu0 %v3479
    %4949 = vmatpush1.bf16.msra.mxu0 %v3478
    %4950 = vmatprep.subr.bf16.mxu0 %v3483
    %4951 = vmatpush1.bf16.msra.mxu0 %v3482
    %4952 = vmatprep.subr.bf16.mxu0 %v3487
    %4953 = vmatpush1.bf16.msra.mxu0 %v3486
    %4954 = vmatprep.subr.bf16.mxu0 %v3491
    %4955 = vmatpush1.bf16.msra.mxu0 %v3490
    %4956 = vmatprep.subr.bf16.mxu0 %v3495
    %4957 = vmatpush1.bf16.msra.mxu0 %v3494
    %4958 = vmatprep.subr.bf16.mxu0 %v3499
    %4959 = vmatpush1.bf16.msra.mxu0 %v3498
    %4960 = vmatprep.subr.bf16.mxu0 %v3503
    %4961 = vmatpush1.bf16.msra.mxu0 %v3502
    %4962 = vmatprep.mubr.bf16.mxu0 %v123
    %4963 = vmatmul.mubr.bf16.gmra.mrb[0].mxu0 %v122
    %v4964 = vpop.f32.mrb[0].mxu0
    %v4965 = vadd.f32 %v4924, %v4964
    %v4966 = vpop.f32.mrb[0].mxu0
    %v4967 = vadd.f32 %v4926, %v4966
    %v4968 = vpop.f32.mrb[0].mxu0
    %v4969 = vpop.f32.mrb[0].mxu0
    %4970 = vdwg.mxu0
    %4971 = vmatprep.subr.bf16.mxu0 %v3507
    %4972 = vmatpush1.bf16.msra.mxu0 %v3506
    %4973 = vmatprep.subr.bf16.mxu0 %v3511
    %4974 = vmatpush1.bf16.msra.mxu0 %v3510
    %4975 = vmatprep.subr.bf16.mxu0 %v3515
    %4976 = vmatpush1.bf16.msra.mxu0 %v3514
    %4977 = vmatprep.subr.bf16.mxu0 %v3519
    %4978 = vmatpush1.bf16.msra.mxu0 %v3518
    %4979 = vmatprep.subr.bf16.mxu0 %v3523
    %4980 = vmatpush1.bf16.msra.mxu0 %v3522
    %4981 = vmatprep.subr.bf16.mxu0 %v3527
    %4982 = vmatpush1.bf16.msra.mxu0 %v3526
    %4983 = vmatprep.subr.bf16.mxu0 %v3531
    %4984 = vmatpush1.bf16.msra.mxu0 %v3530
    %4985 = vmatprep.subr.bf16.mxu0 %v3535
    %4986 = vmatpush1.bf16.msra.mxu0 %v3534
    %4987 = vmatprep.subr.bf16.mxu0 %v3539
    %4988 = vmatpush1.bf16.msra.mxu0 %v3538
    %4989 = vmatprep.subr.bf16.mxu0 %v3543
    %4990 = vmatpush1.bf16.msra.mxu0 %v3542
    %4991 = vmatprep.subr.bf16.mxu0 %v3547
    %4992 = vmatpush1.bf16.msra.mxu0 %v3546
    %4993 = vmatprep.subr.bf16.mxu0 %v3551
    %4994 = vmatpush1.bf16.msra.mxu0 %v3550
    %4995 = vmatprep.subr.bf16.mxu0 %v3555
    %4996 = vmatpush1.bf16.msra.mxu0 %v3554
    %4997 = vmatprep.subr.bf16.mxu0 %v3559
    %4998 = vmatpush1.bf16.msra.mxu0 %v3558
    %4999 = vmatprep.subr.bf16.mxu0 %v3563
    %5000 = vmatpush1.bf16.msra.mxu0 %v3562
    %5001 = vmatprep.subr.bf16.mxu0 %v3567
    %5002 = vmatpush1.bf16.msra.mxu0 %v3566
    %5003 = vmatprep.mubr.bf16.mxu0 %v125
    %5004 = vmatmul.mubr.bf16.gmra.mrb[0].mxu0 %v124
    %v5005 = vpop.f32.mrb[0].mxu0
    %v5006 = vadd.f32 %v4965, %v5005
    %v5007 = vpop.f32.mrb[0].mxu0
    %v5008 = vadd.f32 %v4967, %v5007
    %v5009 = vpop.f32.mrb[0].mxu0
    %v5010 = vpop.f32.mrb[0].mxu0
    %5011 = vdwg.mxu0
    %5012 = vmatprep.subr.bf16.mxu0 %v3571
    %5013 = vmatpush1.bf16.msra.mxu0 %v3570
    %5014 = vmatprep.subr.bf16.mxu0 %v3575
    %5015 = vmatpush1.bf16.msra.mxu0 %v3574
    %5016 = vmatprep.subr.bf16.mxu0 %v3579
    %5017 = vmatpush1.bf16.msra.mxu0 %v3578
    %5018 = vmatprep.subr.bf16.mxu0 %v3583
    %5019 = vmatpush1.bf16.msra.mxu0 %v3582
    %5020 = vmatprep.subr.bf16.mxu0 %v3587
    %5021 = vmatpush1.bf16.msra.mxu0 %v3586
    %5022 = vmatprep.subr.bf16.mxu0 %v3591
    %5023 = vmatpush1.bf16.msra.mxu0 %v3590
    %5024 = vmatprep.subr.bf16.mxu0 %v3595
    %5025 = vmatpush1.bf16.msra.mxu0 %v3594
    %5026 = vmatprep.subr.bf16.mxu0 %v3599
    %5027 = vmatpush1.bf16.msra.mxu0 %v3598
    %5028 = vmatprep.subr.bf16.mxu0 %v3603
    %5029 = vmatpush1.bf16.msra.mxu0 %v3602
    %5030 = vmatprep.subr.bf16.mxu0 %v3607
    %5031 = vmatpush1.bf16.msra.mxu0 %v3606
    %5032 = vmatprep.subr.bf16.mxu0 %v3611
    %5033 = vmatpush1.bf16.msra.mxu0 %v3610
    %5034 = vmatprep.subr.bf16.mxu0 %v3615
    %5035 = vmatpush1.bf16.msra.mxu0 %v3614
    %5036 = vmatprep.subr.bf16.mxu0 %v3619
    %5037 = vmatpush1.bf16.msra.mxu0 %v3618
    %5038 = vmatprep.subr.bf16.mxu0 %v3623
    %5039 = vmatpush1.bf16.msra.mxu0 %v3622
    %5040 = vmatprep.subr.bf16.mxu0 %v3627
    %5041 = vmatpush1.bf16.msra.mxu0 %v3626
    %5042 = vmatprep.subr.bf16.mxu0 %v3631
    %5043 = vmatpush1.bf16.msra.mxu0 %v3630
    %5044 = vmatprep.mubr.bf16.mxu0 %v127
    %5045 = vmatmul.mubr.bf16.gmra.mrb[0].mxu0 %v126
    %v5046 = vpop.f32.mrb[0].mxu0
    %v5047 = vadd.f32 %v5006, %v5046
    %v5048 = vpop.f32.mrb[0].mxu0
    %v5049 = vadd.f32 %v5008, %v5048
    %v5050 = vpop.f32.mrb[0].mxu0
    %v5051 = vpop.f32.mrb[0].mxu0
    %5052 = vdwg.mxu0
    %5053 = vmatprep.subr.bf16.mxu0 %v3635
    %5054 = vmatpush1.bf16.msra.mxu0 %v3634
    %5055 = vmatprep.subr.bf16.mxu0 %v3639
    %5056 = vmatpush1.bf16.msra.mxu0 %v3638
    %5057 = vmatprep.subr.bf16.mxu0 %v3643
    %5058 = vmatpush1.bf16.msra.mxu0 %v3642
    %5059 = vmatprep.subr.bf16.mxu0 %v3647
    %5060 = vmatpush1.bf16.msra.mxu0 %v3646
    %5061 = vmatprep.subr.bf16.mxu0 %v3651
    %5062 = vmatpush1.bf16.msra.mxu0 %v3650
    %5063 = vmatprep.subr.bf16.mxu0 %v3655
    %5064 = vmatpush1.bf16.msra.mxu0 %v3654
    %5065 = vmatprep.subr.bf16.mxu0 %v3659
    %5066 = vmatpush1.bf16.msra.mxu0 %v3658
    %5067 = vmatprep.subr.bf16.mxu0 %v3663
    %5068 = vmatpush1.bf16.msra.mxu0 %v3662
    %5069 = vmatprep.subr.bf16.mxu0 %v3667
    %5070 = vmatpush1.bf16.msra.mxu0 %v3666
    %5071 = vmatprep.subr.bf16.mxu0 %v3671
    %5072 = vmatpush1.bf16.msra.mxu0 %v3670
    %5073 = vmatprep.subr.bf16.mxu0 %v3675
    %5074 = vmatpush1.bf16.msra.mxu0 %v3674
    %5075 = vmatprep.subr.bf16.mxu0 %v3679
    %5076 = vmatpush1.bf16.msra.mxu0 %v3678
    %5077 = vmatprep.subr.bf16.mxu0 %v3683
    %5078 = vmatpush1.bf16.msra.mxu0 %v3682
    %5079 = vmatprep.subr.bf16.mxu0 %v3687
    %5080 = vmatpush1.bf16.msra.mxu0 %v3686
    %5081 = vmatprep.subr.bf16.mxu0 %v3691
    %5082 = vmatpush1.bf16.msra.mxu0 %v3690
    %5083 = vmatprep.subr.bf16.mxu0 %v3695
    %5084 = vmatpush1.bf16.msra.mxu0 %v3694
    %5085 = vmatprep.mubr.bf16.mxu0 %v129
    %5086 = vmatmul.mubr.bf16.gmra.mrb[0].mxu0 %v128
    %v5087 = vpop.f32.mrb[0].mxu0
    %v5088 = vadd.f32 %v5047, %v5087
    %v5089 = vpop.f32.mrb[0].mxu0
    %v5090 = vadd.f32 %v5049, %v5089
    %v5091 = vpop.f32.mrb[0].mxu0
    %v5092 = vpop.f32.mrb[0].mxu0
    %5093 = vdwg.mxu0
    %5094 = vmatprep.subr.bf16.mxu0 %v3699
    %5095 = vmatpush1.bf16.msra.mxu0 %v3698
    %5096 = vmatprep.subr.bf16.mxu0 %v3703
    %5097 = vmatpush1.bf16.msra.mxu0 %v3702
    %5098 = vmatprep.subr.bf16.mxu0 %v3707
    %5099 = vmatpush1.bf16.msra.mxu0 %v3706
    %5100 = vmatprep.subr.bf16.mxu0 %v3711
    %5101 = vmatpush1.bf16.msra.mxu0 %v3710
    %5102 = vmatprep.subr.bf16.mxu0 %v3715
    %5103 = vmatpush1.bf16.msra.mxu0 %v3714
    %5104 = vmatprep.subr.bf16.mxu0 %v3719
    %5105 = vmatpush1.bf16.msra.mxu0 %v3718
    %5106 = vmatprep.subr.bf16.mxu0 %v3723
    %5107 = vmatpush1.bf16.msra.mxu0 %v3722
    %5108 = vmatprep.subr.bf16.mxu0 %v3727
    %5109 = vmatpush1.bf16.msra.mxu0 %v3726
    %5110 = vmatprep.subr.bf16.mxu0 %v3731
    %5111 = vmatpush1.bf16.msra.mxu0 %v3730
    %5112 = vmatprep.subr.bf16.mxu0 %v3735
    %5113 = vmatpush1.bf16.msra.mxu0 %v3734
    %5114 = vmatprep.subr.bf16.mxu0 %v3739
    %5115 = vmatpush1.bf16.msra.mxu0 %v3738
    %5116 = vmatprep.subr.bf16.mxu0 %v3743
    %5117 = vmatpush1.bf16.msra.mxu0 %v3742
    %5118 = vmatprep.subr.bf16.mxu0 %v3747
    %5119 = vmatpush1.bf16.msra.mxu0 %v3746
    %5120 = vmatprep.subr.bf16.mxu0 %v3751
    %5121 = vmatpush1.bf16.msra.mxu0 %v3750
    %5122 = vmatprep.subr.bf16.mxu0 %v3755
    %5123 = vmatpush1.bf16.msra.mxu0 %v3754
    %5124 = vmatprep.subr.bf16.mxu0 %v3759
    %5125 = vmatpush1.bf16.msra.mxu0 %v3758
    %5126 = vmatprep.mubr.bf16.mxu0 %v131
    %5127 = vmatmul.mubr.bf16.gmra.mrb[0].mxu0 %v130
    %v5128 = vpop.f32.mrb[0].mxu0
    %v5129 = vadd.f32 %v5088, %v5128
    %v5130 = vpop.f32.mrb[0].mxu0
    %v5131 = vadd.f32 %v5090, %v5130
    %v5132 = vpop.f32.mrb[0].mxu0
    %v5133 = vpop.f32.mrb[0].mxu0
    %5134 = vdwg.mxu0
    %5135 = vmatprep.subr.bf16.mxu0 %v3763
    %5136 = vmatpush1.bf16.msra.mxu0 %v3762
    %5137 = vmatprep.subr.bf16.mxu0 %v3767
    %5138 = vmatpush1.bf16.msra.mxu0 %v3766
    %5139 = vmatprep.subr.bf16.mxu0 %v3771
    %5140 = vmatpush1.bf16.msra.mxu0 %v3770
    %5141 = vmatprep.subr.bf16.mxu0 %v3775
    %5142 = vmatpush1.bf16.msra.mxu0 %v3774
    %5143 = vmatprep.subr.bf16.mxu0 %v3779
    %5144 = vmatpush1.bf16.msra.mxu0 %v3778
    %5145 = vmatprep.subr.bf16.mxu0 %v3783
    %5146 = vmatpush1.bf16.msra.mxu0 %v3782
    %5147 = vmatprep.subr.bf16.mxu0 %v3787
    %5148 = vmatpush1.bf16.msra.mxu0 %v3786
    %5149 = vmatprep.subr.bf16.mxu0 %v3791
    %5150 = vmatpush1.bf16.msra.mxu0 %v3790
    %5151 = vmatprep.subr.bf16.mxu0 %v3795
    %5152 = vmatpush1.bf16.msra.mxu0 %v3794
    %5153 = vmatprep.subr.bf16.mxu0 %v3799
    %5154 = vmatpush1.bf16.msra.mxu0 %v3798
    %5155 = vmatprep.subr.bf16.mxu0 %v3803
    %5156 = vmatpush1.bf16.msra.mxu0 %v3802
    %5157 = vmatprep.subr.bf16.mxu0 %v3807
    %5158 = vmatpush1.bf16.msra.mxu0 %v3806
    %5159 = vmatprep.subr.bf16.mxu0 %v3811
    %5160 = vmatpush1.bf16.msra.mxu0 %v3810
    %5161 = vmatprep.subr.bf16.mxu0 %v3815
    %5162 = vmatpush1.bf16.msra.mxu0 %v3814
    %5163 = vmatprep.subr.bf16.mxu0 %v3819
    %5164 = vmatpush1.bf16.msra.mxu0 %v3818
    %5165 = vmatprep.subr.bf16.mxu0 %v3823
    %5166 = vmatpush1.bf16.msra.mxu0 %v3822
    %5167 = vmatprep.mubr.bf16.mxu0 %v133
    %5168 = vmatmul.mubr.bf16.gmra.mrb[0].mxu0 %v132
    %v5169 = vpop.f32.mrb[0].mxu0
    %v5170 = vadd.f32 %v5129, %v5169
    %v5171 = vpop.f32.mrb[0].mxu0
    %v5172 = vadd.f32 %v5131, %v5171
    %v5173 = vpop.f32.mrb[0].mxu0
    %v5174 = vpop.f32.mrb[0].mxu0
    %5175 = vdwg.mxu0
    %5176 = vmatprep.subr.bf16.mxu0 %v3827
    %5177 = vmatpush1.bf16.msra.mxu0 %v3826
    %5178 = vmatprep.subr.bf16.mxu0 %v3831
    %5179 = vmatpush1.bf16.msra.mxu0 %v3830
    %5180 = vmatprep.subr.bf16.mxu0 %v3835
    %5181 = vmatpush1.bf16.msra.mxu0 %v3834
    %5182 = vmatprep.subr.bf16.mxu0 %v3839
    %5183 = vmatpush1.bf16.msra.mxu0 %v3838
    %5184 = vmatprep.subr.bf16.mxu0 %v3843
    %5185 = vmatpush1.bf16.msra.mxu0 %v3842
    %5186 = vmatprep.subr.bf16.mxu0 %v3847
    %5187 = vmatpush1.bf16.msra.mxu0 %v3846
    %5188 = vmatprep.subr.bf16.mxu0 %v3851
    %5189 = vmatpush1.bf16.msra.mxu0 %v3850
    %5190 = vmatprep.subr.bf16.mxu0 %v3855
    %5191 = vmatpush1.bf16.msra.mxu0 %v3854
    %5192 = vmatprep.subr.bf16.mxu0 %v3859
    %5193 = vmatpush1.bf16.msra.mxu0 %v3858
    %5194 = vmatprep.subr.bf16.mxu0 %v3863
    %5195 = vmatpush1.bf16.msra.mxu0 %v3862
    %5196 = vmatprep.subr.bf16.mxu0 %v3867
    %5197 = vmatpush1.bf16.msra.mxu0 %v3866
    %5198 = vmatprep.subr.bf16.mxu0 %v3871
    %5199 = vmatpush1.bf16.msra.mxu0 %v3870
    %5200 = vmatprep.subr.bf16.mxu0 %v3875
    %5201 = vmatpush1.bf16.msra.mxu0 %v3874
    %5202 = vmatprep.subr.bf16.mxu0 %v3879
    %5203 = vmatpush1.bf16.msra.mxu0 %v3878
    %5204 = vmatprep.subr.bf16.mxu0 %v3883
    %5205 = vmatpush1.bf16.msra.mxu0 %v3882
    %5206 = vmatprep.subr.bf16.mxu0 %v3887
    %5207 = vmatpush1.bf16.msra.mxu0 %v3886
    %5208 = vmatprep.mubr.bf16.mxu0 %v135
    %5209 = vmatmul.mubr.bf16.gmra.mrb[0].mxu0 %v134
    %v5210 = vpop.f32.mrb[0].mxu0
    %v5211 = vadd.f32 %v5170, %v5210
    %v5212 = vpop.f32.mrb[0].mxu0
    %v5213 = vadd.f32 %v5172, %v5212
    %v5214 = vpop.f32.mrb[0].mxu0
    %v5215 = vpop.f32.mrb[0].mxu0
    %5216 = vdwg.mxu0
    %5217 = vmatprep.subr.bf16.mxu0 %v3891
    %5218 = vmatpush1.bf16.msra.mxu0 %v3890
    %5219 = vmatprep.subr.bf16.mxu0 %v3895
    %5220 = vmatpush1.bf16.msra.mxu0 %v3894
    %5221 = vmatprep.subr.bf16.mxu0 %v3899
    %5222 = vmatpush1.bf16.msra.mxu0 %v3898
    %5223 = vmatprep.subr.bf16.mxu0 %v3903
    %5224 = vmatpush1.bf16.msra.mxu0 %v3902
    %5225 = vmatprep.subr.bf16.mxu0 %v3907
    %5226 = vmatpush1.bf16.msra.mxu0 %v3906
    %5227 = vmatprep.subr.bf16.mxu0 %v3911
    %5228 = vmatpush1.bf16.msra.mxu0 %v3910
    %5229 = vmatprep.subr.bf16.mxu0 %v3915
    %5230 = vmatpush1.bf16.msra.mxu0 %v3914
    %5231 = vmatprep.subr.bf16.mxu0 %v3919
    %5232 = vmatpush1.bf16.msra.mxu0 %v3918
    %5233 = vmatprep.subr.bf16.mxu0 %v3923
    %5234 = vmatpush1.bf16.msra.mxu0 %v3922
    %5235 = vmatprep.subr.bf16.mxu0 %v3927
    %5236 = vmatpush1.bf16.msra.mxu0 %v3926
    %5237 = vmatprep.subr.bf16.mxu0 %v3931
    %5238 = vmatpush1.bf16.msra.mxu0 %v3930
    %5239 = vmatprep.subr.bf16.mxu0 %v3935
    %5240 = vmatpush1.bf16.msra.mxu0 %v3934
    %5241 = vmatprep.subr.bf16.mxu0 %v3939
    %5242 = vmatpush1.bf16.msra.mxu0 %v3938
    %5243 = vmatprep.subr.bf16.mxu0 %v3943
    %5244 = vmatpush1.bf16.msra.mxu0 %v3942
    %5245 = vmatprep.subr.bf16.mxu0 %v3947
    %5246 = vmatpush1.bf16.msra.mxu0 %v3946
    %5247 = vmatprep.subr.bf16.mxu0 %v3951
    %5248 = vmatpush1.bf16.msra.mxu0 %v3950
    %5249 = vmatprep.mubr.bf16.mxu0 %v137
    %5250 = vmatmul.mubr.bf16.gmra.mrb[0].mxu0 %v136
    %v5251 = vpop.f32.mrb[0].mxu0
    %v5252 = vadd.f32 %v5211, %v5251
    %v5253 = vpop.f32.mrb[0].mxu0
    %v5254 = vadd.f32 %v5213, %v5253
    %v5255 = vpop.f32.mrb[0].mxu0
    %v5256 = vpop.f32.mrb[0].mxu0
    %5257 = vdwg.mxu0
    %5258 = vmatprep.subr.bf16.mxu0 %v3955
    %5259 = vmatpush1.bf16.msra.mxu0 %v3954
    %5260 = vmatprep.subr.bf16.mxu0 %v3959
    %5261 = vmatpush1.bf16.msra.mxu0 %v3958
    %5262 = vmatprep.subr.bf16.mxu0 %v3963
    %5263 = vmatpush1.bf16.msra.mxu0 %v3962
    %5264 = vmatprep.subr.bf16.mxu0 %v3967
    %5265 = vmatpush1.bf16.msra.mxu0 %v3966
    %5266 = vmatprep.subr.bf16.mxu0 %v3971
    %5267 = vmatpush1.bf16.msra.mxu0 %v3970
    %5268 = vmatprep.subr.bf16.mxu0 %v3975
    %5269 = vmatpush1.bf16.msra.mxu0 %v3974
    %5270 = vmatprep.subr.bf16.mxu0 %v3979
    %5271 = vmatpush1.bf16.msra.mxu0 %v3978
    %5272 = vmatprep.subr.bf16.mxu0 %v3983
    %5273 = vmatpush1.bf16.msra.mxu0 %v3982
    %5274 = vmatprep.subr.bf16.mxu0 %v3987
    %5275 = vmatpush1.bf16.msra.mxu0 %v3986
    %5276 = vmatprep.subr.bf16.mxu0 %v3991
    %5277 = vmatpush1.bf16.msra.mxu0 %v3990
    %5278 = vmatprep.subr.bf16.mxu0 %v3995
    %5279 = vmatpush1.bf16.msra.mxu0 %v3994
    %5280 = vmatprep.subr.bf16.mxu0 %v3999
    %5281 = vmatpush1.bf16.msra.mxu0 %v3998
    %5282 = vmatprep.subr.bf16.mxu0 %v4003
    %5283 = vmatpush1.bf16.msra.mxu0 %v4002
    %5284 = vmatprep.subr.bf16.mxu0 %v4007
    %5285 = vmatpush1.bf16.msra.mxu0 %v4006
    %5286 = vmatprep.subr.bf16.mxu0 %v4011
    %5287 = vmatpush1.bf16.msra.mxu0 %v4010
    %5288 = vmatprep.subr.bf16.mxu0 %v4015
    %5289 = vmatpush1.bf16.msra.mxu0 %v4014
    %5290 = vmatprep.mubr.bf16.mxu0 %v139
    %5291 = vmatmul.mubr.bf16.gmra.mrb[0].mxu0 %v138
    %v5292 = vpop.f32.mrb[0].mxu0
    %v5293 = vadd.f32 %v5252, %v5292
    %v5294 = vpop.f32.mrb[0].mxu0
    %v5295 = vadd.f32 %v5254, %v5294
    %v5296 = vpop.f32.mrb[0].mxu0
    %v5297 = vpop.f32.mrb[0].mxu0
    %5298 = vdwg.mxu0
    %5299 = vmatprep.subr.bf16.mxu0 %v4799
    %5300 = vmatpush1.bf16.msra.mxu0 %v4796
    %5301 = vmatprep.subr.bf16.mxu0 0
    %5302 = vmatpush1.bf16.msra.mxu0 0
    %5303 = vmatprep.subr.bf16.mxu0 0
    %5304 = vmatpush1.bf16.msra.mxu0 0
    %5305 = vmatprep.subr.bf16.mxu0 0
    %5306 = vmatpush1.bf16.msra.mxu0 0
    %5307 = vmatprep.subr.bf16.mxu0 0
    %5308 = vmatpush1.bf16.msra.mxu0 0
    %5309 = vmatprep.subr.bf16.mxu0 0
    %5310 = vmatpush1.bf16.msra.mxu0 0
    %5311 = vmatprep.subr.bf16.mxu0 0
    %5312 = vmatpush1.bf16.msra.mxu0 0
    %5313 = vmatprep.subr.bf16.mxu0 0
    %5314 = vmatpush1.bf16.msra.mxu0 0
    %5315 = vmatprep.subr.bf16.mxu0 0
    %5316 = vmatpush1.bf16.msra.mxu0 0
    %5317 = vmatprep.subr.bf16.mxu0 0
    %5318 = vmatpush1.bf16.msra.mxu0 0
    %5319 = vmatprep.subr.bf16.mxu0 0
    %5320 = vmatpush1.bf16.msra.mxu0 0
    %5321 = vmatprep.subr.bf16.mxu0 0
    %5322 = vmatpush1.bf16.msra.mxu0 0
    %5323 = vmatprep.subr.bf16.mxu0 0
    %5324 = vmatpush1.bf16.msra.mxu0 0
    %5325 = vmatprep.subr.bf16.mxu0 0
    %5326 = vmatpush1.bf16.msra.mxu0 0
    %5327 = vmatprep.subr.bf16.mxu0 0
    %5328 = vmatpush1.bf16.msra.mxu0 0
    %5329 = vmatprep.subr.bf16.mxu0 0
    %5330 = vmatpush1.bf16.msra.mxu0 0
    %5331 = vmatprep.mubr.bf16.mxu0 0
    %5332 = vmatmul.mubr.bf16.gmra.mrb[0].mxu0 %v4792
    %v5333 = vpop.f32.mrb[0].mxu0
    %v5334 = vadd.f32 %v5293, %v5333
    %v5335 = vpop.f32.mrb[0].mxu0
    %v5336 = vadd.f32 %v5295, %v5335
    %v5337 = vpop.f32.mrb[0].mxu0
    %v5338 = vpop.f32.mrb[0].mxu0
    %5339 = vdwg.mxu0
    %5340 = vmatprep.subr.bf16.mxu0 %v3253
    %5341 = vmatpush1.bf16.msra.mxu0 %v3252
    %5342 = vmatprep.subr.bf16.mxu0 %v3257
    %5343 = vmatpush1.bf16.msra.mxu0 %v3256
    %5344 = vmatprep.subr.bf16.mxu0 %v3261
    %5345 = vmatpush1.bf16.msra.mxu0 %v3260
    %5346 = vmatprep.subr.bf16.mxu0 %v3265
    %5347 = vmatpush1.bf16.msra.mxu0 %v3264
    %5348 = vmatprep.subr.bf16.mxu0 %v3269
    %5349 = vmatpush1.bf16.msra.mxu0 %v3268
    %5350 = vmatprep.subr.bf16.mxu0 %v3273
    %5351 = vmatpush1.bf16.msra.mxu0 %v3272
    %5352 = vmatprep.subr.bf16.mxu0 %v3277
    %5353 = vmatpush1.bf16.msra.mxu0 %v3276
    %5354 = vmatprep.subr.bf16.mxu0 %v3281
    %5355 = vmatpush1.bf16.msra.mxu0 %v3280
    %5356 = vmatprep.subr.bf16.mxu0 %v3285
    %5357 = vmatpush1.bf16.msra.mxu0 %v3284
    %5358 = vmatprep.subr.bf16.mxu0 %v3289
    %5359 = vmatpush1.bf16.msra.mxu0 %v3288
    %5360 = vmatprep.subr.bf16.mxu0 %v3293
    %5361 = vmatpush1.bf16.msra.mxu0 %v3292
    %5362 = vmatprep.subr.bf16.mxu0 %v3297
    %5363 = vmatpush1.bf16.msra.mxu0 %v3296
    %5364 = vmatprep.subr.bf16.mxu0 %v3301
    %5365 = vmatpush1.bf16.msra.mxu0 %v3300
    %5366 = vmatprep.subr.bf16.mxu0 %v3305
    %5367 = vmatpush1.bf16.msra.mxu0 %v3304
    %5368 = vmatprep.subr.bf16.mxu0 %v3309
    %5369 = vmatpush1.bf16.msra.mxu0 %v3308
    %5370 = vmatprep.subr.bf16.mxu0 %v3313
    %5371 = vmatpush1.bf16.msra.mxu0 %v3312
    %5372 = vmatprep.mubr.bf16.mxu0 %v117
    %5373 = vmatmul.mubr.bf16.gmra.mrb[0].mxu0 %v116
    %v5374 = vpop.f32.mrb[0].mxu0
    %v5375 = vadd.f32 %v925, %v5374
    %v5376 = vpop.f32.mrb[0].mxu0
    %v5377 = vadd.f32 %v929, %v5376
    %v5378 = vpop.f32.mrb[0].mxu0
    %v5379 = vpop.f32.mrb[0].mxu0
    %5380 = vdwg.mxu0
    %5381 = vmatprep.subr.bf16.mxu0 %v3317
    %5382 = vmatpush1.bf16.msra.mxu0 %v3316
    %5383 = vmatprep.subr.bf16.mxu0 %v3321
    %5384 = vmatpush1.bf16.msra.mxu0 %v3320
    %5385 = vmatprep.subr.bf16.mxu0 %v3325
    %5386 = vmatpush1.bf16.msra.mxu0 %v3324
    %5387 = vmatprep.subr.bf16.mxu0 %v3329
    %5388 = vmatpush1.bf16.msra.mxu0 %v3328
    %5389 = vmatprep.subr.bf16.mxu0 %v3333
    %5390 = vmatpush1.bf16.msra.mxu0 %v3332
    %5391 = vmatprep.subr.bf16.mxu0 %v3337
    %5392 = vmatpush1.bf16.msra.mxu0 %v3336
    %5393 = vmatprep.subr.bf16.mxu0 %v3341
    %5394 = vmatpush1.bf16.msra.mxu0 %v3340
    %5395 = vmatprep.subr.bf16.mxu0 %v3345
    %5396 = vmatpush1.bf16.msra.mxu0 %v3344
    %5397 = vmatprep.subr.bf16.mxu0 %v3349
    %5398 = vmatpush1.bf16.msra.mxu0 %v3348
    %5399 = vmatprep.subr.bf16.mxu0 %v3353
    %5400 = vmatpush1.bf16.msra.mxu0 %v3352
    %5401 = vmatprep.subr.bf16.mxu0 %v3357
    %5402 = vmatpush1.bf16.msra.mxu0 %v3356
    %5403 = vmatprep.subr.bf16.mxu0 %v3361
    %5404 = vmatpush1.bf16.msra.mxu0 %v3360
    %5405 = vmatprep.subr.bf16.mxu0 %v3365
    %5406 = vmatpush1.bf16.msra.mxu0 %v3364
    %5407 = vmatprep.subr.bf16.mxu0 %v3369
    %5408 = vmatpush1.bf16.msra.mxu0 %v3368
    %5409 = vmatprep.subr.bf16.mxu0 %v3373
    %5410 = vmatpush1.bf16.msra.mxu0 %v3372
    %5411 = vmatprep.subr.bf16.mxu0 %v3377
    %5412 = vmatpush1.bf16.msra.mxu0 %v3376
    %5413 = vmatprep.mubr.bf16.mxu0 %v119
    %5414 = vmatmul.mubr.bf16.gmra.mrb[0].mxu0 %v118
    %v5415 = vpop.f32.mrb[0].mxu0
    %v5416 = vadd.f32 %v5375, %v5415
    %v5417 = vpop.f32.mrb[0].mxu0
    %v5418 = vadd.f32 %v5377, %v5417
    %v5419 = vpop.f32.mrb[0].mxu0
    %v5420 = vpop.f32.mrb[0].mxu0
    %5421 = vdwg.mxu0
    %5422 = vmatprep.subr.bf16.mxu0 %v3381
    %5423 = vmatpush1.bf16.msra.mxu0 %v3380
    %5424 = vmatprep.subr.bf16.mxu0 %v3385
    %5425 = vmatpush1.bf16.msra.mxu0 %v3384
    %5426 = vmatprep.subr.bf16.mxu0 %v3389
    %5427 = vmatpush1.bf16.msra.mxu0 %v3388
    %5428 = vmatprep.subr.bf16.mxu0 %v3393
    %5429 = vmatpush1.bf16.msra.mxu0 %v3392
    %5430 = vmatprep.subr.bf16.mxu0 %v3397
    %5431 = vmatpush1.bf16.msra.mxu0 %v3396
    %5432 = vmatprep.subr.bf16.mxu0 %v3401
    %5433 = vmatpush1.bf16.msra.mxu0 %v3400
    %5434 = vmatprep.subr.bf16.mxu0 %v3405
    %5435 = vmatpush1.bf16.msra.mxu0 %v3404
    %5436 = vmatprep.subr.bf16.mxu0 %v3409
    %5437 = vmatpush1.bf16.msra.mxu0 %v3408
    %5438 = vmatprep.subr.bf16.mxu0 %v3413
    %5439 = vmatpush1.bf16.msra.mxu0 %v3412
    %5440 = vmatprep.subr.bf16.mxu0 %v3417
    %5441 = vmatpush1.bf16.msra.mxu0 %v3416
    %5442 = vmatprep.subr.bf16.mxu0 %v3421
    %5443 = vmatpush1.bf16.msra.mxu0 %v3420
    %5444 = vmatprep.subr.bf16.mxu0 %v3425
    %5445 = vmatpush1.bf16.msra.mxu0 %v3424
    %5446 = vmatprep.subr.bf16.mxu0 %v3429
    %5447 = vmatpush1.bf16.msra.mxu0 %v3428
    %5448 = vmatprep.subr.bf16.mxu0 %v3433
    %5449 = vmatpush1.bf16.msra.mxu0 %v3432
    %5450 = vmatprep.subr.bf16.mxu0 %v3437
    %5451 = vmatpush1.bf16.msra.mxu0 %v3436
    %5452 = vmatprep.subr.bf16.mxu0 %v3441
    %5453 = vmatpush1.bf16.msra.mxu0 %v3440
    %5454 = vmatprep.mubr.bf16.mxu0 %v121
    %5455 = vmatmul.mubr.bf16.gmra.mrb[0].mxu0 %v120
    %v5456 = vpop.f32.mrb[0].mxu0
    %v5457 = vadd.f32 %v5416, %v5456
    %v5458 = vpop.f32.mrb[0].mxu0
    %v5459 = vadd.f32 %v5418, %v5458
    %v5460 = vpop.f32.mrb[0].mxu0
    %v5461 = vpop.f32.mrb[0].mxu0
    %5462 = vdwg.mxu0
    %5463 = vmatprep.subr.bf16.mxu0 %v3445
    %5464 = vmatpush1.bf16.msra.mxu0 %v3444
    %5465 = vmatprep.subr.bf16.mxu0 %v3449
    %5466 = vmatpush1.bf16.msra.mxu0 %v3448
    %5467 = vmatprep.subr.bf16.mxu0 %v3453
    %5468 = vmatpush1.bf16.msra.mxu0 %v3452
    %5469 = vmatprep.subr.bf16.mxu0 %v3457
    %5470 = vmatpush1.bf16.msra.mxu0 %v3456
    %5471 = vmatprep.subr.bf16.mxu0 %v3461
    %5472 = vmatpush1.bf16.msra.mxu0 %v3460
    %5473 = vmatprep.subr.bf16.mxu0 %v3465
    %5474 = vmatpush1.bf16.msra.mxu0 %v3464
    %5475 = vmatprep.subr.bf16.mxu0 %v3469
    %5476 = vmatpush1.bf16.msra.mxu0 %v3468
    %5477 = vmatprep.subr.bf16.mxu0 %v3473
    %5478 = vmatpush1.bf16.msra.mxu0 %v3472
    %5479 = vmatprep.subr.bf16.mxu0 %v3477
    %5480 = vmatpush1.bf16.msra.mxu0 %v3476
    %5481 = vmatprep.subr.bf16.mxu0 %v3481
    %5482 = vmatpush1.bf16.msra.mxu0 %v3480
    %5483 = vmatprep.subr.bf16.mxu0 %v3485
    %5484 = vmatpush1.bf16.msra.mxu0 %v3484
    %5485 = vmatprep.subr.bf16.mxu0 %v3489
    %5486 = vmatpush1.bf16.msra.mxu0 %v3488
    %5487 = vmatprep.subr.bf16.mxu0 %v3493
    %5488 = vmatpush1.bf16.msra.mxu0 %v3492
    %5489 = vmatprep.subr.bf16.mxu0 %v3497
    %5490 = vmatpush1.bf16.msra.mxu0 %v3496
    %5491 = vmatprep.subr.bf16.mxu0 %v3501
    %5492 = vmatpush1.bf16.msra.mxu0 %v3500
    %5493 = vmatprep.subr.bf16.mxu0 %v3505
    %5494 = vmatpush1.bf16.msra.mxu0 %v3504
    %5495 = vmatprep.mubr.bf16.mxu0 %v123
    %5496 = vmatmul.mubr.bf16.gmra.mrb[0].mxu0 %v122
    %v5497 = vpop.f32.mrb[0].mxu0
    %v5498 = vadd.f32 %v5457, %v5497
    %v5499 = vpop.f32.mrb[0].mxu0
    %v5500 = vadd.f32 %v5459, %v5499
    %v5501 = vpop.f32.mrb[0].mxu0
    %v5502 = vpop.f32.mrb[0].mxu0
    %5503 = vdwg.mxu0
    %5504 = vmatprep.subr.bf16.mxu0 %v3509
    %5505 = vmatpush1.bf16.msra.mxu0 %v3508
    %5506 = vmatprep.subr.bf16.mxu0 %v3513
    %5507 = vmatpush1.bf16.msra.mxu0 %v3512
    %5508 = vmatprep.subr.bf16.mxu0 %v3517
    %5509 = vmatpush1.bf16.msra.mxu0 %v3516
    %5510 = vmatprep.subr.bf16.mxu0 %v3521
    %5511 = vmatpush1.bf16.msra.mxu0 %v3520
    %5512 = vmatprep.subr.bf16.mxu0 %v3525
    %5513 = vmatpush1.bf16.msra.mxu0 %v3524
    %5514 = vmatprep.subr.bf16.mxu0 %v3529
    %5515 = vmatpush1.bf16.msra.mxu0 %v3528
    %5516 = vmatprep.subr.bf16.mxu0 %v3533
    %5517 = vmatpush1.bf16.msra.mxu0 %v3532
    %5518 = vmatprep.subr.bf16.mxu0 %v3537
    %5519 = vmatpush1.bf16.msra.mxu0 %v3536
    %5520 = vmatprep.subr.bf16.mxu0 %v3541
    %5521 = vmatpush1.bf16.msra.mxu0 %v3540
    %5522 = vmatprep.subr.bf16.mxu0 %v3545
    %5523 = vmatpush1.bf16.msra.mxu0 %v3544
    %5524 = vmatprep.subr.bf16.mxu0 %v3549
    %5525 = vmatpush1.bf16.msra.mxu0 %v3548
    %5526 = vmatprep.subr.bf16.mxu0 %v3553
    %5527 = vmatpush1.bf16.msra.mxu0 %v3552
    %5528 = vmatprep.subr.bf16.mxu0 %v3557
    %5529 = vmatpush1.bf16.msra.mxu0 %v3556
    %5530 = vmatprep.subr.bf16.mxu0 %v3561
    %5531 = vmatpush1.bf16.msra.mxu0 %v3560
    %5532 = vmatprep.subr.bf16.mxu0 %v3565
    %5533 = vmatpush1.bf16.msra.mxu0 %v3564
    %5534 = vmatprep.subr.bf16.mxu0 %v3569
    %5535 = vmatpush1.bf16.msra.mxu0 %v3568
    %5536 = vmatprep.mubr.bf16.mxu0 %v125
    %5537 = vmatmul.mubr.bf16.gmra.mrb[0].mxu0 %v124
    %v5538 = vpop.f32.mrb[0].mxu0
    %v5539 = vadd.f32 %v5498, %v5538
    %v5540 = vpop.f32.mrb[0].mxu0
    %v5541 = vadd.f32 %v5500, %v5540
    %v5542 = vpop.f32.mrb[0].mxu0
    %v5543 = vpop.f32.mrb[0].mxu0
    %5544 = vdwg.mxu0
    %5545 = vmatprep.subr.bf16.mxu0 %v3573
    %5546 = vmatpush1.bf16.msra.mxu0 %v3572
    %5547 = vmatprep.subr.bf16.mxu0 %v3577
    %5548 = vmatpush1.bf16.msra.mxu0 %v3576
    %5549 = vmatprep.subr.bf16.mxu0 %v3581
    %5550 = vmatpush1.bf16.msra.mxu0 %v3580
    %5551 = vmatprep.subr.bf16.mxu0 %v3585
    %5552 = vmatpush1.bf16.msra.mxu0 %v3584
    %5553 = vmatprep.subr.bf16.mxu0 %v3589
    %5554 = vmatpush1.bf16.msra.mxu0 %v3588
    %5555 = vmatprep.subr.bf16.mxu0 %v3593
    %5556 = vmatpush1.bf16.msra.mxu0 %v3592
    %5557 = vmatprep.subr.bf16.mxu0 %v3597
    %5558 = vmatpush1.bf16.msra.mxu0 %v3596
    %5559 = vmatprep.subr.bf16.mxu0 %v3601
    %5560 = vmatpush1.bf16.msra.mxu0 %v3600
    %5561 = vmatprep.subr.bf16.mxu0 %v3605
    %5562 = vmatpush1.bf16.msra.mxu0 %v3604
    %5563 = vmatprep.subr.bf16.mxu0 %v3609
    %5564 = vmatpush1.bf16.msra.mxu0 %v3608
    %5565 = vmatprep.subr.bf16.mxu0 %v3613
    %5566 = vmatpush1.bf16.msra.mxu0 %v3612
    %5567 = vmatprep.subr.bf16.mxu0 %v3617
    %5568 = vmatpush1.bf16.msra.mxu0 %v3616
    %5569 = vmatprep.subr.bf16.mxu0 %v3621
    %5570 = vmatpush1.bf16.msra.mxu0 %v3620
    %5571 = vmatprep.subr.bf16.mxu0 %v3625
    %5572 = vmatpush1.bf16.msra.mxu0 %v3624
    %5573 = vmatprep.subr.bf16.mxu0 %v3629
    %5574 = vmatpush1.bf16.msra.mxu0 %v3628
    %5575 = vmatprep.subr.bf16.mxu0 %v3633
    %5576 = vmatpush1.bf16.msra.mxu0 %v3632
    %5577 = vmatprep.mubr.bf16.mxu0 %v127
    %5578 = vmatmul.mubr.bf16.gmra.mrb[0].mxu0 %v126
    %v5579 = vpop.f32.mrb[0].mxu0
    %v5580 = vadd.f32 %v5539, %v5579
    %v5581 = vpop.f32.mrb[0].mxu0
    %v5582 = vadd.f32 %v5541, %v5581
    %v5583 = vpop.f32.mrb[0].mxu0
    %v5584 = vpop.f32.mrb[0].mxu0
    %5585 = vdwg.mxu0
    %5586 = vmatprep.subr.bf16.mxu0 %v3637
    %5587 = vmatpush1.bf16.msra.mxu0 %v3636
    %5588 = vmatprep.subr.bf16.mxu0 %v3641
    %5589 = vmatpush1.bf16.msra.mxu0 %v3640
    %5590 = vmatprep.subr.bf16.mxu0 %v3645
    %5591 = vmatpush1.bf16.msra.mxu0 %v3644
    %5592 = vmatprep.subr.bf16.mxu0 %v3649
    %5593 = vmatpush1.bf16.msra.mxu0 %v3648
    %5594 = vmatprep.subr.bf16.mxu0 %v3653
    %5595 = vmatpush1.bf16.msra.mxu0 %v3652
    %5596 = vmatprep.subr.bf16.mxu0 %v3657
    %5597 = vmatpush1.bf16.msra.mxu0 %v3656
    %5598 = vmatprep.subr.bf16.mxu0 %v3661
    %5599 = vmatpush1.bf16.msra.mxu0 %v3660
    %5600 = vmatprep.subr.bf16.mxu0 %v3665
    %5601 = vmatpush1.bf16.msra.mxu0 %v3664
    %5602 = vmatprep.subr.bf16.mxu0 %v3669
    %5603 = vmatpush1.bf16.msra.mxu0 %v3668
    %5604 = vmatprep.subr.bf16.mxu0 %v3673
    %5605 = vmatpush1.bf16.msra.mxu0 %v3672
    %5606 = vmatprep.subr.bf16.mxu0 %v3677
    %5607 = vmatpush1.bf16.msra.mxu0 %v3676
    %5608 = vmatprep.subr.bf16.mxu0 %v3681
    %5609 = vmatpush1.bf16.msra.mxu0 %v3680
    %5610 = vmatprep.subr.bf16.mxu0 %v3685
    %5611 = vmatpush1.bf16.msra.mxu0 %v3684
    %5612 = vmatprep.subr.bf16.mxu0 %v3689
    %5613 = vmatpush1.bf16.msra.mxu0 %v3688
    %5614 = vmatprep.subr.bf16.mxu0 %v3693
    %5615 = vmatpush1.bf16.msra.mxu0 %v3692
    %5616 = vmatprep.subr.bf16.mxu0 %v3697
    %5617 = vmatpush1.bf16.msra.mxu0 %v3696
    %5618 = vmatprep.mubr.bf16.mxu0 %v129
    %5619 = vmatmul.mubr.bf16.gmra.mrb[0].mxu0 %v128
    %v5620 = vpop.f32.mrb[0].mxu0
    %v5621 = vadd.f32 %v5580, %v5620
    %v5622 = vpop.f32.mrb[0].mxu0
    %v5623 = vadd.f32 %v5582, %v5622
    %v5624 = vpop.f32.mrb[0].mxu0
    %v5625 = vpop.f32.mrb[0].mxu0
    %5626 = vdwg.mxu0
    %5627 = vmatprep.subr.bf16.mxu0 %v3701
    %5628 = vmatpush1.bf16.msra.mxu0 %v3700
    %5629 = vmatprep.subr.bf16.mxu0 %v3705
    %5630 = vmatpush1.bf16.msra.mxu0 %v3704
    %5631 = vmatprep.subr.bf16.mxu0 %v3709
    %5632 = vmatpush1.bf16.msra.mxu0 %v3708
    %5633 = vmatprep.subr.bf16.mxu0 %v3713
    %5634 = vmatpush1.bf16.msra.mxu0 %v3712
    %5635 = vmatprep.subr.bf16.mxu0 %v3717
    %5636 = vmatpush1.bf16.msra.mxu0 %v3716
    %5637 = vmatprep.subr.bf16.mxu0 %v3721
    %5638 = vmatpush1.bf16.msra.mxu0 %v3720
    %5639 = vmatprep.subr.bf16.mxu0 %v3725
    %5640 = vmatpush1.bf16.msra.mxu0 %v3724
    %5641 = vmatprep.subr.bf16.mxu0 %v3729
    %5642 = vmatpush1.bf16.msra.mxu0 %v3728
    %5643 = vmatprep.subr.bf16.mxu0 %v3733
    %5644 = vmatpush1.bf16.msra.mxu0 %v3732
    %5645 = vmatprep.subr.bf16.mxu0 %v3737
    %5646 = vmatpush1.bf16.msra.mxu0 %v3736
    %5647 = vmatprep.subr.bf16.mxu0 %v3741
    %5648 = vmatpush1.bf16.msra.mxu0 %v3740
    %5649 = vmatprep.subr.bf16.mxu0 %v3745
    %5650 = vmatpush1.bf16.msra.mxu0 %v3744
    %5651 = vmatprep.subr.bf16.mxu0 %v3749
    %5652 = vmatpush1.bf16.msra.mxu0 %v3748
    %5653 = vmatprep.subr.bf16.mxu0 %v3753
    %5654 = vmatpush1.bf16.msra.mxu0 %v3752
    %5655 = vmatprep.subr.bf16.mxu0 %v3757
    %5656 = vmatpush1.bf16.msra.mxu0 %v3756
    %5657 = vmatprep.subr.bf16.mxu0 %v3761
    %5658 = vmatpush1.bf16.msra.mxu0 %v3760
    %5659 = vmatprep.mubr.bf16.mxu0 %v131
    %5660 = vmatmul.mubr.bf16.gmra.mrb[0].mxu0 %v130
    %v5661 = vpop.f32.mrb[0].mxu0
    %v5662 = vadd.f32 %v5621, %v5661
    %v5663 = vpop.f32.mrb[0].mxu0
    %v5664 = vadd.f32 %v5623, %v5663
    %v5665 = vpop.f32.mrb[0].mxu0
    %v5666 = vpop.f32.mrb[0].mxu0
    %5667 = vdwg.mxu0
    %5668 = vmatprep.subr.bf16.mxu0 %v3765
    %5669 = vmatpush1.bf16.msra.mxu0 %v3764
    %5670 = vmatprep.subr.bf16.mxu0 %v3769
    %5671 = vmatpush1.bf16.msra.mxu0 %v3768
    %5672 = vmatprep.subr.bf16.mxu0 %v3773
    %5673 = vmatpush1.bf16.msra.mxu0 %v3772
    %5674 = vmatprep.subr.bf16.mxu0 %v3777
    %5675 = vmatpush1.bf16.msra.mxu0 %v3776
    %5676 = vmatprep.subr.bf16.mxu0 %v3781
    %5677 = vmatpush1.bf16.msra.mxu0 %v3780
    %5678 = vmatprep.subr.bf16.mxu0 %v3785
    %5679 = vmatpush1.bf16.msra.mxu0 %v3784
    %5680 = vmatprep.subr.bf16.mxu0 %v3789
    %5681 = vmatpush1.bf16.msra.mxu0 %v3788
    %5682 = vmatprep.subr.bf16.mxu0 %v3793
    %5683 = vmatpush1.bf16.msra.mxu0 %v3792
    %5684 = vmatprep.subr.bf16.mxu0 %v3797
    %5685 = vmatpush1.bf16.msra.mxu0 %v3796
    %5686 = vmatprep.subr.bf16.mxu0 %v3801
    %5687 = vmatpush1.bf16.msra.mxu0 %v3800
    %5688 = vmatprep.subr.bf16.mxu0 %v3805
    %5689 = vmatpush1.bf16.msra.mxu0 %v3804
    %5690 = vmatprep.subr.bf16.mxu0 %v3809
    %5691 = vmatpush1.bf16.msra.mxu0 %v3808
    %5692 = vmatprep.subr.bf16.mxu0 %v3813
    %5693 = vmatpush1.bf16.msra.mxu0 %v3812
    %5694 = vmatprep.subr.bf16.mxu0 %v3817
    %5695 = vmatpush1.bf16.msra.mxu0 %v3816
    %5696 = vmatprep.subr.bf16.mxu0 %v3821
    %5697 = vmatpush1.bf16.msra.mxu0 %v3820
    %5698 = vmatprep.subr.bf16.mxu0 %v3825
    %5699 = vmatpush1.bf16.msra.mxu0 %v3824
    %5700 = vmatprep.mubr.bf16.mxu0 %v133
    %5701 = vmatmul.mubr.bf16.gmra.mrb[0].mxu0 %v132
    %v5702 = vpop.f32.mrb[0].mxu0
    %v5703 = vadd.f32 %v5662, %v5702
    %v5704 = vpop.f32.mrb[0].mxu0
    %v5705 = vadd.f32 %v5664, %v5704
    %v5706 = vpop.f32.mrb[0].mxu0
    %v5707 = vpop.f32.mrb[0].mxu0
    %5708 = vdwg.mxu0
    %5709 = vmatprep.subr.bf16.mxu0 %v3829
    %5710 = vmatpush1.bf16.msra.mxu0 %v3828
    %5711 = vmatprep.subr.bf16.mxu0 %v3833
    %5712 = vmatpush1.bf16.msra.mxu0 %v3832
    %5713 = vmatprep.subr.bf16.mxu0 %v3837
    %5714 = vmatpush1.bf16.msra.mxu0 %v3836
    %5715 = vmatprep.subr.bf16.mxu0 %v3841
    %5716 = vmatpush1.bf16.msra.mxu0 %v3840
    %5717 = vmatprep.subr.bf16.mxu0 %v3845
    %5718 = vmatpush1.bf16.msra.mxu0 %v3844
    %5719 = vmatprep.subr.bf16.mxu0 %v3849
    %5720 = vmatpush1.bf16.msra.mxu0 %v3848
    %5721 = vmatprep.subr.bf16.mxu0 %v3853
    %5722 = vmatpush1.bf16.msra.mxu0 %v3852
    %5723 = vmatprep.subr.bf16.mxu0 %v3857
    %5724 = vmatpush1.bf16.msra.mxu0 %v3856
    %5725 = vmatprep.subr.bf16.mxu0 %v3861
    %5726 = vmatpush1.bf16.msra.mxu0 %v3860
    %5727 = vmatprep.subr.bf16.mxu0 %v3865
    %5728 = vmatpush1.bf16.msra.mxu0 %v3864
    %5729 = vmatprep.subr.bf16.mxu0 %v3869
    %5730 = vmatpush1.bf16.msra.mxu0 %v3868
    %5731 = vmatprep.subr.bf16.mxu0 %v3873
    %5732 = vmatpush1.bf16.msra.mxu0 %v3872
    %5733 = vmatprep.subr.bf16.mxu0 %v3877
    %5734 = vmatpush1.bf16.msra.mxu0 %v3876
    %5735 = vmatprep.subr.bf16.mxu0 %v3881
    %5736 = vmatpush1.bf16.msra.mxu0 %v3880
    %5737 = vmatprep.subr.bf16.mxu0 %v3885
    %5738 = vmatpush1.bf16.msra.mxu0 %v3884
    %5739 = vmatprep.subr.bf16.mxu0 %v3889
    %5740 = vmatpush1.bf16.msra.mxu0 %v3888
    %5741 = vmatprep.mubr.bf16.mxu0 %v135
    %5742 = vmatmul.mubr.bf16.gmra.mrb[0].mxu0 %v134
    %v5743 = vpop.f32.mrb[0].mxu0
    %v5744 = vadd.f32 %v5703, %v5743
    %v5745 = vpop.f32.mrb[0].mxu0
    %v5746 = vadd.f32 %v5705, %v5745
    %v5747 = vpop.f32.mrb[0].mxu0
    %v5748 = vpop.f32.mrb[0].mxu0
    %5749 = vdwg.mxu0
    %5750 = vmatprep.subr.bf16.mxu0 %v3893
    %5751 = vmatpush1.bf16.msra.mxu0 %v3892
    %5752 = vmatprep.subr.bf16.mxu0 %v3897
    %5753 = vmatpush1.bf16.msra.mxu0 %v3896
    %5754 = vmatprep.subr.bf16.mxu0 %v3901
    %5755 = vmatpush1.bf16.msra.mxu0 %v3900
    %5756 = vmatprep.subr.bf16.mxu0 %v3905
    %5757 = vmatpush1.bf16.msra.mxu0 %v3904
    %5758 = vmatprep.subr.bf16.mxu0 %v3909
    %5759 = vmatpush1.bf16.msra.mxu0 %v3908
    %5760 = vmatprep.subr.bf16.mxu0 %v3913
    %5761 = vmatpush1.bf16.msra.mxu0 %v3912
    %5762 = vmatprep.subr.bf16.mxu0 %v3917
    %5763 = vmatpush1.bf16.msra.mxu0 %v3916
    %5764 = vmatprep.subr.bf16.mxu0 %v3921
    %5765 = vmatpush1.bf16.msra.mxu0 %v3920
    %5766 = vmatprep.subr.bf16.mxu0 %v3925
    %5767 = vmatpush1.bf16.msra.mxu0 %v3924
    %5768 = vmatprep.subr.bf16.mxu0 %v3929
    %5769 = vmatpush1.bf16.msra.mxu0 %v3928
    %5770 = vmatprep.subr.bf16.mxu0 %v3933
    %5771 = vmatpush1.bf16.msra.mxu0 %v3932
    %5772 = vmatprep.subr.bf16.mxu0 %v3937
    %5773 = vmatpush1.bf16.msra.mxu0 %v3936
    %5774 = vmatprep.subr.bf16.mxu0 %v3941
    %5775 = vmatpush1.bf16.msra.mxu0 %v3940
    %5776 = vmatprep.subr.bf16.mxu0 %v3945
    %5777 = vmatpush1.bf16.msra.mxu0 %v3944
    %5778 = vmatprep.subr.bf16.mxu0 %v3949
    %5779 = vmatpush1.bf16.msra.mxu0 %v3948
    %5780 = vmatprep.subr.bf16.mxu0 %v3953
    %5781 = vmatpush1.bf16.msra.mxu0 %v3952
    %5782 = vmatprep.mubr.bf16.mxu0 %v137
    %5783 = vmatmul.mubr.bf16.gmra.mrb[0].mxu0 %v136
    %v5784 = vpop.f32.mrb[0].mxu0
    %v5785 = vadd.f32 %v5744, %v5784
    %v5786 = vpop.f32.mrb[0].mxu0
    %v5787 = vadd.f32 %v5746, %v5786
    %v5788 = vpop.f32.mrb[0].mxu0
    %v5789 = vpop.f32.mrb[0].mxu0
    %5790 = vdwg.mxu0
    %5791 = vmatprep.subr.bf16.mxu0 %v3957
    %5792 = vmatpush1.bf16.msra.mxu0 %v3956
    %5793 = vmatprep.subr.bf16.mxu0 %v3961
    %5794 = vmatpush1.bf16.msra.mxu0 %v3960
    %5795 = vmatprep.subr.bf16.mxu0 %v3965
    %5796 = vmatpush1.bf16.msra.mxu0 %v3964
    %5797 = vmatprep.subr.bf16.mxu0 %v3969
    %5798 = vmatpush1.bf16.msra.mxu0 %v3968
    %5799 = vmatprep.subr.bf16.mxu0 %v3973
    %5800 = vmatpush1.bf16.msra.mxu0 %v3972
    %5801 = vmatprep.subr.bf16.mxu0 %v3977
    %5802 = vmatpush1.bf16.msra.mxu0 %v3976
    %5803 = vmatprep.subr.bf16.mxu0 %v3981
    %5804 = vmatpush1.bf16.msra.mxu0 %v3980
    %5805 = vmatprep.subr.bf16.mxu0 %v3985
    %5806 = vmatpush1.bf16.msra.mxu0 %v3984
    %5807 = vmatprep.subr.bf16.mxu0 %v3989
    %5808 = vmatpush1.bf16.msra.mxu0 %v3988
    %5809 = vmatprep.subr.bf16.mxu0 %v3993
    %5810 = vmatpush1.bf16.msra.mxu0 %v3992
    %5811 = vmatprep.subr.bf16.mxu0 %v3997
    %5812 = vmatpush1.bf16.msra.mxu0 %v3996
    %5813 = vmatprep.subr.bf16.mxu0 %v4001
    %5814 = vmatpush1.bf16.msra.mxu0 %v4000
    %5815 = vmatprep.subr.bf16.mxu0 %v4005
    %5816 = vmatpush1.bf16.msra.mxu0 %v4004
    %5817 = vmatprep.subr.bf16.mxu0 %v4009
    %5818 = vmatpush1.bf16.msra.mxu0 %v4008
    %5819 = vmatprep.subr.bf16.mxu0 %v4013
    %5820 = vmatpush1.bf16.msra.mxu0 %v4012
    %5821 = vmatprep.subr.bf16.mxu0 %v4017
    %5822 = vmatpush1.bf16.msra.mxu0 %v4016
    %5823 = vmatprep.mubr.bf16.mxu0 %v139
    %5824 = vmatmul.mubr.bf16.gmra.mrb[0].mxu0 %v138
    %v5825 = vpop.f32.mrb[0].mxu0
    %v5826 = vadd.f32 %v5785, %v5825
    %v5827 = vpop.f32.mrb[0].mxu0
    %v5828 = vadd.f32 %v5787, %v5827
    %v5829 = vpop.f32.mrb[0].mxu0
    %v5830 = vpop.f32.mrb[0].mxu0
    %5831 = vdwg.mxu0
    %5832 = vmatprep.subr.bf16.mxu0 %v4805
    %5833 = vmatpush1.bf16.msra.mxu0 %v4802
    %5834 = vmatprep.subr.bf16.mxu0 0
    %5835 = vmatpush1.bf16.msra.mxu0 0
    %5836 = vmatprep.subr.bf16.mxu0 0
    %5837 = vmatpush1.bf16.msra.mxu0 0
    %5838 = vmatprep.subr.bf16.mxu0 0
    %5839 = vmatpush1.bf16.msra.mxu0 0
    %5840 = vmatprep.subr.bf16.mxu0 0
    %5841 = vmatpush1.bf16.msra.mxu0 0
    %5842 = vmatprep.subr.bf16.mxu0 0
    %5843 = vmatpush1.bf16.msra.mxu0 0
    %5844 = vmatprep.subr.bf16.mxu0 0
    %5845 = vmatpush1.bf16.msra.mxu0 0
    %5846 = vmatprep.subr.bf16.mxu0 0
    %5847 = vmatpush1.bf16.msra.mxu0 0
    %5848 = vmatprep.subr.bf16.mxu0 0
    %5849 = vmatpush1.bf16.msra.mxu0 0
    %5850 = vmatprep.subr.bf16.mxu0 0
    %5851 = vmatpush1.bf16.msra.mxu0 0
    %5852 = vmatprep.subr.bf16.mxu0 0
    %5853 = vmatpush1.bf16.msra.mxu0 0
    %5854 = vmatprep.subr.bf16.mxu0 0
    %5855 = vmatpush1.bf16.msra.mxu0 0
    %5856 = vmatprep.subr.bf16.mxu0 0
    %5857 = vmatpush1.bf16.msra.mxu0 0
    %5858 = vmatprep.subr.bf16.mxu0 0
    %5859 = vmatpush1.bf16.msra.mxu0 0
    %5860 = vmatprep.subr.bf16.mxu0 0
    %5861 = vmatpush1.bf16.msra.mxu0 0
    %5862 = vmatprep.subr.bf16.mxu0 0
    %5863 = vmatpush1.bf16.msra.mxu0 0
    %5864 = vmatprep.mubr.bf16.mxu0 0
    %5865 = vmatmul.mubr.bf16.gmra.mrb[0].mxu0 %v4792
    %v5866 = vpop.f32.mrb[0].mxu0
    %v5867 = vadd.f32 %v5826, %v5866
    %v5868 = vpop.f32.mrb[0].mxu0
    %v5869 = vadd.f32 %v5828, %v5868
    %v5870 = vpop.f32.mrb[0].mxu0
    %v5871 = vpop.f32.mrb[0].mxu0
    %5872 = vdwg.mxu0
    %vm5873 = vcmp.gt.f32.partialorder %v5334, 0.0
    %vm5874 = vcmp.gt.f32.partialorder %v5336, 0.0
    %vm5875 = vcmp.gt.f32.partialorder %v5867, 0.0
    %vm5876 = vcmp.gt.f32.partialorder %v5869, 0.0
    %v5877 = vmul.f32 %v5334, 0.2
    %v5878 = vmul.f32 %v5336, 0.2
    %v5879 = vmul.f32 %v5867, 0.2
    %v5880 = vmul.f32 %v5869, 0.2
    %v5881 = vsel %vm5873, %v5334, %v5877
    %v5882 = vsel %vm5874, %v5336, %v5878
    %v5883 = vsel %vm5875, %v5867, %v5879
    %v5884 = vsel %vm5876, %v5869, %v5880
    %s5885 = scalar_lea.vmem [#allocation9], 1
    %v5886 = vld [vmem:[%s5885] ss:$4 sm:$0xf]
    %v5887 = vpack.c.bf16 %v5881, %v5881
    %v5888 = vpack.c.bf16 %v5882, %v5882
    %v5889 = vpack.c.bf16 %v5883, %v5883
    %v5890 = vpack.c.bf16 %v5884, %v5884
    %v5891 = vld [vmem:[#allocation4] sm:$0xff]
    %v5892 = vld [vmem:[#allocation4 + $0x8] sm:$0xff]
    %v5893 = vld [vmem:[#allocation4 + $0x10] sm:$0xff]
    %v5894 = vld [vmem:[#allocation4 + $0x18] sm:$0xff]
    %v5895 = vld [vmem:[#allocation4 + $0x20] sm:$0xff]
    %v5896 = vld [vmem:[#allocation4 + $0x28] sm:$0xff]
    %v5897 = vld [vmem:[#allocation4 + $0x30] sm:$0xff]
    %v5898 = vld [vmem:[#allocation4 + $0x38] sm:$0xff]
    %v5899 = vld [vmem:[#allocation4 + $0x40] sm:$0xff]
    %v5900 = vld [vmem:[#allocation4 + $0x48] sm:$0xff]
    %v5901 = vld [vmem:[#allocation4 + $0x50] sm:$0xff]
    %v5902 = vld [vmem:[#allocation4 + $0x58] sm:$0xff]
    %v5903 = vld [vmem:[#allocation4 + $0x60] sm:$0xff]
    %v5904 = vld [vmem:[#allocation4 + $0x68] sm:$0xff]
    %v5905 = vld [vmem:[#allocation4 + $0x70] sm:$0xff]
    %v5906 = vld [vmem:[#allocation4 + $0x78] sm:$0xff]
    %v5907 = vld [vmem:[#allocation4 + $0x80] sm:$0xff]
    %v5908 = vld [vmem:[#allocation4 + $0x88] sm:$0xff]
    %v5909 = vld [vmem:[#allocation4 + $0x90] sm:$0xff]
    %v5910 = vld [vmem:[#allocation4 + $0x98] sm:$0xff]
    %v5911 = vld [vmem:[#allocation4 + $0xa0] sm:$0xff]
    %v5912 = vld [vmem:[#allocation4 + $0xa8] sm:$0xff]
    %v5913 = vld [vmem:[#allocation4 + $0xb0] sm:$0xff]
    %v5914 = vld [vmem:[#allocation4 + $0xb8] sm:$0xff]
    %v5915 = vld [vmem:[#allocation4 + $0xc0] sm:$0xff]
    %v5916 = vld [vmem:[#allocation4 + $0xc8] sm:$0xff]
    %v5917 = vld [vmem:[#allocation4 + $0xd0] sm:$0xff]
    %v5918 = vld [vmem:[#allocation4 + $0xd8] sm:$0xff]
    %v5919 = vld [vmem:[#allocation4 + $0xe0] sm:$0xff]
    %v5920 = vld [vmem:[#allocation4 + $0xe8] sm:$0xff]
    %v5921 = vld [vmem:[#allocation4 + $0xf0] sm:$0xff]
    %v5922 = vld [vmem:[#allocation4 + $0xf8] sm:$0xff]
    %v5923 = vld [vmem:[#allocation4 + $0x100] sm:$0xff]
    %v5924 = vld [vmem:[#allocation4 + $0x108] sm:$0xff]
    %v5925 = vld [vmem:[#allocation4 + $0x110] sm:$0xff]
    %v5926 = vld [vmem:[#allocation4 + $0x118] sm:$0xff]
    %v5927 = vld [vmem:[#allocation4 + $0x120] sm:$0xff]
    %v5928 = vld [vmem:[#allocation4 + $0x128] sm:$0xff]
    %v5929 = vld [vmem:[#allocation4 + $0x130] sm:$0xff]
    %v5930 = vld [vmem:[#allocation4 + $0x138] sm:$0xff]
    %v5931 = vld [vmem:[#allocation4 + $0x140] sm:$0xff]
    %v5932 = vld [vmem:[#allocation4 + $0x148] sm:$0xff]
    %v5933 = vld [vmem:[#allocation4 + $0x150] sm:$0xff]
    %v5934 = vld [vmem:[#allocation4 + $0x158] sm:$0xff]
    %v5935 = vld [vmem:[#allocation4 + $0x160] sm:$0xff]
    %v5936 = vld [vmem:[#allocation4 + $0x168] sm:$0xff]
    %v5937 = vld [vmem:[#allocation4 + $0x170] sm:$0xff]
    %v5938 = vld [vmem:[#allocation4 + $0x178] sm:$0xff]
    %v5939 = vld [vmem:[#allocation4 + $0x180] sm:$0xff]
    %v5940 = vld [vmem:[#allocation4 + $0x188] sm:$0xff]
    %v5941 = vld [vmem:[#allocation4 + $0x190] sm:$0xff]
    %v5942 = vld [vmem:[#allocation4 + $0x198] sm:$0xff]
    %v5943 = vld [vmem:[#allocation4 + $0x1a0] sm:$0xff]
    %v5944 = vld [vmem:[#allocation4 + $0x1a8] sm:$0xff]
    %v5945 = vld [vmem:[#allocation4 + $0x1b0] sm:$0xff]
    %v5946 = vld [vmem:[#allocation4 + $0x1b8] sm:$0xff]
    %v5947 = vld [vmem:[#allocation4 + $0x1c0] sm:$0xff]
    %v5948 = vld [vmem:[#allocation4 + $0x1c8] sm:$0xff]
    %v5949 = vld [vmem:[#allocation4 + $0x1d0] sm:$0xff]
    %v5950 = vld [vmem:[#allocation4 + $0x1d8] sm:$0xff]
    %v5951 = vld [vmem:[#allocation4 + $0x1e0] sm:$0xff]
    %v5952 = vld [vmem:[#allocation4 + $0x1e8] sm:$0xff]
    %v5953 = vld [vmem:[#allocation4 + $0x1f0] sm:$0xff]
    %v5954 = vld [vmem:[#allocation4 + $0x1f8] sm:$0xff]
    %v5955 = vld [vmem:[#allocation4 + $0x200] sm:$0xff]
    %v5956 = vld [vmem:[#allocation4 + $0x208] sm:$0xff]
    %v5957 = vld [vmem:[#allocation4 + $0x210] sm:$0xff]
    %v5958 = vld [vmem:[#allocation4 + $0x218] sm:$0xff]
    %v5959 = vld [vmem:[#allocation4 + $0x220] sm:$0xff]
    %v5960 = vld [vmem:[#allocation4 + $0x228] sm:$0xff]
    %v5961 = vld [vmem:[#allocation4 + $0x230] sm:$0xff]
    %v5962 = vld [vmem:[#allocation4 + $0x238] sm:$0xff]
    %v5963 = vld [vmem:[#allocation4 + $0x240] sm:$0xff]
    %v5964 = vld [vmem:[#allocation4 + $0x248] sm:$0xff]
    %v5965 = vld [vmem:[#allocation4 + $0x250] sm:$0xff]
    %v5966 = vld [vmem:[#allocation4 + $0x258] sm:$0xff]
    %v5967 = vld [vmem:[#allocation4 + $0x260] sm:$0xff]
    %v5968 = vld [vmem:[#allocation4 + $0x268] sm:$0xff]
    %v5969 = vld [vmem:[#allocation4 + $0x270] sm:$0xff]
    %v5970 = vld [vmem:[#allocation4 + $0x278] sm:$0xff]
    %v5971 = vld [vmem:[#allocation4 + $0x280] sm:$0xff]
    %v5972 = vld [vmem:[#allocation4 + $0x288] sm:$0xff]
    %v5973 = vld [vmem:[#allocation4 + $0x290] sm:$0xff]
    %v5974 = vld [vmem:[#allocation4 + $0x298] sm:$0xff]
    %v5975 = vld [vmem:[#allocation4 + $0x2a0] sm:$0xff]
    %v5976 = vld [vmem:[#allocation4 + $0x2a8] sm:$0xff]
    %v5977 = vld [vmem:[#allocation4 + $0x2b0] sm:$0xff]
    %v5978 = vld [vmem:[#allocation4 + $0x2b8] sm:$0xff]
    %v5979 = vld [vmem:[#allocation4 + $0x2c0] sm:$0xff]
    %v5980 = vld [vmem:[#allocation4 + $0x2c8] sm:$0xff]
    %v5981 = vld [vmem:[#allocation4 + $0x2d0] sm:$0xff]
    %v5982 = vld [vmem:[#allocation4 + $0x2d8] sm:$0xff]
    %v5983 = vld [vmem:[#allocation4 + $0x2e0] sm:$0xff]
    %v5984 = vld [vmem:[#allocation4 + $0x2e8] sm:$0xff]
    %v5985 = vld [vmem:[#allocation4 + $0x2f0] sm:$0xff]
    %v5986 = vld [vmem:[#allocation4 + $0x2f8] sm:$0xff]
    %v5987 = vld [vmem:[#allocation4 + $0x300] sm:$0xff]
    %v5988 = vld [vmem:[#allocation4 + $0x308] sm:$0xff]
    %v5989 = vld [vmem:[#allocation4 + $0x310] sm:$0xff]
    %v5990 = vld [vmem:[#allocation4 + $0x318] sm:$0xff]
    %v5991 = vld [vmem:[#allocation4 + $0x320] sm:$0xff]
    %v5992 = vld [vmem:[#allocation4 + $0x328] sm:$0xff]
    %v5993 = vld [vmem:[#allocation4 + $0x330] sm:$0xff]
    %v5994 = vld [vmem:[#allocation4 + $0x338] sm:$0xff]
    %v5995 = vld [vmem:[#allocation4 + $0x340] sm:$0xff]
    %v5996 = vld [vmem:[#allocation4 + $0x348] sm:$0xff]
    %v5997 = vld [vmem:[#allocation4 + $0x350] sm:$0xff]
    %v5998 = vld [vmem:[#allocation4 + $0x358] sm:$0xff]
    %v5999 = vld [vmem:[#allocation4 + $0x360] sm:$0xff]
    %v6000 = vld [vmem:[#allocation4 + $0x368] sm:$0xff]
    %v6001 = vld [vmem:[#allocation4 + $0x370] sm:$0xff]
    %v6002 = vld [vmem:[#allocation4 + $0x378] sm:$0xff]
    %v6003 = vld [vmem:[#allocation4 + $0x380] sm:$0xff]
    %v6004 = vld [vmem:[#allocation4 + $0x388] sm:$0xff]
    %v6005 = vld [vmem:[#allocation4 + $0x390] sm:$0xff]
    %v6006 = vld [vmem:[#allocation4 + $0x398] sm:$0xff]
    %v6007 = vld [vmem:[#allocation4 + $0x3a0] sm:$0xff]
    %v6008 = vld [vmem:[#allocation4 + $0x3a8] sm:$0xff]
    %v6009 = vld [vmem:[#allocation4 + $0x3b0] sm:$0xff]
    %v6010 = vld [vmem:[#allocation4 + $0x3b8] sm:$0xff]
    %v6011 = vld [vmem:[#allocation4 + $0x3c0] sm:$0xff]
    %v6012 = vld [vmem:[#allocation4 + $0x3c8] sm:$0xff]
    %v6013 = vld [vmem:[#allocation4 + $0x3d0] sm:$0xff]
    %v6014 = vld [vmem:[#allocation4 + $0x3d8] sm:$0xff]
    %v6015 = vld [vmem:[#allocation4 + $0x3e0] sm:$0xff]
    %v6016 = vld [vmem:[#allocation4 + $0x3e8] sm:$0xff]
    %v6017 = vld [vmem:[#allocation4 + $0x3f0] sm:$0xff]
    %v6018 = vld [vmem:[#allocation4 + $0x3f8] sm:$0xff]
    %v6020 = vlaneseq
    %v6021 = vshrl.u32 %v6020, 7
    %v6022 = vsub.s32 0, %v6021
    %v6023 = vrot.slane %v5886, %v6022
    %v6024 = vlaneseq
    %v6025 = vshrl.u32 %v6024, 7
    %v6026 = vsub.s32 1, %v6025
    %v6027 = vrot.slane %v5886, %v6026
    %v6028 = vlaneseq
    %v6029 = vshrl.u32 %v6028, 7
    %v6030 = vsub.s32 2, %v6029
    %v6031 = vrot.slane %v5886, %v6030
    %v6032 = vlaneseq
    %v6033 = vshrl.u32 %v6032, 7
    %v6034 = vsub.s32 3, %v6033
    %v6035 = vrot.slane %v5886, %v6034
    %v6168 = vunpack.c.l.b16 %v5891
    %v6169 = vunpack.c.h.b16 %v5891
    %v6170 = vunpack.c.l.b16 %v5892
    %v6171 = vunpack.c.h.b16 %v5892
    %v6172 = vunpack.c.l.b16 %v5893
    %v6173 = vunpack.c.h.b16 %v5893
    %v6174 = vunpack.c.l.b16 %v5894
    %v6175 = vunpack.c.h.b16 %v5894
    %v6176 = vunpack.c.l.b16 %v5895
    %v6177 = vunpack.c.h.b16 %v5895
    %v6178 = vunpack.c.l.b16 %v5896
    %v6179 = vunpack.c.h.b16 %v5896
    %v6180 = vunpack.c.l.b16 %v5897
    %v6181 = vunpack.c.h.b16 %v5897
    %v6182 = vunpack.c.l.b16 %v5898
    %v6183 = vunpack.c.h.b16 %v5898
    %v6184 = vunpack.c.l.b16 %v5899
    %v6185 = vunpack.c.h.b16 %v5899
    %v6186 = vunpack.c.l.b16 %v5900
    %v6187 = vunpack.c.h.b16 %v5900
    %v6188 = vunpack.c.l.b16 %v5901
    %v6189 = vunpack.c.h.b16 %v5901
    %v6190 = vunpack.c.l.b16 %v5902
    %v6191 = vunpack.c.h.b16 %v5902
    %v6192 = vunpack.c.l.b16 %v5903
    %v6193 = vunpack.c.h.b16 %v5903
    %v6194 = vunpack.c.l.b16 %v5904
    %v6195 = vunpack.c.h.b16 %v5904
    %v6196 = vunpack.c.l.b16 %v5905
    %v6197 = vunpack.c.h.b16 %v5905
    %v6198 = vunpack.c.l.b16 %v5906
    %v6199 = vunpack.c.h.b16 %v5906
    %v6200 = vunpack.c.l.b16 %v5907
    %v6201 = vunpack.c.h.b16 %v5907
    %v6202 = vunpack.c.l.b16 %v5908
    %v6203 = vunpack.c.h.b16 %v5908
    %v6204 = vunpack.c.l.b16 %v5909
    %v6205 = vunpack.c.h.b16 %v5909
    %v6206 = vunpack.c.l.b16 %v5910
    %v6207 = vunpack.c.h.b16 %v5910
    %v6208 = vunpack.c.l.b16 %v5911
    %v6209 = vunpack.c.h.b16 %v5911
    %v6210 = vunpack.c.l.b16 %v5912
    %v6211 = vunpack.c.h.b16 %v5912
    %v6212 = vunpack.c.l.b16 %v5913
    %v6213 = vunpack.c.h.b16 %v5913
    %v6214 = vunpack.c.l.b16 %v5914
    %v6215 = vunpack.c.h.b16 %v5914
    %v6216 = vunpack.c.l.b16 %v5915
    %v6217 = vunpack.c.h.b16 %v5915
    %v6218 = vunpack.c.l.b16 %v5916
    %v6219 = vunpack.c.h.b16 %v5916
    %v6220 = vunpack.c.l.b16 %v5917
    %v6221 = vunpack.c.h.b16 %v5917
    %v6222 = vunpack.c.l.b16 %v5918
    %v6223 = vunpack.c.h.b16 %v5918
    %v6224 = vunpack.c.l.b16 %v5919
    %v6225 = vunpack.c.h.b16 %v5919
    %v6226 = vunpack.c.l.b16 %v5920
    %v6227 = vunpack.c.h.b16 %v5920
    %v6228 = vunpack.c.l.b16 %v5921
    %v6229 = vunpack.c.h.b16 %v5921
    %v6230 = vunpack.c.l.b16 %v5922
    %v6231 = vunpack.c.h.b16 %v5922
    %v6232 = vunpack.c.l.b16 %v5923
    %v6233 = vunpack.c.h.b16 %v5923
    %v6234 = vunpack.c.l.b16 %v5924
    %v6235 = vunpack.c.h.b16 %v5924
    %v6236 = vunpack.c.l.b16 %v5925
    %v6237 = vunpack.c.h.b16 %v5925
    %v6238 = vunpack.c.l.b16 %v5926
    %v6239 = vunpack.c.h.b16 %v5926
    %v6240 = vunpack.c.l.b16 %v5927
    %v6241 = vunpack.c.h.b16 %v5927
    %v6242 = vunpack.c.l.b16 %v5928
    %v6243 = vunpack.c.h.b16 %v5928
    %v6244 = vunpack.c.l.b16 %v5929
    %v6245 = vunpack.c.h.b16 %v5929
    %v6246 = vunpack.c.l.b16 %v5930
    %v6247 = vunpack.c.h.b16 %v5930
    %v6248 = vunpack.c.l.b16 %v5931
    %v6249 = vunpack.c.h.b16 %v5931
    %v6250 = vunpack.c.l.b16 %v5932
    %v6251 = vunpack.c.h.b16 %v5932
    %v6252 = vunpack.c.l.b16 %v5933
    %v6253 = vunpack.c.h.b16 %v5933
    %v6254 = vunpack.c.l.b16 %v5934
    %v6255 = vunpack.c.h.b16 %v5934
    %v6256 = vunpack.c.l.b16 %v5935
    %v6257 = vunpack.c.h.b16 %v5935
    %v6258 = vunpack.c.l.b16 %v5936
    %v6259 = vunpack.c.h.b16 %v5936
    %v6260 = vunpack.c.l.b16 %v5937
    %v6261 = vunpack.c.h.b16 %v5937
    %v6262 = vunpack.c.l.b16 %v5938
    %v6263 = vunpack.c.h.b16 %v5938
    %v6264 = vunpack.c.l.b16 %v5939
    %v6265 = vunpack.c.h.b16 %v5939
    %v6266 = vunpack.c.l.b16 %v5940
    %v6267 = vunpack.c.h.b16 %v5940
    %v6268 = vunpack.c.l.b16 %v5941
    %v6269 = vunpack.c.h.b16 %v5941
    %v6270 = vunpack.c.l.b16 %v5942
    %v6271 = vunpack.c.h.b16 %v5942
    %v6272 = vunpack.c.l.b16 %v5943
    %v6273 = vunpack.c.h.b16 %v5943
    %v6274 = vunpack.c.l.b16 %v5944
    %v6275 = vunpack.c.h.b16 %v5944
    %v6276 = vunpack.c.l.b16 %v5945
    %v6277 = vunpack.c.h.b16 %v5945
    %v6278 = vunpack.c.l.b16 %v5946
    %v6279 = vunpack.c.h.b16 %v5946
    %v6280 = vunpack.c.l.b16 %v5947
    %v6281 = vunpack.c.h.b16 %v5947
    %v6282 = vunpack.c.l.b16 %v5948
    %v6283 = vunpack.c.h.b16 %v5948
    %v6284 = vunpack.c.l.b16 %v5949
    %v6285 = vunpack.c.h.b16 %v5949
    %v6286 = vunpack.c.l.b16 %v5950
    %v6287 = vunpack.c.h.b16 %v5950
    %v6288 = vunpack.c.l.b16 %v5951
    %v6289 = vunpack.c.h.b16 %v5951
    %v6290 = vunpack.c.l.b16 %v5952
    %v6291 = vunpack.c.h.b16 %v5952
    %v6292 = vunpack.c.l.b16 %v5953
    %v6293 = vunpack.c.h.b16 %v5953
    %v6294 = vunpack.c.l.b16 %v5954
    %v6295 = vunpack.c.h.b16 %v5954
    %v6296 = vunpack.c.l.b16 %v5955
    %v6297 = vunpack.c.h.b16 %v5955
    %v6298 = vunpack.c.l.b16 %v5956
    %v6299 = vunpack.c.h.b16 %v5956
    %v6300 = vunpack.c.l.b16 %v5957
    %v6301 = vunpack.c.h.b16 %v5957
    %v6302 = vunpack.c.l.b16 %v5958
    %v6303 = vunpack.c.h.b16 %v5958
    %v6304 = vunpack.c.l.b16 %v5959
    %v6305 = vunpack.c.h.b16 %v5959
    %v6306 = vunpack.c.l.b16 %v5960
    %v6307 = vunpack.c.h.b16 %v5960
    %v6308 = vunpack.c.l.b16 %v5961
    %v6309 = vunpack.c.h.b16 %v5961
    %v6310 = vunpack.c.l.b16 %v5962
    %v6311 = vunpack.c.h.b16 %v5962
    %v6312 = vunpack.c.l.b16 %v5963
    %v6313 = vunpack.c.h.b16 %v5963
    %v6314 = vunpack.c.l.b16 %v5964
    %v6315 = vunpack.c.h.b16 %v5964
    %v6316 = vunpack.c.l.b16 %v5965
    %v6317 = vunpack.c.h.b16 %v5965
    %v6318 = vunpack.c.l.b16 %v5966
    %v6319 = vunpack.c.h.b16 %v5966
    %v6320 = vunpack.c.l.b16 %v5967
    %v6321 = vunpack.c.h.b16 %v5967
    %v6322 = vunpack.c.l.b16 %v5968
    %v6323 = vunpack.c.h.b16 %v5968
    %v6324 = vunpack.c.l.b16 %v5969
    %v6325 = vunpack.c.h.b16 %v5969
    %v6326 = vunpack.c.l.b16 %v5970
    %v6327 = vunpack.c.h.b16 %v5970
    %v6328 = vunpack.c.l.b16 %v5971
    %v6329 = vunpack.c.h.b16 %v5971
    %v6330 = vunpack.c.l.b16 %v5972
    %v6331 = vunpack.c.h.b16 %v5972
    %v6332 = vunpack.c.l.b16 %v5973
    %v6333 = vunpack.c.h.b16 %v5973
    %v6334 = vunpack.c.l.b16 %v5974
    %v6335 = vunpack.c.h.b16 %v5974
    %v6336 = vunpack.c.l.b16 %v5975
    %v6337 = vunpack.c.h.b16 %v5975
    %v6338 = vunpack.c.l.b16 %v5976
    %v6339 = vunpack.c.h.b16 %v5976
    %v6340 = vunpack.c.l.b16 %v5977
    %v6341 = vunpack.c.h.b16 %v5977
    %v6342 = vunpack.c.l.b16 %v5978
    %v6343 = vunpack.c.h.b16 %v5978
    %v6344 = vunpack.c.l.b16 %v5979
    %v6345 = vunpack.c.h.b16 %v5979
    %v6346 = vunpack.c.l.b16 %v5980
    %v6347 = vunpack.c.h.b16 %v5980
    %v6348 = vunpack.c.l.b16 %v5981
    %v6349 = vunpack.c.h.b16 %v5981
    %v6350 = vunpack.c.l.b16 %v5982
    %v6351 = vunpack.c.h.b16 %v5982
    %v6352 = vunpack.c.l.b16 %v5983
    %v6353 = vunpack.c.h.b16 %v5983
    %v6354 = vunpack.c.l.b16 %v5984
    %v6355 = vunpack.c.h.b16 %v5984
    %v6356 = vunpack.c.l.b16 %v5985
    %v6357 = vunpack.c.h.b16 %v5985
    %v6358 = vunpack.c.l.b16 %v5986
    %v6359 = vunpack.c.h.b16 %v5986
    %v6360 = vunpack.c.l.b16 %v5987
    %v6361 = vunpack.c.h.b16 %v5987
    %v6362 = vunpack.c.l.b16 %v5988
    %v6363 = vunpack.c.h.b16 %v5988
    %v6364 = vunpack.c.l.b16 %v5989
    %v6365 = vunpack.c.h.b16 %v5989
    %v6366 = vunpack.c.l.b16 %v5990
    %v6367 = vunpack.c.h.b16 %v5990
    %v6368 = vunpack.c.l.b16 %v5991
    %v6369 = vunpack.c.h.b16 %v5991
    %v6370 = vunpack.c.l.b16 %v5992
    %v6371 = vunpack.c.h.b16 %v5992
    %v6372 = vunpack.c.l.b16 %v5993
    %v6373 = vunpack.c.h.b16 %v5993
    %v6374 = vunpack.c.l.b16 %v5994
    %v6375 = vunpack.c.h.b16 %v5994
    %v6376 = vunpack.c.l.b16 %v5995
    %v6377 = vunpack.c.h.b16 %v5995
    %v6378 = vunpack.c.l.b16 %v5996
    %v6379 = vunpack.c.h.b16 %v5996
    %v6380 = vunpack.c.l.b16 %v5997
    %v6381 = vunpack.c.h.b16 %v5997
    %v6382 = vunpack.c.l.b16 %v5998
    %v6383 = vunpack.c.h.b16 %v5998
    %v6384 = vunpack.c.l.b16 %v5999
    %v6385 = vunpack.c.h.b16 %v5999
    %v6386 = vunpack.c.l.b16 %v6000
    %v6387 = vunpack.c.h.b16 %v6000
    %v6388 = vunpack.c.l.b16 %v6001
    %v6389 = vunpack.c.h.b16 %v6001
    %v6390 = vunpack.c.l.b16 %v6002
    %v6391 = vunpack.c.h.b16 %v6002
    %v6392 = vunpack.c.l.b16 %v6003
    %v6393 = vunpack.c.h.b16 %v6003
    %v6394 = vunpack.c.l.b16 %v6004
    %v6395 = vunpack.c.h.b16 %v6004
    %v6396 = vunpack.c.l.b16 %v6005
    %v6397 = vunpack.c.h.b16 %v6005
    %v6398 = vunpack.c.l.b16 %v6006
    %v6399 = vunpack.c.h.b16 %v6006
    %v6400 = vunpack.c.l.b16 %v6007
    %v6401 = vunpack.c.h.b16 %v6007
    %v6402 = vunpack.c.l.b16 %v6008
    %v6403 = vunpack.c.h.b16 %v6008
    %v6404 = vunpack.c.l.b16 %v6009
    %v6405 = vunpack.c.h.b16 %v6009
    %v6406 = vunpack.c.l.b16 %v6010
    %v6407 = vunpack.c.h.b16 %v6010
    %v6408 = vunpack.c.l.b16 %v6011
    %v6409 = vunpack.c.h.b16 %v6011
    %v6410 = vunpack.c.l.b16 %v6012
    %v6411 = vunpack.c.h.b16 %v6012
    %v6412 = vunpack.c.l.b16 %v6013
    %v6413 = vunpack.c.h.b16 %v6013
    %v6414 = vunpack.c.l.b16 %v6014
    %v6415 = vunpack.c.h.b16 %v6014
    %v6416 = vunpack.c.l.b16 %v6015
    %v6417 = vunpack.c.h.b16 %v6015
    %v6418 = vunpack.c.l.b16 %v6016
    %v6419 = vunpack.c.h.b16 %v6016
    %v6420 = vunpack.c.l.b16 %v6017
    %v6421 = vunpack.c.h.b16 %v6017
    %v6422 = vunpack.c.l.b16 %v6018
    %v6423 = vunpack.c.h.b16 %v6018
    %v6424 = vpack.c.b16 %v6172, %v6168
    %v6425 = vpack.c.b16 %v6173, %v6169
    %v6426 = vpack.c.b16 %v6174, %v6170
    %v6427 = vpack.c.b16 %v6175, %v6171
    %v6428 = vpack.c.b16 %v6180, %v6176
    %v6429 = vpack.c.b16 %v6181, %v6177
    %v6430 = vpack.c.b16 %v6182, %v6178
    %v6431 = vpack.c.b16 %v6183, %v6179
    %v6432 = vpack.c.b16 %v6188, %v6184
    %v6433 = vpack.c.b16 %v6189, %v6185
    %v6434 = vpack.c.b16 %v6190, %v6186
    %v6435 = vpack.c.b16 %v6191, %v6187
    %v6436 = vpack.c.b16 %v6196, %v6192
    %v6437 = vpack.c.b16 %v6197, %v6193
    %v6438 = vpack.c.b16 %v6198, %v6194
    %v6439 = vpack.c.b16 %v6199, %v6195
    %v6440 = vpack.c.b16 %v6204, %v6200
    %v6441 = vpack.c.b16 %v6205, %v6201
    %v6442 = vpack.c.b16 %v6206, %v6202
    %v6443 = vpack.c.b16 %v6207, %v6203
    %v6444 = vpack.c.b16 %v6212, %v6208
    %v6445 = vpack.c.b16 %v6213, %v6209
    %v6446 = vpack.c.b16 %v6214, %v6210
    %v6447 = vpack.c.b16 %v6215, %v6211
    %v6448 = vpack.c.b16 %v6220, %v6216
    %v6449 = vpack.c.b16 %v6221, %v6217
    %v6450 = vpack.c.b16 %v6222, %v6218
    %v6451 = vpack.c.b16 %v6223, %v6219
    %v6452 = vpack.c.b16 %v6228, %v6224
    %v6453 = vpack.c.b16 %v6229, %v6225
    %v6454 = vpack.c.b16 %v6230, %v6226
    %v6455 = vpack.c.b16 %v6231, %v6227
    %v6456 = vpack.c.b16 %v6236, %v6232
    %v6457 = vpack.c.b16 %v6237, %v6233
    %v6458 = vpack.c.b16 %v6238, %v6234
    %v6459 = vpack.c.b16 %v6239, %v6235
    %v6460 = vpack.c.b16 %v6244, %v6240
    %v6461 = vpack.c.b16 %v6245, %v6241
    %v6462 = vpack.c.b16 %v6246, %v6242
    %v6463 = vpack.c.b16 %v6247, %v6243
    %v6464 = vpack.c.b16 %v6252, %v6248
    %v6465 = vpack.c.b16 %v6253, %v6249
    %v6466 = vpack.c.b16 %v6254, %v6250
    %v6467 = vpack.c.b16 %v6255, %v6251
    %v6468 = vpack.c.b16 %v6260, %v6256
    %v6469 = vpack.c.b16 %v6261, %v6257
    %v6470 = vpack.c.b16 %v6262, %v6258
    %v6471 = vpack.c.b16 %v6263, %v6259
    %v6472 = vpack.c.b16 %v6268, %v6264
    %v6473 = vpack.c.b16 %v6269, %v6265
    %v6474 = vpack.c.b16 %v6270, %v6266
    %v6475 = vpack.c.b16 %v6271, %v6267
    %v6476 = vpack.c.b16 %v6276, %v6272
    %v6477 = vpack.c.b16 %v6277, %v6273
    %v6478 = vpack.c.b16 %v6278, %v6274
    %v6479 = vpack.c.b16 %v6279, %v6275
    %v6480 = vpack.c.b16 %v6284, %v6280
    %v6481 = vpack.c.b16 %v6285, %v6281
    %v6482 = vpack.c.b16 %v6286, %v6282
    %v6483 = vpack.c.b16 %v6287, %v6283
    %v6484 = vpack.c.b16 %v6292, %v6288
    %v6485 = vpack.c.b16 %v6293, %v6289
    %v6486 = vpack.c.b16 %v6294, %v6290
    %v6487 = vpack.c.b16 %v6295, %v6291
    %v6488 = vpack.c.b16 %v6300, %v6296
    %v6489 = vpack.c.b16 %v6301, %v6297
    %v6490 = vpack.c.b16 %v6302, %v6298
    %v6491 = vpack.c.b16 %v6303, %v6299
    %v6492 = vpack.c.b16 %v6308, %v6304
    %v6493 = vpack.c.b16 %v6309, %v6305
    %v6494 = vpack.c.b16 %v6310, %v6306
    %v6495 = vpack.c.b16 %v6311, %v6307
    %v6496 = vpack.c.b16 %v6316, %v6312
    %v6497 = vpack.c.b16 %v6317, %v6313
    %v6498 = vpack.c.b16 %v6318, %v6314
    %v6499 = vpack.c.b16 %v6319, %v6315
    %v6500 = vpack.c.b16 %v6324, %v6320
    %v6501 = vpack.c.b16 %v6325, %v6321
    %v6502 = vpack.c.b16 %v6326, %v6322
    %v6503 = vpack.c.b16 %v6327, %v6323
    %v6504 = vpack.c.b16 %v6332, %v6328
    %v6505 = vpack.c.b16 %v6333, %v6329
    %v6506 = vpack.c.b16 %v6334, %v6330
    %v6507 = vpack.c.b16 %v6335, %v6331
    %v6508 = vpack.c.b16 %v6340, %v6336
    %v6509 = vpack.c.b16 %v6341, %v6337
    %v6510 = vpack.c.b16 %v6342, %v6338
    %v6511 = vpack.c.b16 %v6343, %v6339
    %v6512 = vpack.c.b16 %v6348, %v6344
    %v6513 = vpack.c.b16 %v6349, %v6345
    %v6514 = vpack.c.b16 %v6350, %v6346
    %v6515 = vpack.c.b16 %v6351, %v6347
    %v6516 = vpack.c.b16 %v6356, %v6352
    %v6517 = vpack.c.b16 %v6357, %v6353
    %v6518 = vpack.c.b16 %v6358, %v6354
    %v6519 = vpack.c.b16 %v6359, %v6355
    %v6520 = vpack.c.b16 %v6364, %v6360
    %v6521 = vpack.c.b16 %v6365, %v6361
    %v6522 = vpack.c.b16 %v6366, %v6362
    %v6523 = vpack.c.b16 %v6367, %v6363
    %v6524 = vpack.c.b16 %v6372, %v6368
    %v6525 = vpack.c.b16 %v6373, %v6369
    %v6526 = vpack.c.b16 %v6374, %v6370
    %v6527 = vpack.c.b16 %v6375, %v6371
    %v6528 = vpack.c.b16 %v6380, %v6376
    %v6529 = vpack.c.b16 %v6381, %v6377
    %v6530 = vpack.c.b16 %v6382, %v6378
    %v6531 = vpack.c.b16 %v6383, %v6379
    %v6532 = vpack.c.b16 %v6388, %v6384
    %v6533 = vpack.c.b16 %v6389, %v6385
    %v6534 = vpack.c.b16 %v6390, %v6386
    %v6535 = vpack.c.b16 %v6391, %v6387
    %v6536 = vpack.c.b16 %v6396, %v6392
    %v6537 = vpack.c.b16 %v6397, %v6393
    %v6538 = vpack.c.b16 %v6398, %v6394
    %v6539 = vpack.c.b16 %v6399, %v6395
    %v6540 = vpack.c.b16 %v6404, %v6400
    %v6541 = vpack.c.b16 %v6405, %v6401
    %v6542 = vpack.c.b16 %v6406, %v6402
    %v6543 = vpack.c.b16 %v6407, %v6403
    %v6544 = vpack.c.b16 %v6412, %v6408
    %v6545 = vpack.c.b16 %v6413, %v6409
    %v6546 = vpack.c.b16 %v6414, %v6410
    %v6547 = vpack.c.b16 %v6415, %v6411
    %v6548 = vpack.c.b16 %v6420, %v6416
    %v6549 = vpack.c.b16 %v6421, %v6417
    %v6550 = vpack.c.b16 %v6422, %v6418
    %v6551 = vpack.c.b16 %v6423, %v6419
    %6680 = vmatprep.subr.bf16.mxu0 %v6425
    %6681 = vmatpush1.bf16.msra.mxu0 %v6424
    %6682 = vmatprep.subr.bf16.mxu0 %v6429
    %6683 = vmatpush1.bf16.msra.mxu0 %v6428
    %6684 = vmatprep.subr.bf16.mxu0 %v6433
    %6685 = vmatpush1.bf16.msra.mxu0 %v6432
    %6686 = vmatprep.subr.bf16.mxu0 %v6437
    %6687 = vmatpush1.bf16.msra.mxu0 %v6436
    %6688 = vmatprep.subr.bf16.mxu0 %v6441
    %6689 = vmatpush1.bf16.msra.mxu0 %v6440
    %6690 = vmatprep.subr.bf16.mxu0 %v6445
    %6691 = vmatpush1.bf16.msra.mxu0 %v6444
    %6692 = vmatprep.subr.bf16.mxu0 %v6449
    %6693 = vmatpush1.bf16.msra.mxu0 %v6448
    %6694 = vmatprep.subr.bf16.mxu0 %v6453
    %6695 = vmatpush1.bf16.msra.mxu0 %v6452
    %6696 = vmatprep.subr.bf16.mxu0 %v6457
    %6697 = vmatpush1.bf16.msra.mxu0 %v6456
    %6698 = vmatprep.subr.bf16.mxu0 %v6461
    %6699 = vmatpush1.bf16.msra.mxu0 %v6460
    %6700 = vmatprep.subr.bf16.mxu0 %v6465
    %6701 = vmatpush1.bf16.msra.mxu0 %v6464
    %6702 = vmatprep.subr.bf16.mxu0 %v6469
    %6703 = vmatpush1.bf16.msra.mxu0 %v6468
    %6704 = vmatprep.subr.bf16.mxu0 %v6473
    %6705 = vmatpush1.bf16.msra.mxu0 %v6472
    %6706 = vmatprep.subr.bf16.mxu0 %v6477
    %6707 = vmatpush1.bf16.msra.mxu0 %v6476
    %6708 = vmatprep.subr.bf16.mxu0 %v6481
    %6709 = vmatpush1.bf16.msra.mxu0 %v6480
    %6710 = vmatprep.subr.bf16.mxu0 %v6485
    %6711 = vmatpush1.bf16.msra.mxu0 %v6484
    %6712 = vmatprep.mubr.bf16.mxu0 %v5888
    %6713 = vmatmul.mubr.bf16.gmra.mrb[0].mxu0 %v5887
    %v6714 = vpop.f32.mrb[0].mxu0
    %v6715 = vadd.f32 %v6023, %v6714
    %v6716 = vpop.f32.mrb[0].mxu0
    %v6717 = vadd.f32 %v6027, %v6716
    %v6718 = vpop.f32.mrb[0].mxu0
    %v6719 = vpop.f32.mrb[0].mxu0
    %6720 = vdwg.mxu0
    %6721 = vmatprep.subr.bf16.mxu0 %v6489
    %6722 = vmatpush1.bf16.msra.mxu0 %v6488
    %6723 = vmatprep.subr.bf16.mxu0 %v6493
    %6724 = vmatpush1.bf16.msra.mxu0 %v6492
    %6725 = vmatprep.subr.bf16.mxu0 %v6497
    %6726 = vmatpush1.bf16.msra.mxu0 %v6496
    %6727 = vmatprep.subr.bf16.mxu0 %v6501
    %6728 = vmatpush1.bf16.msra.mxu0 %v6500
    %6729 = vmatprep.subr.bf16.mxu0 %v6505
    %6730 = vmatpush1.bf16.msra.mxu0 %v6504
    %6731 = vmatprep.subr.bf16.mxu0 %v6509
    %6732 = vmatpush1.bf16.msra.mxu0 %v6508
    %6733 = vmatprep.subr.bf16.mxu0 %v6513
    %6734 = vmatpush1.bf16.msra.mxu0 %v6512
    %6735 = vmatprep.subr.bf16.mxu0 %v6517
    %6736 = vmatpush1.bf16.msra.mxu0 %v6516
    %6737 = vmatprep.subr.bf16.mxu0 %v6521
    %6738 = vmatpush1.bf16.msra.mxu0 %v6520
    %6739 = vmatprep.subr.bf16.mxu0 %v6525
    %6740 = vmatpush1.bf16.msra.mxu0 %v6524
    %6741 = vmatprep.subr.bf16.mxu0 %v6529
    %6742 = vmatpush1.bf16.msra.mxu0 %v6528
    %6743 = vmatprep.subr.bf16.mxu0 %v6533
    %6744 = vmatpush1.bf16.msra.mxu0 %v6532
    %6745 = vmatprep.subr.bf16.mxu0 %v6537
    %6746 = vmatpush1.bf16.msra.mxu0 %v6536
    %6747 = vmatprep.subr.bf16.mxu0 %v6541
    %6748 = vmatpush1.bf16.msra.mxu0 %v6540
    %6749 = vmatprep.subr.bf16.mxu0 %v6545
    %6750 = vmatpush1.bf16.msra.mxu0 %v6544
    %6751 = vmatprep.subr.bf16.mxu0 %v6549
    %6752 = vmatpush1.bf16.msra.mxu0 %v6548
    %6753 = vmatprep.mubr.bf16.mxu0 %v5890
    %6754 = vmatmul.mubr.bf16.gmra.mrb[0].mxu0 %v5889
    %v6755 = vpop.f32.mrb[0].mxu0
    %v6756 = vadd.f32 %v6715, %v6755
    %v6757 = vpop.f32.mrb[0].mxu0
    %v6758 = vadd.f32 %v6717, %v6757
    %v6759 = vpop.f32.mrb[0].mxu0
    %v6760 = vpop.f32.mrb[0].mxu0
    %6761 = vdwg.mxu0
    %6762 = vmatprep.subr.bf16.mxu0 %v6427
    %6763 = vmatpush1.bf16.msra.mxu0 %v6426
    %6764 = vmatprep.subr.bf16.mxu0 %v6431
    %6765 = vmatpush1.bf16.msra.mxu0 %v6430
    %6766 = vmatprep.subr.bf16.mxu0 %v6435
    %6767 = vmatpush1.bf16.msra.mxu0 %v6434
    %6768 = vmatprep.subr.bf16.mxu0 %v6439
    %6769 = vmatpush1.bf16.msra.mxu0 %v6438
    %6770 = vmatprep.subr.bf16.mxu0 %v6443
    %6771 = vmatpush1.bf16.msra.mxu0 %v6442
    %6772 = vmatprep.subr.bf16.mxu0 %v6447
    %6773 = vmatpush1.bf16.msra.mxu0 %v6446
    %6774 = vmatprep.subr.bf16.mxu0 %v6451
    %6775 = vmatpush1.bf16.msra.mxu0 %v6450
    %6776 = vmatprep.subr.bf16.mxu0 %v6455
    %6777 = vmatpush1.bf16.msra.mxu0 %v6454
    %6778 = vmatprep.subr.bf16.mxu0 %v6459
    %6779 = vmatpush1.bf16.msra.mxu0 %v6458
    %6780 = vmatprep.subr.bf16.mxu0 %v6463
    %6781 = vmatpush1.bf16.msra.mxu0 %v6462
    %6782 = vmatprep.subr.bf16.mxu0 %v6467
    %6783 = vmatpush1.bf16.msra.mxu0 %v6466
    %6784 = vmatprep.subr.bf16.mxu0 %v6471
    %6785 = vmatpush1.bf16.msra.mxu0 %v6470
    %6786 = vmatprep.subr.bf16.mxu0 %v6475
    %6787 = vmatpush1.bf16.msra.mxu0 %v6474
    %6788 = vmatprep.subr.bf16.mxu0 %v6479
    %6789 = vmatpush1.bf16.msra.mxu0 %v6478
    %6790 = vmatprep.subr.bf16.mxu0 %v6483
    %6791 = vmatpush1.bf16.msra.mxu0 %v6482
    %6792 = vmatprep.subr.bf16.mxu0 %v6487
    %6793 = vmatpush1.bf16.msra.mxu0 %v6486
    %6794 = vmatprep.mubr.bf16.mxu0 %v5888
    %6795 = vmatmul.mubr.bf16.gmra.mrb[0].mxu0 %v5887
    %v6796 = vpop.f32.mrb[0].mxu0
    %v6797 = vadd.f32 %v6031, %v6796
    %v6798 = vpop.f32.mrb[0].mxu0
    %v6799 = vadd.f32 %v6035, %v6798
    %v6800 = vpop.f32.mrb[0].mxu0
    %v6801 = vpop.f32.mrb[0].mxu0
    %6802 = vdwg.mxu0
    %6803 = vmatprep.subr.bf16.mxu0 %v6491
    %6804 = vmatpush1.bf16.msra.mxu0 %v6490
    %6805 = vmatprep.subr.bf16.mxu0 %v6495
    %6806 = vmatpush1.bf16.msra.mxu0 %v6494
    %6807 = vmatprep.subr.bf16.mxu0 %v6499
    %6808 = vmatpush1.bf16.msra.mxu0 %v6498
    %6809 = vmatprep.subr.bf16.mxu0 %v6503
    %6810 = vmatpush1.bf16.msra.mxu0 %v6502
    %6811 = vmatprep.subr.bf16.mxu0 %v6507
    %6812 = vmatpush1.bf16.msra.mxu0 %v6506
    %6813 = vmatprep.subr.bf16.mxu0 %v6511
    %6814 = vmatpush1.bf16.msra.mxu0 %v6510
    %6815 = vmatprep.subr.bf16.mxu0 %v6515
    %6816 = vmatpush1.bf16.msra.mxu0 %v6514
    %6817 = vmatprep.subr.bf16.mxu0 %v6519
    %6818 = vmatpush1.bf16.msra.mxu0 %v6518
    %6819 = vmatprep.subr.bf16.mxu0 %v6523
    %6820 = vmatpush1.bf16.msra.mxu0 %v6522
    %6821 = vmatprep.subr.bf16.mxu0 %v6527
    %6822 = vmatpush1.bf16.msra.mxu0 %v6526
    %6823 = vmatprep.subr.bf16.mxu0 %v6531
    %6824 = vmatpush1.bf16.msra.mxu0 %v6530
    %6825 = vmatprep.subr.bf16.mxu0 %v6535
    %6826 = vmatpush1.bf16.msra.mxu0 %v6534
    %6827 = vmatprep.subr.bf16.mxu0 %v6539
    %6828 = vmatpush1.bf16.msra.mxu0 %v6538
    %6829 = vmatprep.subr.bf16.mxu0 %v6543
    %6830 = vmatpush1.bf16.msra.mxu0 %v6542
    %6831 = vmatprep.subr.bf16.mxu0 %v6547
    %6832 = vmatpush1.bf16.msra.mxu0 %v6546
    %6833 = vmatprep.subr.bf16.mxu0 %v6551
    %6834 = vmatpush1.bf16.msra.mxu0 %v6550
    %6835 = vmatprep.mubr.bf16.mxu0 %v5890
    %6836 = vmatmul.mubr.bf16.gmra.mrb[0].mxu0 %v5889
    %v6837 = vpop.f32.mrb[0].mxu0
    %v6838 = vadd.f32 %v6797, %v6837
    %v6839 = vpop.f32.mrb[0].mxu0
    %v6840 = vadd.f32 %v6799, %v6839
    %v6841 = vpop.f32.mrb[0].mxu0
    %v6842 = vpop.f32.mrb[0].mxu0
    %6843 = vdwg.mxu0
    %vm6844 = vcmp.gt.f32.partialorder %v6756, 0.0
    %vm6845 = vcmp.gt.f32.partialorder %v6758, 0.0
    %vm6846 = vcmp.gt.f32.partialorder %v6838, 0.0
    %vm6847 = vcmp.gt.f32.partialorder %v6840, 0.0
    %v6848 = vmul.f32 %v6756, 0.2
    %v6849 = vmul.f32 %v6758, 0.2
    %v6850 = vmul.f32 %v6838, 0.2
    %v6851 = vmul.f32 %v6840, 0.2
    %v6852 = vsel %vm6844, %v6756, %v6848
    %v6853 = vsel %vm6845, %v6758, %v6849
    %v6854 = vsel %vm6846, %v6838, %v6850
    %v6855 = vsel %vm6847, %v6840, %v6851
    %s6856 = scalar_lea.vmem [#allocation9], 2
    %v6857 = vld [vmem:[%s6856] ss:$4 sm:$0xf]
    %v6858 = vpack.c.bf16 %v6852, %v6852
    %v6859 = vpack.c.bf16 %v6853, %v6853
    %v6860 = vpack.c.bf16 %v6854, %v6854
    %v6861 = vpack.c.bf16 %v6855, %v6855
    %v6862 = vld [vmem:[#allocation6] sm:$0xff]
    %v6863 = vld [vmem:[#allocation6 + $0x8] sm:$0xff]
    %v6864 = vld [vmem:[#allocation6 + $0x10] sm:$0xff]
    %v6865 = vld [vmem:[#allocation6 + $0x18] sm:$0xff]
    %v6866 = vld [vmem:[#allocation6 + $0x20] sm:$0xff]
    %v6867 = vld [vmem:[#allocation6 + $0x28] sm:$0xff]
    %v6868 = vld [vmem:[#allocation6 + $0x30] sm:$0xff]
    %v6869 = vld [vmem:[#allocation6 + $0x38] sm:$0xff]
    %v6870 = vld [vmem:[#allocation6 + $0x40] sm:$0xff]
    %v6871 = vld [vmem:[#allocation6 + $0x48] sm:$0xff]
    %v6872 = vld [vmem:[#allocation6 + $0x50] sm:$0xff]
    %v6873 = vld [vmem:[#allocation6 + $0x58] sm:$0xff]
    %v6874 = vld [vmem:[#allocation6 + $0x60] sm:$0xff]
    %v6875 = vld [vmem:[#allocation6 + $0x68] sm:$0xff]
    %v6876 = vld [vmem:[#allocation6 + $0x70] sm:$0xff]
    %v6877 = vld [vmem:[#allocation6 + $0x78] sm:$0xff]
    %v6878 = vld [vmem:[#allocation6 + $0x80] sm:$0xff]
    %v6879 = vld [vmem:[#allocation6 + $0x88] sm:$0xff]
    %v6880 = vld [vmem:[#allocation6 + $0x90] sm:$0xff]
    %v6881 = vld [vmem:[#allocation6 + $0x98] sm:$0xff]
    %v6882 = vld [vmem:[#allocation6 + $0xa0] sm:$0xff]
    %v6883 = vld [vmem:[#allocation6 + $0xa8] sm:$0xff]
    %v6884 = vld [vmem:[#allocation6 + $0xb0] sm:$0xff]
    %v6885 = vld [vmem:[#allocation6 + $0xb8] sm:$0xff]
    %v6886 = vld [vmem:[#allocation6 + $0xc0] sm:$0xff]
    %v6887 = vld [vmem:[#allocation6 + $0xc8] sm:$0xff]
    %v6888 = vld [vmem:[#allocation6 + $0xd0] sm:$0xff]
    %v6889 = vld [vmem:[#allocation6 + $0xd8] sm:$0xff]
    %v6890 = vld [vmem:[#allocation6 + $0xe0] sm:$0xff]
    %v6891 = vld [vmem:[#allocation6 + $0xe8] sm:$0xff]
    %v6892 = vld [vmem:[#allocation6 + $0xf0] sm:$0xff]
    %v6893 = vld [vmem:[#allocation6 + $0xf8] sm:$0xff]
    %v6894 = vld [vmem:[#allocation6 + $0x100] sm:$0xff]
    %v6895 = vld [vmem:[#allocation6 + $0x108] sm:$0xff]
    %v6896 = vld [vmem:[#allocation6 + $0x110] sm:$0xff]
    %v6897 = vld [vmem:[#allocation6 + $0x118] sm:$0xff]
    %v6898 = vld [vmem:[#allocation6 + $0x120] sm:$0xff]
    %v6899 = vld [vmem:[#allocation6 + $0x128] sm:$0xff]
    %v6900 = vld [vmem:[#allocation6 + $0x130] sm:$0xff]
    %v6901 = vld [vmem:[#allocation6 + $0x138] sm:$0xff]
    %v6902 = vld [vmem:[#allocation6 + $0x140] sm:$0xff]
    %v6903 = vld [vmem:[#allocation6 + $0x148] sm:$0xff]
    %v6904 = vld [vmem:[#allocation6 + $0x150] sm:$0xff]
    %v6905 = vld [vmem:[#allocation6 + $0x158] sm:$0xff]
    %v6906 = vld [vmem:[#allocation6 + $0x160] sm:$0xff]
    %v6907 = vld [vmem:[#allocation6 + $0x168] sm:$0xff]
    %v6908 = vld [vmem:[#allocation6 + $0x170] sm:$0xff]
    %v6909 = vld [vmem:[#allocation6 + $0x178] sm:$0xff]
    %v6910 = vld [vmem:[#allocation6 + $0x180] sm:$0xff]
    %v6911 = vld [vmem:[#allocation6 + $0x188] sm:$0xff]
    %v6912 = vld [vmem:[#allocation6 + $0x190] sm:$0xff]
    %v6913 = vld [vmem:[#allocation6 + $0x198] sm:$0xff]
    %v6914 = vld [vmem:[#allocation6 + $0x1a0] sm:$0xff]
    %v6915 = vld [vmem:[#allocation6 + $0x1a8] sm:$0xff]
    %v6916 = vld [vmem:[#allocation6 + $0x1b0] sm:$0xff]
    %v6917 = vld [vmem:[#allocation6 + $0x1b8] sm:$0xff]
    %v6918 = vld [vmem:[#allocation6 + $0x1c0] sm:$0xff]
    %v6919 = vld [vmem:[#allocation6 + $0x1c8] sm:$0xff]
    %v6920 = vld [vmem:[#allocation6 + $0x1d0] sm:$0xff]
    %v6921 = vld [vmem:[#allocation6 + $0x1d8] sm:$0xff]
    %v6922 = vld [vmem:[#allocation6 + $0x1e0] sm:$0xff]
    %v6923 = vld [vmem:[#allocation6 + $0x1e8] sm:$0xff]
    %v6924 = vld [vmem:[#allocation6 + $0x1f0] sm:$0xff]
    %v6925 = vld [vmem:[#allocation6 + $0x1f8] sm:$0xff]
    %v6926 = vld [vmem:[#allocation6 + $0x200] sm:$0xff]
    %v6927 = vld [vmem:[#allocation6 + $0x208] sm:$0xff]
    %v6928 = vld [vmem:[#allocation6 + $0x210] sm:$0xff]
    %v6929 = vld [vmem:[#allocation6 + $0x218] sm:$0xff]
    %v6930 = vld [vmem:[#allocation6 + $0x220] sm:$0xff]
    %v6931 = vld [vmem:[#allocation6 + $0x228] sm:$0xff]
    %v6932 = vld [vmem:[#allocation6 + $0x230] sm:$0xff]
    %v6933 = vld [vmem:[#allocation6 + $0x238] sm:$0xff]
    %v6934 = vld [vmem:[#allocation6 + $0x240] sm:$0xff]
    %v6935 = vld [vmem:[#allocation6 + $0x248] sm:$0xff]
    %v6936 = vld [vmem:[#allocation6 + $0x250] sm:$0xff]
    %v6937 = vld [vmem:[#allocation6 + $0x258] sm:$0xff]
    %v6938 = vld [vmem:[#allocation6 + $0x260] sm:$0xff]
    %v6939 = vld [vmem:[#allocation6 + $0x268] sm:$0xff]
    %v6940 = vld [vmem:[#allocation6 + $0x270] sm:$0xff]
    %v6941 = vld [vmem:[#allocation6 + $0x278] sm:$0xff]
    %v6942 = vld [vmem:[#allocation6 + $0x280] sm:$0xff]
    %v6943 = vld [vmem:[#allocation6 + $0x288] sm:$0xff]
    %v6944 = vld [vmem:[#allocation6 + $0x290] sm:$0xff]
    %v6945 = vld [vmem:[#allocation6 + $0x298] sm:$0xff]
    %v6946 = vld [vmem:[#allocation6 + $0x2a0] sm:$0xff]
    %v6947 = vld [vmem:[#allocation6 + $0x2a8] sm:$0xff]
    %v6948 = vld [vmem:[#allocation6 + $0x2b0] sm:$0xff]
    %v6949 = vld [vmem:[#allocation6 + $0x2b8] sm:$0xff]
    %v6950 = vld [vmem:[#allocation6 + $0x2c0] sm:$0xff]
    %v6951 = vld [vmem:[#allocation6 + $0x2c8] sm:$0xff]
    %v6952 = vld [vmem:[#allocation6 + $0x2d0] sm:$0xff]
    %v6953 = vld [vmem:[#allocation6 + $0x2d8] sm:$0xff]
    %v6954 = vld [vmem:[#allocation6 + $0x2e0] sm:$0xff]
    %v6955 = vld [vmem:[#allocation6 + $0x2e8] sm:$0xff]
    %v6956 = vld [vmem:[#allocation6 + $0x2f0] sm:$0xff]
    %v6957 = vld [vmem:[#allocation6 + $0x2f8] sm:$0xff]
    %v6958 = vld [vmem:[#allocation6 + $0x300] sm:$0xff]
    %v6959 = vld [vmem:[#allocation6 + $0x308] sm:$0xff]
    %v6960 = vld [vmem:[#allocation6 + $0x310] sm:$0xff]
    %v6961 = vld [vmem:[#allocation6 + $0x318] sm:$0xff]
    %v6962 = vld [vmem:[#allocation6 + $0x320] sm:$0xff]
    %v6963 = vld [vmem:[#allocation6 + $0x328] sm:$0xff]
    %v6964 = vld [vmem:[#allocation6 + $0x330] sm:$0xff]
    %v6965 = vld [vmem:[#allocation6 + $0x338] sm:$0xff]
    %v6966 = vld [vmem:[#allocation6 + $0x340] sm:$0xff]
    %v6967 = vld [vmem:[#allocation6 + $0x348] sm:$0xff]
    %v6968 = vld [vmem:[#allocation6 + $0x350] sm:$0xff]
    %v6969 = vld [vmem:[#allocation6 + $0x358] sm:$0xff]
    %v6970 = vld [vmem:[#allocation6 + $0x360] sm:$0xff]
    %v6971 = vld [vmem:[#allocation6 + $0x368] sm:$0xff]
    %v6972 = vld [vmem:[#allocation6 + $0x370] sm:$0xff]
    %v6973 = vld [vmem:[#allocation6 + $0x378] sm:$0xff]
    %v6974 = vld [vmem:[#allocation6 + $0x380] sm:$0xff]
    %v6975 = vld [vmem:[#allocation6 + $0x388] sm:$0xff]
    %v6976 = vld [vmem:[#allocation6 + $0x390] sm:$0xff]
    %v6977 = vld [vmem:[#allocation6 + $0x398] sm:$0xff]
    %v6978 = vld [vmem:[#allocation6 + $0x3a0] sm:$0xff]
    %v6979 = vld [vmem:[#allocation6 + $0x3a8] sm:$0xff]
    %v6980 = vld [vmem:[#allocation6 + $0x3b0] sm:$0xff]
    %v6981 = vld [vmem:[#allocation6 + $0x3b8] sm:$0xff]
    %v6982 = vld [vmem:[#allocation6 + $0x3c0] sm:$0xff]
    %v6983 = vld [vmem:[#allocation6 + $0x3c8] sm:$0xff]
    %v6984 = vld [vmem:[#allocation6 + $0x3d0] sm:$0xff]
    %v6985 = vld [vmem:[#allocation6 + $0x3d8] sm:$0xff]
    %v6986 = vld [vmem:[#allocation6 + $0x3e0] sm:$0xff]
    %v6987 = vld [vmem:[#allocation6 + $0x3e8] sm:$0xff]
    %v6988 = vld [vmem:[#allocation6 + $0x3f0] sm:$0xff]
    %v6989 = vld [vmem:[#allocation6 + $0x3f8] sm:$0xff]
    %v6991 = vlaneseq
    %v6992 = vshrl.u32 %v6991, 7
    %v6993 = vsub.s32 0, %v6992
    %v6994 = vrot.slane %v6857, %v6993
    %v6995 = vlaneseq
    %v6996 = vshrl.u32 %v6995, 7
    %v6997 = vsub.s32 1, %v6996
    %v6998 = vrot.slane %v6857, %v6997
    %v6999 = vlaneseq
    %v7000 = vshrl.u32 %v6999, 7
    %v7001 = vsub.s32 2, %v7000
    %v7002 = vrot.slane %v6857, %v7001
    %v7003 = vlaneseq
    %v7004 = vshrl.u32 %v7003, 7
    %v7005 = vsub.s32 3, %v7004
    %v7006 = vrot.slane %v6857, %v7005
    %v7139 = vunpack.c.l.b16 %v6862
    %v7140 = vunpack.c.h.b16 %v6862
    %v7141 = vunpack.c.l.b16 %v6863
    %v7142 = vunpack.c.h.b16 %v6863
    %v7143 = vunpack.c.l.b16 %v6864
    %v7144 = vunpack.c.h.b16 %v6864
    %v7145 = vunpack.c.l.b16 %v6865
    %v7146 = vunpack.c.h.b16 %v6865
    %v7147 = vunpack.c.l.b16 %v6866
    %v7148 = vunpack.c.h.b16 %v6866
    %v7149 = vunpack.c.l.b16 %v6867
    %v7150 = vunpack.c.h.b16 %v6867
    %v7151 = vunpack.c.l.b16 %v6868
    %v7152 = vunpack.c.h.b16 %v6868
    %v7153 = vunpack.c.l.b16 %v6869
    %v7154 = vunpack.c.h.b16 %v6869
    %v7155 = vunpack.c.l.b16 %v6870
    %v7156 = vunpack.c.h.b16 %v6870
    %v7157 = vunpack.c.l.b16 %v6871
    %v7158 = vunpack.c.h.b16 %v6871
    %v7159 = vunpack.c.l.b16 %v6872
    %v7160 = vunpack.c.h.b16 %v6872
    %v7161 = vunpack.c.l.b16 %v6873
    %v7162 = vunpack.c.h.b16 %v6873
    %v7163 = vunpack.c.l.b16 %v6874
    %v7164 = vunpack.c.h.b16 %v6874
    %v7165 = vunpack.c.l.b16 %v6875
    %v7166 = vunpack.c.h.b16 %v6875
    %v7167 = vunpack.c.l.b16 %v6876
    %v7168 = vunpack.c.h.b16 %v6876
    %v7169 = vunpack.c.l.b16 %v6877
    %v7170 = vunpack.c.h.b16 %v6877
    %v7171 = vunpack.c.l.b16 %v6878
    %v7172 = vunpack.c.h.b16 %v6878
    %v7173 = vunpack.c.l.b16 %v6879
    %v7174 = vunpack.c.h.b16 %v6879
    %v7175 = vunpack.c.l.b16 %v6880
    %v7176 = vunpack.c.h.b16 %v6880
    %v7177 = vunpack.c.l.b16 %v6881
    %v7178 = vunpack.c.h.b16 %v6881
    %v7179 = vunpack.c.l.b16 %v6882
    %v7180 = vunpack.c.h.b16 %v6882
    %v7181 = vunpack.c.l.b16 %v6883
    %v7182 = vunpack.c.h.b16 %v6883
    %v7183 = vunpack.c.l.b16 %v6884
    %v7184 = vunpack.c.h.b16 %v6884
    %v7185 = vunpack.c.l.b16 %v6885
    %v7186 = vunpack.c.h.b16 %v6885
    %v7187 = vunpack.c.l.b16 %v6886
    %v7188 = vunpack.c.h.b16 %v6886
    %v7189 = vunpack.c.l.b16 %v6887
    %v7190 = vunpack.c.h.b16 %v6887
    %v7191 = vunpack.c.l.b16 %v6888
    %v7192 = vunpack.c.h.b16 %v6888
    %v7193 = vunpack.c.l.b16 %v6889
    %v7194 = vunpack.c.h.b16 %v6889
    %v7195 = vunpack.c.l.b16 %v6890
    %v7196 = vunpack.c.h.b16 %v6890
    %v7197 = vunpack.c.l.b16 %v6891
    %v7198 = vunpack.c.h.b16 %v6891
    %v7199 = vunpack.c.l.b16 %v6892
    %v7200 = vunpack.c.h.b16 %v6892
    %v7201 = vunpack.c.l.b16 %v6893
    %v7202 = vunpack.c.h.b16 %v6893
    %v7203 = vunpack.c.l.b16 %v6894
    %v7204 = vunpack.c.h.b16 %v6894
    %v7205 = vunpack.c.l.b16 %v6895
    %v7206 = vunpack.c.h.b16 %v6895
    %v7207 = vunpack.c.l.b16 %v6896
    %v7208 = vunpack.c.h.b16 %v6896
    %v7209 = vunpack.c.l.b16 %v6897
    %v7210 = vunpack.c.h.b16 %v6897
    %v7211 = vunpack.c.l.b16 %v6898
    %v7212 = vunpack.c.h.b16 %v6898
    %v7213 = vunpack.c.l.b16 %v6899
    %v7214 = vunpack.c.h.b16 %v6899
    %v7215 = vunpack.c.l.b16 %v6900
    %v7216 = vunpack.c.h.b16 %v6900
    %v7217 = vunpack.c.l.b16 %v6901
    %v7218 = vunpack.c.h.b16 %v6901
    %v7219 = vunpack.c.l.b16 %v6902
    %v7220 = vunpack.c.h.b16 %v6902
    %v7221 = vunpack.c.l.b16 %v6903
    %v7222 = vunpack.c.h.b16 %v6903
    %v7223 = vunpack.c.l.b16 %v6904
    %v7224 = vunpack.c.h.b16 %v6904
    %v7225 = vunpack.c.l.b16 %v6905
    %v7226 = vunpack.c.h.b16 %v6905
    %v7227 = vunpack.c.l.b16 %v6906
    %v7228 = vunpack.c.h.b16 %v6906
    %v7229 = vunpack.c.l.b16 %v6907
    %v7230 = vunpack.c.h.b16 %v6907
    %v7231 = vunpack.c.l.b16 %v6908
    %v7232 = vunpack.c.h.b16 %v6908
    %v7233 = vunpack.c.l.b16 %v6909
    %v7234 = vunpack.c.h.b16 %v6909
    %v7235 = vunpack.c.l.b16 %v6910
    %v7236 = vunpack.c.h.b16 %v6910
    %v7237 = vunpack.c.l.b16 %v6911
    %v7238 = vunpack.c.h.b16 %v6911
    %v7239 = vunpack.c.l.b16 %v6912
    %v7240 = vunpack.c.h.b16 %v6912
    %v7241 = vunpack.c.l.b16 %v6913
    %v7242 = vunpack.c.h.b16 %v6913
    %v7243 = vunpack.c.l.b16 %v6914
    %v7244 = vunpack.c.h.b16 %v6914
    %v7245 = vunpack.c.l.b16 %v6915
    %v7246 = vunpack.c.h.b16 %v6915
    %v7247 = vunpack.c.l.b16 %v6916
    %v7248 = vunpack.c.h.b16 %v6916
    %v7249 = vunpack.c.l.b16 %v6917
    %v7250 = vunpack.c.h.b16 %v6917
    %v7251 = vunpack.c.l.b16 %v6918
    %v7252 = vunpack.c.h.b16 %v6918
    %v7253 = vunpack.c.l.b16 %v6919
    %v7254 = vunpack.c.h.b16 %v6919
    %v7255 = vunpack.c.l.b16 %v6920
    %v7256 = vunpack.c.h.b16 %v6920
    %v7257 = vunpack.c.l.b16 %v6921
    %v7258 = vunpack.c.h.b16 %v6921
    %v7259 = vunpack.c.l.b16 %v6922
    %v7260 = vunpack.c.h.b16 %v6922
    %v7261 = vunpack.c.l.b16 %v6923
    %v7262 = vunpack.c.h.b16 %v6923
    %v7263 = vunpack.c.l.b16 %v6924
    %v7264 = vunpack.c.h.b16 %v6924
    %v7265 = vunpack.c.l.b16 %v6925
    %v7266 = vunpack.c.h.b16 %v6925
    %v7267 = vunpack.c.l.b16 %v6926
    %v7268 = vunpack.c.h.b16 %v6926
    %v7269 = vunpack.c.l.b16 %v6927
    %v7270 = vunpack.c.h.b16 %v6927
    %v7271 = vunpack.c.l.b16 %v6928
    %v7272 = vunpack.c.h.b16 %v6928
    %v7273 = vunpack.c.l.b16 %v6929
    %v7274 = vunpack.c.h.b16 %v6929
    %v7275 = vunpack.c.l.b16 %v6930
    %v7276 = vunpack.c.h.b16 %v6930
    %v7277 = vunpack.c.l.b16 %v6931
    %v7278 = vunpack.c.h.b16 %v6931
    %v7279 = vunpack.c.l.b16 %v6932
    %v7280 = vunpack.c.h.b16 %v6932
    %v7281 = vunpack.c.l.b16 %v6933
    %v7282 = vunpack.c.h.b16 %v6933
    %v7283 = vunpack.c.l.b16 %v6934
    %v7284 = vunpack.c.h.b16 %v6934
    %v7285 = vunpack.c.l.b16 %v6935
    %v7286 = vunpack.c.h.b16 %v6935
    %v7287 = vunpack.c.l.b16 %v6936
    %v7288 = vunpack.c.h.b16 %v6936
    %v7289 = vunpack.c.l.b16 %v6937
    %v7290 = vunpack.c.h.b16 %v6937
    %v7291 = vunpack.c.l.b16 %v6938
    %v7292 = vunpack.c.h.b16 %v6938
    %v7293 = vunpack.c.l.b16 %v6939
    %v7294 = vunpack.c.h.b16 %v6939
    %v7295 = vunpack.c.l.b16 %v6940
    %v7296 = vunpack.c.h.b16 %v6940
    %v7297 = vunpack.c.l.b16 %v6941
    %v7298 = vunpack.c.h.b16 %v6941
    %v7299 = vunpack.c.l.b16 %v6942
    %v7300 = vunpack.c.h.b16 %v6942
    %v7301 = vunpack.c.l.b16 %v6943
    %v7302 = vunpack.c.h.b16 %v6943
    %v7303 = vunpack.c.l.b16 %v6944
    %v7304 = vunpack.c.h.b16 %v6944
    %v7305 = vunpack.c.l.b16 %v6945
    %v7306 = vunpack.c.h.b16 %v6945
    %v7307 = vunpack.c.l.b16 %v6946
    %v7308 = vunpack.c.h.b16 %v6946
    %v7309 = vunpack.c.l.b16 %v6947
    %v7310 = vunpack.c.h.b16 %v6947
    %v7311 = vunpack.c.l.b16 %v6948
    %v7312 = vunpack.c.h.b16 %v6948
    %v7313 = vunpack.c.l.b16 %v6949
    %v7314 = vunpack.c.h.b16 %v6949
    %v7315 = vunpack.c.l.b16 %v6950
    %v7316 = vunpack.c.h.b16 %v6950
    %v7317 = vunpack.c.l.b16 %v6951
    %v7318 = vunpack.c.h.b16 %v6951
    %v7319 = vunpack.c.l.b16 %v6952
    %v7320 = vunpack.c.h.b16 %v6952
    %v7321 = vunpack.c.l.b16 %v6953
    %v7322 = vunpack.c.h.b16 %v6953
    %v7323 = vunpack.c.l.b16 %v6954
    %v7324 = vunpack.c.h.b16 %v6954
    %v7325 = vunpack.c.l.b16 %v6955
    %v7326 = vunpack.c.h.b16 %v6955
    %v7327 = vunpack.c.l.b16 %v6956
    %v7328 = vunpack.c.h.b16 %v6956
    %v7329 = vunpack.c.l.b16 %v6957
    %v7330 = vunpack.c.h.b16 %v6957
    %v7331 = vunpack.c.l.b16 %v6958
    %v7332 = vunpack.c.h.b16 %v6958
    %v7333 = vunpack.c.l.b16 %v6959
    %v7334 = vunpack.c.h.b16 %v6959
    %v7335 = vunpack.c.l.b16 %v6960
    %v7336 = vunpack.c.h.b16 %v6960
    %v7337 = vunpack.c.l.b16 %v6961
    %v7338 = vunpack.c.h.b16 %v6961
    %v7339 = vunpack.c.l.b16 %v6962
    %v7340 = vunpack.c.h.b16 %v6962
    %v7341 = vunpack.c.l.b16 %v6963
    %v7342 = vunpack.c.h.b16 %v6963
    %v7343 = vunpack.c.l.b16 %v6964
    %v7344 = vunpack.c.h.b16 %v6964
    %v7345 = vunpack.c.l.b16 %v6965
    %v7346 = vunpack.c.h.b16 %v6965
    %v7347 = vunpack.c.l.b16 %v6966
    %v7348 = vunpack.c.h.b16 %v6966
    %v7349 = vunpack.c.l.b16 %v6967
    %v7350 = vunpack.c.h.b16 %v6967
    %v7351 = vunpack.c.l.b16 %v6968
    %v7352 = vunpack.c.h.b16 %v6968
    %v7353 = vunpack.c.l.b16 %v6969
    %v7354 = vunpack.c.h.b16 %v6969
    %v7355 = vunpack.c.l.b16 %v6970
    %v7356 = vunpack.c.h.b16 %v6970
    %v7357 = vunpack.c.l.b16 %v6971
    %v7358 = vunpack.c.h.b16 %v6971
    %v7359 = vunpack.c.l.b16 %v6972
    %v7360 = vunpack.c.h.b16 %v6972
    %v7361 = vunpack.c.l.b16 %v6973
    %v7362 = vunpack.c.h.b16 %v6973
    %v7363 = vunpack.c.l.b16 %v6974
    %v7364 = vunpack.c.h.b16 %v6974
    %v7365 = vunpack.c.l.b16 %v6975
    %v7366 = vunpack.c.h.b16 %v6975
    %v7367 = vunpack.c.l.b16 %v6976
    %v7368 = vunpack.c.h.b16 %v6976
    %v7369 = vunpack.c.l.b16 %v6977
    %v7370 = vunpack.c.h.b16 %v6977
    %v7371 = vunpack.c.l.b16 %v6978
    %v7372 = vunpack.c.h.b16 %v6978
    %v7373 = vunpack.c.l.b16 %v6979
    %v7374 = vunpack.c.h.b16 %v6979
    %v7375 = vunpack.c.l.b16 %v6980
    %v7376 = vunpack.c.h.b16 %v6980
    %v7377 = vunpack.c.l.b16 %v6981
    %v7378 = vunpack.c.h.b16 %v6981
    %v7379 = vunpack.c.l.b16 %v6982
    %v7380 = vunpack.c.h.b16 %v6982
    %v7381 = vunpack.c.l.b16 %v6983
    %v7382 = vunpack.c.h.b16 %v6983
    %v7383 = vunpack.c.l.b16 %v6984
    %v7384 = vunpack.c.h.b16 %v6984
    %v7385 = vunpack.c.l.b16 %v6985
    %v7386 = vunpack.c.h.b16 %v6985
    %v7387 = vunpack.c.l.b16 %v6986
    %v7388 = vunpack.c.h.b16 %v6986
    %v7389 = vunpack.c.l.b16 %v6987
    %v7390 = vunpack.c.h.b16 %v6987
    %v7391 = vunpack.c.l.b16 %v6988
    %v7392 = vunpack.c.h.b16 %v6988
    %v7393 = vunpack.c.l.b16 %v6989
    %v7394 = vunpack.c.h.b16 %v6989
    %v7395 = vpack.c.b16 %v7143, %v7139
    %v7396 = vpack.c.b16 %v7144, %v7140
    %v7397 = vpack.c.b16 %v7145, %v7141
    %v7398 = vpack.c.b16 %v7146, %v7142
    %v7399 = vpack.c.b16 %v7151, %v7147
    %v7400 = vpack.c.b16 %v7152, %v7148
    %v7401 = vpack.c.b16 %v7153, %v7149
    %v7402 = vpack.c.b16 %v7154, %v7150
    %v7403 = vpack.c.b16 %v7159, %v7155
    %v7404 = vpack.c.b16 %v7160, %v7156
    %v7405 = vpack.c.b16 %v7161, %v7157
    %v7406 = vpack.c.b16 %v7162, %v7158
    %v7407 = vpack.c.b16 %v7167, %v7163
    %v7408 = vpack.c.b16 %v7168, %v7164
    %v7409 = vpack.c.b16 %v7169, %v7165
    %v7410 = vpack.c.b16 %v7170, %v7166
    %v7411 = vpack.c.b16 %v7175, %v7171
    %v7412 = vpack.c.b16 %v7176, %v7172
    %v7413 = vpack.c.b16 %v7177, %v7173
    %v7414 = vpack.c.b16 %v7178, %v7174
    %v7415 = vpack.c.b16 %v7183, %v7179
    %v7416 = vpack.c.b16 %v7184, %v7180
    %v7417 = vpack.c.b16 %v7185, %v7181
    %v7418 = vpack.c.b16 %v7186, %v7182
    %v7419 = vpack.c.b16 %v7191, %v7187
    %v7420 = vpack.c.b16 %v7192, %v7188
    %v7421 = vpack.c.b16 %v7193, %v7189
    %v7422 = vpack.c.b16 %v7194, %v7190
    %v7423 = vpack.c.b16 %v7199, %v7195
    %v7424 = vpack.c.b16 %v7200, %v7196
    %v7425 = vpack.c.b16 %v7201, %v7197
    %v7426 = vpack.c.b16 %v7202, %v7198
    %v7427 = vpack.c.b16 %v7207, %v7203
    %v7428 = vpack.c.b16 %v7208, %v7204
    %v7429 = vpack.c.b16 %v7209, %v7205
    %v7430 = vpack.c.b16 %v7210, %v7206
    %v7431 = vpack.c.b16 %v7215, %v7211
    %v7432 = vpack.c.b16 %v7216, %v7212
    %v7433 = vpack.c.b16 %v7217, %v7213
    %v7434 = vpack.c.b16 %v7218, %v7214
    %v7435 = vpack.c.b16 %v7223, %v7219
    %v7436 = vpack.c.b16 %v7224, %v7220
    %v7437 = vpack.c.b16 %v7225, %v7221
    %v7438 = vpack.c.b16 %v7226, %v7222
    %v7439 = vpack.c.b16 %v7231, %v7227
    %v7440 = vpack.c.b16 %v7232, %v7228
    %v7441 = vpack.c.b16 %v7233, %v7229
    %v7442 = vpack.c.b16 %v7234, %v7230
    %v7443 = vpack.c.b16 %v7239, %v7235
    %v7444 = vpack.c.b16 %v7240, %v7236
    %v7445 = vpack.c.b16 %v7241, %v7237
    %v7446 = vpack.c.b16 %v7242, %v7238
    %v7447 = vpack.c.b16 %v7247, %v7243
    %v7448 = vpack.c.b16 %v7248, %v7244
    %v7449 = vpack.c.b16 %v7249, %v7245
    %v7450 = vpack.c.b16 %v7250, %v7246
    %v7451 = vpack.c.b16 %v7255, %v7251
    %v7452 = vpack.c.b16 %v7256, %v7252
    %v7453 = vpack.c.b16 %v7257, %v7253
    %v7454 = vpack.c.b16 %v7258, %v7254
    %v7455 = vpack.c.b16 %v7263, %v7259
    %v7456 = vpack.c.b16 %v7264, %v7260
    %v7457 = vpack.c.b16 %v7265, %v7261
    %v7458 = vpack.c.b16 %v7266, %v7262
    %v7459 = vpack.c.b16 %v7271, %v7267
    %v7460 = vpack.c.b16 %v7272, %v7268
    %v7461 = vpack.c.b16 %v7273, %v7269
    %v7462 = vpack.c.b16 %v7274, %v7270
    %v7463 = vpack.c.b16 %v7279, %v7275
    %v7464 = vpack.c.b16 %v7280, %v7276
    %v7465 = vpack.c.b16 %v7281, %v7277
    %v7466 = vpack.c.b16 %v7282, %v7278
    %v7467 = vpack.c.b16 %v7287, %v7283
    %v7468 = vpack.c.b16 %v7288, %v7284
    %v7469 = vpack.c.b16 %v7289, %v7285
    %v7470 = vpack.c.b16 %v7290, %v7286
    %v7471 = vpack.c.b16 %v7295, %v7291
    %v7472 = vpack.c.b16 %v7296, %v7292
    %v7473 = vpack.c.b16 %v7297, %v7293
    %v7474 = vpack.c.b16 %v7298, %v7294
    %v7475 = vpack.c.b16 %v7303, %v7299
    %v7476 = vpack.c.b16 %v7304, %v7300
    %v7477 = vpack.c.b16 %v7305, %v7301
    %v7478 = vpack.c.b16 %v7306, %v7302
    %v7479 = vpack.c.b16 %v7311, %v7307
    %v7480 = vpack.c.b16 %v7312, %v7308
    %v7481 = vpack.c.b16 %v7313, %v7309
    %v7482 = vpack.c.b16 %v7314, %v7310
    %v7483 = vpack.c.b16 %v7319, %v7315
    %v7484 = vpack.c.b16 %v7320, %v7316
    %v7485 = vpack.c.b16 %v7321, %v7317
    %v7486 = vpack.c.b16 %v7322, %v7318
    %v7487 = vpack.c.b16 %v7327, %v7323
    %v7488 = vpack.c.b16 %v7328, %v7324
    %v7489 = vpack.c.b16 %v7329, %v7325
    %v7490 = vpack.c.b16 %v7330, %v7326
    %v7491 = vpack.c.b16 %v7335, %v7331
    %v7492 = vpack.c.b16 %v7336, %v7332
    %v7493 = vpack.c.b16 %v7337, %v7333
    %v7494 = vpack.c.b16 %v7338, %v7334
    %v7495 = vpack.c.b16 %v7343, %v7339
    %v7496 = vpack.c.b16 %v7344, %v7340
    %v7497 = vpack.c.b16 %v7345, %v7341
    %v7498 = vpack.c.b16 %v7346, %v7342
    %v7499 = vpack.c.b16 %v7351, %v7347
    %v7500 = vpack.c.b16 %v7352, %v7348
    %v7501 = vpack.c.b16 %v7353, %v7349
    %v7502 = vpack.c.b16 %v7354, %v7350
    %v7503 = vpack.c.b16 %v7359, %v7355
    %v7504 = vpack.c.b16 %v7360, %v7356
    %v7505 = vpack.c.b16 %v7361, %v7357
    %v7506 = vpack.c.b16 %v7362, %v7358
    %v7507 = vpack.c.b16 %v7367, %v7363
    %v7508 = vpack.c.b16 %v7368, %v7364
    %v7509 = vpack.c.b16 %v7369, %v7365
    %v7510 = vpack.c.b16 %v7370, %v7366
    %v7511 = vpack.c.b16 %v7375, %v7371
    %v7512 = vpack.c.b16 %v7376, %v7372
    %v7513 = vpack.c.b16 %v7377, %v7373
    %v7514 = vpack.c.b16 %v7378, %v7374
    %v7515 = vpack.c.b16 %v7383, %v7379
    %v7516 = vpack.c.b16 %v7384, %v7380
    %v7517 = vpack.c.b16 %v7385, %v7381
    %v7518 = vpack.c.b16 %v7386, %v7382
    %v7519 = vpack.c.b16 %v7391, %v7387
    %v7520 = vpack.c.b16 %v7392, %v7388
    %v7521 = vpack.c.b16 %v7393, %v7389
    %v7522 = vpack.c.b16 %v7394, %v7390
    %7651 = vmatprep.subr.bf16.mxu0 %v7396
    %7652 = vmatpush1.bf16.msra.mxu0 %v7395
    %7653 = vmatprep.subr.bf16.mxu0 %v7400
    %7654 = vmatpush1.bf16.msra.mxu0 %v7399
    %7655 = vmatprep.subr.bf16.mxu0 %v7404
    %7656 = vmatpush1.bf16.msra.mxu0 %v7403
    %7657 = vmatprep.subr.bf16.mxu0 %v7408
    %7658 = vmatpush1.bf16.msra.mxu0 %v7407
    %7659 = vmatprep.subr.bf16.mxu0 %v7412
    %7660 = vmatpush1.bf16.msra.mxu0 %v7411
    %7661 = vmatprep.subr.bf16.mxu0 %v7416
    %7662 = vmatpush1.bf16.msra.mxu0 %v7415
    %7663 = vmatprep.subr.bf16.mxu0 %v7420
    %7664 = vmatpush1.bf16.msra.mxu0 %v7419
    %7665 = vmatprep.subr.bf16.mxu0 %v7424
    %7666 = vmatpush1.bf16.msra.mxu0 %v7423
    %7667 = vmatprep.subr.bf16.mxu0 %v7428
    %7668 = vmatpush1.bf16.msra.mxu0 %v7427
    %7669 = vmatprep.subr.bf16.mxu0 %v7432
    %7670 = vmatpush1.bf16.msra.mxu0 %v7431
    %7671 = vmatprep.subr.bf16.mxu0 %v7436
    %7672 = vmatpush1.bf16.msra.mxu0 %v7435
    %7673 = vmatprep.subr.bf16.mxu0 %v7440
    %7674 = vmatpush1.bf16.msra.mxu0 %v7439
    %7675 = vmatprep.subr.bf16.mxu0 %v7444
    %7676 = vmatpush1.bf16.msra.mxu0 %v7443
    %7677 = vmatprep.subr.bf16.mxu0 %v7448
    %7678 = vmatpush1.bf16.msra.mxu0 %v7447
    %7679 = vmatprep.subr.bf16.mxu0 %v7452
    %7680 = vmatpush1.bf16.msra.mxu0 %v7451
    %7681 = vmatprep.subr.bf16.mxu0 %v7456
    %7682 = vmatpush1.bf16.msra.mxu0 %v7455
    %7683 = vmatprep.mubr.bf16.mxu0 %v6859
    %7684 = vmatmul.mubr.bf16.gmra.mrb[0].mxu0 %v6858
    %v7685 = vpop.f32.mrb[0].mxu0
    %v7686 = vadd.f32 %v6994, %v7685
    %v7687 = vpop.f32.mrb[0].mxu0
    %v7688 = vadd.f32 %v6998, %v7687
    %v7689 = vpop.f32.mrb[0].mxu0
    %v7690 = vpop.f32.mrb[0].mxu0
    %7691 = vdwg.mxu0
    %7692 = vmatprep.subr.bf16.mxu0 %v7460
    %7693 = vmatpush1.bf16.msra.mxu0 %v7459
    %7694 = vmatprep.subr.bf16.mxu0 %v7464
    %7695 = vmatpush1.bf16.msra.mxu0 %v7463
    %7696 = vmatprep.subr.bf16.mxu0 %v7468
    %7697 = vmatpush1.bf16.msra.mxu0 %v7467
    %7698 = vmatprep.subr.bf16.mxu0 %v7472
    %7699 = vmatpush1.bf16.msra.mxu0 %v7471
    %7700 = vmatprep.subr.bf16.mxu0 %v7476
    %7701 = vmatpush1.bf16.msra.mxu0 %v7475
    %7702 = vmatprep.subr.bf16.mxu0 %v7480
    %7703 = vmatpush1.bf16.msra.mxu0 %v7479
    %7704 = vmatprep.subr.bf16.mxu0 %v7484
    %7705 = vmatpush1.bf16.msra.mxu0 %v7483
    %7706 = vmatprep.subr.bf16.mxu0 %v7488
    %7707 = vmatpush1.bf16.msra.mxu0 %v7487
    %7708 = vmatprep.subr.bf16.mxu0 %v7492
    %7709 = vmatpush1.bf16.msra.mxu0 %v7491
    %7710 = vmatprep.subr.bf16.mxu0 %v7496
    %7711 = vmatpush1.bf16.msra.mxu0 %v7495
    %7712 = vmatprep.subr.bf16.mxu0 %v7500
    %7713 = vmatpush1.bf16.msra.mxu0 %v7499
    %7714 = vmatprep.subr.bf16.mxu0 %v7504
    %7715 = vmatpush1.bf16.msra.mxu0 %v7503
    %7716 = vmatprep.subr.bf16.mxu0 %v7508
    %7717 = vmatpush1.bf16.msra.mxu0 %v7507
    %7718 = vmatprep.subr.bf16.mxu0 %v7512
    %7719 = vmatpush1.bf16.msra.mxu0 %v7511
    %7720 = vmatprep.subr.bf16.mxu0 %v7516
    %7721 = vmatpush1.bf16.msra.mxu0 %v7515
    %7722 = vmatprep.subr.bf16.mxu0 %v7520
    %7723 = vmatpush1.bf16.msra.mxu0 %v7519
    %7724 = vmatprep.mubr.bf16.mxu0 %v6861
    %7725 = vmatmul.mubr.bf16.gmra.mrb[0].mxu0 %v6860
    %v7726 = vpop.f32.mrb[0].mxu0
    %v7727 = vadd.f32 %v7686, %v7726
    %v7728 = vpop.f32.mrb[0].mxu0
    %v7729 = vadd.f32 %v7688, %v7728
    %v7730 = vpop.f32.mrb[0].mxu0
    %v7731 = vpop.f32.mrb[0].mxu0
    %7732 = vdwg.mxu0
    %7733 = vmatprep.subr.bf16.mxu0 %v7398
    %7734 = vmatpush1.bf16.msra.mxu0 %v7397
    %7735 = vmatprep.subr.bf16.mxu0 %v7402
    %7736 = vmatpush1.bf16.msra.mxu0 %v7401
    %7737 = vmatprep.subr.bf16.mxu0 %v7406
    %7738 = vmatpush1.bf16.msra.mxu0 %v7405
    %7739 = vmatprep.subr.bf16.mxu0 %v7410
    %7740 = vmatpush1.bf16.msra.mxu0 %v7409
    %7741 = vmatprep.subr.bf16.mxu0 %v7414
    %7742 = vmatpush1.bf16.msra.mxu0 %v7413
    %7743 = vmatprep.subr.bf16.mxu0 %v7418
    %7744 = vmatpush1.bf16.msra.mxu0 %v7417
    %7745 = vmatprep.subr.bf16.mxu0 %v7422
    %7746 = vmatpush1.bf16.msra.mxu0 %v7421
    %7747 = vmatprep.subr.bf16.mxu0 %v7426
    %7748 = vmatpush1.bf16.msra.mxu0 %v7425
    %7749 = vmatprep.subr.bf16.mxu0 %v7430
    %7750 = vmatpush1.bf16.msra.mxu0 %v7429
    %7751 = vmatprep.subr.bf16.mxu0 %v7434
    %7752 = vmatpush1.bf16.msra.mxu0 %v7433
    %7753 = vmatprep.subr.bf16.mxu0 %v7438
    %7754 = vmatpush1.bf16.msra.mxu0 %v7437
    %7755 = vmatprep.subr.bf16.mxu0 %v7442
    %7756 = vmatpush1.bf16.msra.mxu0 %v7441
    %7757 = vmatprep.subr.bf16.mxu0 %v7446
    %7758 = vmatpush1.bf16.msra.mxu0 %v7445
    %7759 = vmatprep.subr.bf16.mxu0 %v7450
    %7760 = vmatpush1.bf16.msra.mxu0 %v7449
    %7761 = vmatprep.subr.bf16.mxu0 %v7454
    %7762 = vmatpush1.bf16.msra.mxu0 %v7453
    %7763 = vmatprep.subr.bf16.mxu0 %v7458
    %7764 = vmatpush1.bf16.msra.mxu0 %v7457
    %7765 = vmatprep.mubr.bf16.mxu0 %v6859
    %7766 = vmatmul.mubr.bf16.gmra.mrb[0].mxu0 %v6858
    %v7767 = vpop.f32.mrb[0].mxu0
    %v7768 = vadd.f32 %v7002, %v7767
    %v7769 = vpop.f32.mrb[0].mxu0
    %v7770 = vadd.f32 %v7006, %v7769
    %v7771 = vpop.f32.mrb[0].mxu0
    %v7772 = vpop.f32.mrb[0].mxu0
    %7773 = vdwg.mxu0
    %7774 = vmatprep.subr.bf16.mxu0 %v7462
    %7775 = vmatpush1.bf16.msra.mxu0 %v7461
    %7776 = vmatprep.subr.bf16.mxu0 %v7466
    %7777 = vmatpush1.bf16.msra.mxu0 %v7465
    %7778 = vmatprep.subr.bf16.mxu0 %v7470
    %7779 = vmatpush1.bf16.msra.mxu0 %v7469
    %7780 = vmatprep.subr.bf16.mxu0 %v7474
    %7781 = vmatpush1.bf16.msra.mxu0 %v7473
    %7782 = vmatprep.subr.bf16.mxu0 %v7478
    %7783 = vmatpush1.bf16.msra.mxu0 %v7477
    %7784 = vmatprep.subr.bf16.mxu0 %v7482
    %7785 = vmatpush1.bf16.msra.mxu0 %v7481
    %7786 = vmatprep.subr.bf16.mxu0 %v7486
    %7787 = vmatpush1.bf16.msra.mxu0 %v7485
    %7788 = vmatprep.subr.bf16.mxu0 %v7490
    %7789 = vmatpush1.bf16.msra.mxu0 %v7489
    %7790 = vmatprep.subr.bf16.mxu0 %v7494
    %7791 = vmatpush1.bf16.msra.mxu0 %v7493
    %7792 = vmatprep.subr.bf16.mxu0 %v7498
    %7793 = vmatpush1.bf16.msra.mxu0 %v7497
    %7794 = vmatprep.subr.bf16.mxu0 %v7502
    %7795 = vmatpush1.bf16.msra.mxu0 %v7501
    %7796 = vmatprep.subr.bf16.mxu0 %v7506
    %7797 = vmatpush1.bf16.msra.mxu0 %v7505
    %7798 = vmatprep.subr.bf16.mxu0 %v7510
    %7799 = vmatpush1.bf16.msra.mxu0 %v7509
    %7800 = vmatprep.subr.bf16.mxu0 %v7514
    %7801 = vmatpush1.bf16.msra.mxu0 %v7513
    %7802 = vmatprep.subr.bf16.mxu0 %v7518
    %7803 = vmatpush1.bf16.msra.mxu0 %v7517
    %7804 = vmatprep.subr.bf16.mxu0 %v7522
    %7805 = vmatpush1.bf16.msra.mxu0 %v7521
    %7806 = vmatprep.mubr.bf16.mxu0 %v6861
    %7807 = vmatmul.mubr.bf16.gmra.mrb[0].mxu0 %v6860
    %v7808 = vpop.f32.mrb[0].mxu0
    %v7809 = vadd.f32 %v7768, %v7808
    %v7810 = vpop.f32.mrb[0].mxu0
    %v7811 = vadd.f32 %v7770, %v7810
    %v7812 = vpop.f32.mrb[0].mxu0
    %v7813 = vpop.f32.mrb[0].mxu0
    %7814 = vdwg.mxu0
    %vm7815 = vcmp.gt.f32.partialorder %v7727, 0.0
    %vm7816 = vcmp.gt.f32.partialorder %v7729, 0.0
    %vm7817 = vcmp.gt.f32.partialorder %v7809, 0.0
    %vm7818 = vcmp.gt.f32.partialorder %v7811, 0.0
    %v7819 = vmul.f32 %v7727, 0.2
    %v7820 = vmul.f32 %v7729, 0.2
    %v7821 = vmul.f32 %v7809, 0.2
    %v7822 = vmul.f32 %v7811, 0.2
    %v7823 = vsel %vm7815, %v7727, %v7819
    %v7824 = vsel %vm7816, %v7729, %v7820
    %v7825 = vsel %vm7817, %v7809, %v7821
    %v7826 = vsel %vm7818, %v7811, %v7822
    %v7827 = vld [vmem:[#allocation9 + $0x3] sm:$0x1]
    %v7828 = vpack.c.bf16 %v7823, %v7823
    %v7829 = vpack.c.bf16 %v7824, %v7824
    %v7830 = vpack.c.bf16 %v7825, %v7825
    %v7831 = vpack.c.bf16 %v7826, %v7826
    %v7832 = vld [vmem:[#allocation7] sm:$0xf]
    %v7833 = vld [vmem:[#allocation7 + $0x4] sm:$0xf]
    %v7834 = vld [vmem:[#allocation7 + $0x8] sm:$0xf]
    %v7835 = vld [vmem:[#allocation7 + $0xc] sm:$0xf]
    %v7836 = vld [vmem:[#allocation7 + $0x10] sm:$0xf]
    %v7837 = vld [vmem:[#allocation7 + $0x14] sm:$0xf]
    %v7838 = vld [vmem:[#allocation7 + $0x18] sm:$0xf]
    %v7839 = vld [vmem:[#allocation7 + $0x1c] sm:$0xf]
    %v7840 = vld [vmem:[#allocation7 + $0x20] sm:$0xf]
    %v7841 = vld [vmem:[#allocation7 + $0x24] sm:$0xf]
    %v7842 = vld [vmem:[#allocation7 + $0x28] sm:$0xf]
    %v7843 = vld [vmem:[#allocation7 + $0x2c] sm:$0xf]
    %v7844 = vld [vmem:[#allocation7 + $0x30] sm:$0xf]
    %v7845 = vld [vmem:[#allocation7 + $0x34] sm:$0xf]
    %v7846 = vld [vmem:[#allocation7 + $0x38] sm:$0xf]
    %v7847 = vld [vmem:[#allocation7 + $0x3c] sm:$0xf]
    %v7848 = vld [vmem:[#allocation7 + $0x40] sm:$0xf]
    %v7849 = vld [vmem:[#allocation7 + $0x44] sm:$0xf]
    %v7850 = vld [vmem:[#allocation7 + $0x48] sm:$0xf]
    %v7851 = vld [vmem:[#allocation7 + $0x4c] sm:$0xf]
    %v7852 = vld [vmem:[#allocation7 + $0x50] sm:$0xf]
    %v7853 = vld [vmem:[#allocation7 + $0x54] sm:$0xf]
    %v7854 = vld [vmem:[#allocation7 + $0x58] sm:$0xf]
    %v7855 = vld [vmem:[#allocation7 + $0x5c] sm:$0xf]
    %v7856 = vld [vmem:[#allocation7 + $0x60] sm:$0xf]
    %v7857 = vld [vmem:[#allocation7 + $0x64] sm:$0xf]
    %v7858 = vld [vmem:[#allocation7 + $0x68] sm:$0xf]
    %v7859 = vld [vmem:[#allocation7 + $0x6c] sm:$0xf]
    %v7860 = vld [vmem:[#allocation7 + $0x70] sm:$0xf]
    %v7861 = vld [vmem:[#allocation7 + $0x74] sm:$0xf]
    %v7862 = vld [vmem:[#allocation7 + $0x78] sm:$0xf]
    %v7863 = vld [vmem:[#allocation7 + $0x7c] sm:$0xf]
    %v7864 = vld [vmem:[#allocation7 + $0x80] sm:$0xf]
    %v7865 = vld [vmem:[#allocation7 + $0x84] sm:$0xf]
    %v7866 = vld [vmem:[#allocation7 + $0x88] sm:$0xf]
    %v7867 = vld [vmem:[#allocation7 + $0x8c] sm:$0xf]
    %v7868 = vld [vmem:[#allocation7 + $0x90] sm:$0xf]
    %v7869 = vld [vmem:[#allocation7 + $0x94] sm:$0xf]
    %v7870 = vld [vmem:[#allocation7 + $0x98] sm:$0xf]
    %v7871 = vld [vmem:[#allocation7 + $0x9c] sm:$0xf]
    %v7872 = vld [vmem:[#allocation7 + $0xa0] sm:$0xf]
    %v7873 = vld [vmem:[#allocation7 + $0xa4] sm:$0xf]
    %v7874 = vld [vmem:[#allocation7 + $0xa8] sm:$0xf]
    %v7875 = vld [vmem:[#allocation7 + $0xac] sm:$0xf]
    %v7876 = vld [vmem:[#allocation7 + $0xb0] sm:$0xf]
    %v7877 = vld [vmem:[#allocation7 + $0xb4] sm:$0xf]
    %v7878 = vld [vmem:[#allocation7 + $0xb8] sm:$0xf]
    %v7879 = vld [vmem:[#allocation7 + $0xbc] sm:$0xf]
    %v7880 = vld [vmem:[#allocation7 + $0xc0] sm:$0xf]
    %v7881 = vld [vmem:[#allocation7 + $0xc4] sm:$0xf]
    %v7882 = vld [vmem:[#allocation7 + $0xc8] sm:$0xf]
    %v7883 = vld [vmem:[#allocation7 + $0xcc] sm:$0xf]
    %v7884 = vld [vmem:[#allocation7 + $0xd0] sm:$0xf]
    %v7885 = vld [vmem:[#allocation7 + $0xd4] sm:$0xf]
    %v7886 = vld [vmem:[#allocation7 + $0xd8] sm:$0xf]
    %v7887 = vld [vmem:[#allocation7 + $0xdc] sm:$0xf]
    %v7888 = vld [vmem:[#allocation7 + $0xe0] sm:$0xf]
    %v7889 = vld [vmem:[#allocation7 + $0xe4] sm:$0xf]
    %v7890 = vld [vmem:[#allocation7 + $0xe8] sm:$0xf]
    %v7891 = vld [vmem:[#allocation7 + $0xec] sm:$0xf]
    %v7892 = vld [vmem:[#allocation7 + $0xf0] sm:$0xf]
    %v7893 = vld [vmem:[#allocation7 + $0xf4] sm:$0xf]
    %v7894 = vld [vmem:[#allocation7 + $0xf8] sm:$0xf]
    %v7895 = vld [vmem:[#allocation7 + $0xfc] sm:$0xf]
    %v7896 = vlaneseq
    %v7897 = vshrl.u32 %v7896, 7
    %v7898 = vsub.s32 0, %v7897
    %v7899 = vrot.slane %v7827, %v7898
    %v7964 = vunpack.c.l.b16 %v7832
    %v7965 = vunpack.c.l.b16 %v7833
    %v7966 = vunpack.c.l.b16 %v7834
    %v7967 = vunpack.c.l.b16 %v7835
    %v7968 = vunpack.c.l.b16 %v7836
    %v7969 = vunpack.c.l.b16 %v7837
    %v7970 = vunpack.c.l.b16 %v7838
    %v7971 = vunpack.c.l.b16 %v7839
    %v7972 = vunpack.c.l.b16 %v7840
    %v7973 = vunpack.c.l.b16 %v7841
    %v7974 = vunpack.c.l.b16 %v7842
    %v7975 = vunpack.c.l.b16 %v7843
    %v7976 = vunpack.c.l.b16 %v7844
    %v7977 = vunpack.c.l.b16 %v7845
    %v7978 = vunpack.c.l.b16 %v7846
    %v7979 = vunpack.c.l.b16 %v7847
    %v7980 = vunpack.c.l.b16 %v7848
    %v7981 = vunpack.c.l.b16 %v7849
    %v7982 = vunpack.c.l.b16 %v7850
    %v7983 = vunpack.c.l.b16 %v7851
    %v7984 = vunpack.c.l.b16 %v7852
    %v7985 = vunpack.c.l.b16 %v7853
    %v7986 = vunpack.c.l.b16 %v7854
    %v7987 = vunpack.c.l.b16 %v7855
    %v7988 = vunpack.c.l.b16 %v7856
    %v7989 = vunpack.c.l.b16 %v7857
    %v7990 = vunpack.c.l.b16 %v7858
    %v7991 = vunpack.c.l.b16 %v7859
    %v7992 = vunpack.c.l.b16 %v7860
    %v7993 = vunpack.c.l.b16 %v7861
    %v7994 = vunpack.c.l.b16 %v7862
    %v7995 = vunpack.c.l.b16 %v7863
    %v7996 = vunpack.c.l.b16 %v7864
    %v7997 = vunpack.c.l.b16 %v7865
    %v7998 = vunpack.c.l.b16 %v7866
    %v7999 = vunpack.c.l.b16 %v7867
    %v8000 = vunpack.c.l.b16 %v7868
    %v8001 = vunpack.c.l.b16 %v7869
    %v8002 = vunpack.c.l.b16 %v7870
    %v8003 = vunpack.c.l.b16 %v7871
    %v8004 = vunpack.c.l.b16 %v7872
    %v8005 = vunpack.c.l.b16 %v7873
    %v8006 = vunpack.c.l.b16 %v7874
    %v8007 = vunpack.c.l.b16 %v7875
    %v8008 = vunpack.c.l.b16 %v7876
    %v8009 = vunpack.c.l.b16 %v7877
    %v8010 = vunpack.c.l.b16 %v7878
    %v8011 = vunpack.c.l.b16 %v7879
    %v8012 = vunpack.c.l.b16 %v7880
    %v8013 = vunpack.c.l.b16 %v7881
    %v8014 = vunpack.c.l.b16 %v7882
    %v8015 = vunpack.c.l.b16 %v7883
    %v8016 = vunpack.c.l.b16 %v7884
    %v8017 = vunpack.c.l.b16 %v7885
    %v8018 = vunpack.c.l.b16 %v7886
    %v8019 = vunpack.c.l.b16 %v7887
    %v8020 = vunpack.c.l.b16 %v7888
    %v8021 = vunpack.c.l.b16 %v7889
    %v8022 = vunpack.c.l.b16 %v7890
    %v8023 = vunpack.c.l.b16 %v7891
    %v8024 = vunpack.c.l.b16 %v7892
    %v8025 = vunpack.c.l.b16 %v7893
    %v8026 = vunpack.c.l.b16 %v7894
    %v8027 = vunpack.c.l.b16 %v7895
    %v8028 = vpack.c.b16 %v7965, %v7964
    %v8029 = vpack.c.b16 %v7967, %v7966
    %v8030 = vpack.c.b16 %v7969, %v7968
    %v8031 = vpack.c.b16 %v7971, %v7970
    %v8032 = vpack.c.b16 %v7973, %v7972
    %v8033 = vpack.c.b16 %v7975, %v7974
    %v8034 = vpack.c.b16 %v7977, %v7976
    %v8035 = vpack.c.b16 %v7979, %v7978
    %v8036 = vpack.c.b16 %v7981, %v7980
    %v8037 = vpack.c.b16 %v7983, %v7982
    %v8038 = vpack.c.b16 %v7985, %v7984
    %v8039 = vpack.c.b16 %v7987, %v7986
    %v8040 = vpack.c.b16 %v7989, %v7988
    %v8041 = vpack.c.b16 %v7991, %v7990
    %v8042 = vpack.c.b16 %v7993, %v7992
    %v8043 = vpack.c.b16 %v7995, %v7994
    %v8044 = vpack.c.b16 %v7997, %v7996
    %v8045 = vpack.c.b16 %v7999, %v7998
    %v8046 = vpack.c.b16 %v8001, %v8000
    %v8047 = vpack.c.b16 %v8003, %v8002
    %v8048 = vpack.c.b16 %v8005, %v8004
    %v8049 = vpack.c.b16 %v8007, %v8006
    %v8050 = vpack.c.b16 %v8009, %v8008
    %v8051 = vpack.c.b16 %v8011, %v8010
    %v8052 = vpack.c.b16 %v8013, %v8012
    %v8053 = vpack.c.b16 %v8015, %v8014
    %v8054 = vpack.c.b16 %v8017, %v8016
    %v8055 = vpack.c.b16 %v8019, %v8018
    %v8056 = vpack.c.b16 %v8021, %v8020
    %v8057 = vpack.c.b16 %v8023, %v8022
    %v8058 = vpack.c.b16 %v8025, %v8024
    %v8059 = vpack.c.b16 %v8027, %v8026
    %8092 = vmatprep.subr.bf16.mxu0 0
    %8093 = vmatpush1.bf16.msra.mxu0 %v8028
    %8094 = vmatprep.subr.bf16.mxu0 0
    %8095 = vmatpush1.bf16.msra.mxu0 %v8029
    %8096 = vmatprep.subr.bf16.mxu0 0
    %8097 = vmatpush1.bf16.msra.mxu0 %v8030
    %8098 = vmatprep.subr.bf16.mxu0 0
    %8099 = vmatpush1.bf16.msra.mxu0 %v8031
    %8100 = vmatprep.subr.bf16.mxu0 0
    %8101 = vmatpush1.bf16.msra.mxu0 %v8032
    %8102 = vmatprep.subr.bf16.mxu0 0
    %8103 = vmatpush1.bf16.msra.mxu0 %v8033
    %8104 = vmatprep.subr.bf16.mxu0 0
    %8105 = vmatpush1.bf16.msra.mxu0 %v8034
    %8106 = vmatprep.subr.bf16.mxu0 0
    %8107 = vmatpush1.bf16.msra.mxu0 %v8035
    %8108 = vmatprep.subr.bf16.mxu0 0
    %8109 = vmatpush1.bf16.msra.mxu0 %v8036
    %8110 = vmatprep.subr.bf16.mxu0 0
    %8111 = vmatpush1.bf16.msra.mxu0 %v8037
    %8112 = vmatprep.subr.bf16.mxu0 0
    %8113 = vmatpush1.bf16.msra.mxu0 %v8038
    %8114 = vmatprep.subr.bf16.mxu0 0
    %8115 = vmatpush1.bf16.msra.mxu0 %v8039
    %8116 = vmatprep.subr.bf16.mxu0 0
    %8117 = vmatpush1.bf16.msra.mxu0 %v8040
    %8118 = vmatprep.subr.bf16.mxu0 0
    %8119 = vmatpush1.bf16.msra.mxu0 %v8041
    %8120 = vmatprep.subr.bf16.mxu0 0
    %8121 = vmatpush1.bf16.msra.mxu0 %v8042
    %8122 = vmatprep.subr.bf16.mxu0 0
    %8123 = vmatpush1.bf16.msra.mxu0 %v8043
    %8124 = vmatprep.mubr.bf16.mxu0 %v7829
    %8125 = vmatmul.mubr.bf16.gmra.mrb[0].mxu0 %v7828
    %v8126 = vpop.f32.mrb[0].mxu0
    %v8127 = vadd.f32 %v7899, %v8126
    %v8128 = vpop.f32.mrb[0].mxu0
    %v8129 = vpop.f32.mrb[0].mxu0
    %v8130 = vpop.f32.mrb[0].mxu0
    %8131 = vdwg.mxu0
    %8132 = vmatprep.subr.bf16.mxu0 0
    %8133 = vmatpush1.bf16.msra.mxu0 %v8044
    %8134 = vmatprep.subr.bf16.mxu0 0
    %8135 = vmatpush1.bf16.msra.mxu0 %v8045
    %8136 = vmatprep.subr.bf16.mxu0 0
    %8137 = vmatpush1.bf16.msra.mxu0 %v8046
    %8138 = vmatprep.subr.bf16.mxu0 0
    %8139 = vmatpush1.bf16.msra.mxu0 %v8047
    %8140 = vmatprep.subr.bf16.mxu0 0
    %8141 = vmatpush1.bf16.msra.mxu0 %v8048
    %8142 = vmatprep.subr.bf16.mxu0 0
    %8143 = vmatpush1.bf16.msra.mxu0 %v8049
    %8144 = vmatprep.subr.bf16.mxu0 0
    %8145 = vmatpush1.bf16.msra.mxu0 %v8050
    %8146 = vmatprep.subr.bf16.mxu0 0
    %8147 = vmatpush1.bf16.msra.mxu0 %v8051
    %8148 = vmatprep.subr.bf16.mxu0 0
    %8149 = vmatpush1.bf16.msra.mxu0 %v8052
    %8150 = vmatprep.subr.bf16.mxu0 0
    %8151 = vmatpush1.bf16.msra.mxu0 %v8053
    %8152 = vmatprep.subr.bf16.mxu0 0
    %8153 = vmatpush1.bf16.msra.mxu0 %v8054
    %8154 = vmatprep.subr.bf16.mxu0 0
    %8155 = vmatpush1.bf16.msra.mxu0 %v8055
    %8156 = vmatprep.subr.bf16.mxu0 0
    %8157 = vmatpush1.bf16.msra.mxu0 %v8056
    %8158 = vmatprep.subr.bf16.mxu0 0
    %8159 = vmatpush1.bf16.msra.mxu0 %v8057
    %8160 = vmatprep.subr.bf16.mxu0 0
    %8161 = vmatpush1.bf16.msra.mxu0 %v8058
    %8162 = vmatprep.subr.bf16.mxu0 0
    %8163 = vmatpush1.bf16.msra.mxu0 %v8059
    %8164 = vmatprep.mubr.bf16.mxu0 %v7831
    %8165 = vmatmul.mubr.bf16.gmra.mrb[0].mxu0 %v7830
    %v8166 = vpop.f32.mrb[0].mxu0
    %v8167 = vadd.f32 %v8127, %v8166
    %v8168 = vpop.f32.mrb[0].mxu0
    %v8169 = vpop.f32.mrb[0].mxu0
    %v8170 = vpop.f32.mrb[0].mxu0
    %8171 = vdwg.mxu0
    %v8172 = vsub.f32 0.0, %v8167
    %v8173 = vmul.f32 %v8172, 1.442695
    %v8174 = vpow.pop %v8173
    %v8175 = vadd.f32 %v8174, 1.0
    %v8176 = vrcp.pop %v8175
    %v8177 = vmul.f32 1.0, %v8176
    %8178 = vst [vmem:[%s6] sm:$0xff] %v8177
    // Predicated region
    $region46: #{cdiscriminator_forward.1} parent=1 // pred_check
      _
    $region47: #{cdiscriminator_forward.1} parent=1 // pred_check_branch
      %8180 = sbr.rel (0) target = $region49
    $region48: #{cdiscriminator_forward.1} parent=1 // pred_region
      _
    $region49: #{cdiscriminator_forward.1} parent=1 // pred_fallthru
      _
    // Predicated region
    $region50: #{cdiscriminator_forward.1} parent=1 // pred_check
      _
    $region51: #{cdiscriminator_forward.1} parent=1 // pred_check_branch
      %8182 = sbr.rel (0) target = $region53
    $region52: #{cdiscriminator_forward.1} parent=1 // pred_region
      _
    $region53: #{cdiscriminator_forward.1} parent=1 // pred_fallthru
      _
    %8183 = vsyncpa [#allocation3], 1
    %8184 = vsyncpa [#allocation5], 1
    %8185 = vsyncpa [#allocation8], 1

</llo_original>
